<compile_context>
chip_gen: v6e
topology: v6e:2x2x1
jax: 0.10.0
libtpu: 0.0.40
codegen_flags: <defaults>
</compile_context>

<pallas_src>
import functools

import numpy as np
import jax
import jax.numpy as jnp
from jax.experimental import pallas as pl
from jax.experimental.pallas import tpu as pltpu


# ------------------------------ fused kernel ----------------------------------
def decoder_kernel(x_ref, wfc_ref, bfc_ref, w2g_ref, b2_ref, w1g_ref, b1_ref,
                   o_ref, yp_ref, ap_ref):
    B = x_ref.shape[0]
    HO, WO = o_ref.shape[1], o_ref.shape[2]          # final spatial size
    H1, W1 = HO - 4, WO - 4                          # fc image size
    H2, W2 = HO - 2, WO - 2                          # first deconv output size
    C1 = yp_ref.shape[-1]                            # 64
    C2 = ap_ref.shape[-1]                            # 8
    K = 3

    # ---- fc + bias + ReLU: one MXU call (weight columns already NHWC) -------
    y = jnp.dot(x_ref[...], wfc_ref[...], preferred_element_type=jnp.float32)
    y = jnp.maximum(y + bfc_ref[...], 0.0)           # (B, H1*W1*C1), NHWC order

    # ---- scatter fc activations into a zero-padded NHWC image ---------------
    # (equivalent to torch .view + NCHW->NHWC + pad(2); done with small
    #  contiguous stores so no lane->sublane reshape of the (B, 4096) value
    #  is required)
    yp_ref[...] = jnp.zeros(yp_ref.shape, jnp.float32)
    for h in range(H1):
        for w in range(W1):
            s = (h * W1 + w) * C1
            yp_ref[:, (K - 1) + h, (K - 1) + w, :] = y[:, s:s + C1]

    # ---- ConvTranspose2d(64 -> 8, 3): gather form, ONE matmul for all 9 taps
    big = jnp.dot(yp_ref[...].reshape(B * HO * WO, C1), w2g_ref[...],
                  preferred_element_type=jnp.float32)          # (B*HO*WO, 9*C2)
    big = big.reshape(B, HO, WO, K * K * C2)

    a2 = None
    for u in range(K):
        for v in range(K):
            g = u * K + v
            t = big[:, u:u + H2, v:v + W2, g * C2:(g + 1) * C2]
            a2 = t if a2 is None else a2 + t
    a2 = jnp.maximum(a2 + b2_ref[...], 0.0)                    # (B, H2, W2, C2)

    # ---- zero-pad again for the second gather-form deconv -------------------
    ap_ref[...] = jnp.zeros(ap_ref.shape, jnp.float32)
    ap_ref[:, K - 1:K - 1 + H2, K - 1:K - 1 + W2, :] = a2
    ap = ap_ref[...]                                           # (B, HO+2, WO+2, C2)

    # ---- ConvTranspose2d(8 -> 1, 3) + bias + sigmoid -------------------------
    # accumulate the 9 shifted, weighted taps in registers; reduce lanes once.
    acc8 = None
    for u in range(K):
        for v in range(K):
            g = u * K + v
            t = ap[:, u:u + HO, v:v + WO, :] * w1g_ref[g]      # (B, HO, WO, C2)
            acc8 = t if acc8 is None else acc8 + t
    z = jnp.sum(acc8, axis=-1) + b1_ref[...]                   # (B, HO, WO)
    o_ref[...] = pl.reciprocal(1.0 + jnp.exp(-z), approx=True)  # sigmoid


# --------------------------------- wrapper ------------------------------------
def decoder_forward(packed, x, *, width, height):
    B = x.shape[0]
    vmem = pltpu.MemorySpace.VMEM
    out = pl.pallas_call(
        decoder_kernel,
        out_shape=jax.ShapeDtypeStruct((B, width, height), jnp.float32),
        in_specs=[pl.BlockSpec(memory_space=vmem)] * 7,
        out_specs=pl.BlockSpec(memory_space=vmem),
        scratch_shapes=[
            pltpu.VMEM((B, width, height, 64), jnp.float32),        # padded deconv-1 input
            pltpu.VMEM((B, width + 2, height + 2, 8), jnp.float32),  # padded deconv-2 input
        ],
    )(x, packed["fcw"], packed["fcb"], packed["w2g"], packed["b2"],
      packed["w1g"], packed["b1"])
    # (B, W, H) -> (B, 1, W, H): free reshape since the channel dim is 1.
    return out.reshape(B, 1, width, height)


# ------------------------------ params / packing -------------------------------
def init_params(key, width, height, hidden_dim):
    H1, W1 = width - 4, height - 4
    n_out = H1 * W1 * 64
    ks = jax.random.split(key, 6)
    fc_w = jax.random.normal(ks[0], (n_out, hidden_dim), jnp.float32) * 0.05
    fc_b = jax.random.normal(ks[1], (n_out,), jnp.float32) * 0.05
    w2 = jax.random.normal(ks[2], (64, 8, 3, 3), jnp.float32) * 0.05   # ConvT(64,8,3)
    b2 = jax.random.normal(ks[3], (8,), jnp.float32) * 0.05
    w1 = jax.random.normal(ks[4], (8, 1, 3, 3), jnp.float32) * 0.05    # ConvT(8,1,3)
    b1 = jax.random.normal(ks[5], (1,), jnp.float32) * 0.05
    raw = dict(fc_w=fc_w, fc_b=fc_b, w2=w2, b2=b2, w1=w1, b1=b1)

    # fc weight/bias columns permuted from (c, h, w) -> (h, w, c) so the fc
    # output is already NHWC-ordered (kills the XLA transpose).
    fcw_nhwc = jnp.transpose(fc_w.reshape(64, H1, W1, hidden_dim),
                             (1, 2, 0, 3)).reshape(n_out, hidden_dim)
    fcb_nhwc = jnp.transpose(fc_b.reshape(64, H1, W1), (1, 2, 0)).reshape(1, n_out)

    # gather-form (flipped) deconv taps:
    #   conv1: (64, 9*8), column group g = u*3+v holds w2[:, :, 2-u, 2-v]
    #   conv2: (9, 1, 8),  row g holds              w1[:, 0, 2-u, 2-v]
    w2g = jnp.concatenate(
        [w2[:, :, 2 - u, 2 - v] for u in range(3) for v in range(3)], axis=1)
    w1g = jnp.stack(
        [w1[:, 0, 2 - u, 2 - v] for u in range(3) for v in range(3)],
        axis=0).reshape(9, 1, 8)

    packed = dict(
        fcw=fcw_nhwc.T,                 # (hidden, n_out), NHWC columns
        fcb=fcb_nhwc,                   # (1, n_out)
        w2g=w2g,                        # (64, 72)
        b2=b2.reshape(1, 8),
        w1g=w1g,                        # (9, 1, 8)
        b1=b1.reshape(1, 1),
    )
    return raw, packed


# ------------------------------ numpy reference --------------------------------
def reference_numpy(raw, x, width, height):
    x = np.asarray(x, np.float32)
    fc_w, fc_b = np.asarray(raw["fc_w"]), np.asarray(raw["fc_b"])
    w2, b2 = np.asarray(raw["w2"]), np.asarray(raw["b2"])
    w1, b1 = np.asarray(raw["w1"]), np.asarray(raw["b1"])
    B = x.shape[0]
    H1, W1 = width - 4, height - 4
    y = x @ fc_w.T + fc_b
    y = y.reshape(B, 64, H1, W1)
    y = np.maximum(y, 0.0)

    def conv_t(inp, w, b):
        Bn, Cin, H, W = inp.shape
        Cout = w.shape[1]
        out = np.zeros((Bn, Cout, H + 2, W + 2), np.float32)
        for ki in range(3):
            for kj in range(3):
                out[:, :, ki:ki + H, kj:kj + W] += np.einsum(
                    "bihw,io->bohw", inp, w[:, :, ki, kj])
        return out + b.reshape(1, -1, 1, 1)

    z = np.maximum(conv_t(y, w2, b2), 0.0)
    z = conv_t(z, w1, b1)
    return 1.0 / (1.0 + np.exp(-z))


# ----------------------------------- main --------------------------------------
if __name__ == "__main__":
    width, height, hidden_dim, batch = 12, 12, 32, 2

    key = jax.random.PRNGKey(0)
    kp, kx = jax.random.split(key)
    raw, packed = init_params(kp, width, height, hidden_dim)
    x = jax.random.normal(kx, (batch, hidden_dim), jnp.float32)

    fwd = jax.jit(functools.partial(decoder_forward, width=width, height=height))
    out = jax.block_until_ready(fwd(packed, x))

    assert out.shape == (batch, 1, width, height), out.shape
    ref = reference_numpy(raw, x, width, height)
    np.testing.assert_allclose(np.asarray(out), ref, rtol=5e-3, atol=5e-3)

    print("KERNEL_OK")
</pallas_src>

<mosaic_0001>
module attributes {stable_mosaic.version = 11 : i64} {
  func.func @decoder_kernel(%arg0: memref<2x32xf32, #tpu.memory_space<vmem>>, %arg1: memref<32x4096xf32, #tpu.memory_space<vmem>>, %arg2: memref<1x4096xf32, #tpu.memory_space<vmem>>, %arg3: memref<64x72xf32, #tpu.memory_space<vmem>>, %arg4: memref<1x8xf32, #tpu.memory_space<vmem>>, %arg5: memref<9x1x8xf32, #tpu.memory_space<vmem>>, %arg6: memref<1x1xf32, #tpu.memory_space<vmem>>, %arg7: memref<2x12x12xf32, #tpu.memory_space<vmem>>, %arg8: memref<2x12x12x64xf32, #tpu.memory_space<vmem>>, %arg9: memref<2x14x14x8xf32, #tpu.memory_space<vmem>>) attributes {dimension_semantics = [], scalar_prefetch = 0 : i64, scratch_operands = 2 : i64, tpu.core_type = #tpu.core_type<tc>} {
    %c0 = arith.constant 0 : index
    %c0_0 = arith.constant 0 : index
    %0 = vector.load %arg0[%c0, %c0_0] : memref<2x32xf32, #tpu.memory_space<vmem>>, vector<2x32xf32>
    %c0_1 = arith.constant 0 : index
    %c0_2 = arith.constant 0 : index
    %1 = vector.load %arg1[%c0_1, %c0_2] : memref<32x4096xf32, #tpu.memory_space<vmem>>, vector<32x4096xf32>
    %cst = arith.constant dense<0.000000e+00> : vector<2x4096xf32>
    %2 = tpu.matmul %0, %1, %cst {dimension_numbers = #tpu.dot_dimension_numbers<[1], [0], [0], [1], [0, 0, 1, 1], [], []>} : vector<2x32xf32>, vector<32x4096xf32>, vector<2x4096xf32> -> vector<2x4096xf32>
    %c0_3 = arith.constant 0 : index
    %c0_4 = arith.constant 0 : index
    %3 = vector.load %arg2[%c0_3, %c0_4] : memref<1x4096xf32, #tpu.memory_space<vmem>>, vector<1x4096xf32>
    %4 = vector.broadcast %3 : vector<1x4096xf32> to vector<2x4096xf32>
    %5 = arith.addf %2, %4 : vector<2x4096xf32>
    %cst_5 = arith.constant 0.000000e+00 : f32
    %6 = vector.broadcast %cst_5 : f32 to vector<2x4096xf32>
    %7 = arith.maximumf %5, %6 : vector<2x4096xf32>
    %cst_6 = arith.constant 0.000000e+00 : f32
    %8 = vector.broadcast %cst_6 : f32 to vector<2x12x12x64xf32>
    %c0_7 = arith.constant 0 : index
    %c0_8 = arith.constant 0 : index
    %c0_9 = arith.constant 0 : index
    %c0_10 = arith.constant 0 : index
    %9 = vector.load %arg8[%c0_7, %c0_8, %c0_9, %c0_10] : memref<2x12x12x64xf32, #tpu.memory_space<vmem>>, vector<2x12x12x64xf32>
    tpu.vector_store %arg8[%c0_7, %c0_8, %c0_9, %c0_10], %8 {strides = array<i32>} : memref<2x12x12x64xf32, #tpu.memory_space<vmem>>, vector<2x12x12x64xf32>,
    %10 = vector.extract_strided_slice %7 {offsets = [0, 0], sizes = [2, 64], strides = [1, 1]} : vector<2x4096xf32> to vector<2x64xf32>
    %c0_11 = arith.constant 0 : index
    %c2 = arith.constant 2 : index
    %c2_12 = arith.constant 2 : index
    %c0_13 = arith.constant 0 : index
    %11 = vector.load %arg8[%c0_11, %c2, %c2_12, %c0_13] : memref<2x12x12x64xf32, #tpu.memory_space<vmem>>, vector<2x1x1x64xf32>
    %12 = vector.shape_cast %11 : vector<2x1x1x64xf32> to vector<2x64xf32>
    %13 = vector.shape_cast %10 : vector<2x64xf32> to vector<2x1x1x64xf32>
    tpu.vector_store %arg8[%c0_11, %c2, %c2_12, %c0_13], %13 {strides = array<i32>} : memref<2x12x12x64xf32, #tpu.memory_space<vmem>>, vector<2x1x1x64xf32>,
    %14 = vector.extract_strided_slice %7 {offsets = [0, 64], sizes = [2, 64], strides = [1, 1]} : vector<2x4096xf32> to vector<2x64xf32>
    %c0_14 = arith.constant 0 : index
    %c2_15 = arith.constant 2 : index
    %c3 = arith.constant 3 : index
    %c0_16 = arith.constant 0 : index
    %15 = vector.load %arg8[%c0_14, %c2_15, %c3, %c0_16] : memref<2x12x12x64xf32, #tpu.memory_space<vmem>>, vector<2x1x1x64xf32>
    %16 = vector.shape_cast %15 : vector<2x1x1x64xf32> to vector<2x64xf32>
    %17 = vector.shape_cast %14 : vector<2x64xf32> to vector<2x1x1x64xf32>
    tpu.vector_store %arg8[%c0_14, %c2_15, %c3, %c0_16], %17 {strides = array<i32>} : memref<2x12x12x64xf32, #tpu.memory_space<vmem>>, vector<2x1x1x64xf32>,
    %18 = vector.extract_strided_slice %7 {offsets = [0, 128], sizes = [2, 64], strides = [1, 1]} : vector<2x4096xf32> to vector<2x64xf32>
    %c0_17 = arith.constant 0 : index
    %c2_18 = arith.constant 2 : index
    %c4 = arith.constant 4 : index
    %c0_19 = arith.constant 0 : index
    %19 = vector.load %arg8[%c0_17, %c2_18, %c4, %c0_19] : memref<2x12x12x64xf32, #tpu.memory_space<vmem>>, vector<2x1x1x64xf32>
    %20 = vector.shape_cast %19 : vector<2x1x1x64xf32> to vector<2x64xf32>
    %21 = vector.shape_cast %18 : vector<2x64xf32> to vector<2x1x1x64xf32>
    tpu.vector_store %arg8[%c0_17, %c2_18, %c4, %c0_19], %21 {strides = array<i32>} : memref<2x12x12x64xf32, #tpu.memory_space<vmem>>, vector<2x1x1x64xf32>,
    %22 = vector.extract_strided_slice %7 {offsets = [0, 192], sizes = [2, 64], strides = [1, 1]} : vector<2x4096xf32> to vector<2x64xf32>
    %c0_20 = arith.constant 0 : index
    %c2_21 = arith.constant 2 : index
    %c5 = arith.constant 5 : index
    %c0_22 = arith.constant 0 : index
    %23 = vector.load %arg8[%c0_20, %c2_21, %c5, %c0_22] : memref<2x12x12x64xf32, #tpu.memory_space<vmem>>, vector<2x1x1x64xf32>
    %24 = vector.shape_cast %23 : vector<2x1x1x64xf32> to vector<2x64xf32>
    %25 = vector.shape_cast %22 : vector<2x64xf32> to vector<2x1x1x64xf32>
    tpu.vector_store %arg8[%c0_20, %c2_21, %c5, %c0_22], %25 {strides = array<i32>} : memref<2x12x12x64xf32, #tpu.memory_space<vmem>>, vector<2x1x1x64xf32>,
    %26 = vector.extract_strided_slice %7 {offsets = [0, 256], sizes = [2, 64], strides = [1, 1]} : vector<2x4096xf32> to vector<2x64xf32>
    %c0_23 = arith.constant 0 : index
    %c2_24 = arith.constant 2 : index
    %c6 = arith.constant 6 : index
    %c0_25 = arith.constant 0 : index
    %27 = vector.load %arg8[%c0_23, %c2_24, %c6, %c0_25] : memref<2x12x12x64xf32, #tpu.memory_space<vmem>>, vector<2x1x1x64xf32>
    %28 = vector.shape_cast %27 : vector<2x1x1x64xf32> to vector<2x64xf32>
    %29 = vector.shape_cast %26 : vector<2x64xf32> to vector<2x1x1x64xf32>
    tpu.vector_store %arg8[%c0_23, %c2_24, %c6, %c0_25], %29 {strides = array<i32>} : memref<2x12x12x64xf32, #tpu.memory_space<vmem>>, vector<2x1x1x64xf32>,
    %30 = vector.extract_strided_slice %7 {offsets = [0, 320], sizes = [2, 64], strides = [1, 1]} : vector<2x4096xf32> to vector<2x64xf32>
    %c0_26 = arith.constant 0 : index
    %c2_27 = arith.constant 2 : index
    %c7 = arith.constant 7 : index
    %c0_28 = arith.constant 0 : index
    %31 = vector.load %arg8[%c0_26, %c2_27, %c7, %c0_28] : memref<2x12x12x64xf32, #tpu.memory_space<vmem>>, vector<2x1x1x64xf32>
    %32 = vector.shape_cast %31 : vector<2x1x1x64xf32> to vector<2x64xf32>
    %33 = vector.shape_cast %30 : vector<2x64xf32> to vector<2x1x1x64xf32>
    tpu.vector_store %arg8[%c0_26, %c2_27, %c7, %c0_28], %33 {strides = array<i32>} : memref<2x12x12x64xf32, #tpu.memory_space<vmem>>, vector<2x1x1x64xf32>,
    %34 = vector.extract_strided_slice %7 {offsets = [0, 384], sizes = [2, 64], strides = [1, 1]} : vector<2x4096xf32> to vector<2x64xf32>
    %c0_29 = arith.constant 0 : index
    %c2_30 = arith.constant 2 : index
    %c8 = arith.constant 8 : index
    %c0_31 = arith.constant 0 : index
    %35 = vector.load %arg8[%c0_29, %c2_30, %c8, %c0_31] : memref<2x12x12x64xf32, #tpu.memory_space<vmem>>, vector<2x1x1x64xf32>
    %36 = vector.shape_cast %35 : vector<2x1x1x64xf32> to vector<2x64xf32>
    %37 = vector.shape_cast %34 : vector<2x64xf32> to vector<2x1x1x64xf32>
    tpu.vector_store %arg8[%c0_29, %c2_30, %c8, %c0_31], %37 {strides = array<i32>} : memref<2x12x12x64xf32, #tpu.memory_space<vmem>>, vector<2x1x1x64xf32>,
    %38 = vector.extract_strided_slice %7 {offsets = [0, 448], sizes = [2, 64], strides = [1, 1]} : vector<2x4096xf32> to vector<2x64xf32>
    %c0_32 = arith.constant 0 : index
    %c2_33 = arith.constant 2 : index
    %c9 = arith.constant 9 : index
    %c0_34 = arith.constant 0 : index
    %39 = vector.load %arg8[%c0_32, %c2_33, %c9, %c0_34] : memref<2x12x12x64xf32, #tpu.memory_space<vmem>>, vector<2x1x1x64xf32>
    %40 = vector.shape_cast %39 : vector<2x1x1x64xf32> to vector<2x64xf32>
    %41 = vector.shape_cast %38 : vector<2x64xf32> to vector<2x1x1x64xf32>
    tpu.vector_store %arg8[%c0_32, %c2_33, %c9, %c0_34], %41 {strides = array<i32>} : memref<2x12x12x64xf32, #tpu.memory_space<vmem>>, vector<2x1x1x64xf32>,
    %42 = vector.extract_strided_slice %7 {offsets = [0, 512], sizes = [2, 64], strides = [1, 1]} : vector<2x4096xf32> to vector<2x64xf32>
    %c0_35 = arith.constant 0 : index
    %c3_36 = arith.constant 3 : index
    %c2_37 = arith.constant 2 : index
    %c0_38 = arith.constant 0 : index
    %43 = vector.load %arg8[%c0_35, %c3_36, %c2_37, %c0_38] : memref<2x12x12x64xf32, #tpu.memory_space<vmem>>, vector<2x1x1x64xf32>
    %44 = vector.shape_cast %43 : vector<2x1x1x64xf32> to vector<2x64xf32>
    %45 = vector.shape_cast %42 : vector<2x64xf32> to vector<2x1x1x64xf32>
    tpu.vector_store %arg8[%c0_35, %c3_36, %c2_37, %c0_38], %45 {strides = array<i32>} : memref<2x12x12x64xf32, #tpu.memory_space<vmem>>, vector<2x1x1x64xf32>,
    %46 = vector.extract_strided_slice %7 {offsets = [0, 576], sizes = [2, 64], strides = [1, 1]} : vector<2x4096xf32> to vector<2x64xf32>
    %c0_39 = arith.constant 0 : index
    %c3_40 = arith.constant 3 : index
    %c3_41 = arith.constant 3 : index
    %c0_42 = arith.constant 0 : index
    %47 = vector.load %arg8[%c0_39, %c3_40, %c3_41, %c0_42] : memref<2x12x12x64xf32, #tpu.memory_space<vmem>>, vector<2x1x1x64xf32>
    %48 = vector.shape_cast %47 : vector<2x1x1x64xf32> to vector<2x64xf32>
    %49 = vector.shape_cast %46 : vector<2x64xf32> to vector<2x1x1x64xf32>
    tpu.vector_store %arg8[%c0_39, %c3_40, %c3_41, %c0_42], %49 {strides = array<i32>} : memref<2x12x12x64xf32, #tpu.memory_space<vmem>>, vector<2x1x1x64xf32>,
    %50 = vector.extract_strided_slice %7 {offsets = [0, 640], sizes = [2, 64], strides = [1, 1]} : vector<2x4096xf32> to vector<2x64xf32>
    %c0_43 = arith.constant 0 : index
    %c3_44 = arith.constant 3 : index
    %c4_45 = arith.constant 4 : index
    %c0_46 = arith.constant 0 : index
    %51 = vector.load %arg8[%c0_43, %c3_44, %c4_45, %c0_46] : memref<2x12x12x64xf32, #tpu.memory_space<vmem>>, vector<2x1x1x64xf32>
    %52 = vector.shape_cast %51 : vector<2x1x1x64xf32> to vector<2x64xf32>
    %53 = vector.shape_cast %50 : vector<2x64xf32> to vector<2x1x1x64xf32>
    tpu.vector_store %arg8[%c0_43, %c3_44, %c4_45, %c0_46], %53 {strides = array<i32>} : memref<2x12x12x64xf32, #tpu.memory_space<vmem>>, vector<2x1x1x64xf32>,
    %54 = vector.extract_strided_slice %7 {offsets = [0, 704], sizes = [2, 64], strides = [1, 1]} : vector<2x4096xf32> to vector<2x64xf32>
    %c0_47 = arith.constant 0 : index
    %c3_48 = arith.constant 3 : index
    %c5_49 = arith.constant 5 : index
    %c0_50 = arith.constant 0 : index
    %55 = vector.load %arg8[%c0_47, %c3_48, %c5_49, %c0_50] : memref<2x12x12x64xf32, #tpu.memory_space<vmem>>, vector<2x1x1x64xf32>
    %56 = vector.shape_cast %55 : vector<2x1x1x64xf32> to vector<2x64xf32>
    %57 = vector.shape_cast %54 : vector<2x64xf32> to vector<2x1x1x64xf32>
    tpu.vector_store %arg8[%c0_47, %c3_48, %c5_49, %c0_50], %57 {strides = array<i32>} : memref<2x12x12x64xf32, #tpu.memory_space<vmem>>, vector<2x1x1x64xf32>,
    %58 = vector.extract_strided_slice %7 {offsets = [0, 768], sizes = [2, 64], strides = [1, 1]} : vector<2x4096xf32> to vector<2x64xf32>
    %c0_51 = arith.constant 0 : index
    %c3_52 = arith.constant 3 : index
    %c6_53 = arith.constant 6 : index
    %c0_54 = arith.constant 0 : index
    %59 = vector.load %arg8[%c0_51, %c3_52, %c6_53, %c0_54] : memref<2x12x12x64xf32, #tpu.memory_space<vmem>>, vector<2x1x1x64xf32>
    %60 = vector.shape_cast %59 : vector<2x1x1x64xf32> to vector<2x64xf32>
    %61 = vector.shape_cast %58 : vector<2x64xf32> to vector<2x1x1x64xf32>
    tpu.vector_store %arg8[%c0_51, %c3_52, %c6_53, %c0_54], %61 {strides = array<i32>} : memref<2x12x12x64xf32, #tpu.memory_space<vmem>>, vector<2x1x1x64xf32>,
    %62 = vector.extract_strided_slice %7 {offsets = [0, 832], sizes = [2, 64], strides = [1, 1]} : vector<2x4096xf32> to vector<2x64xf32>
    %c0_55 = arith.constant 0 : index
    %c3_56 = arith.constant 3 : index
    %c7_57 = arith.constant 7 : index
    %c0_58 = arith.constant 0 : index
    %63 = vector.load %arg8[%c0_55, %c3_56, %c7_57, %c0_58] : memref<2x12x12x64xf32, #tpu.memory_space<vmem>>, vector<2x1x1x64xf32>
    %64 = vector.shape_cast %63 : vector<2x1x1x64xf32> to vector<2x64xf32>
    %65 = vector.shape_cast %62 : vector<2x64xf32> to vector<2x1x1x64xf32>
    tpu.vector_store %arg8[%c0_55, %c3_56, %c7_57, %c0_58], %65 {strides = array<i32>} : memref<2x12x12x64xf32, #tpu.memory_space<vmem>>, vector<2x1x1x64xf32>,
    %66 = vector.extract_strided_slice %7 {offsets = [0, 896], sizes = [2, 64], strides = [1, 1]} : vector<2x4096xf32> to vector<2x64xf32>
    %c0_59 = arith.constant 0 : index
    %c3_60 = arith.constant 3 : index
    %c8_61 = arith.constant 8 : index
    %c0_62 = arith.constant 0 : index
    %67 = vector.load %arg8[%c0_59, %c3_60, %c8_61, %c0_62] : memref<2x12x12x64xf32, #tpu.memory_space<vmem>>, vector<2x1x1x64xf32>
    %68 = vector.shape_cast %67 : vector<2x1x1x64xf32> to vector<2x64xf32>
    %69 = vector.shape_cast %66 : vector<2x64xf32> to vector<2x1x1x64xf32>
    tpu.vector_store %arg8[%c0_59, %c3_60, %c8_61, %c0_62], %69 {strides = array<i32>} : memref<2x12x12x64xf32, #tpu.memory_space<vmem>>, vector<2x1x1x64xf32>,
    %70 = vector.extract_strided_slice %7 {offsets = [0, 960], sizes = [2, 64], strides = [1, 1]} : vector<2x4096xf32> to vector<2x64xf32>
    %c0_63 = arith.constant 0 : index
    %c3_64 = arith.constant 3 : index
    %c9_65 = arith.constant 9 : index
    %c0_66 = arith.constant 0 : index
    %71 = vector.load %arg8[%c0_63, %c3_64, %c9_65, %c0_66] : memref<2x12x12x64xf32, #tpu.memory_space<vmem>>, vector<2x1x1x64xf32>
    %72 = vector.shape_cast %71 : vector<2x1x1x64xf32> to vector<2x64xf32>
    %73 = vector.shape_cast %70 : vector<2x64xf32> to vector<2x1x1x64xf32>
    tpu.vector_store %arg8[%c0_63, %c3_64, %c9_65, %c0_66], %73 {strides = array<i32>} : memref<2x12x12x64xf32, #tpu.memory_space<vmem>>, vector<2x1x1x64xf32>,
    %74 = vector.extract_strided_slice %7 {offsets = [0, 1024], sizes = [2, 64], strides = [1, 1]} : vector<2x4096xf32> to vector<2x64xf32>
    %c0_67 = arith.constant 0 : index
    %c4_68 = arith.constant 4 : index
    %c2_69 = arith.constant 2 : index
    %c0_70 = arith.constant 0 : index
    %75 = vector.load %arg8[%c0_67, %c4_68, %c2_69, %c0_70] : memref<2x12x12x64xf32, #tpu.memory_space<vmem>>, vector<2x1x1x64xf32>
    %76 = vector.shape_cast %75 : vector<2x1x1x64xf32> to vector<2x64xf32>
    %77 = vector.shape_cast %74 : vector<2x64xf32> to vector<2x1x1x64xf32>
    tpu.vector_store %arg8[%c0_67, %c4_68, %c2_69, %c0_70], %77 {strides = array<i32>} : memref<2x12x12x64xf32, #tpu.memory_space<vmem>>, vector<2x1x1x64xf32>,
    %78 = vector.extract_strided_slice %7 {offsets = [0, 1088], sizes = [2, 64], strides = [1, 1]} : vector<2x4096xf32> to vector<2x64xf32>
    %c0_71 = arith.constant 0 : index
    %c4_72 = arith.constant 4 : index
    %c3_73 = arith.constant 3 : index
    %c0_74 = arith.constant 0 : index
    %79 = vector.load %arg8[%c0_71, %c4_72, %c3_73, %c0_74] : memref<2x12x12x64xf32, #tpu.memory_space<vmem>>, vector<2x1x1x64xf32>
    %80 = vector.shape_cast %79 : vector<2x1x1x64xf32> to vector<2x64xf32>
    %81 = vector.shape_cast %78 : vector<2x64xf32> to vector<2x1x1x64xf32>
    tpu.vector_store %arg8[%c0_71, %c4_72, %c3_73, %c0_74], %81 {strides = array<i32>} : memref<2x12x12x64xf32, #tpu.memory_space<vmem>>, vector<2x1x1x64xf32>,
    %82 = vector.extract_strided_slice %7 {offsets = [0, 1152], sizes = [2, 64], strides = [1, 1]} : vector<2x4096xf32> to vector<2x64xf32>
    %c0_75 = arith.constant 0 : index
    %c4_76 = arith.constant 4 : index
    %c4_77 = arith.constant 4 : index
    %c0_78 = arith.constant 0 : index
    %83 = vector.load %arg8[%c0_75, %c4_76, %c4_77, %c0_78] : memref<2x12x12x64xf32, #tpu.memory_space<vmem>>, vector<2x1x1x64xf32>
    %84 = vector.shape_cast %83 : vector<2x1x1x64xf32> to vector<2x64xf32>
    %85 = vector.shape_cast %82 : vector<2x64xf32> to vector<2x1x1x64xf32>
    tpu.vector_store %arg8[%c0_75, %c4_76, %c4_77, %c0_78], %85 {strides = array<i32>} : memref<2x12x12x64xf32, #tpu.memory_space<vmem>>, vector<2x1x1x64xf32>,
    %86 = vector.extract_strided_slice %7 {offsets = [0, 1216], sizes = [2, 64], strides = [1, 1]} : vector<2x4096xf32> to vector<2x64xf32>
    %c0_79 = arith.constant 0 : index
    %c4_80 = arith.constant 4 : index
    %c5_81 = arith.constant 5 : index
    %c0_82 = arith.constant 0 : index
    %87 = vector.load %arg8[%c0_79, %c4_80, %c5_81, %c0_82] : memref<2x12x12x64xf32, #tpu.memory_space<vmem>>, vector<2x1x1x64xf32>
    %88 = vector.shape_cast %87 : vector<2x1x1x64xf32> to vector<2x64xf32>
    %89 = vector.shape_cast %86 : vector<2x64xf32> to vector<2x1x1x64xf32>
    tpu.vector_store %arg8[%c0_79, %c4_80, %c5_81, %c0_82], %89 {strides = array<i32>} : memref<2x12x12x64xf32, #tpu.memory_space<vmem>>, vector<2x1x1x64xf32>,
    %90 = vector.extract_strided_slice %7 {offsets = [0, 1280], sizes = [2, 64], strides = [1, 1]} : vector<2x4096xf32> to vector<2x64xf32>
    %c0_83 = arith.constant 0 : index
    %c4_84 = arith.constant 4 : index
    %c6_85 = arith.constant 6 : index
    %c0_86 = arith.constant 0 : index
    %91 = vector.load %arg8[%c0_83, %c4_84, %c6_85, %c0_86] : memref<2x12x12x64xf32, #tpu.memory_space<vmem>>, vector<2x1x1x64xf32>
    %92 = vector.shape_cast %91 : vector<2x1x1x64xf32> to vector<2x64xf32>
    %93 = vector.shape_cast %90 : vector<2x64xf32> to vector<2x1x1x64xf32>
    tpu.vector_store %arg8[%c0_83, %c4_84, %c6_85, %c0_86], %93 {strides = array<i32>} : memref<2x12x12x64xf32, #tpu.memory_space<vmem>>, vector<2x1x1x64xf32>,
    %94 = vector.extract_strided_slice %7 {offsets = [0, 1344], sizes = [2, 64], strides = [1, 1]} : vector<2x4096xf32> to vector<2x64xf32>
    %c0_87 = arith.constant 0 : index
    %c4_88 = arith.constant 4 : index
    %c7_89 = arith.constant 7 : index
    %c0_90 = arith.constant 0 : index
    %95 = vector.load %arg8[%c0_87, %c4_88, %c7_89, %c0_90] : memref<2x12x12x64xf32, #tpu.memory_space<vmem>>, vector<2x1x1x64xf32>
    %96 = vector.shape_cast %95 : vector<2x1x1x64xf32> to vector<2x64xf32>
    %97 = vector.shape_cast %94 : vector<2x64xf32> to vector<2x1x1x64xf32>
    tpu.vector_store %arg8[%c0_87, %c4_88, %c7_89, %c0_90], %97 {strides = array<i32>} : memref<2x12x12x64xf32, #tpu.memory_space<vmem>>, vector<2x1x1x64xf32>,
    %98 = vector.extract_strided_slice %7 {offsets = [0, 1408], sizes = [2, 64], strides = [1, 1]} : vector<2x4096xf32> to vector<2x64xf32>
    %c0_91 = arith.constant 0 : index
    %c4_92 = arith.constant 4 : index
    %c8_93 = arith.constant 8 : index
    %c0_94 = arith.constant 0 : index
    %99 = vector.load %arg8[%c0_91, %c4_92, %c8_93, %c0_94] : memref<2x12x12x64xf32, #tpu.memory_space<vmem>>, vector<2x1x1x64xf32>
    %100 = vector.shape_cast %99 : vector<2x1x1x64xf32> to vector<2x64xf32>
    %101 = vector.shape_cast %98 : vector<2x64xf32> to vector<2x1x1x64xf32>
    tpu.vector_store %arg8[%c0_91, %c4_92, %c8_93, %c0_94], %101 {strides = array<i32>} : memref<2x12x12x64xf32, #tpu.memory_space<vmem>>, vector<2x1x1x64xf32>,
    %102 = vector.extract_strided_slice %7 {offsets = [0, 1472], sizes = [2, 64], strides = [1, 1]} : vector<2x4096xf32> to vector<2x64xf32>
    %c0_95 = arith.constant 0 : index
    %c4_96 = arith.constant 4 : index
    %c9_97 = arith.constant 9 : index
    %c0_98 = arith.constant 0 : index
    %103 = vector.load %arg8[%c0_95, %c4_96, %c9_97, %c0_98] : memref<2x12x12x64xf32, #tpu.memory_space<vmem>>, vector<2x1x1x64xf32>
    %104 = vector.shape_cast %103 : vector<2x1x1x64xf32> to vector<2x64xf32>
    %105 = vector.shape_cast %102 : vector<2x64xf32> to vector<2x1x1x64xf32>
    tpu.vector_store %arg8[%c0_95, %c4_96, %c9_97, %c0_98], %105 {strides = array<i32>} : memref<2x12x12x64xf32, #tpu.memory_space<vmem>>, vector<2x1x1x64xf32>,
    %106 = vector.extract_strided_slice %7 {offsets = [0, 1536], sizes = [2, 64], strides = [1, 1]} : vector<2x4096xf32> to vector<2x64xf32>
    %c0_99 = arith.constant 0 : index
    %c5_100 = arith.constant 5 : index
    %c2_101 = arith.constant 2 : index
    %c0_102 = arith.constant 0 : index
    %107 = vector.load %arg8[%c0_99, %c5_100, %c2_101, %c0_102] : memref<2x12x12x64xf32, #tpu.memory_space<vmem>>, vector<2x1x1x64xf32>
    %108 = vector.shape_cast %107 : vector<2x1x1x64xf32> to vector<2x64xf32>
    %109 = vector.shape_cast %106 : vector<2x64xf32> to vector<2x1x1x64xf32>
    tpu.vector_store %arg8[%c0_99, %c5_100, %c2_101, %c0_102], %109 {strides = array<i32>} : memref<2x12x12x64xf32, #tpu.memory_space<vmem>>, vector<2x1x1x64xf32>,
    %110 = vector.extract_strided_slice %7 {offsets = [0, 1600], sizes = [2, 64], strides = [1, 1]} : vector<2x4096xf32> to vector<2x64xf32>
    %c0_103 = arith.constant 0 : index
    %c5_104 = arith.constant 5 : index
    %c3_105 = arith.constant 3 : index
    %c0_106 = arith.constant 0 : index
    %111 = vector.load %arg8[%c0_103, %c5_104, %c3_105, %c0_106] : memref<2x12x12x64xf32, #tpu.memory_space<vmem>>, vector<2x1x1x64xf32>
    %112 = vector.shape_cast %111 : vector<2x1x1x64xf32> to vector<2x64xf32>
    %113 = vector.shape_cast %110 : vector<2x64xf32> to vector<2x1x1x64xf32>
    tpu.vector_store %arg8[%c0_103, %c5_104, %c3_105, %c0_106], %113 {strides = array<i32>} : memref<2x12x12x64xf32, #tpu.memory_space<vmem>>, vector<2x1x1x64xf32>,
    %114 = vector.extract_strided_slice %7 {offsets = [0, 1664], sizes = [2, 64], strides = [1, 1]} : vector<2x4096xf32> to vector<2x64xf32>
    %c0_107 = arith.constant 0 : index
    %c5_108 = arith.constant 5 : index
    %c4_109 = arith.constant 4 : index
    %c0_110 = arith.constant 0 : index
    %115 = vector.load %arg8[%c0_107, %c5_108, %c4_109, %c0_110] : memref<2x12x12x64xf32, #tpu.memory_space<vmem>>, vector<2x1x1x64xf32>
    %116 = vector.shape_cast %115 : vector<2x1x1x64xf32> to vector<2x64xf32>
    %117 = vector.shape_cast %114 : vector<2x64xf32> to vector<2x1x1x64xf32>
    tpu.vector_store %arg8[%c0_107, %c5_108, %c4_109, %c0_110], %117 {strides = array<i32>} : memref<2x12x12x64xf32, #tpu.memory_space<vmem>>, vector<2x1x1x64xf32>,
    %118 = vector.extract_strided_slice %7 {offsets = [0, 1728], sizes = [2, 64], strides = [1, 1]} : vector<2x4096xf32> to vector<2x64xf32>
    %c0_111 = arith.constant 0 : index
    %c5_112 = arith.constant 5 : index
    %c5_113 = arith.constant 5 : index
    %c0_114 = arith.constant 0 : index
    %119 = vector.load %arg8[%c0_111, %c5_112, %c5_113, %c0_114] : memref<2x12x12x64xf32, #tpu.memory_space<vmem>>, vector<2x1x1x64xf32>
    %120 = vector.shape_cast %119 : vector<2x1x1x64xf32> to vector<2x64xf32>
    %121 = vector.shape_cast %118 : vector<2x64xf32> to vector<2x1x1x64xf32>
    tpu.vector_store %arg8[%c0_111, %c5_112, %c5_113, %c0_114], %121 {strides = array<i32>} : memref<2x12x12x64xf32, #tpu.memory_space<vmem>>, vector<2x1x1x64xf32>,
    %122 = vector.extract_strided_slice %7 {offsets = [0, 1792], sizes = [2, 64], strides = [1, 1]} : vector<2x4096xf32> to vector<2x64xf32>
    %c0_115 = arith.constant 0 : index
    %c5_116 = arith.constant 5 : index
    %c6_117 = arith.constant 6 : index
    %c0_118 = arith.constant 0 : index
    %123 = vector.load %arg8[%c0_115, %c5_116, %c6_117, %c0_118] : memref<2x12x12x64xf32, #tpu.memory_space<vmem>>, vector<2x1x1x64xf32>
    %124 = vector.shape_cast %123 : vector<2x1x1x64xf32> to vector<2x64xf32>
    %125 = vector.shape_cast %122 : vector<2x64xf32> to vector<2x1x1x64xf32>
    tpu.vector_store %arg8[%c0_115, %c5_116, %c6_117, %c0_118], %125 {strides = array<i32>} : memref<2x12x12x64xf32, #tpu.memory_space<vmem>>, vector<2x1x1x64xf32>,
    %126 = vector.extract_strided_slice %7 {offsets = [0, 1856], sizes = [2, 64], strides = [1, 1]} : vector<2x4096xf32> to vector<2x64xf32>
    %c0_119 = arith.constant 0 : index
    %c5_120 = arith.constant 5 : index
    %c7_121 = arith.constant 7 : index
    %c0_122 = arith.constant 0 : index
    %127 = vector.load %arg8[%c0_119, %c5_120, %c7_121, %c0_122] : memref<2x12x12x64xf32, #tpu.memory_space<vmem>>, vector<2x1x1x64xf32>
    %128 = vector.shape_cast %127 : vector<2x1x1x64xf32> to vector<2x64xf32>
    %129 = vector.shape_cast %126 : vector<2x64xf32> to vector<2x1x1x64xf32>
    tpu.vector_store %arg8[%c0_119, %c5_120, %c7_121, %c0_122], %129 {strides = array<i32>} : memref<2x12x12x64xf32, #tpu.memory_space<vmem>>, vector<2x1x1x64xf32>,
    %130 = vector.extract_strided_slice %7 {offsets = [0, 1920], sizes = [2, 64], strides = [1, 1]} : vector<2x4096xf32> to vector<2x64xf32>
    %c0_123 = arith.constant 0 : index
    %c5_124 = arith.constant 5 : index
    %c8_125 = arith.constant 8 : index
    %c0_126 = arith.constant 0 : index
    %131 = vector.load %arg8[%c0_123, %c5_124, %c8_125, %c0_126] : memref<2x12x12x64xf32, #tpu.memory_space<vmem>>, vector<2x1x1x64xf32>
    %132 = vector.shape_cast %131 : vector<2x1x1x64xf32> to vector<2x64xf32>
    %133 = vector.shape_cast %130 : vector<2x64xf32> to vector<2x1x1x64xf32>
    tpu.vector_store %arg8[%c0_123, %c5_124, %c8_125, %c0_126], %133 {strides = array<i32>} : memref<2x12x12x64xf32, #tpu.memory_space<vmem>>, vector<2x1x1x64xf32>,
    %134 = vector.extract_strided_slice %7 {offsets = [0, 1984], sizes = [2, 64], strides = [1, 1]} : vector<2x4096xf32> to vector<2x64xf32>
    %c0_127 = arith.constant 0 : index
    %c5_128 = arith.constant 5 : index
    %c9_129 = arith.constant 9 : index
    %c0_130 = arith.constant 0 : index
    %135 = vector.load %arg8[%c0_127, %c5_128, %c9_129, %c0_130] : memref<2x12x12x64xf32, #tpu.memory_space<vmem>>, vector<2x1x1x64xf32>
    %136 = vector.shape_cast %135 : vector<2x1x1x64xf32> to vector<2x64xf32>
    %137 = vector.shape_cast %134 : vector<2x64xf32> to vector<2x1x1x64xf32>
    tpu.vector_store %arg8[%c0_127, %c5_128, %c9_129, %c0_130], %137 {strides = array<i32>} : memref<2x12x12x64xf32, #tpu.memory_space<vmem>>, vector<2x1x1x64xf32>,
    %138 = vector.extract_strided_slice %7 {offsets = [0, 2048], sizes = [2, 64], strides = [1, 1]} : vector<2x4096xf32> to vector<2x64xf32>
    %c0_131 = arith.constant 0 : index
    %c6_132 = arith.constant 6 : index
    %c2_133 = arith.constant 2 : index
    %c0_134 = arith.constant 0 : index
    %139 = vector.load %arg8[%c0_131, %c6_132, %c2_133, %c0_134] : memref<2x12x12x64xf32, #tpu.memory_space<vmem>>, vector<2x1x1x64xf32>
    %140 = vector.shape_cast %139 : vector<2x1x1x64xf32> to vector<2x64xf32>
    %141 = vector.shape_cast %138 : vector<2x64xf32> to vector<2x1x1x64xf32>
    tpu.vector_store %arg8[%c0_131, %c6_132, %c2_133, %c0_134], %141 {strides = array<i32>} : memref<2x12x12x64xf32, #tpu.memory_space<vmem>>, vector<2x1x1x64xf32>,
    %142 = vector.extract_strided_slice %7 {offsets = [0, 2112], sizes = [2, 64], strides = [1, 1]} : vector<2x4096xf32> to vector<2x64xf32>
    %c0_135 = arith.constant 0 : index
    %c6_136 = arith.constant 6 : index
    %c3_137 = arith.constant 3 : index
    %c0_138 = arith.constant 0 : index
    %143 = vector.load %arg8[%c0_135, %c6_136, %c3_137, %c0_138] : memref<2x12x12x64xf32, #tpu.memory_space<vmem>>, vector<2x1x1x64xf32>
    %144 = vector.shape_cast %143 : vector<2x1x1x64xf32> to vector<2x64xf32>
    %145 = vector.shape_cast %142 : vector<2x64xf32> to vector<2x1x1x64xf32>
    tpu.vector_store %arg8[%c0_135, %c6_136, %c3_137, %c0_138], %145 {strides = array<i32>} : memref<2x12x12x64xf32, #tpu.memory_space<vmem>>, vector<2x1x1x64xf32>,
    %146 = vector.extract_strided_slice %7 {offsets = [0, 2176], sizes = [2, 64], strides = [1, 1]} : vector<2x4096xf32> to vector<2x64xf32>
    %c0_139 = arith.constant 0 : index
    %c6_140 = arith.constant 6 : index
    %c4_141 = arith.constant 4 : index
    %c0_142 = arith.constant 0 : index
    %147 = vector.load %arg8[%c0_139, %c6_140, %c4_141, %c0_142] : memref<2x12x12x64xf32, #tpu.memory_space<vmem>>, vector<2x1x1x64xf32>
    %148 = vector.shape_cast %147 : vector<2x1x1x64xf32> to vector<2x64xf32>
    %149 = vector.shape_cast %146 : vector<2x64xf32> to vector<2x1x1x64xf32>
    tpu.vector_store %arg8[%c0_139, %c6_140, %c4_141, %c0_142], %149 {strides = array<i32>} : memref<2x12x12x64xf32, #tpu.memory_space<vmem>>, vector<2x1x1x64xf32>,
    %150 = vector.extract_strided_slice %7 {offsets = [0, 2240], sizes = [2, 64], strides = [1, 1]} : vector<2x4096xf32> to vector<2x64xf32>
    %c0_143 = arith.constant 0 : index
    %c6_144 = arith.constant 6 : index
    %c5_145 = arith.constant 5 : index
    %c0_146 = arith.constant 0 : index
    %151 = vector.load %arg8[%c0_143, %c6_144, %c5_145, %c0_146] : memref<2x12x12x64xf32, #tpu.memory_space<vmem>>, vector<2x1x1x64xf32>
    %152 = vector.shape_cast %151 : vector<2x1x1x64xf32> to vector<2x64xf32>
    %153 = vector.shape_cast %150 : vector<2x64xf32> to vector<2x1x1x64xf32>
    tpu.vector_store %arg8[%c0_143, %c6_144, %c5_145, %c0_146], %153 {strides = array<i32>} : memref<2x12x12x64xf32, #tpu.memory_space<vmem>>, vector<2x1x1x64xf32>,
    %154 = vector.extract_strided_slice %7 {offsets = [0, 2304], sizes = [2, 64], strides = [1, 1]} : vector<2x4096xf32> to vector<2x64xf32>
    %c0_147 = arith.constant 0 : index
    %c6_148 = arith.constant 6 : index
    %c6_149 = arith.constant 6 : index
    %c0_150 = arith.constant 0 : index
    %155 = vector.load %arg8[%c0_147, %c6_148, %c6_149, %c0_150] : memref<2x12x12x64xf32, #tpu.memory_space<vmem>>, vector<2x1x1x64xf32>
    %156 = vector.shape_cast %155 : vector<2x1x1x64xf32> to vector<2x64xf32>
    %157 = vector.shape_cast %154 : vector<2x64xf32> to vector<2x1x1x64xf32>
    tpu.vector_store %arg8[%c0_147, %c6_148, %c6_149, %c0_150], %157 {strides = array<i32>} : memref<2x12x12x64xf32, #tpu.memory_space<vmem>>, vector<2x1x1x64xf32>,
    %158 = vector.extract_strided_slice %7 {offsets = [0, 2368], sizes = [2, 64], strides = [1, 1]} : vector<2x4096xf32> to vector<2x64xf32>
    %c0_151 = arith.constant 0 : index
    %c6_152 = arith.constant 6 : index
    %c7_153 = arith.constant 7 : index
    %c0_154 = arith.constant 0 : index
    %159 = vector.load %arg8[%c0_151, %c6_152, %c7_153, %c0_154] : memref<2x12x12x64xf32, #tpu.memory_space<vmem>>, vector<2x1x1x64xf32>
    %160 = vector.shape_cast %159 : vector<2x1x1x64xf32> to vector<2x64xf32>
    %161 = vector.shape_cast %158 : vector<2x64xf32> to vector<2x1x1x64xf32>
    tpu.vector_store %arg8[%c0_151, %c6_152, %c7_153, %c0_154], %161 {strides = array<i32>} : memref<2x12x12x64xf32, #tpu.memory_space<vmem>>, vector<2x1x1x64xf32>,
    %162 = vector.extract_strided_slice %7 {offsets = [0, 2432], sizes = [2, 64], strides = [1, 1]} : vector<2x4096xf32> to vector<2x64xf32>
    %c0_155 = arith.constant 0 : index
    %c6_156 = arith.constant 6 : index
    %c8_157 = arith.constant 8 : index
    %c0_158 = arith.constant 0 : index
    %163 = vector.load %arg8[%c0_155, %c6_156, %c8_157, %c0_158] : memref<2x12x12x64xf32, #tpu.memory_space<vmem>>, vector<2x1x1x64xf32>
    %164 = vector.shape_cast %163 : vector<2x1x1x64xf32> to vector<2x64xf32>
    %165 = vector.shape_cast %162 : vector<2x64xf32> to vector<2x1x1x64xf32>
    tpu.vector_store %arg8[%c0_155, %c6_156, %c8_157, %c0_158], %165 {strides = array<i32>} : memref<2x12x12x64xf32, #tpu.memory_space<vmem>>, vector<2x1x1x64xf32>,
    %166 = vector.extract_strided_slice %7 {offsets = [0, 2496], sizes = [2, 64], strides = [1, 1]} : vector<2x4096xf32> to vector<2x64xf32>
    %c0_159 = arith.constant 0 : index
    %c6_160 = arith.constant 6 : index
    %c9_161 = arith.constant 9 : index
    %c0_162 = arith.constant 0 : index
    %167 = vector.load %arg8[%c0_159, %c6_160, %c9_161, %c0_162] : memref<2x12x12x64xf32, #tpu.memory_space<vmem>>, vector<2x1x1x64xf32>
    %168 = vector.shape_cast %167 : vector<2x1x1x64xf32> to vector<2x64xf32>
    %169 = vector.shape_cast %166 : vector<2x64xf32> to vector<2x1x1x64xf32>
    tpu.vector_store %arg8[%c0_159, %c6_160, %c9_161, %c0_162], %169 {strides = array<i32>} : memref<2x12x12x64xf32, #tpu.memory_space<vmem>>, vector<2x1x1x64xf32>,
    %170 = vector.extract_strided_slice %7 {offsets = [0, 2560], sizes = [2, 64], strides = [1, 1]} : vector<2x4096xf32> to vector<2x64xf32>
    %c0_163 = arith.constant 0 : index
    %c7_164 = arith.constant 7 : index
    %c2_165 = arith.constant 2 : index
    %c0_166 = arith.constant 0 : index
    %171 = vector.load %arg8[%c0_163, %c7_164, %c2_165, %c0_166] : memref<2x12x12x64xf32, #tpu.memory_space<vmem>>, vector<2x1x1x64xf32>
    %172 = vector.shape_cast %171 : vector<2x1x1x64xf32> to vector<2x64xf32>
    %173 = vector.shape_cast %170 : vector<2x64xf32> to vector<2x1x1x64xf32>
    tpu.vector_store %arg8[%c0_163, %c7_164, %c2_165, %c0_166], %173 {strides = array<i32>} : memref<2x12x12x64xf32, #tpu.memory_space<vmem>>, vector<2x1x1x64xf32>,
    %174 = vector.extract_strided_slice %7 {offsets = [0, 2624], sizes = [2, 64], strides = [1, 1]} : vector<2x4096xf32> to vector<2x64xf32>
    %c0_167 = arith.constant 0 : index
    %c7_168 = arith.constant 7 : index
    %c3_169 = arith.constant 3 : index
    %c0_170 = arith.constant 0 : index
    %175 = vector.load %arg8[%c0_167, %c7_168, %c3_169, %c0_170] : memref<2x12x12x64xf32, #tpu.memory_space<vmem>>, vector<2x1x1x64xf32>
    %176 = vector.shape_cast %175 : vector<2x1x1x64xf32> to vector<2x64xf32>
    %177 = vector.shape_cast %174 : vector<2x64xf32> to vector<2x1x1x64xf32>
    tpu.vector_store %arg8[%c0_167, %c7_168, %c3_169, %c0_170], %177 {strides = array<i32>} : memref<2x12x12x64xf32, #tpu.memory_space<vmem>>, vector<2x1x1x64xf32>,
    %178 = vector.extract_strided_slice %7 {offsets = [0, 2688], sizes = [2, 64], strides = [1, 1]} : vector<2x4096xf32> to vector<2x64xf32>
    %c0_171 = arith.constant 0 : index
    %c7_172 = arith.constant 7 : index
    %c4_173 = arith.constant 4 : index
    %c0_174 = arith.constant 0 : index
    %179 = vector.load %arg8[%c0_171, %c7_172, %c4_173, %c0_174] : memref<2x12x12x64xf32, #tpu.memory_space<vmem>>, vector<2x1x1x64xf32>
    %180 = vector.shape_cast %179 : vector<2x1x1x64xf32> to vector<2x64xf32>
    %181 = vector.shape_cast %178 : vector<2x64xf32> to vector<2x1x1x64xf32>
    tpu.vector_store %arg8[%c0_171, %c7_172, %c4_173, %c0_174], %181 {strides = array<i32>} : memref<2x12x12x64xf32, #tpu.memory_space<vmem>>, vector<2x1x1x64xf32>,
    %182 = vector.extract_strided_slice %7 {offsets = [0, 2752], sizes = [2, 64], strides = [1, 1]} : vector<2x4096xf32> to vector<2x64xf32>
    %c0_175 = arith.constant 0 : index
    %c7_176 = arith.constant 7 : index
    %c5_177 = arith.constant 5 : index
    %c0_178 = arith.constant 0 : index
    %183 = vector.load %arg8[%c0_175, %c7_176, %c5_177, %c0_178] : memref<2x12x12x64xf32, #tpu.memory_space<vmem>>, vector<2x1x1x64xf32>
    %184 = vector.shape_cast %183 : vector<2x1x1x64xf32> to vector<2x64xf32>
    %185 = vector.shape_cast %182 : vector<2x64xf32> to vector<2x1x1x64xf32>
    tpu.vector_store %arg8[%c0_175, %c7_176, %c5_177, %c0_178], %185 {strides = array<i32>} : memref<2x12x12x64xf32, #tpu.memory_space<vmem>>, vector<2x1x1x64xf32>,
    %186 = vector.extract_strided_slice %7 {offsets = [0, 2816], sizes = [2, 64], strides = [1, 1]} : vector<2x4096xf32> to vector<2x64xf32>
    %c0_179 = arith.constant 0 : index
    %c7_180 = arith.constant 7 : index
    %c6_181 = arith.constant 6 : index
    %c0_182 = arith.constant 0 : index
    %187 = vector.load %arg8[%c0_179, %c7_180, %c6_181, %c0_182] : memref<2x12x12x64xf32, #tpu.memory_space<vmem>>, vector<2x1x1x64xf32>
    %188 = vector.shape_cast %187 : vector<2x1x1x64xf32> to vector<2x64xf32>
    %189 = vector.shape_cast %186 : vector<2x64xf32> to vector<2x1x1x64xf32>
    tpu.vector_store %arg8[%c0_179, %c7_180, %c6_181, %c0_182], %189 {strides = array<i32>} : memref<2x12x12x64xf32, #tpu.memory_space<vmem>>, vector<2x1x1x64xf32>,
    %190 = vector.extract_strided_slice %7 {offsets = [0, 2880], sizes = [2, 64], strides = [1, 1]} : vector<2x4096xf32> to vector<2x64xf32>
    %c0_183 = arith.constant 0 : index
    %c7_184 = arith.constant 7 : index
    %c7_185 = arith.constant 7 : index
    %c0_186 = arith.constant 0 : index
    %191 = vector.load %arg8[%c0_183, %c7_184, %c7_185, %c0_186] : memref<2x12x12x64xf32, #tpu.memory_space<vmem>>, vector<2x1x1x64xf32>
    %192 = vector.shape_cast %191 : vector<2x1x1x64xf32> to vector<2x64xf32>
    %193 = vector.shape_cast %190 : vector<2x64xf32> to vector<2x1x1x64xf32>
    tpu.vector_store %arg8[%c0_183, %c7_184, %c7_185, %c0_186], %193 {strides = array<i32>} : memref<2x12x12x64xf32, #tpu.memory_space<vmem>>, vector<2x1x1x64xf32>,
    %194 = vector.extract_strided_slice %7 {offsets = [0, 2944], sizes = [2, 64], strides = [1, 1]} : vector<2x4096xf32> to vector<2x64xf32>
    %c0_187 = arith.constant 0 : index
    %c7_188 = arith.constant 7 : index
    %c8_189 = arith.constant 8 : index
    %c0_190 = arith.constant 0 : index
    %195 = vector.load %arg8[%c0_187, %c7_188, %c8_189, %c0_190] : memref<2x12x12x64xf32, #tpu.memory_space<vmem>>, vector<2x1x1x64xf32>
    %196 = vector.shape_cast %195 : vector<2x1x1x64xf32> to vector<2x64xf32>
    %197 = vector.shape_cast %194 : vector<2x64xf32> to vector<2x1x1x64xf32>
    tpu.vector_store %arg8[%c0_187, %c7_188, %c8_189, %c0_190], %197 {strides = array<i32>} : memref<2x12x12x64xf32, #tpu.memory_space<vmem>>, vector<2x1x1x64xf32>,
    %198 = vector.extract_strided_slice %7 {offsets = [0, 3008], sizes = [2, 64], strides = [1, 1]} : vector<2x4096xf32> to vector<2x64xf32>
    %c0_191 = arith.constant 0 : index
    %c7_192 = arith.constant 7 : index
    %c9_193 = arith.constant 9 : index
    %c0_194 = arith.constant 0 : index
    %199 = vector.load %arg8[%c0_191, %c7_192, %c9_193, %c0_194] : memref<2x12x12x64xf32, #tpu.memory_space<vmem>>, vector<2x1x1x64xf32>
    %200 = vector.shape_cast %199 : vector<2x1x1x64xf32> to vector<2x64xf32>
    %201 = vector.shape_cast %198 : vector<2x64xf32> to vector<2x1x1x64xf32>
    tpu.vector_store %arg8[%c0_191, %c7_192, %c9_193, %c0_194], %201 {strides = array<i32>} : memref<2x12x12x64xf32, #tpu.memory_space<vmem>>, vector<2x1x1x64xf32>,
    %202 = vector.extract_strided_slice %7 {offsets = [0, 3072], sizes = [2, 64], strides = [1, 1]} : vector<2x4096xf32> to vector<2x64xf32>
    %c0_195 = arith.constant 0 : index
    %c8_196 = arith.constant 8 : index
    %c2_197 = arith.constant 2 : index
    %c0_198 = arith.constant 0 : index
    %203 = vector.load %arg8[%c0_195, %c8_196, %c2_197, %c0_198] : memref<2x12x12x64xf32, #tpu.memory_space<vmem>>, vector<2x1x1x64xf32>
    %204 = vector.shape_cast %203 : vector<2x1x1x64xf32> to vector<2x64xf32>
    %205 = vector.shape_cast %202 : vector<2x64xf32> to vector<2x1x1x64xf32>
    tpu.vector_store %arg8[%c0_195, %c8_196, %c2_197, %c0_198], %205 {strides = array<i32>} : memref<2x12x12x64xf32, #tpu.memory_space<vmem>>, vector<2x1x1x64xf32>,
    %206 = vector.extract_strided_slice %7 {offsets = [0, 3136], sizes = [2, 64], strides = [1, 1]} : vector<2x4096xf32> to vector<2x64xf32>
    %c0_199 = arith.constant 0 : index
    %c8_200 = arith.constant 8 : index
    %c3_201 = arith.constant 3 : index
    %c0_202 = arith.constant 0 : index
    %207 = vector.load %arg8[%c0_199, %c8_200, %c3_201, %c0_202] : memref<2x12x12x64xf32, #tpu.memory_space<vmem>>, vector<2x1x1x64xf32>
    %208 = vector.shape_cast %207 : vector<2x1x1x64xf32> to vector<2x64xf32>
    %209 = vector.shape_cast %206 : vector<2x64xf32> to vector<2x1x1x64xf32>
    tpu.vector_store %arg8[%c0_199, %c8_200, %c3_201, %c0_202], %209 {strides = array<i32>} : memref<2x12x12x64xf32, #tpu.memory_space<vmem>>, vector<2x1x1x64xf32>,
    %210 = vector.extract_strided_slice %7 {offsets = [0, 3200], sizes = [2, 64], strides = [1, 1]} : vector<2x4096xf32> to vector<2x64xf32>
    %c0_203 = arith.constant 0 : index
    %c8_204 = arith.constant 8 : index
    %c4_205 = arith.constant 4 : index
    %c0_206 = arith.constant 0 : index
    %211 = vector.load %arg8[%c0_203, %c8_204, %c4_205, %c0_206] : memref<2x12x12x64xf32, #tpu.memory_space<vmem>>, vector<2x1x1x64xf32>
    %212 = vector.shape_cast %211 : vector<2x1x1x64xf32> to vector<2x64xf32>
    %213 = vector.shape_cast %210 : vector<2x64xf32> to vector<2x1x1x64xf32>
    tpu.vector_store %arg8[%c0_203, %c8_204, %c4_205, %c0_206], %213 {strides = array<i32>} : memref<2x12x12x64xf32, #tpu.memory_space<vmem>>, vector<2x1x1x64xf32>,
    %214 = vector.extract_strided_slice %7 {offsets = [0, 3264], sizes = [2, 64], strides = [1, 1]} : vector<2x4096xf32> to vector<2x64xf32>
    %c0_207 = arith.constant 0 : index
    %c8_208 = arith.constant 8 : index
    %c5_209 = arith.constant 5 : index
    %c0_210 = arith.constant 0 : index
    %215 = vector.load %arg8[%c0_207, %c8_208, %c5_209, %c0_210] : memref<2x12x12x64xf32, #tpu.memory_space<vmem>>, vector<2x1x1x64xf32>
    %216 = vector.shape_cast %215 : vector<2x1x1x64xf32> to vector<2x64xf32>
    %217 = vector.shape_cast %214 : vector<2x64xf32> to vector<2x1x1x64xf32>
    tpu.vector_store %arg8[%c0_207, %c8_208, %c5_209, %c0_210], %217 {strides = array<i32>} : memref<2x12x12x64xf32, #tpu.memory_space<vmem>>, vector<2x1x1x64xf32>,
    %218 = vector.extract_strided_slice %7 {offsets = [0, 3328], sizes = [2, 64], strides = [1, 1]} : vector<2x4096xf32> to vector<2x64xf32>
    %c0_211 = arith.constant 0 : index
    %c8_212 = arith.constant 8 : index
    %c6_213 = arith.constant 6 : index
    %c0_214 = arith.constant 0 : index
    %219 = vector.load %arg8[%c0_211, %c8_212, %c6_213, %c0_214] : memref<2x12x12x64xf32, #tpu.memory_space<vmem>>, vector<2x1x1x64xf32>
    %220 = vector.shape_cast %219 : vector<2x1x1x64xf32> to vector<2x64xf32>
    %221 = vector.shape_cast %218 : vector<2x64xf32> to vector<2x1x1x64xf32>
    tpu.vector_store %arg8[%c0_211, %c8_212, %c6_213, %c0_214], %221 {strides = array<i32>} : memref<2x12x12x64xf32, #tpu.memory_space<vmem>>, vector<2x1x1x64xf32>,
    %222 = vector.extract_strided_slice %7 {offsets = [0, 3392], sizes = [2, 64], strides = [1, 1]} : vector<2x4096xf32> to vector<2x64xf32>
    %c0_215 = arith.constant 0 : index
    %c8_216 = arith.constant 8 : index
    %c7_217 = arith.constant 7 : index
    %c0_218 = arith.constant 0 : index
    %223 = vector.load %arg8[%c0_215, %c8_216, %c7_217, %c0_218] : memref<2x12x12x64xf32, #tpu.memory_space<vmem>>, vector<2x1x1x64xf32>
    %224 = vector.shape_cast %223 : vector<2x1x1x64xf32> to vector<2x64xf32>
    %225 = vector.shape_cast %222 : vector<2x64xf32> to vector<2x1x1x64xf32>
    tpu.vector_store %arg8[%c0_215, %c8_216, %c7_217, %c0_218], %225 {strides = array<i32>} : memref<2x12x12x64xf32, #tpu.memory_space<vmem>>, vector<2x1x1x64xf32>,
    %226 = vector.extract_strided_slice %7 {offsets = [0, 3456], sizes = [2, 64], strides = [1, 1]} : vector<2x4096xf32> to vector<2x64xf32>
    %c0_219 = arith.constant 0 : index
    %c8_220 = arith.constant 8 : index
    %c8_221 = arith.constant 8 : index
    %c0_222 = arith.constant 0 : index
    %227 = vector.load %arg8[%c0_219, %c8_220, %c8_221, %c0_222] : memref<2x12x12x64xf32, #tpu.memory_space<vmem>>, vector<2x1x1x64xf32>
    %228 = vector.shape_cast %227 : vector<2x1x1x64xf32> to vector<2x64xf32>
    %229 = vector.shape_cast %226 : vector<2x64xf32> to vector<2x1x1x64xf32>
    tpu.vector_store %arg8[%c0_219, %c8_220, %c8_221, %c0_222], %229 {strides = array<i32>} : memref<2x12x12x64xf32, #tpu.memory_space<vmem>>, vector<2x1x1x64xf32>,
    %230 = vector.extract_strided_slice %7 {offsets = [0, 3520], sizes = [2, 64], strides = [1, 1]} : vector<2x4096xf32> to vector<2x64xf32>
    %c0_223 = arith.constant 0 : index
    %c8_224 = arith.constant 8 : index
    %c9_225 = arith.constant 9 : index
    %c0_226 = arith.constant 0 : index
    %231 = vector.load %arg8[%c0_223, %c8_224, %c9_225, %c0_226] : memref<2x12x12x64xf32, #tpu.memory_space<vmem>>, vector<2x1x1x64xf32>
    %232 = vector.shape_cast %231 : vector<2x1x1x64xf32> to vector<2x64xf32>
    %233 = vector.shape_cast %230 : vector<2x64xf32> to vector<2x1x1x64xf32>
    tpu.vector_store %arg8[%c0_223, %c8_224, %c9_225, %c0_226], %233 {strides = array<i32>} : memref<2x12x12x64xf32, #tpu.memory_space<vmem>>, vector<2x1x1x64xf32>,
    %234 = vector.extract_strided_slice %7 {offsets = [0, 3584], sizes = [2, 64], strides = [1, 1]} : vector<2x4096xf32> to vector<2x64xf32>
    %c0_227 = arith.constant 0 : index
    %c9_228 = arith.constant 9 : index
    %c2_229 = arith.constant 2 : index
    %c0_230 = arith.constant 0 : index
    %235 = vector.load %arg8[%c0_227, %c9_228, %c2_229, %c0_230] : memref<2x12x12x64xf32, #tpu.memory_space<vmem>>, vector<2x1x1x64xf32>
    %236 = vector.shape_cast %235 : vector<2x1x1x64xf32> to vector<2x64xf32>
    %237 = vector.shape_cast %234 : vector<2x64xf32> to vector<2x1x1x64xf32>
    tpu.vector_store %arg8[%c0_227, %c9_228, %c2_229, %c0_230], %237 {strides = array<i32>} : memref<2x12x12x64xf32, #tpu.memory_space<vmem>>, vector<2x1x1x64xf32>,
    %238 = vector.extract_strided_slice %7 {offsets = [0, 3648], sizes = [2, 64], strides = [1, 1]} : vector<2x4096xf32> to vector<2x64xf32>
    %c0_231 = arith.constant 0 : index
    %c9_232 = arith.constant 9 : index
    %c3_233 = arith.constant 3 : index
    %c0_234 = arith.constant 0 : index
    %239 = vector.load %arg8[%c0_231, %c9_232, %c3_233, %c0_234] : memref<2x12x12x64xf32, #tpu.memory_space<vmem>>, vector<2x1x1x64xf32>
    %240 = vector.shape_cast %239 : vector<2x1x1x64xf32> to vector<2x64xf32>
    %241 = vector.shape_cast %238 : vector<2x64xf32> to vector<2x1x1x64xf32>
    tpu.vector_store %arg8[%c0_231, %c9_232, %c3_233, %c0_234], %241 {strides = array<i32>} : memref<2x12x12x64xf32, #tpu.memory_space<vmem>>, vector<2x1x1x64xf32>,
    %242 = vector.extract_strided_slice %7 {offsets = [0, 3712], sizes = [2, 64], strides = [1, 1]} : vector<2x4096xf32> to vector<2x64xf32>
    %c0_235 = arith.constant 0 : index
    %c9_236 = arith.constant 9 : index
    %c4_237 = arith.constant 4 : index
    %c0_238 = arith.constant 0 : index
    %243 = vector.load %arg8[%c0_235, %c9_236, %c4_237, %c0_238] : memref<2x12x12x64xf32, #tpu.memory_space<vmem>>, vector<2x1x1x64xf32>
    %244 = vector.shape_cast %243 : vector<2x1x1x64xf32> to vector<2x64xf32>
    %245 = vector.shape_cast %242 : vector<2x64xf32> to vector<2x1x1x64xf32>
    tpu.vector_store %arg8[%c0_235, %c9_236, %c4_237, %c0_238], %245 {strides = array<i32>} : memref<2x12x12x64xf32, #tpu.memory_space<vmem>>, vector<2x1x1x64xf32>,
    %246 = vector.extract_strided_slice %7 {offsets = [0, 3776], sizes = [2, 64], strides = [1, 1]} : vector<2x4096xf32> to vector<2x64xf32>
    %c0_239 = arith.constant 0 : index
    %c9_240 = arith.constant 9 : index
    %c5_241 = arith.constant 5 : index
    %c0_242 = arith.constant 0 : index
    %247 = vector.load %arg8[%c0_239, %c9_240, %c5_241, %c0_242] : memref<2x12x12x64xf32, #tpu.memory_space<vmem>>, vector<2x1x1x64xf32>
    %248 = vector.shape_cast %247 : vector<2x1x1x64xf32> to vector<2x64xf32>
    %249 = vector.shape_cast %246 : vector<2x64xf32> to vector<2x1x1x64xf32>
    tpu.vector_store %arg8[%c0_239, %c9_240, %c5_241, %c0_242], %249 {strides = array<i32>} : memref<2x12x12x64xf32, #tpu.memory_space<vmem>>, vector<2x1x1x64xf32>,
    %250 = vector.extract_strided_slice %7 {offsets = [0, 3840], sizes = [2, 64], strides = [1, 1]} : vector<2x4096xf32> to vector<2x64xf32>
    %c0_243 = arith.constant 0 : index
    %c9_244 = arith.constant 9 : index
    %c6_245 = arith.constant 6 : index
    %c0_246 = arith.constant 0 : index
    %251 = vector.load %arg8[%c0_243, %c9_244, %c6_245, %c0_246] : memref<2x12x12x64xf32, #tpu.memory_space<vmem>>, vector<2x1x1x64xf32>
    %252 = vector.shape_cast %251 : vector<2x1x1x64xf32> to vector<2x64xf32>
    %253 = vector.shape_cast %250 : vector<2x64xf32> to vector<2x1x1x64xf32>
    tpu.vector_store %arg8[%c0_243, %c9_244, %c6_245, %c0_246], %253 {strides = array<i32>} : memref<2x12x12x64xf32, #tpu.memory_space<vmem>>, vector<2x1x1x64xf32>,
    %254 = vector.extract_strided_slice %7 {offsets = [0, 3904], sizes = [2, 64], strides = [1, 1]} : vector<2x4096xf32> to vector<2x64xf32>
    %c0_247 = arith.constant 0 : index
    %c9_248 = arith.constant 9 : index
    %c7_249 = arith.constant 7 : index
    %c0_250 = arith.constant 0 : index
    %255 = vector.load %arg8[%c0_247, %c9_248, %c7_249, %c0_250] : memref<2x12x12x64xf32, #tpu.memory_space<vmem>>, vector<2x1x1x64xf32>
    %256 = vector.shape_cast %255 : vector<2x1x1x64xf32> to vector<2x64xf32>
    %257 = vector.shape_cast %254 : vector<2x64xf32> to vector<2x1x1x64xf32>
    tpu.vector_store %arg8[%c0_247, %c9_248, %c7_249, %c0_250], %257 {strides = array<i32>} : memref<2x12x12x64xf32, #tpu.memory_space<vmem>>, vector<2x1x1x64xf32>,
    %258 = vector.extract_strided_slice %7 {offsets = [0, 3968], sizes = [2, 64], strides = [1, 1]} : vector<2x4096xf32> to vector<2x64xf32>
    %c0_251 = arith.constant 0 : index
    %c9_252 = arith.constant 9 : index
    %c8_253 = arith.constant 8 : index
    %c0_254 = arith.constant 0 : index
    %259 = vector.load %arg8[%c0_251, %c9_252, %c8_253, %c0_254] : memref<2x12x12x64xf32, #tpu.memory_space<vmem>>, vector<2x1x1x64xf32>
    %260 = vector.shape_cast %259 : vector<2x1x1x64xf32> to vector<2x64xf32>
    %261 = vector.shape_cast %258 : vector<2x64xf32> to vector<2x1x1x64xf32>
    tpu.vector_store %arg8[%c0_251, %c9_252, %c8_253, %c0_254], %261 {strides = array<i32>} : memref<2x12x12x64xf32, #tpu.memory_space<vmem>>, vector<2x1x1x64xf32>,
    %262 = vector.extract_strided_slice %7 {offsets = [0, 4032], sizes = [2, 64], strides = [1, 1]} : vector<2x4096xf32> to vector<2x64xf32>
    %c0_255 = arith.constant 0 : index
    %c9_256 = arith.constant 9 : index
    %c9_257 = arith.constant 9 : index
    %c0_258 = arith.constant 0 : index
    %263 = vector.load %arg8[%c0_255, %c9_256, %c9_257, %c0_258] : memref<2x12x12x64xf32, #tpu.memory_space<vmem>>, vector<2x1x1x64xf32>
    %264 = vector.shape_cast %263 : vector<2x1x1x64xf32> to vector<2x64xf32>
    %265 = vector.shape_cast %262 : vector<2x64xf32> to vector<2x1x1x64xf32>
    tpu.vector_store %arg8[%c0_255, %c9_256, %c9_257, %c0_258], %265 {strides = array<i32>} : memref<2x12x12x64xf32, #tpu.memory_space<vmem>>, vector<2x1x1x64xf32>,
    %c0_259 = arith.constant 0 : index
    %c0_260 = arith.constant 0 : index
    %c0_261 = arith.constant 0 : index
    %c0_262 = arith.constant 0 : index
    %266 = vector.load %arg8[%c0_259, %c0_260, %c0_261, %c0_262] : memref<2x12x12x64xf32, #tpu.memory_space<vmem>>, vector<2x12x12x64xf32>
    %267 = vector.shape_cast %266 : vector<2x12x12x64xf32> to vector<288x64xf32>
    %c0_263 = arith.constant 0 : index
    %c0_264 = arith.constant 0 : index
    %268 = vector.load %arg3[%c0_263, %c0_264] : memref<64x72xf32, #tpu.memory_space<vmem>>, vector<64x72xf32>
    %cst_265 = arith.constant dense<0.000000e+00> : vector<288x72xf32>
    %269 = tpu.matmul %267, %268, %cst_265 {dimension_numbers = #tpu.dot_dimension_numbers<[1], [0], [0], [1], [0, 0, 1, 1], [], []>} : vector<288x64xf32>, vector<64x72xf32>, vector<288x72xf32> -> vector<288x72xf32>
    %270 = vector.shape_cast %269 : vector<288x72xf32> to vector<2x12x12x72xf32>
    %271 = vector.extract_strided_slice %270 {offsets = [0, 0, 0, 0], sizes = [2, 10, 10, 8], strides = [1, 1, 1, 1]} : vector<2x12x12x72xf32> to vector<2x10x10x8xf32>
    %272 = vector.extract_strided_slice %270 {offsets = [0, 0, 1, 8], sizes = [2, 10, 10, 8], strides = [1, 1, 1, 1]} : vector<2x12x12x72xf32> to vector<2x10x10x8xf32>
    %273 = arith.addf %271, %272 : vector<2x10x10x8xf32>
    %274 = vector.extract_strided_slice %270 {offsets = [0, 0, 2, 16], sizes = [2, 10, 10, 8], strides = [1, 1, 1, 1]} : vector<2x12x12x72xf32> to vector<2x10x10x8xf32>
    %275 = arith.addf %273, %274 : vector<2x10x10x8xf32>
    %276 = vector.extract_strided_slice %270 {offsets = [0, 1, 0, 24], sizes = [2, 10, 10, 8], strides = [1, 1, 1, 1]} : vector<2x12x12x72xf32> to vector<2x10x10x8xf32>
    %277 = arith.addf %275, %276 : vector<2x10x10x8xf32>
    %278 = vector.extract_strided_slice %270 {offsets = [0, 1, 1, 32], sizes = [2, 10, 10, 8], strides = [1, 1, 1, 1]} : vector<2x12x12x72xf32> to vector<2x10x10x8xf32>
    %279 = arith.addf %277, %278 : vector<2x10x10x8xf32>
    %280 = vector.extract_strided_slice %270 {offsets = [0, 1, 2, 40], sizes = [2, 10, 10, 8], strides = [1, 1, 1, 1]} : vector<2x12x12x72xf32> to vector<2x10x10x8xf32>
    %281 = arith.addf %279, %280 : vector<2x10x10x8xf32>
    %282 = vector.extract_strided_slice %270 {offsets = [0, 2, 0, 48], sizes = [2, 10, 10, 8], strides = [1, 1, 1, 1]} : vector<2x12x12x72xf32> to vector<2x10x10x8xf32>
    %283 = arith.addf %281, %282 : vector<2x10x10x8xf32>
    %284 = vector.extract_strided_slice %270 {offsets = [0, 2, 1, 56], sizes = [2, 10, 10, 8], strides = [1, 1, 1, 1]} : vector<2x12x12x72xf32> to vector<2x10x10x8xf32>
    %285 = arith.addf %283, %284 : vector<2x10x10x8xf32>
    %286 = vector.extract_strided_slice %270 {offsets = [0, 2, 2, 64], sizes = [2, 10, 10, 8], strides = [1, 1, 1, 1]} : vector<2x12x12x72xf32> to vector<2x10x10x8xf32>
    %287 = arith.addf %285, %286 : vector<2x10x10x8xf32>
    %c0_266 = arith.constant 0 : index
    %c0_267 = arith.constant 0 : index
    %288 = vector.load %arg4[%c0_266, %c0_267] : memref<1x8xf32, #tpu.memory_space<vmem>>, vector<1x8xf32>
    %289 = vector.shape_cast %288 : vector<1x8xf32> to vector<1x1x1x8xf32>
    %290 = vector.broadcast %289 : vector<1x1x1x8xf32> to vector<2x10x10x8xf32>
    %291 = arith.addf %287, %290 : vector<2x10x10x8xf32>
    %cst_268 = arith.constant 0.000000e+00 : f32
    %292 = vector.broadcast %cst_268 : f32 to vector<2x10x10x8xf32>
    %293 = arith.maximumf %291, %292 : vector<2x10x10x8xf32>
    %cst_269 = arith.constant 0.000000e+00 : f32
    %294 = vector.broadcast %cst_269 : f32 to vector<2x14x14x8xf32>
    %c0_270 = arith.constant 0 : index
    %c0_271 = arith.constant 0 : index
    %c0_272 = arith.constant 0 : index
    %c0_273 = arith.constant 0 : index
    %295 = vector.load %arg9[%c0_270, %c0_271, %c0_272, %c0_273] : memref<2x14x14x8xf32, #tpu.memory_space<vmem>>, vector<2x14x14x8xf32>
    tpu.vector_store %arg9[%c0_270, %c0_271, %c0_272, %c0_273], %294 {strides = array<i32>} : memref<2x14x14x8xf32, #tpu.memory_space<vmem>>, vector<2x14x14x8xf32>,
    %c0_274 = arith.constant 0 : index
    %c2_275 = arith.constant 2 : index
    %c2_276 = arith.constant 2 : index
    %c0_277 = arith.constant 0 : index
    %296 = vector.load %arg9[%c0_274, %c2_275, %c2_276, %c0_277] : memref<2x14x14x8xf32, #tpu.memory_space<vmem>>, vector<2x10x10x8xf32>
    tpu.vector_store %arg9[%c0_274, %c2_275, %c2_276, %c0_277], %293 {strides = array<i32>} : memref<2x14x14x8xf32, #tpu.memory_space<vmem>>, vector<2x10x10x8xf32>,
    %c0_278 = arith.constant 0 : index
    %c0_279 = arith.constant 0 : index
    %c0_280 = arith.constant 0 : index
    %c0_281 = arith.constant 0 : index
    %297 = vector.load %arg9[%c0_278, %c0_279, %c0_280, %c0_281] : memref<2x14x14x8xf32, #tpu.memory_space<vmem>>, vector<2x14x14x8xf32>
    %298 = vector.extract_strided_slice %297 {offsets = [0, 0, 0, 0], sizes = [2, 12, 12, 8], strides = [1, 1, 1, 1]} : vector<2x14x14x8xf32> to vector<2x12x12x8xf32>
    %c0_282 = arith.constant 0 : index
    %c0_283 = arith.constant 0 : index
    %c0_284 = arith.constant 0 : index
    %299 = vector.load %arg5[%c0_282, %c0_283, %c0_284] : memref<9x1x8xf32, #tpu.memory_space<vmem>>, vector<1x1x8xf32>
    %300 = vector.shape_cast %299 : vector<1x1x8xf32> to vector<1x8xf32>
    %301 = vector.shape_cast %300 : vector<1x8xf32> to vector<1x1x1x8xf32>
    %302 = vector.broadcast %301 : vector<1x1x1x8xf32> to vector<2x12x12x8xf32>
    %303 = arith.mulf %298, %302 : vector<2x12x12x8xf32>
    %304 = vector.extract_strided_slice %297 {offsets = [0, 0, 1, 0], sizes = [2, 12, 12, 8], strides = [1, 1, 1, 1]} : vector<2x14x14x8xf32> to vector<2x12x12x8xf32>
    %c1 = arith.constant 1 : index
    %c0_285 = arith.constant 0 : index
    %c0_286 = arith.constant 0 : index
    %305 = vector.load %arg5[%c1, %c0_285, %c0_286] : memref<9x1x8xf32, #tpu.memory_space<vmem>>, vector<1x1x8xf32>
    %306 = vector.shape_cast %305 : vector<1x1x8xf32> to vector<1x8xf32>
    %307 = vector.shape_cast %306 : vector<1x8xf32> to vector<1x1x1x8xf32>
    %308 = vector.broadcast %307 : vector<1x1x1x8xf32> to vector<2x12x12x8xf32>
    %309 = arith.mulf %304, %308 : vector<2x12x12x8xf32>
    %310 = arith.addf %303, %309 : vector<2x12x12x8xf32>
    %311 = vector.extract_strided_slice %297 {offsets = [0, 0, 2, 0], sizes = [2, 12, 12, 8], strides = [1, 1, 1, 1]} : vector<2x14x14x8xf32> to vector<2x12x12x8xf32>
    %c2_287 = arith.constant 2 : index
    %c0_288 = arith.constant 0 : index
    %c0_289 = arith.constant 0 : index
    %312 = vector.load %arg5[%c2_287, %c0_288, %c0_289] : memref<9x1x8xf32, #tpu.memory_space<vmem>>, vector<1x1x8xf32>
    %313 = vector.shape_cast %312 : vector<1x1x8xf32> to vector<1x8xf32>
    %314 = vector.shape_cast %313 : vector<1x8xf32> to vector<1x1x1x8xf32>
    %315 = vector.broadcast %314 : vector<1x1x1x8xf32> to vector<2x12x12x8xf32>
    %316 = arith.mulf %311, %315 : vector<2x12x12x8xf32>
    %317 = arith.addf %310, %316 : vector<2x12x12x8xf32>
    %318 = vector.extract_strided_slice %297 {offsets = [0, 1, 0, 0], sizes = [2, 12, 12, 8], strides = [1, 1, 1, 1]} : vector<2x14x14x8xf32> to vector<2x12x12x8xf32>
    %c3_290 = arith.constant 3 : index
    %c0_291 = arith.constant 0 : index
    %c0_292 = arith.constant 0 : index
    %319 = vector.load %arg5[%c3_290, %c0_291, %c0_292] : memref<9x1x8xf32, #tpu.memory_space<vmem>>, vector<1x1x8xf32>
    %320 = vector.shape_cast %319 : vector<1x1x8xf32> to vector<1x8xf32>
    %321 = vector.shape_cast %320 : vector<1x8xf32> to vector<1x1x1x8xf32>
    %322 = vector.broadcast %321 : vector<1x1x1x8xf32> to vector<2x12x12x8xf32>
    %323 = arith.mulf %318, %322 : vector<2x12x12x8xf32>
    %324 = arith.addf %317, %323 : vector<2x12x12x8xf32>
    %325 = vector.extract_strided_slice %297 {offsets = [0, 1, 1, 0], sizes = [2, 12, 12, 8], strides = [1, 1, 1, 1]} : vector<2x14x14x8xf32> to vector<2x12x12x8xf32>
    %c4_293 = arith.constant 4 : index
    %c0_294 = arith.constant 0 : index
    %c0_295 = arith.constant 0 : index
    %326 = vector.load %arg5[%c4_293, %c0_294, %c0_295] : memref<9x1x8xf32, #tpu.memory_space<vmem>>, vector<1x1x8xf32>
    %327 = vector.shape_cast %326 : vector<1x1x8xf32> to vector<1x8xf32>
    %328 = vector.shape_cast %327 : vector<1x8xf32> to vector<1x1x1x8xf32>
    %329 = vector.broadcast %328 : vector<1x1x1x8xf32> to vector<2x12x12x8xf32>
    %330 = arith.mulf %325, %329 : vector<2x12x12x8xf32>
    %331 = arith.addf %324, %330 : vector<2x12x12x8xf32>
    %332 = vector.extract_strided_slice %297 {offsets = [0, 1, 2, 0], sizes = [2, 12, 12, 8], strides = [1, 1, 1, 1]} : vector<2x14x14x8xf32> to vector<2x12x12x8xf32>
    %c5_296 = arith.constant 5 : index
    %c0_297 = arith.constant 0 : index
    %c0_298 = arith.constant 0 : index
    %333 = vector.load %arg5[%c5_296, %c0_297, %c0_298] : memref<9x1x8xf32, #tpu.memory_space<vmem>>, vector<1x1x8xf32>
    %334 = vector.shape_cast %333 : vector<1x1x8xf32> to vector<1x8xf32>
    %335 = vector.shape_cast %334 : vector<1x8xf32> to vector<1x1x1x8xf32>
    %336 = vector.broadcast %335 : vector<1x1x1x8xf32> to vector<2x12x12x8xf32>
    %337 = arith.mulf %332, %336 : vector<2x12x12x8xf32>
    %338 = arith.addf %331, %337 : vector<2x12x12x8xf32>
    %339 = vector.extract_strided_slice %297 {offsets = [0, 2, 0, 0], sizes = [2, 12, 12, 8], strides = [1, 1, 1, 1]} : vector<2x14x14x8xf32> to vector<2x12x12x8xf32>
    %c6_299 = arith.constant 6 : index
    %c0_300 = arith.constant 0 : index
    %c0_301 = arith.constant 0 : index
    %340 = vector.load %arg5[%c6_299, %c0_300, %c0_301] : memref<9x1x8xf32, #tpu.memory_space<vmem>>, vector<1x1x8xf32>
    %341 = vector.shape_cast %340 : vector<1x1x8xf32> to vector<1x8xf32>
    %342 = vector.shape_cast %341 : vector<1x8xf32> to vector<1x1x1x8xf32>
    %343 = vector.broadcast %342 : vector<1x1x1x8xf32> to vector<2x12x12x8xf32>
    %344 = arith.mulf %339, %343 : vector<2x12x12x8xf32>
    %345 = arith.addf %338, %344 : vector<2x12x12x8xf32>
    %346 = vector.extract_strided_slice %297 {offsets = [0, 2, 1, 0], sizes = [2, 12, 12, 8], strides = [1, 1, 1, 1]} : vector<2x14x14x8xf32> to vector<2x12x12x8xf32>
    %c7_302 = arith.constant 7 : index
    %c0_303 = arith.constant 0 : index
    %c0_304 = arith.constant 0 : index
    %347 = vector.load %arg5[%c7_302, %c0_303, %c0_304] : memref<9x1x8xf32, #tpu.memory_space<vmem>>, vector<1x1x8xf32>
    %348 = vector.shape_cast %347 : vector<1x1x8xf32> to vector<1x8xf32>
    %349 = vector.shape_cast %348 : vector<1x8xf32> to vector<1x1x1x8xf32>
    %350 = vector.broadcast %349 : vector<1x1x1x8xf32> to vector<2x12x12x8xf32>
    %351 = arith.mulf %346, %350 : vector<2x12x12x8xf32>
    %352 = arith.addf %345, %351 : vector<2x12x12x8xf32>
    %353 = vector.extract_strided_slice %297 {offsets = [0, 2, 2, 0], sizes = [2, 12, 12, 8], strides = [1, 1, 1, 1]} : vector<2x14x14x8xf32> to vector<2x12x12x8xf32>
    %c8_305 = arith.constant 8 : index
    %c0_306 = arith.constant 0 : index
    %c0_307 = arith.constant 0 : index
    %354 = vector.load %arg5[%c8_305, %c0_306, %c0_307] : memref<9x1x8xf32, #tpu.memory_space<vmem>>, vector<1x1x8xf32>
    %355 = vector.shape_cast %354 : vector<1x1x8xf32> to vector<1x8xf32>
    %356 = vector.shape_cast %355 : vector<1x8xf32> to vector<1x1x1x8xf32>
    %357 = vector.broadcast %356 : vector<1x1x1x8xf32> to vector<2x12x12x8xf32>
    %358 = arith.mulf %353, %357 : vector<2x12x12x8xf32>
    %359 = arith.addf %352, %358 : vector<2x12x12x8xf32>
    %cst_308 = arith.constant dense<0.000000e+00> : vector<2x12x12xf32>
    %360 = vector.multi_reduction <add>, %359, %cst_308 [3] : vector<2x12x12x8xf32> to vector<2x12x12xf32>
    %c0_309 = arith.constant 0 : index
    %c0_310 = arith.constant 0 : index
    %361 = vector.load %arg6[%c0_309, %c0_310] : memref<1x1xf32, #tpu.memory_space<vmem>>, vector<1x1xf32>
    %362 = vector.shape_cast %361 : vector<1x1xf32> to vector<1x1x1xf32>
    %363 = vector.broadcast %362 : vector<1x1x1xf32> to vector<2x12x12xf32>
    %364 = arith.addf %360, %363 : vector<2x12x12xf32>
    %cst_311 = arith.constant 0.000000e+00 : f32
    %365 = vector.broadcast %cst_311 : f32 to vector<2x12x12xf32>
    %366 = arith.subf %365, %364 : vector<2x12x12xf32>
    %367 = math.exp %366 : vector<2x12x12xf32>
    %cst_312 = arith.constant 1.000000e+00 : f32
    %368 = vector.broadcast %cst_312 : f32 to vector<2x12x12xf32>
    %369 = arith.addf %368, %367 : vector<2x12x12xf32>
    %370 = tpu.reciprocal %369 {approx = true} : vector<2x12x12xf32> -> vector<2x12x12xf32>
    %c0_313 = arith.constant 0 : index
    %c0_314 = arith.constant 0 : index
    %c0_315 = arith.constant 0 : index
    %371 = vector.load %arg7[%c0_313, %c0_314, %c0_315] : memref<2x12x12xf32, #tpu.memory_space<vmem>>, vector<2x12x12xf32>
    tpu.vector_store %arg7[%c0_313, %c0_314, %c0_315], %370 {strides = array<i32>} : memref<2x12x12xf32, #tpu.memory_space<vmem>>, vector<2x12x12xf32>,
    return
  }
}

</mosaic_0001>

<llo_original>
// kernel: decoder_forward.1
$region0: #{decoder_forward.1}
  #allocation0 [shape = 'u32[]', space=smem, size = 0x4, offset = 0x4, fixed_abs, tag = 'smem constant byte address 0x4 - core index']
  #allocation1 [shape = 'u32[144,128]{1,0:T(1,128)}', space=vmem, size = 0x12000, scoped, tag = 'internal scratch']
  #allocation2 [shape = 'f32[2,12,12,64]{3,2,1,0:T(8,128)}', space=vmem, size = 0x30000, scoped, tag = 'scratch operand']
  #allocation3 [shape = 'f32[2,14,14,8]{3,2,1,0:T(8,128)}', space=vmem, size = 0x38000, scoped, tag = 'scratch operand']
  #allocation4 [shape = 'f32[1,1]{1,0:T(1,128)S(1)}', space=vmem, size = 0x200, scoped, tag = 'scoped memory for decoder_forward.1']
  %s0 = inlined_call_operand.vmem [shape: f32[2,32], index: 0, kind: input, shape index: {}]
  %s1 = inlined_call_operand.hbm [shape: f32[32,4096], index: 1, kind: input, shape index: {}]
  %s2 = inlined_call_operand.hbm [shape: f32[1,4096], index: 2, kind: input, shape index: {}]
  %s3 = inlined_call_operand.hbm [shape: f32[64,72], index: 3, kind: input, shape index: {}]
  %s4 = inlined_call_operand.vmem [shape: f32[1,8], index: 4, kind: input, shape index: {}]
  %s5 = inlined_call_operand.vmem [shape: f32[9,1,8], index: 5, kind: input, shape index: {}]
  %s6 = inlined_call_operand.<no memory space> [shape: f32[1,1], index: 6, kind: input, shape index: {}]
  %s7 = inlined_call_operand.vmem [shape: f32[2,12,12], index: 7, kind: output, shape index: {}]
  %s8 = sld [smem:[#allocation0]]
  $region50: #{decoder_forward.1} parent=0
    _
  %s10 = ssub.s32 1, %s8
  %s11 = scalar_select 0, %s10, %s8
  %v12 = vstv %s6
  %13 = vst [vmem:[#allocation4] sm:$0x1] %v12
  $region1: #{decoder_forward.1} parent=0
    #allocation5 [shape = 'u8[524288]{0}', space=vmem, size = 0x80000, scoped, tag = 'input window, operand 1, single buffered']
    #allocation6 [shape = 's32[1]{0}', space=sflag, size = 0x4, scoped, tag = 'scoped memory for decoder_forward.1']
    #allocation7 [shape = 'u8[16384]{0}', space=vmem, size = 0x4000, scoped, tag = 'input window, operand 2, single buffered']
    #allocation8 [shape = 's32[1]{0}', space=sflag, size = 0x4, scoped, tag = 'scoped memory for decoder_forward.1']
    #allocation9 [shape = 'u8[32768]{0}', space=vmem, size = 0x8000, scoped, tag = 'input window, operand 3, single buffered']
    %14 = vsyncpa [#allocation6], 0
    %15 = vsyncpa [#allocation8], 0
    // Predicated region
    $region2: #{decoder_forward.1} parent=1 // pred_check
      _
    $region3: #{decoder_forward.1} parent=1 // pred_check_branch
      %17 = sbr.rel (0) target = $region5
    $region4: #{decoder_forward.1} parent=1 // pred_region
      _
    $region5: #{decoder_forward.1} parent=1 // pred_fallthru
      _
    // Predicated region
    $region6: #{decoder_forward.1} parent=1 // pred_check
      _
    $region7: #{decoder_forward.1} parent=1 // pred_check_branch
      %19 = sbr.rel (0) target = $region9
    $region8: #{decoder_forward.1} parent=1 // pred_region
      %s21 = ssub.s32 16384, 16384
      %22 = vsyncadd [#allocation6], %s21
      %s23 = sshll.u32 [#allocation5], 4
      %s24 = int_to_ptr.vmem [resolvable:$true] %s23
      %29 = dma.hbm_to_vmem [thread:$0]  %s1, 16384, %s24, [#allocation6], 4096, 4096, 256
    $region9: #{decoder_forward.1} parent=1 // pred_fallthru
      _
    // Predicated region
    $region10: #{decoder_forward.1} parent=1 // pred_check
      _
    $region11: #{decoder_forward.1} parent=1 // pred_check_branch
      %31 = sbr.rel (0) target = $region13
    $region12: #{decoder_forward.1} parent=1 // pred_region
      %s33 = ssub.s32 512, 512
      %34 = vsyncadd [#allocation8], %s33
      %s36 = sshll.u32 [#allocation7], 4
      %s37 = int_to_ptr.vmem [resolvable:$true] %s36
      %39 = dma.hbm_to_vmem [thread:$0]  %s2, 512, %s37, [#allocation8]
    $region13: #{decoder_forward.1} parent=1 // pred_fallthru
      _
    // Predicated region
    $region14: #{decoder_forward.1} parent=1 // pred_check
      _
    $region15: #{decoder_forward.1} parent=1 // pred_check_branch
      %41 = sbr.rel (0) target = $region17
    $region16: #{decoder_forward.1} parent=1 // pred_region
      %s43 = ssub.s32 1024, 1024
      %44 = vsyncadd [#allocation8], %s43
      %s45 = sshll.u32 [#allocation9], 4
      %s46 = int_to_ptr.vmem [resolvable:$true] %s45
      %51 = dma.hbm_to_vmem [thread:$0]  %s3, 1024, %s46, [#allocation8], 128, 128, 8
    $region17: #{decoder_forward.1} parent=1 // pred_fallthru
      _
    // Predicated region
    $region18: #{decoder_forward.1} parent=1 // pred_check
      _
    $region19: #{decoder_forward.1} parent=1 // pred_check_branch
      %53 = sbr.rel (0) target = $region21
    $region20: #{decoder_forward.1} parent=1 // pred_region
      _
    $region21: #{decoder_forward.1} parent=1 // pred_fallthru
      _
    // Predicated region
    $region22: #{decoder_forward.1} parent=1 // pred_check
      _
    $region23: #{decoder_forward.1} parent=1 // pred_check_branch
      %55 = sbr.rel (0) target = $region25
    $region24: #{decoder_forward.1} parent=1 // pred_region
      _
    $region25: #{decoder_forward.1} parent=1 // pred_fallthru
      _
    // Predicated region
    $region26: #{decoder_forward.1} parent=1 // pred_check
      _
    $region27: #{decoder_forward.1} parent=1 // pred_check_branch
      %57 = sbr.rel (0) target = $region29
    $region28: #{decoder_forward.1} parent=1 // pred_region
      _
    $region29: #{decoder_forward.1} parent=1 // pred_fallthru
      _
    // Predicated region
    $region30: #{decoder_forward.1} parent=1 // pred_check
      _
    $region31: #{decoder_forward.1} parent=1 // pred_check_branch
      %59 = sbr.rel (0) target = $region33
    $region32: #{decoder_forward.1} parent=1 // pred_region
      %60 = dma.done [#allocation6], 16384
    $region33: #{decoder_forward.1} parent=1 // pred_fallthru
      _
    // Predicated region
    $region34: #{decoder_forward.1} parent=1 // pred_check
      _
    $region35: #{decoder_forward.1} parent=1 // pred_check_branch
      %62 = sbr.rel (0) target = $region37
    $region36: #{decoder_forward.1} parent=1 // pred_region
      %63 = dma.done [#allocation8], 512
    $region37: #{decoder_forward.1} parent=1 // pred_fallthru
      _
    // Predicated region
    $region38: #{decoder_forward.1} parent=1 // pred_check
      _
    $region39: #{decoder_forward.1} parent=1 // pred_check_branch
      %65 = sbr.rel (0) target = $region41
    $region40: #{decoder_forward.1} parent=1 // pred_region
      %66 = dma.done [#allocation8], 1024
    $region41: #{decoder_forward.1} parent=1 // pred_fallthru
      _
    %v67 = vld [vmem:[%s0] sm:$0x3]
    %v68 = vld [vmem:[#allocation5] sm:$0xff]
    %v69 = vld [vmem:[#allocation5 + $0x8] sm:$0xff]
    %v70 = vld [vmem:[#allocation5 + $0x10] sm:$0xff]
    %v71 = vld [vmem:[#allocation5 + $0x18] sm:$0xff]
    %v72 = vld [vmem:[#allocation5 + $0x20] sm:$0xff]
    %v73 = vld [vmem:[#allocation5 + $0x28] sm:$0xff]
    %v74 = vld [vmem:[#allocation5 + $0x30] sm:$0xff]
    %v75 = vld [vmem:[#allocation5 + $0x38] sm:$0xff]
    %v76 = vld [vmem:[#allocation5 + $0x40] sm:$0xff]
    %v77 = vld [vmem:[#allocation5 + $0x48] sm:$0xff]
    %v78 = vld [vmem:[#allocation5 + $0x50] sm:$0xff]
    %v79 = vld [vmem:[#allocation5 + $0x58] sm:$0xff]
    %v80 = vld [vmem:[#allocation5 + $0x60] sm:$0xff]
    %v81 = vld [vmem:[#allocation5 + $0x68] sm:$0xff]
    %v82 = vld [vmem:[#allocation5 + $0x70] sm:$0xff]
    %v83 = vld [vmem:[#allocation5 + $0x78] sm:$0xff]
    %v84 = vld [vmem:[#allocation5 + $0x80] sm:$0xff]
    %v85 = vld [vmem:[#allocation5 + $0x88] sm:$0xff]
    %v86 = vld [vmem:[#allocation5 + $0x90] sm:$0xff]
    %v87 = vld [vmem:[#allocation5 + $0x98] sm:$0xff]
    %v88 = vld [vmem:[#allocation5 + $0xa0] sm:$0xff]
    %v89 = vld [vmem:[#allocation5 + $0xa8] sm:$0xff]
    %v90 = vld [vmem:[#allocation5 + $0xb0] sm:$0xff]
    %v91 = vld [vmem:[#allocation5 + $0xb8] sm:$0xff]
    %v92 = vld [vmem:[#allocation5 + $0xc0] sm:$0xff]
    %v93 = vld [vmem:[#allocation5 + $0xc8] sm:$0xff]
    %v94 = vld [vmem:[#allocation5 + $0xd0] sm:$0xff]
    %v95 = vld [vmem:[#allocation5 + $0xd8] sm:$0xff]
    %v96 = vld [vmem:[#allocation5 + $0xe0] sm:$0xff]
    %v97 = vld [vmem:[#allocation5 + $0xe8] sm:$0xff]
    %v98 = vld [vmem:[#allocation5 + $0xf0] sm:$0xff]
    %v99 = vld [vmem:[#allocation5 + $0xf8] sm:$0xff]
    %v100 = vld [vmem:[#allocation5 + $0x100] sm:$0xff]
    %v101 = vld [vmem:[#allocation5 + $0x108] sm:$0xff]
    %v102 = vld [vmem:[#allocation5 + $0x110] sm:$0xff]
    %v103 = vld [vmem:[#allocation5 + $0x118] sm:$0xff]
    %v104 = vld [vmem:[#allocation5 + $0x120] sm:$0xff]
    %v105 = vld [vmem:[#allocation5 + $0x128] sm:$0xff]
    %v106 = vld [vmem:[#allocation5 + $0x130] sm:$0xff]
    %v107 = vld [vmem:[#allocation5 + $0x138] sm:$0xff]
    %v108 = vld [vmem:[#allocation5 + $0x140] sm:$0xff]
    %v109 = vld [vmem:[#allocation5 + $0x148] sm:$0xff]
    %v110 = vld [vmem:[#allocation5 + $0x150] sm:$0xff]
    %v111 = vld [vmem:[#allocation5 + $0x158] sm:$0xff]
    %v112 = vld [vmem:[#allocation5 + $0x160] sm:$0xff]
    %v113 = vld [vmem:[#allocation5 + $0x168] sm:$0xff]
    %v114 = vld [vmem:[#allocation5 + $0x170] sm:$0xff]
    %v115 = vld [vmem:[#allocation5 + $0x178] sm:$0xff]
    %v116 = vld [vmem:[#allocation5 + $0x180] sm:$0xff]
    %v117 = vld [vmem:[#allocation5 + $0x188] sm:$0xff]
    %v118 = vld [vmem:[#allocation5 + $0x190] sm:$0xff]
    %v119 = vld [vmem:[#allocation5 + $0x198] sm:$0xff]
    %v120 = vld [vmem:[#allocation5 + $0x1a0] sm:$0xff]
    %v121 = vld [vmem:[#allocation5 + $0x1a8] sm:$0xff]
    %v122 = vld [vmem:[#allocation5 + $0x1b0] sm:$0xff]
    %v123 = vld [vmem:[#allocation5 + $0x1b8] sm:$0xff]
    %v124 = vld [vmem:[#allocation5 + $0x1c0] sm:$0xff]
    %v125 = vld [vmem:[#allocation5 + $0x1c8] sm:$0xff]
    %v126 = vld [vmem:[#allocation5 + $0x1d0] sm:$0xff]
    %v127 = vld [vmem:[#allocation5 + $0x1d8] sm:$0xff]
    %v128 = vld [vmem:[#allocation5 + $0x1e0] sm:$0xff]
    %v129 = vld [vmem:[#allocation5 + $0x1e8] sm:$0xff]
    %v130 = vld [vmem:[#allocation5 + $0x1f0] sm:$0xff]
    %v131 = vld [vmem:[#allocation5 + $0x1f8] sm:$0xff]
    %v132 = vld [vmem:[#allocation5 + $0x200] sm:$0xff]
    %v133 = vld [vmem:[#allocation5 + $0x208] sm:$0xff]
    %v134 = vld [vmem:[#allocation5 + $0x210] sm:$0xff]
    %v135 = vld [vmem:[#allocation5 + $0x218] sm:$0xff]
    %v136 = vld [vmem:[#allocation5 + $0x220] sm:$0xff]
    %v137 = vld [vmem:[#allocation5 + $0x228] sm:$0xff]
    %v138 = vld [vmem:[#allocation5 + $0x230] sm:$0xff]
    %v139 = vld [vmem:[#allocation5 + $0x238] sm:$0xff]
    %v140 = vld [vmem:[#allocation5 + $0x240] sm:$0xff]
    %v141 = vld [vmem:[#allocation5 + $0x248] sm:$0xff]
    %v142 = vld [vmem:[#allocation5 + $0x250] sm:$0xff]
    %v143 = vld [vmem:[#allocation5 + $0x258] sm:$0xff]
    %v144 = vld [vmem:[#allocation5 + $0x260] sm:$0xff]
    %v145 = vld [vmem:[#allocation5 + $0x268] sm:$0xff]
    %v146 = vld [vmem:[#allocation5 + $0x270] sm:$0xff]
    %v147 = vld [vmem:[#allocation5 + $0x278] sm:$0xff]
    %v148 = vld [vmem:[#allocation5 + $0x280] sm:$0xff]
    %v149 = vld [vmem:[#allocation5 + $0x288] sm:$0xff]
    %v150 = vld [vmem:[#allocation5 + $0x290] sm:$0xff]
    %v151 = vld [vmem:[#allocation5 + $0x298] sm:$0xff]
    %v152 = vld [vmem:[#allocation5 + $0x2a0] sm:$0xff]
    %v153 = vld [vmem:[#allocation5 + $0x2a8] sm:$0xff]
    %v154 = vld [vmem:[#allocation5 + $0x2b0] sm:$0xff]
    %v155 = vld [vmem:[#allocation5 + $0x2b8] sm:$0xff]
    %v156 = vld [vmem:[#allocation5 + $0x2c0] sm:$0xff]
    %v157 = vld [vmem:[#allocation5 + $0x2c8] sm:$0xff]
    %v158 = vld [vmem:[#allocation5 + $0x2d0] sm:$0xff]
    %v159 = vld [vmem:[#allocation5 + $0x2d8] sm:$0xff]
    %v160 = vld [vmem:[#allocation5 + $0x2e0] sm:$0xff]
    %v161 = vld [vmem:[#allocation5 + $0x2e8] sm:$0xff]
    %v162 = vld [vmem:[#allocation5 + $0x2f0] sm:$0xff]
    %v163 = vld [vmem:[#allocation5 + $0x2f8] sm:$0xff]
    %v164 = vld [vmem:[#allocation5 + $0x300] sm:$0xff]
    %v165 = vld [vmem:[#allocation5 + $0x308] sm:$0xff]
    %v166 = vld [vmem:[#allocation5 + $0x310] sm:$0xff]
    %v167 = vld [vmem:[#allocation5 + $0x318] sm:$0xff]
    %v168 = vld [vmem:[#allocation5 + $0x320] sm:$0xff]
    %v169 = vld [vmem:[#allocation5 + $0x328] sm:$0xff]
    %v170 = vld [vmem:[#allocation5 + $0x330] sm:$0xff]
    %v171 = vld [vmem:[#allocation5 + $0x338] sm:$0xff]
    %v172 = vld [vmem:[#allocation5 + $0x340] sm:$0xff]
    %v173 = vld [vmem:[#allocation5 + $0x348] sm:$0xff]
    %v174 = vld [vmem:[#allocation5 + $0x350] sm:$0xff]
    %v175 = vld [vmem:[#allocation5 + $0x358] sm:$0xff]
    %v176 = vld [vmem:[#allocation5 + $0x360] sm:$0xff]
    %v177 = vld [vmem:[#allocation5 + $0x368] sm:$0xff]
    %v178 = vld [vmem:[#allocation5 + $0x370] sm:$0xff]
    %v179 = vld [vmem:[#allocation5 + $0x378] sm:$0xff]
    %v180 = vld [vmem:[#allocation5 + $0x380] sm:$0xff]
    %v181 = vld [vmem:[#allocation5 + $0x388] sm:$0xff]
    %v182 = vld [vmem:[#allocation5 + $0x390] sm:$0xff]
    %v183 = vld [vmem:[#allocation5 + $0x398] sm:$0xff]
    %v184 = vld [vmem:[#allocation5 + $0x3a0] sm:$0xff]
    %v185 = vld [vmem:[#allocation5 + $0x3a8] sm:$0xff]
    %v186 = vld [vmem:[#allocation5 + $0x3b0] sm:$0xff]
    %v187 = vld [vmem:[#allocation5 + $0x3b8] sm:$0xff]
    %v188 = vld [vmem:[#allocation5 + $0x3c0] sm:$0xff]
    %v189 = vld [vmem:[#allocation5 + $0x3c8] sm:$0xff]
    %v190 = vld [vmem:[#allocation5 + $0x3d0] sm:$0xff]
    %v191 = vld [vmem:[#allocation5 + $0x3d8] sm:$0xff]
    %v192 = vld [vmem:[#allocation5 + $0x3e0] sm:$0xff]
    %v193 = vld [vmem:[#allocation5 + $0x3e8] sm:$0xff]
    %v194 = vld [vmem:[#allocation5 + $0x3f0] sm:$0xff]
    %v195 = vld [vmem:[#allocation5 + $0x3f8] sm:$0xff]
    %v196 = vld [vmem:[#allocation7] sm:$0xff]
    %v197 = vld [vmem:[#allocation7 + $0x8] sm:$0xff]
    %v198 = vld [vmem:[#allocation7 + $0x10] sm:$0xff]
    %v199 = vld [vmem:[#allocation7 + $0x18] sm:$0xff]
    %v204 = vlaneseq
    %v205 = vshrl.u32 %v204, 7
    %v206 = vsub.s32 0, %v205
    %v207 = vrot.slane %v196, %v206
    %v208 = vlaneseq
    %v209 = vshrl.u32 %v208, 7
    %v210 = vsub.s32 1, %v209
    %v211 = vrot.slane %v196, %v210
    %v212 = vlaneseq
    %v213 = vshrl.u32 %v212, 7
    %v214 = vsub.s32 2, %v213
    %v215 = vrot.slane %v196, %v214
    %v216 = vlaneseq
    %v217 = vshrl.u32 %v216, 7
    %v218 = vsub.s32 3, %v217
    %v219 = vrot.slane %v196, %v218
    %v220 = vlaneseq
    %v221 = vshrl.u32 %v220, 7
    %v222 = vsub.s32 4, %v221
    %v223 = vrot.slane %v196, %v222
    %v224 = vlaneseq
    %v225 = vshrl.u32 %v224, 7
    %v226 = vsub.s32 5, %v225
    %v227 = vrot.slane %v196, %v226
    %v228 = vlaneseq
    %v229 = vshrl.u32 %v228, 7
    %v230 = vsub.s32 6, %v229
    %v231 = vrot.slane %v196, %v230
    %v232 = vlaneseq
    %v233 = vshrl.u32 %v232, 7
    %v234 = vsub.s32 7, %v233
    %v235 = vrot.slane %v196, %v234
    %v236 = vlaneseq
    %v237 = vshrl.u32 %v236, 7
    %v238 = vsub.s32 0, %v237
    %v239 = vrot.slane %v197, %v238
    %v240 = vlaneseq
    %v241 = vshrl.u32 %v240, 7
    %v242 = vsub.s32 1, %v241
    %v243 = vrot.slane %v197, %v242
    %v244 = vlaneseq
    %v245 = vshrl.u32 %v244, 7
    %v246 = vsub.s32 2, %v245
    %v247 = vrot.slane %v197, %v246
    %v248 = vlaneseq
    %v249 = vshrl.u32 %v248, 7
    %v250 = vsub.s32 3, %v249
    %v251 = vrot.slane %v197, %v250
    %v252 = vlaneseq
    %v253 = vshrl.u32 %v252, 7
    %v254 = vsub.s32 4, %v253
    %v255 = vrot.slane %v197, %v254
    %v256 = vlaneseq
    %v257 = vshrl.u32 %v256, 7
    %v258 = vsub.s32 5, %v257
    %v259 = vrot.slane %v197, %v258
    %v260 = vlaneseq
    %v261 = vshrl.u32 %v260, 7
    %v262 = vsub.s32 6, %v261
    %v263 = vrot.slane %v197, %v262
    %v264 = vlaneseq
    %v265 = vshrl.u32 %v264, 7
    %v266 = vsub.s32 7, %v265
    %v267 = vrot.slane %v197, %v266
    %v268 = vlaneseq
    %v269 = vshrl.u32 %v268, 7
    %v270 = vsub.s32 0, %v269
    %v271 = vrot.slane %v198, %v270
    %v272 = vlaneseq
    %v273 = vshrl.u32 %v272, 7
    %v274 = vsub.s32 1, %v273
    %v275 = vrot.slane %v198, %v274
    %v276 = vlaneseq
    %v277 = vshrl.u32 %v276, 7
    %v278 = vsub.s32 2, %v277
    %v279 = vrot.slane %v198, %v278
    %v280 = vlaneseq
    %v281 = vshrl.u32 %v280, 7
    %v282 = vsub.s32 3, %v281
    %v283 = vrot.slane %v198, %v282
    %v284 = vlaneseq
    %v285 = vshrl.u32 %v284, 7
    %v286 = vsub.s32 4, %v285
    %v287 = vrot.slane %v198, %v286
    %v288 = vlaneseq
    %v289 = vshrl.u32 %v288, 7
    %v290 = vsub.s32 5, %v289
    %v291 = vrot.slane %v198, %v290
    %v292 = vlaneseq
    %v293 = vshrl.u32 %v292, 7
    %v294 = vsub.s32 6, %v293
    %v295 = vrot.slane %v198, %v294
    %v296 = vlaneseq
    %v297 = vshrl.u32 %v296, 7
    %v298 = vsub.s32 7, %v297
    %v299 = vrot.slane %v198, %v298
    %v300 = vlaneseq
    %v301 = vshrl.u32 %v300, 7
    %v302 = vsub.s32 0, %v301
    %v303 = vrot.slane %v199, %v302
    %v304 = vlaneseq
    %v305 = vshrl.u32 %v304, 7
    %v306 = vsub.s32 1, %v305
    %v307 = vrot.slane %v199, %v306
    %v308 = vlaneseq
    %v309 = vshrl.u32 %v308, 7
    %v310 = vsub.s32 2, %v309
    %v311 = vrot.slane %v199, %v310
    %v312 = vlaneseq
    %v313 = vshrl.u32 %v312, 7
    %v314 = vsub.s32 3, %v313
    %v315 = vrot.slane %v199, %v314
    %v316 = vlaneseq
    %v317 = vshrl.u32 %v316, 7
    %v318 = vsub.s32 4, %v317
    %v319 = vrot.slane %v199, %v318
    %v320 = vlaneseq
    %v321 = vshrl.u32 %v320, 7
    %v322 = vsub.s32 5, %v321
    %v323 = vrot.slane %v199, %v322
    %v324 = vlaneseq
    %v325 = vshrl.u32 %v324, 7
    %v326 = vsub.s32 6, %v325
    %v327 = vrot.slane %v199, %v326
    %v328 = vlaneseq
    %v329 = vshrl.u32 %v328, 7
    %v330 = vsub.s32 7, %v329
    %v331 = vrot.slane %v199, %v330
    %vm364 = vcmask 261120
    %v366 = vsel %vm364, %v67, 0
    %368 = vmatprep.subr.mxu0 0.0
    %369 = vmatpush1.msra.mxu0 0.0
    %370 = vmatprep.subr.mxu0 0.0
    %371 = vmatpush1.msra.mxu0 0.0
    %372 = vmatprep.subr.mxu0 0.0
    %373 = vmatpush1.msra.mxu0 0.0
    %374 = vmatprep.subr.mxu0 0.0
    %375 = vmatpush1.msra.mxu0 0.0
    %376 = vmatprep.subr.mxu0 0.0
    %377 = vmatpush1.msra.mxu0 0.0
    %378 = vmatprep.subr.mxu0 0.0
    %379 = vmatpush1.msra.mxu0 0.0
    %380 = vmatprep.subr.mxu0 0.0
    %381 = vmatpush1.msra.mxu0 0.0
    %382 = vmatprep.subr.mxu0 0.0
    %383 = vmatpush1.msra.mxu0 0.0
    %384 = vmatprep.subr.mxu0 0.0
    %385 = vmatpush1.msra.mxu0 0.0
    %386 = vmatprep.subr.mxu0 0.0
    %387 = vmatpush1.msra.mxu0 0.0
    %388 = vmatprep.subr.mxu0 0.0
    %389 = vmatpush1.msra.mxu0 0.0
    %390 = vmatprep.subr.mxu0 0.0
    %391 = vmatpush1.msra.mxu0 0.0
    %392 = vmatprep.subr.mxu0 %v165
    %393 = vmatpush1.msra.mxu0 %v164
    %394 = vmatprep.subr.mxu0 %v133
    %395 = vmatpush1.msra.mxu0 %v132
    %396 = vmatprep.subr.mxu0 %v101
    %397 = vmatpush1.msra.mxu0 %v100
    %398 = vmatprep.subr.mxu0 %v69
    %399 = vmatpush1.msra.mxu0 %v68
    %400 = vmatprep.subr.mxu0 0.0
    %401 = vmatpush2.msra.mxu0 0.0
    %402 = vmatprep.subr.mxu0 0.0
    %403 = vmatpush2.msra.mxu0 0.0
    %404 = vmatprep.subr.mxu0 0.0
    %405 = vmatpush2.msra.mxu0 0.0
    %406 = vmatprep.subr.mxu0 0.0
    %407 = vmatpush2.msra.mxu0 0.0
    %408 = vmatprep.subr.mxu0 0.0
    %409 = vmatpush2.msra.mxu0 0.0
    %410 = vmatprep.subr.mxu0 0.0
    %411 = vmatpush2.msra.mxu0 0.0
    %412 = vmatprep.subr.mxu0 0.0
    %413 = vmatpush2.msra.mxu0 0.0
    %414 = vmatprep.subr.mxu0 0.0
    %415 = vmatpush2.msra.mxu0 0.0
    %416 = vmatprep.subr.mxu0 0.0
    %417 = vmatpush2.msra.mxu0 0.0
    %418 = vmatprep.subr.mxu0 0.0
    %419 = vmatpush2.msra.mxu0 0.0
    %420 = vmatprep.subr.mxu0 0.0
    %421 = vmatpush2.msra.mxu0 0.0
    %422 = vmatprep.subr.mxu0 0.0
    %423 = vmatpush2.msra.mxu0 0.0
    %424 = vmatprep.subr.mxu0 0.0
    %425 = vmatpush2.msra.mxu0 0.0
    %426 = vmatprep.subr.mxu0 0.0
    %427 = vmatpush2.msra.mxu0 0.0
    %428 = vmatprep.subr.mxu0 0.0
    %429 = vmatpush2.msra.mxu0 0.0
    %430 = vmatprep.subr.mxu0 0.0
    %431 = vmatpush2.msra.mxu0 0.0
    %432 = vmatprep.mubr.f32.mxu0 0.0
    %433 = vmatmul.mubr.f32.gmra.mxu0 %v366
    %v434 = vpop.f32.mrf.mxu0
    %v435 = vadd.f32 %v207, %v434
    %v436 = vpop.f32.mrf.mxu0
    %v437 = vadd.f32 %v211, %v436
    %438 = vdwg.mxu0
    %439 = vmatprep.subr.mxu0 0.0
    %440 = vmatpush1.msra.mxu0 0.0
    %441 = vmatprep.subr.mxu0 0.0
    %442 = vmatpush1.msra.mxu0 0.0
    %443 = vmatprep.subr.mxu0 0.0
    %444 = vmatpush1.msra.mxu0 0.0
    %445 = vmatprep.subr.mxu0 0.0
    %446 = vmatpush1.msra.mxu0 0.0
    %447 = vmatprep.subr.mxu0 0.0
    %448 = vmatpush1.msra.mxu0 0.0
    %449 = vmatprep.subr.mxu0 0.0
    %450 = vmatpush1.msra.mxu0 0.0
    %451 = vmatprep.subr.mxu0 0.0
    %452 = vmatpush1.msra.mxu0 0.0
    %453 = vmatprep.subr.mxu0 0.0
    %454 = vmatpush1.msra.mxu0 0.0
    %455 = vmatprep.subr.mxu0 0.0
    %456 = vmatpush1.msra.mxu0 0.0
    %457 = vmatprep.subr.mxu0 0.0
    %458 = vmatpush1.msra.mxu0 0.0
    %459 = vmatprep.subr.mxu0 0.0
    %460 = vmatpush1.msra.mxu0 0.0
    %461 = vmatprep.subr.mxu0 0.0
    %462 = vmatpush1.msra.mxu0 0.0
    %463 = vmatprep.subr.mxu0 %v167
    %464 = vmatpush1.msra.mxu0 %v166
    %465 = vmatprep.subr.mxu0 %v135
    %466 = vmatpush1.msra.mxu0 %v134
    %467 = vmatprep.subr.mxu0 %v103
    %468 = vmatpush1.msra.mxu0 %v102
    %469 = vmatprep.subr.mxu0 %v71
    %470 = vmatpush1.msra.mxu0 %v70
    %471 = vmatprep.subr.mxu0 0.0
    %472 = vmatpush2.msra.mxu0 0.0
    %473 = vmatprep.subr.mxu0 0.0
    %474 = vmatpush2.msra.mxu0 0.0
    %475 = vmatprep.subr.mxu0 0.0
    %476 = vmatpush2.msra.mxu0 0.0
    %477 = vmatprep.subr.mxu0 0.0
    %478 = vmatpush2.msra.mxu0 0.0
    %479 = vmatprep.subr.mxu0 0.0
    %480 = vmatpush2.msra.mxu0 0.0
    %481 = vmatprep.subr.mxu0 0.0
    %482 = vmatpush2.msra.mxu0 0.0
    %483 = vmatprep.subr.mxu0 0.0
    %484 = vmatpush2.msra.mxu0 0.0
    %485 = vmatprep.subr.mxu0 0.0
    %486 = vmatpush2.msra.mxu0 0.0
    %487 = vmatprep.subr.mxu0 0.0
    %488 = vmatpush2.msra.mxu0 0.0
    %489 = vmatprep.subr.mxu0 0.0
    %490 = vmatpush2.msra.mxu0 0.0
    %491 = vmatprep.subr.mxu0 0.0
    %492 = vmatpush2.msra.mxu0 0.0
    %493 = vmatprep.subr.mxu0 0.0
    %494 = vmatpush2.msra.mxu0 0.0
    %495 = vmatprep.subr.mxu0 0.0
    %496 = vmatpush2.msra.mxu0 0.0
    %497 = vmatprep.subr.mxu0 0.0
    %498 = vmatpush2.msra.mxu0 0.0
    %499 = vmatprep.subr.mxu0 0.0
    %500 = vmatpush2.msra.mxu0 0.0
    %501 = vmatprep.subr.mxu0 0.0
    %502 = vmatpush2.msra.mxu0 0.0
    %503 = vmatprep.mubr.f32.mxu0 0.0
    %504 = vmatmul.mubr.f32.gmra.mxu0 %v366
    %v505 = vpop.f32.mrf.mxu0
    %v506 = vadd.f32 %v215, %v505
    %v507 = vpop.f32.mrf.mxu0
    %v508 = vadd.f32 %v219, %v507
    %509 = vdwg.mxu0
    %510 = vmatprep.subr.mxu0 0.0
    %511 = vmatpush1.msra.mxu0 0.0
    %512 = vmatprep.subr.mxu0 0.0
    %513 = vmatpush1.msra.mxu0 0.0
    %514 = vmatprep.subr.mxu0 0.0
    %515 = vmatpush1.msra.mxu0 0.0
    %516 = vmatprep.subr.mxu0 0.0
    %517 = vmatpush1.msra.mxu0 0.0
    %518 = vmatprep.subr.mxu0 0.0
    %519 = vmatpush1.msra.mxu0 0.0
    %520 = vmatprep.subr.mxu0 0.0
    %521 = vmatpush1.msra.mxu0 0.0
    %522 = vmatprep.subr.mxu0 0.0
    %523 = vmatpush1.msra.mxu0 0.0
    %524 = vmatprep.subr.mxu0 0.0
    %525 = vmatpush1.msra.mxu0 0.0
    %526 = vmatprep.subr.mxu0 0.0
    %527 = vmatpush1.msra.mxu0 0.0
    %528 = vmatprep.subr.mxu0 0.0
    %529 = vmatpush1.msra.mxu0 0.0
    %530 = vmatprep.subr.mxu0 0.0
    %531 = vmatpush1.msra.mxu0 0.0
    %532 = vmatprep.subr.mxu0 0.0
    %533 = vmatpush1.msra.mxu0 0.0
    %534 = vmatprep.subr.mxu0 %v169
    %535 = vmatpush1.msra.mxu0 %v168
    %536 = vmatprep.subr.mxu0 %v137
    %537 = vmatpush1.msra.mxu0 %v136
    %538 = vmatprep.subr.mxu0 %v105
    %539 = vmatpush1.msra.mxu0 %v104
    %540 = vmatprep.subr.mxu0 %v73
    %541 = vmatpush1.msra.mxu0 %v72
    %542 = vmatprep.subr.mxu0 0.0
    %543 = vmatpush2.msra.mxu0 0.0
    %544 = vmatprep.subr.mxu0 0.0
    %545 = vmatpush2.msra.mxu0 0.0
    %546 = vmatprep.subr.mxu0 0.0
    %547 = vmatpush2.msra.mxu0 0.0
    %548 = vmatprep.subr.mxu0 0.0
    %549 = vmatpush2.msra.mxu0 0.0
    %550 = vmatprep.subr.mxu0 0.0
    %551 = vmatpush2.msra.mxu0 0.0
    %552 = vmatprep.subr.mxu0 0.0
    %553 = vmatpush2.msra.mxu0 0.0
    %554 = vmatprep.subr.mxu0 0.0
    %555 = vmatpush2.msra.mxu0 0.0
    %556 = vmatprep.subr.mxu0 0.0
    %557 = vmatpush2.msra.mxu0 0.0
    %558 = vmatprep.subr.mxu0 0.0
    %559 = vmatpush2.msra.mxu0 0.0
    %560 = vmatprep.subr.mxu0 0.0
    %561 = vmatpush2.msra.mxu0 0.0
    %562 = vmatprep.subr.mxu0 0.0
    %563 = vmatpush2.msra.mxu0 0.0
    %564 = vmatprep.subr.mxu0 0.0
    %565 = vmatpush2.msra.mxu0 0.0
    %566 = vmatprep.subr.mxu0 0.0
    %567 = vmatpush2.msra.mxu0 0.0
    %568 = vmatprep.subr.mxu0 0.0
    %569 = vmatpush2.msra.mxu0 0.0
    %570 = vmatprep.subr.mxu0 0.0
    %571 = vmatpush2.msra.mxu0 0.0
    %572 = vmatprep.subr.mxu0 0.0
    %573 = vmatpush2.msra.mxu0 0.0
    %574 = vmatprep.mubr.f32.mxu0 0.0
    %575 = vmatmul.mubr.f32.gmra.mxu0 %v366
    %v576 = vpop.f32.mrf.mxu0
    %v577 = vadd.f32 %v223, %v576
    %v578 = vpop.f32.mrf.mxu0
    %v579 = vadd.f32 %v227, %v578
    %580 = vdwg.mxu0
    %581 = vmatprep.subr.mxu0 0.0
    %582 = vmatpush1.msra.mxu0 0.0
    %583 = vmatprep.subr.mxu0 0.0
    %584 = vmatpush1.msra.mxu0 0.0
    %585 = vmatprep.subr.mxu0 0.0
    %586 = vmatpush1.msra.mxu0 0.0
    %587 = vmatprep.subr.mxu0 0.0
    %588 = vmatpush1.msra.mxu0 0.0
    %589 = vmatprep.subr.mxu0 0.0
    %590 = vmatpush1.msra.mxu0 0.0
    %591 = vmatprep.subr.mxu0 0.0
    %592 = vmatpush1.msra.mxu0 0.0
    %593 = vmatprep.subr.mxu0 0.0
    %594 = vmatpush1.msra.mxu0 0.0
    %595 = vmatprep.subr.mxu0 0.0
    %596 = vmatpush1.msra.mxu0 0.0
    %597 = vmatprep.subr.mxu0 0.0
    %598 = vmatpush1.msra.mxu0 0.0
    %599 = vmatprep.subr.mxu0 0.0
    %600 = vmatpush1.msra.mxu0 0.0
    %601 = vmatprep.subr.mxu0 0.0
    %602 = vmatpush1.msra.mxu0 0.0
    %603 = vmatprep.subr.mxu0 0.0
    %604 = vmatpush1.msra.mxu0 0.0
    %605 = vmatprep.subr.mxu0 %v171
    %606 = vmatpush1.msra.mxu0 %v170
    %607 = vmatprep.subr.mxu0 %v139
    %608 = vmatpush1.msra.mxu0 %v138
    %609 = vmatprep.subr.mxu0 %v107
    %610 = vmatpush1.msra.mxu0 %v106
    %611 = vmatprep.subr.mxu0 %v75
    %612 = vmatpush1.msra.mxu0 %v74
    %613 = vmatprep.subr.mxu0 0.0
    %614 = vmatpush2.msra.mxu0 0.0
    %615 = vmatprep.subr.mxu0 0.0
    %616 = vmatpush2.msra.mxu0 0.0
    %617 = vmatprep.subr.mxu0 0.0
    %618 = vmatpush2.msra.mxu0 0.0
    %619 = vmatprep.subr.mxu0 0.0
    %620 = vmatpush2.msra.mxu0 0.0
    %621 = vmatprep.subr.mxu0 0.0
    %622 = vmatpush2.msra.mxu0 0.0
    %623 = vmatprep.subr.mxu0 0.0
    %624 = vmatpush2.msra.mxu0 0.0
    %625 = vmatprep.subr.mxu0 0.0
    %626 = vmatpush2.msra.mxu0 0.0
    %627 = vmatprep.subr.mxu0 0.0
    %628 = vmatpush2.msra.mxu0 0.0
    %629 = vmatprep.subr.mxu0 0.0
    %630 = vmatpush2.msra.mxu0 0.0
    %631 = vmatprep.subr.mxu0 0.0
    %632 = vmatpush2.msra.mxu0 0.0
    %633 = vmatprep.subr.mxu0 0.0
    %634 = vmatpush2.msra.mxu0 0.0
    %635 = vmatprep.subr.mxu0 0.0
    %636 = vmatpush2.msra.mxu0 0.0
    %637 = vmatprep.subr.mxu0 0.0
    %638 = vmatpush2.msra.mxu0 0.0
    %639 = vmatprep.subr.mxu0 0.0
    %640 = vmatpush2.msra.mxu0 0.0
    %641 = vmatprep.subr.mxu0 0.0
    %642 = vmatpush2.msra.mxu0 0.0
    %643 = vmatprep.subr.mxu0 0.0
    %644 = vmatpush2.msra.mxu0 0.0
    %645 = vmatprep.mubr.f32.mxu0 0.0
    %646 = vmatmul.mubr.f32.gmra.mxu0 %v366
    %v647 = vpop.f32.mrf.mxu0
    %v648 = vadd.f32 %v231, %v647
    %v649 = vpop.f32.mrf.mxu0
    %v650 = vadd.f32 %v235, %v649
    %651 = vdwg.mxu0
    %652 = vmatprep.subr.mxu0 0.0
    %653 = vmatpush1.msra.mxu0 0.0
    %654 = vmatprep.subr.mxu0 0.0
    %655 = vmatpush1.msra.mxu0 0.0
    %656 = vmatprep.subr.mxu0 0.0
    %657 = vmatpush1.msra.mxu0 0.0
    %658 = vmatprep.subr.mxu0 0.0
    %659 = vmatpush1.msra.mxu0 0.0
    %660 = vmatprep.subr.mxu0 0.0
    %661 = vmatpush1.msra.mxu0 0.0
    %662 = vmatprep.subr.mxu0 0.0
    %663 = vmatpush1.msra.mxu0 0.0
    %664 = vmatprep.subr.mxu0 0.0
    %665 = vmatpush1.msra.mxu0 0.0
    %666 = vmatprep.subr.mxu0 0.0
    %667 = vmatpush1.msra.mxu0 0.0
    %668 = vmatprep.subr.mxu0 0.0
    %669 = vmatpush1.msra.mxu0 0.0
    %670 = vmatprep.subr.mxu0 0.0
    %671 = vmatpush1.msra.mxu0 0.0
    %672 = vmatprep.subr.mxu0 0.0
    %673 = vmatpush1.msra.mxu0 0.0
    %674 = vmatprep.subr.mxu0 0.0
    %675 = vmatpush1.msra.mxu0 0.0
    %676 = vmatprep.subr.mxu0 %v173
    %677 = vmatpush1.msra.mxu0 %v172
    %678 = vmatprep.subr.mxu0 %v141
    %679 = vmatpush1.msra.mxu0 %v140
    %680 = vmatprep.subr.mxu0 %v109
    %681 = vmatpush1.msra.mxu0 %v108
    %682 = vmatprep.subr.mxu0 %v77
    %683 = vmatpush1.msra.mxu0 %v76
    %684 = vmatprep.subr.mxu0 0.0
    %685 = vmatpush2.msra.mxu0 0.0
    %686 = vmatprep.subr.mxu0 0.0
    %687 = vmatpush2.msra.mxu0 0.0
    %688 = vmatprep.subr.mxu0 0.0
    %689 = vmatpush2.msra.mxu0 0.0
    %690 = vmatprep.subr.mxu0 0.0
    %691 = vmatpush2.msra.mxu0 0.0
    %692 = vmatprep.subr.mxu0 0.0
    %693 = vmatpush2.msra.mxu0 0.0
    %694 = vmatprep.subr.mxu0 0.0
    %695 = vmatpush2.msra.mxu0 0.0
    %696 = vmatprep.subr.mxu0 0.0
    %697 = vmatpush2.msra.mxu0 0.0
    %698 = vmatprep.subr.mxu0 0.0
    %699 = vmatpush2.msra.mxu0 0.0
    %700 = vmatprep.subr.mxu0 0.0
    %701 = vmatpush2.msra.mxu0 0.0
    %702 = vmatprep.subr.mxu0 0.0
    %703 = vmatpush2.msra.mxu0 0.0
    %704 = vmatprep.subr.mxu0 0.0
    %705 = vmatpush2.msra.mxu0 0.0
    %706 = vmatprep.subr.mxu0 0.0
    %707 = vmatpush2.msra.mxu0 0.0
    %708 = vmatprep.subr.mxu0 0.0
    %709 = vmatpush2.msra.mxu0 0.0
    %710 = vmatprep.subr.mxu0 0.0
    %711 = vmatpush2.msra.mxu0 0.0
    %712 = vmatprep.subr.mxu0 0.0
    %713 = vmatpush2.msra.mxu0 0.0
    %714 = vmatprep.subr.mxu0 0.0
    %715 = vmatpush2.msra.mxu0 0.0
    %716 = vmatprep.mubr.f32.mxu0 0.0
    %717 = vmatmul.mubr.f32.gmra.mxu0 %v366
    %v718 = vpop.f32.mrf.mxu0
    %v719 = vadd.f32 %v239, %v718
    %v720 = vpop.f32.mrf.mxu0
    %v721 = vadd.f32 %v243, %v720
    %722 = vdwg.mxu0
    %723 = vmatprep.subr.mxu0 0.0
    %724 = vmatpush1.msra.mxu0 0.0
    %725 = vmatprep.subr.mxu0 0.0
    %726 = vmatpush1.msra.mxu0 0.0
    %727 = vmatprep.subr.mxu0 0.0
    %728 = vmatpush1.msra.mxu0 0.0
    %729 = vmatprep.subr.mxu0 0.0
    %730 = vmatpush1.msra.mxu0 0.0
    %731 = vmatprep.subr.mxu0 0.0
    %732 = vmatpush1.msra.mxu0 0.0
    %733 = vmatprep.subr.mxu0 0.0
    %734 = vmatpush1.msra.mxu0 0.0
    %735 = vmatprep.subr.mxu0 0.0
    %736 = vmatpush1.msra.mxu0 0.0
    %737 = vmatprep.subr.mxu0 0.0
    %738 = vmatpush1.msra.mxu0 0.0
    %739 = vmatprep.subr.mxu0 0.0
    %740 = vmatpush1.msra.mxu0 0.0
    %741 = vmatprep.subr.mxu0 0.0
    %742 = vmatpush1.msra.mxu0 0.0
    %743 = vmatprep.subr.mxu0 0.0
    %744 = vmatpush1.msra.mxu0 0.0
    %745 = vmatprep.subr.mxu0 0.0
    %746 = vmatpush1.msra.mxu0 0.0
    %747 = vmatprep.subr.mxu0 %v175
    %748 = vmatpush1.msra.mxu0 %v174
    %749 = vmatprep.subr.mxu0 %v143
    %750 = vmatpush1.msra.mxu0 %v142
    %751 = vmatprep.subr.mxu0 %v111
    %752 = vmatpush1.msra.mxu0 %v110
    %753 = vmatprep.subr.mxu0 %v79
    %754 = vmatpush1.msra.mxu0 %v78
    %755 = vmatprep.subr.mxu0 0.0
    %756 = vmatpush2.msra.mxu0 0.0
    %757 = vmatprep.subr.mxu0 0.0
    %758 = vmatpush2.msra.mxu0 0.0
    %759 = vmatprep.subr.mxu0 0.0
    %760 = vmatpush2.msra.mxu0 0.0
    %761 = vmatprep.subr.mxu0 0.0
    %762 = vmatpush2.msra.mxu0 0.0
    %763 = vmatprep.subr.mxu0 0.0
    %764 = vmatpush2.msra.mxu0 0.0
    %765 = vmatprep.subr.mxu0 0.0
    %766 = vmatpush2.msra.mxu0 0.0
    %767 = vmatprep.subr.mxu0 0.0
    %768 = vmatpush2.msra.mxu0 0.0
    %769 = vmatprep.subr.mxu0 0.0
    %770 = vmatpush2.msra.mxu0 0.0
    %771 = vmatprep.subr.mxu0 0.0
    %772 = vmatpush2.msra.mxu0 0.0
    %773 = vmatprep.subr.mxu0 0.0
    %774 = vmatpush2.msra.mxu0 0.0
    %775 = vmatprep.subr.mxu0 0.0
    %776 = vmatpush2.msra.mxu0 0.0
    %777 = vmatprep.subr.mxu0 0.0
    %778 = vmatpush2.msra.mxu0 0.0
    %779 = vmatprep.subr.mxu0 0.0
    %780 = vmatpush2.msra.mxu0 0.0
    %781 = vmatprep.subr.mxu0 0.0
    %782 = vmatpush2.msra.mxu0 0.0
    %783 = vmatprep.subr.mxu0 0.0
    %784 = vmatpush2.msra.mxu0 0.0
    %785 = vmatprep.subr.mxu0 0.0
    %786 = vmatpush2.msra.mxu0 0.0
    %787 = vmatprep.mubr.f32.mxu0 0.0
    %788 = vmatmul.mubr.f32.gmra.mxu0 %v366
    %v789 = vpop.f32.mrf.mxu0
    %v790 = vadd.f32 %v247, %v789
    %v791 = vpop.f32.mrf.mxu0
    %v792 = vadd.f32 %v251, %v791
    %793 = vdwg.mxu0
    %794 = vmatprep.subr.mxu0 0.0
    %795 = vmatpush1.msra.mxu0 0.0
    %796 = vmatprep.subr.mxu0 0.0
    %797 = vmatpush1.msra.mxu0 0.0
    %798 = vmatprep.subr.mxu0 0.0
    %799 = vmatpush1.msra.mxu0 0.0
    %800 = vmatprep.subr.mxu0 0.0
    %801 = vmatpush1.msra.mxu0 0.0
    %802 = vmatprep.subr.mxu0 0.0
    %803 = vmatpush1.msra.mxu0 0.0
    %804 = vmatprep.subr.mxu0 0.0
    %805 = vmatpush1.msra.mxu0 0.0
    %806 = vmatprep.subr.mxu0 0.0
    %807 = vmatpush1.msra.mxu0 0.0
    %808 = vmatprep.subr.mxu0 0.0
    %809 = vmatpush1.msra.mxu0 0.0
    %810 = vmatprep.subr.mxu0 0.0
    %811 = vmatpush1.msra.mxu0 0.0
    %812 = vmatprep.subr.mxu0 0.0
    %813 = vmatpush1.msra.mxu0 0.0
    %814 = vmatprep.subr.mxu0 0.0
    %815 = vmatpush1.msra.mxu0 0.0
    %816 = vmatprep.subr.mxu0 0.0
    %817 = vmatpush1.msra.mxu0 0.0
    %818 = vmatprep.subr.mxu0 %v177
    %819 = vmatpush1.msra.mxu0 %v176
    %820 = vmatprep.subr.mxu0 %v145
    %821 = vmatpush1.msra.mxu0 %v144
    %822 = vmatprep.subr.mxu0 %v113
    %823 = vmatpush1.msra.mxu0 %v112
    %824 = vmatprep.subr.mxu0 %v81
    %825 = vmatpush1.msra.mxu0 %v80
    %826 = vmatprep.subr.mxu0 0.0
    %827 = vmatpush2.msra.mxu0 0.0
    %828 = vmatprep.subr.mxu0 0.0
    %829 = vmatpush2.msra.mxu0 0.0
    %830 = vmatprep.subr.mxu0 0.0
    %831 = vmatpush2.msra.mxu0 0.0
    %832 = vmatprep.subr.mxu0 0.0
    %833 = vmatpush2.msra.mxu0 0.0
    %834 = vmatprep.subr.mxu0 0.0
    %835 = vmatpush2.msra.mxu0 0.0
    %836 = vmatprep.subr.mxu0 0.0
    %837 = vmatpush2.msra.mxu0 0.0
    %838 = vmatprep.subr.mxu0 0.0
    %839 = vmatpush2.msra.mxu0 0.0
    %840 = vmatprep.subr.mxu0 0.0
    %841 = vmatpush2.msra.mxu0 0.0
    %842 = vmatprep.subr.mxu0 0.0
    %843 = vmatpush2.msra.mxu0 0.0
    %844 = vmatprep.subr.mxu0 0.0
    %845 = vmatpush2.msra.mxu0 0.0
    %846 = vmatprep.subr.mxu0 0.0
    %847 = vmatpush2.msra.mxu0 0.0
    %848 = vmatprep.subr.mxu0 0.0
    %849 = vmatpush2.msra.mxu0 0.0
    %850 = vmatprep.subr.mxu0 0.0
    %851 = vmatpush2.msra.mxu0 0.0
    %852 = vmatprep.subr.mxu0 0.0
    %853 = vmatpush2.msra.mxu0 0.0
    %854 = vmatprep.subr.mxu0 0.0
    %855 = vmatpush2.msra.mxu0 0.0
    %856 = vmatprep.subr.mxu0 0.0
    %857 = vmatpush2.msra.mxu0 0.0
    %858 = vmatprep.mubr.f32.mxu0 0.0
    %859 = vmatmul.mubr.f32.gmra.mxu0 %v366
    %v860 = vpop.f32.mrf.mxu0
    %v861 = vadd.f32 %v255, %v860
    %v862 = vpop.f32.mrf.mxu0
    %v863 = vadd.f32 %v259, %v862
    %864 = vdwg.mxu0
    %865 = vmatprep.subr.mxu0 0.0
    %866 = vmatpush1.msra.mxu0 0.0
    %867 = vmatprep.subr.mxu0 0.0
    %868 = vmatpush1.msra.mxu0 0.0
    %869 = vmatprep.subr.mxu0 0.0
    %870 = vmatpush1.msra.mxu0 0.0
    %871 = vmatprep.subr.mxu0 0.0
    %872 = vmatpush1.msra.mxu0 0.0
    %873 = vmatprep.subr.mxu0 0.0
    %874 = vmatpush1.msra.mxu0 0.0
    %875 = vmatprep.subr.mxu0 0.0
    %876 = vmatpush1.msra.mxu0 0.0
    %877 = vmatprep.subr.mxu0 0.0
    %878 = vmatpush1.msra.mxu0 0.0
    %879 = vmatprep.subr.mxu0 0.0
    %880 = vmatpush1.msra.mxu0 0.0
    %881 = vmatprep.subr.mxu0 0.0
    %882 = vmatpush1.msra.mxu0 0.0
    %883 = vmatprep.subr.mxu0 0.0
    %884 = vmatpush1.msra.mxu0 0.0
    %885 = vmatprep.subr.mxu0 0.0
    %886 = vmatpush1.msra.mxu0 0.0
    %887 = vmatprep.subr.mxu0 0.0
    %888 = vmatpush1.msra.mxu0 0.0
    %889 = vmatprep.subr.mxu0 %v179
    %890 = vmatpush1.msra.mxu0 %v178
    %891 = vmatprep.subr.mxu0 %v147
    %892 = vmatpush1.msra.mxu0 %v146
    %893 = vmatprep.subr.mxu0 %v115
    %894 = vmatpush1.msra.mxu0 %v114
    %895 = vmatprep.subr.mxu0 %v83
    %896 = vmatpush1.msra.mxu0 %v82
    %897 = vmatprep.subr.mxu0 0.0
    %898 = vmatpush2.msra.mxu0 0.0
    %899 = vmatprep.subr.mxu0 0.0
    %900 = vmatpush2.msra.mxu0 0.0
    %901 = vmatprep.subr.mxu0 0.0
    %902 = vmatpush2.msra.mxu0 0.0
    %903 = vmatprep.subr.mxu0 0.0
    %904 = vmatpush2.msra.mxu0 0.0
    %905 = vmatprep.subr.mxu0 0.0
    %906 = vmatpush2.msra.mxu0 0.0
    %907 = vmatprep.subr.mxu0 0.0
    %908 = vmatpush2.msra.mxu0 0.0
    %909 = vmatprep.subr.mxu0 0.0
    %910 = vmatpush2.msra.mxu0 0.0
    %911 = vmatprep.subr.mxu0 0.0
    %912 = vmatpush2.msra.mxu0 0.0
    %913 = vmatprep.subr.mxu0 0.0
    %914 = vmatpush2.msra.mxu0 0.0
    %915 = vmatprep.subr.mxu0 0.0
    %916 = vmatpush2.msra.mxu0 0.0
    %917 = vmatprep.subr.mxu0 0.0
    %918 = vmatpush2.msra.mxu0 0.0
    %919 = vmatprep.subr.mxu0 0.0
    %920 = vmatpush2.msra.mxu0 0.0
    %921 = vmatprep.subr.mxu0 0.0
    %922 = vmatpush2.msra.mxu0 0.0
    %923 = vmatprep.subr.mxu0 0.0
    %924 = vmatpush2.msra.mxu0 0.0
    %925 = vmatprep.subr.mxu0 0.0
    %926 = vmatpush2.msra.mxu0 0.0
    %927 = vmatprep.subr.mxu0 0.0
    %928 = vmatpush2.msra.mxu0 0.0
    %929 = vmatprep.mubr.f32.mxu0 0.0
    %930 = vmatmul.mubr.f32.gmra.mxu0 %v366
    %v931 = vpop.f32.mrf.mxu0
    %v932 = vadd.f32 %v263, %v931
    %v933 = vpop.f32.mrf.mxu0
    %v934 = vadd.f32 %v267, %v933
    %935 = vdwg.mxu0
    %936 = vmatprep.subr.mxu0 0.0
    %937 = vmatpush1.msra.mxu0 0.0
    %938 = vmatprep.subr.mxu0 0.0
    %939 = vmatpush1.msra.mxu0 0.0
    %940 = vmatprep.subr.mxu0 0.0
    %941 = vmatpush1.msra.mxu0 0.0
    %942 = vmatprep.subr.mxu0 0.0
    %943 = vmatpush1.msra.mxu0 0.0
    %944 = vmatprep.subr.mxu0 0.0
    %945 = vmatpush1.msra.mxu0 0.0
    %946 = vmatprep.subr.mxu0 0.0
    %947 = vmatpush1.msra.mxu0 0.0
    %948 = vmatprep.subr.mxu0 0.0
    %949 = vmatpush1.msra.mxu0 0.0
    %950 = vmatprep.subr.mxu0 0.0
    %951 = vmatpush1.msra.mxu0 0.0
    %952 = vmatprep.subr.mxu0 0.0
    %953 = vmatpush1.msra.mxu0 0.0
    %954 = vmatprep.subr.mxu0 0.0
    %955 = vmatpush1.msra.mxu0 0.0
    %956 = vmatprep.subr.mxu0 0.0
    %957 = vmatpush1.msra.mxu0 0.0
    %958 = vmatprep.subr.mxu0 0.0
    %959 = vmatpush1.msra.mxu0 0.0
    %960 = vmatprep.subr.mxu0 %v181
    %961 = vmatpush1.msra.mxu0 %v180
    %962 = vmatprep.subr.mxu0 %v149
    %963 = vmatpush1.msra.mxu0 %v148
    %964 = vmatprep.subr.mxu0 %v117
    %965 = vmatpush1.msra.mxu0 %v116
    %966 = vmatprep.subr.mxu0 %v85
    %967 = vmatpush1.msra.mxu0 %v84
    %968 = vmatprep.subr.mxu0 0.0
    %969 = vmatpush2.msra.mxu0 0.0
    %970 = vmatprep.subr.mxu0 0.0
    %971 = vmatpush2.msra.mxu0 0.0
    %972 = vmatprep.subr.mxu0 0.0
    %973 = vmatpush2.msra.mxu0 0.0
    %974 = vmatprep.subr.mxu0 0.0
    %975 = vmatpush2.msra.mxu0 0.0
    %976 = vmatprep.subr.mxu0 0.0
    %977 = vmatpush2.msra.mxu0 0.0
    %978 = vmatprep.subr.mxu0 0.0
    %979 = vmatpush2.msra.mxu0 0.0
    %980 = vmatprep.subr.mxu0 0.0
    %981 = vmatpush2.msra.mxu0 0.0
    %982 = vmatprep.subr.mxu0 0.0
    %983 = vmatpush2.msra.mxu0 0.0
    %984 = vmatprep.subr.mxu0 0.0
    %985 = vmatpush2.msra.mxu0 0.0
    %986 = vmatprep.subr.mxu0 0.0
    %987 = vmatpush2.msra.mxu0 0.0
    %988 = vmatprep.subr.mxu0 0.0
    %989 = vmatpush2.msra.mxu0 0.0
    %990 = vmatprep.subr.mxu0 0.0
    %991 = vmatpush2.msra.mxu0 0.0
    %992 = vmatprep.subr.mxu0 0.0
    %993 = vmatpush2.msra.mxu0 0.0
    %994 = vmatprep.subr.mxu0 0.0
    %995 = vmatpush2.msra.mxu0 0.0
    %996 = vmatprep.subr.mxu0 0.0
    %997 = vmatpush2.msra.mxu0 0.0
    %998 = vmatprep.subr.mxu0 0.0
    %999 = vmatpush2.msra.mxu0 0.0
    %1000 = vmatprep.mubr.f32.mxu0 0.0
    %1001 = vmatmul.mubr.f32.gmra.mxu0 %v366
    %v1002 = vpop.f32.mrf.mxu0
    %v1003 = vadd.f32 %v271, %v1002
    %v1004 = vpop.f32.mrf.mxu0
    %v1005 = vadd.f32 %v275, %v1004
    %1006 = vdwg.mxu0
    %1007 = vmatprep.subr.mxu0 0.0
    %1008 = vmatpush1.msra.mxu0 0.0
    %1009 = vmatprep.subr.mxu0 0.0
    %1010 = vmatpush1.msra.mxu0 0.0
    %1011 = vmatprep.subr.mxu0 0.0
    %1012 = vmatpush1.msra.mxu0 0.0
    %1013 = vmatprep.subr.mxu0 0.0
    %1014 = vmatpush1.msra.mxu0 0.0
    %1015 = vmatprep.subr.mxu0 0.0
    %1016 = vmatpush1.msra.mxu0 0.0
    %1017 = vmatprep.subr.mxu0 0.0
    %1018 = vmatpush1.msra.mxu0 0.0
    %1019 = vmatprep.subr.mxu0 0.0
    %1020 = vmatpush1.msra.mxu0 0.0
    %1021 = vmatprep.subr.mxu0 0.0
    %1022 = vmatpush1.msra.mxu0 0.0
    %1023 = vmatprep.subr.mxu0 0.0
    %1024 = vmatpush1.msra.mxu0 0.0
    %1025 = vmatprep.subr.mxu0 0.0
    %1026 = vmatpush1.msra.mxu0 0.0
    %1027 = vmatprep.subr.mxu0 0.0
    %1028 = vmatpush1.msra.mxu0 0.0
    %1029 = vmatprep.subr.mxu0 0.0
    %1030 = vmatpush1.msra.mxu0 0.0
    %1031 = vmatprep.subr.mxu0 %v183
    %1032 = vmatpush1.msra.mxu0 %v182
    %1033 = vmatprep.subr.mxu0 %v151
    %1034 = vmatpush1.msra.mxu0 %v150
    %1035 = vmatprep.subr.mxu0 %v119
    %1036 = vmatpush1.msra.mxu0 %v118
    %1037 = vmatprep.subr.mxu0 %v87
    %1038 = vmatpush1.msra.mxu0 %v86
    %1039 = vmatprep.subr.mxu0 0.0
    %1040 = vmatpush2.msra.mxu0 0.0
    %1041 = vmatprep.subr.mxu0 0.0
    %1042 = vmatpush2.msra.mxu0 0.0
    %1043 = vmatprep.subr.mxu0 0.0
    %1044 = vmatpush2.msra.mxu0 0.0
    %1045 = vmatprep.subr.mxu0 0.0
    %1046 = vmatpush2.msra.mxu0 0.0
    %1047 = vmatprep.subr.mxu0 0.0
    %1048 = vmatpush2.msra.mxu0 0.0
    %1049 = vmatprep.subr.mxu0 0.0
    %1050 = vmatpush2.msra.mxu0 0.0
    %1051 = vmatprep.subr.mxu0 0.0
    %1052 = vmatpush2.msra.mxu0 0.0
    %1053 = vmatprep.subr.mxu0 0.0
    %1054 = vmatpush2.msra.mxu0 0.0
    %1055 = vmatprep.subr.mxu0 0.0
    %1056 = vmatpush2.msra.mxu0 0.0
    %1057 = vmatprep.subr.mxu0 0.0
    %1058 = vmatpush2.msra.mxu0 0.0
    %1059 = vmatprep.subr.mxu0 0.0
    %1060 = vmatpush2.msra.mxu0 0.0
    %1061 = vmatprep.subr.mxu0 0.0
    %1062 = vmatpush2.msra.mxu0 0.0
    %1063 = vmatprep.subr.mxu0 0.0
    %1064 = vmatpush2.msra.mxu0 0.0
    %1065 = vmatprep.subr.mxu0 0.0
    %1066 = vmatpush2.msra.mxu0 0.0
    %1067 = vmatprep.subr.mxu0 0.0
    %1068 = vmatpush2.msra.mxu0 0.0
    %1069 = vmatprep.subr.mxu0 0.0
    %1070 = vmatpush2.msra.mxu0 0.0
    %1071 = vmatprep.mubr.f32.mxu0 0.0
    %1072 = vmatmul.mubr.f32.gmra.mxu0 %v366
    %v1073 = vpop.f32.mrf.mxu0
    %v1074 = vadd.f32 %v279, %v1073
    %v1075 = vpop.f32.mrf.mxu0
    %v1076 = vadd.f32 %v283, %v1075
    %1077 = vdwg.mxu0
    %1078 = vmatprep.subr.mxu0 0.0
    %1079 = vmatpush1.msra.mxu0 0.0
    %1080 = vmatprep.subr.mxu0 0.0
    %1081 = vmatpush1.msra.mxu0 0.0
    %1082 = vmatprep.subr.mxu0 0.0
    %1083 = vmatpush1.msra.mxu0 0.0
    %1084 = vmatprep.subr.mxu0 0.0
    %1085 = vmatpush1.msra.mxu0 0.0
    %1086 = vmatprep.subr.mxu0 0.0
    %1087 = vmatpush1.msra.mxu0 0.0
    %1088 = vmatprep.subr.mxu0 0.0
    %1089 = vmatpush1.msra.mxu0 0.0
    %1090 = vmatprep.subr.mxu0 0.0
    %1091 = vmatpush1.msra.mxu0 0.0
    %1092 = vmatprep.subr.mxu0 0.0
    %1093 = vmatpush1.msra.mxu0 0.0
    %1094 = vmatprep.subr.mxu0 0.0
    %1095 = vmatpush1.msra.mxu0 0.0
    %1096 = vmatprep.subr.mxu0 0.0
    %1097 = vmatpush1.msra.mxu0 0.0
    %1098 = vmatprep.subr.mxu0 0.0
    %1099 = vmatpush1.msra.mxu0 0.0
    %1100 = vmatprep.subr.mxu0 0.0
    %1101 = vmatpush1.msra.mxu0 0.0
    %1102 = vmatprep.subr.mxu0 %v185
    %1103 = vmatpush1.msra.mxu0 %v184
    %1104 = vmatprep.subr.mxu0 %v153
    %1105 = vmatpush1.msra.mxu0 %v152
    %1106 = vmatprep.subr.mxu0 %v121
    %1107 = vmatpush1.msra.mxu0 %v120
    %1108 = vmatprep.subr.mxu0 %v89
    %1109 = vmatpush1.msra.mxu0 %v88
    %1110 = vmatprep.subr.mxu0 0.0
    %1111 = vmatpush2.msra.mxu0 0.0
    %1112 = vmatprep.subr.mxu0 0.0
    %1113 = vmatpush2.msra.mxu0 0.0
    %1114 = vmatprep.subr.mxu0 0.0
    %1115 = vmatpush2.msra.mxu0 0.0
    %1116 = vmatprep.subr.mxu0 0.0
    %1117 = vmatpush2.msra.mxu0 0.0
    %1118 = vmatprep.subr.mxu0 0.0
    %1119 = vmatpush2.msra.mxu0 0.0
    %1120 = vmatprep.subr.mxu0 0.0
    %1121 = vmatpush2.msra.mxu0 0.0
    %1122 = vmatprep.subr.mxu0 0.0
    %1123 = vmatpush2.msra.mxu0 0.0
    %1124 = vmatprep.subr.mxu0 0.0
    %1125 = vmatpush2.msra.mxu0 0.0
    %1126 = vmatprep.subr.mxu0 0.0
    %1127 = vmatpush2.msra.mxu0 0.0
    %1128 = vmatprep.subr.mxu0 0.0
    %1129 = vmatpush2.msra.mxu0 0.0
    %1130 = vmatprep.subr.mxu0 0.0
    %1131 = vmatpush2.msra.mxu0 0.0
    %1132 = vmatprep.subr.mxu0 0.0
    %1133 = vmatpush2.msra.mxu0 0.0
    %1134 = vmatprep.subr.mxu0 0.0
    %1135 = vmatpush2.msra.mxu0 0.0
    %1136 = vmatprep.subr.mxu0 0.0
    %1137 = vmatpush2.msra.mxu0 0.0
    %1138 = vmatprep.subr.mxu0 0.0
    %1139 = vmatpush2.msra.mxu0 0.0
    %1140 = vmatprep.subr.mxu0 0.0
    %1141 = vmatpush2.msra.mxu0 0.0
    %1142 = vmatprep.mubr.f32.mxu0 0.0
    %1143 = vmatmul.mubr.f32.gmra.mxu0 %v366
    %v1144 = vpop.f32.mrf.mxu0
    %v1145 = vadd.f32 %v287, %v1144
    %v1146 = vpop.f32.mrf.mxu0
    %v1147 = vadd.f32 %v291, %v1146
    %1148 = vdwg.mxu0
    %1149 = vmatprep.subr.mxu0 0.0
    %1150 = vmatpush1.msra.mxu0 0.0
    %1151 = vmatprep.subr.mxu0 0.0
    %1152 = vmatpush1.msra.mxu0 0.0
    %1153 = vmatprep.subr.mxu0 0.0
    %1154 = vmatpush1.msra.mxu0 0.0
    %1155 = vmatprep.subr.mxu0 0.0
    %1156 = vmatpush1.msra.mxu0 0.0
    %1157 = vmatprep.subr.mxu0 0.0
    %1158 = vmatpush1.msra.mxu0 0.0
    %1159 = vmatprep.subr.mxu0 0.0
    %1160 = vmatpush1.msra.mxu0 0.0
    %1161 = vmatprep.subr.mxu0 0.0
    %1162 = vmatpush1.msra.mxu0 0.0
    %1163 = vmatprep.subr.mxu0 0.0
    %1164 = vmatpush1.msra.mxu0 0.0
    %1165 = vmatprep.subr.mxu0 0.0
    %1166 = vmatpush1.msra.mxu0 0.0
    %1167 = vmatprep.subr.mxu0 0.0
    %1168 = vmatpush1.msra.mxu0 0.0
    %1169 = vmatprep.subr.mxu0 0.0
    %1170 = vmatpush1.msra.mxu0 0.0
    %1171 = vmatprep.subr.mxu0 0.0
    %1172 = vmatpush1.msra.mxu0 0.0
    %1173 = vmatprep.subr.mxu0 %v187
    %1174 = vmatpush1.msra.mxu0 %v186
    %1175 = vmatprep.subr.mxu0 %v155
    %1176 = vmatpush1.msra.mxu0 %v154
    %1177 = vmatprep.subr.mxu0 %v123
    %1178 = vmatpush1.msra.mxu0 %v122
    %1179 = vmatprep.subr.mxu0 %v91
    %1180 = vmatpush1.msra.mxu0 %v90
    %1181 = vmatprep.subr.mxu0 0.0
    %1182 = vmatpush2.msra.mxu0 0.0
    %1183 = vmatprep.subr.mxu0 0.0
    %1184 = vmatpush2.msra.mxu0 0.0
    %1185 = vmatprep.subr.mxu0 0.0
    %1186 = vmatpush2.msra.mxu0 0.0
    %1187 = vmatprep.subr.mxu0 0.0
    %1188 = vmatpush2.msra.mxu0 0.0
    %1189 = vmatprep.subr.mxu0 0.0
    %1190 = vmatpush2.msra.mxu0 0.0
    %1191 = vmatprep.subr.mxu0 0.0
    %1192 = vmatpush2.msra.mxu0 0.0
    %1193 = vmatprep.subr.mxu0 0.0
    %1194 = vmatpush2.msra.mxu0 0.0
    %1195 = vmatprep.subr.mxu0 0.0
    %1196 = vmatpush2.msra.mxu0 0.0
    %1197 = vmatprep.subr.mxu0 0.0
    %1198 = vmatpush2.msra.mxu0 0.0
    %1199 = vmatprep.subr.mxu0 0.0
    %1200 = vmatpush2.msra.mxu0 0.0
    %1201 = vmatprep.subr.mxu0 0.0
    %1202 = vmatpush2.msra.mxu0 0.0
    %1203 = vmatprep.subr.mxu0 0.0
    %1204 = vmatpush2.msra.mxu0 0.0
    %1205 = vmatprep.subr.mxu0 0.0
    %1206 = vmatpush2.msra.mxu0 0.0
    %1207 = vmatprep.subr.mxu0 0.0
    %1208 = vmatpush2.msra.mxu0 0.0
    %1209 = vmatprep.subr.mxu0 0.0
    %1210 = vmatpush2.msra.mxu0 0.0
    %1211 = vmatprep.subr.mxu0 0.0
    %1212 = vmatpush2.msra.mxu0 0.0
    %1213 = vmatprep.mubr.f32.mxu0 0.0
    %1214 = vmatmul.mubr.f32.gmra.mxu0 %v366
    %v1215 = vpop.f32.mrf.mxu0
    %v1216 = vadd.f32 %v295, %v1215
    %v1217 = vpop.f32.mrf.mxu0
    %v1218 = vadd.f32 %v299, %v1217
    %1219 = vdwg.mxu0
    %1220 = vmatprep.subr.mxu0 0.0
    %1221 = vmatpush1.msra.mxu0 0.0
    %1222 = vmatprep.subr.mxu0 0.0
    %1223 = vmatpush1.msra.mxu0 0.0
    %1224 = vmatprep.subr.mxu0 0.0
    %1225 = vmatpush1.msra.mxu0 0.0
    %1226 = vmatprep.subr.mxu0 0.0
    %1227 = vmatpush1.msra.mxu0 0.0
    %1228 = vmatprep.subr.mxu0 0.0
    %1229 = vmatpush1.msra.mxu0 0.0
    %1230 = vmatprep.subr.mxu0 0.0
    %1231 = vmatpush1.msra.mxu0 0.0
    %1232 = vmatprep.subr.mxu0 0.0
    %1233 = vmatpush1.msra.mxu0 0.0
    %1234 = vmatprep.subr.mxu0 0.0
    %1235 = vmatpush1.msra.mxu0 0.0
    %1236 = vmatprep.subr.mxu0 0.0
    %1237 = vmatpush1.msra.mxu0 0.0
    %1238 = vmatprep.subr.mxu0 0.0
    %1239 = vmatpush1.msra.mxu0 0.0
    %1240 = vmatprep.subr.mxu0 0.0
    %1241 = vmatpush1.msra.mxu0 0.0
    %1242 = vmatprep.subr.mxu0 0.0
    %1243 = vmatpush1.msra.mxu0 0.0
    %1244 = vmatprep.subr.mxu0 %v189
    %1245 = vmatpush1.msra.mxu0 %v188
    %1246 = vmatprep.subr.mxu0 %v157
    %1247 = vmatpush1.msra.mxu0 %v156
    %1248 = vmatprep.subr.mxu0 %v125
    %1249 = vmatpush1.msra.mxu0 %v124
    %1250 = vmatprep.subr.mxu0 %v93
    %1251 = vmatpush1.msra.mxu0 %v92
    %1252 = vmatprep.subr.mxu0 0.0
    %1253 = vmatpush2.msra.mxu0 0.0
    %1254 = vmatprep.subr.mxu0 0.0
    %1255 = vmatpush2.msra.mxu0 0.0
    %1256 = vmatprep.subr.mxu0 0.0
    %1257 = vmatpush2.msra.mxu0 0.0
    %1258 = vmatprep.subr.mxu0 0.0
    %1259 = vmatpush2.msra.mxu0 0.0
    %1260 = vmatprep.subr.mxu0 0.0
    %1261 = vmatpush2.msra.mxu0 0.0
    %1262 = vmatprep.subr.mxu0 0.0
    %1263 = vmatpush2.msra.mxu0 0.0
    %1264 = vmatprep.subr.mxu0 0.0
    %1265 = vmatpush2.msra.mxu0 0.0
    %1266 = vmatprep.subr.mxu0 0.0
    %1267 = vmatpush2.msra.mxu0 0.0
    %1268 = vmatprep.subr.mxu0 0.0
    %1269 = vmatpush2.msra.mxu0 0.0
    %1270 = vmatprep.subr.mxu0 0.0
    %1271 = vmatpush2.msra.mxu0 0.0
    %1272 = vmatprep.subr.mxu0 0.0
    %1273 = vmatpush2.msra.mxu0 0.0
    %1274 = vmatprep.subr.mxu0 0.0
    %1275 = vmatpush2.msra.mxu0 0.0
    %1276 = vmatprep.subr.mxu0 0.0
    %1277 = vmatpush2.msra.mxu0 0.0
    %1278 = vmatprep.subr.mxu0 0.0
    %1279 = vmatpush2.msra.mxu0 0.0
    %1280 = vmatprep.subr.mxu0 0.0
    %1281 = vmatpush2.msra.mxu0 0.0
    %1282 = vmatprep.subr.mxu0 0.0
    %1283 = vmatpush2.msra.mxu0 0.0
    %1284 = vmatprep.mubr.f32.mxu0 0.0
    %1285 = vmatmul.mubr.f32.gmra.mxu0 %v366
    %v1286 = vpop.f32.mrf.mxu0
    %v1287 = vadd.f32 %v303, %v1286
    %v1288 = vpop.f32.mrf.mxu0
    %v1289 = vadd.f32 %v307, %v1288
    %1290 = vdwg.mxu0
    %1291 = vmatprep.subr.mxu0 0.0
    %1292 = vmatpush1.msra.mxu0 0.0
    %1293 = vmatprep.subr.mxu0 0.0
    %1294 = vmatpush1.msra.mxu0 0.0
    %1295 = vmatprep.subr.mxu0 0.0
    %1296 = vmatpush1.msra.mxu0 0.0
    %1297 = vmatprep.subr.mxu0 0.0
    %1298 = vmatpush1.msra.mxu0 0.0
    %1299 = vmatprep.subr.mxu0 0.0
    %1300 = vmatpush1.msra.mxu0 0.0
    %1301 = vmatprep.subr.mxu0 0.0
    %1302 = vmatpush1.msra.mxu0 0.0
    %1303 = vmatprep.subr.mxu0 0.0
    %1304 = vmatpush1.msra.mxu0 0.0
    %1305 = vmatprep.subr.mxu0 0.0
    %1306 = vmatpush1.msra.mxu0 0.0
    %1307 = vmatprep.subr.mxu0 0.0
    %1308 = vmatpush1.msra.mxu0 0.0
    %1309 = vmatprep.subr.mxu0 0.0
    %1310 = vmatpush1.msra.mxu0 0.0
    %1311 = vmatprep.subr.mxu0 0.0
    %1312 = vmatpush1.msra.mxu0 0.0
    %1313 = vmatprep.subr.mxu0 0.0
    %1314 = vmatpush1.msra.mxu0 0.0
    %1315 = vmatprep.subr.mxu0 %v191
    %1316 = vmatpush1.msra.mxu0 %v190
    %1317 = vmatprep.subr.mxu0 %v159
    %1318 = vmatpush1.msra.mxu0 %v158
    %1319 = vmatprep.subr.mxu0 %v127
    %1320 = vmatpush1.msra.mxu0 %v126
    %1321 = vmatprep.subr.mxu0 %v95
    %1322 = vmatpush1.msra.mxu0 %v94
    %1323 = vmatprep.subr.mxu0 0.0
    %1324 = vmatpush2.msra.mxu0 0.0
    %1325 = vmatprep.subr.mxu0 0.0
    %1326 = vmatpush2.msra.mxu0 0.0
    %1327 = vmatprep.subr.mxu0 0.0
    %1328 = vmatpush2.msra.mxu0 0.0
    %1329 = vmatprep.subr.mxu0 0.0
    %1330 = vmatpush2.msra.mxu0 0.0
    %1331 = vmatprep.subr.mxu0 0.0
    %1332 = vmatpush2.msra.mxu0 0.0
    %1333 = vmatprep.subr.mxu0 0.0
    %1334 = vmatpush2.msra.mxu0 0.0
    %1335 = vmatprep.subr.mxu0 0.0
    %1336 = vmatpush2.msra.mxu0 0.0
    %1337 = vmatprep.subr.mxu0 0.0
    %1338 = vmatpush2.msra.mxu0 0.0
    %1339 = vmatprep.subr.mxu0 0.0
    %1340 = vmatpush2.msra.mxu0 0.0
    %1341 = vmatprep.subr.mxu0 0.0
    %1342 = vmatpush2.msra.mxu0 0.0
    %1343 = vmatprep.subr.mxu0 0.0
    %1344 = vmatpush2.msra.mxu0 0.0
    %1345 = vmatprep.subr.mxu0 0.0
    %1346 = vmatpush2.msra.mxu0 0.0
    %1347 = vmatprep.subr.mxu0 0.0
    %1348 = vmatpush2.msra.mxu0 0.0
    %1349 = vmatprep.subr.mxu0 0.0
    %1350 = vmatpush2.msra.mxu0 0.0
    %1351 = vmatprep.subr.mxu0 0.0
    %1352 = vmatpush2.msra.mxu0 0.0
    %1353 = vmatprep.subr.mxu0 0.0
    %1354 = vmatpush2.msra.mxu0 0.0
    %1355 = vmatprep.mubr.f32.mxu0 0.0
    %1356 = vmatmul.mubr.f32.gmra.mxu0 %v366
    %v1357 = vpop.f32.mrf.mxu0
    %v1358 = vadd.f32 %v311, %v1357
    %v1359 = vpop.f32.mrf.mxu0
    %v1360 = vadd.f32 %v315, %v1359
    %1361 = vdwg.mxu0
    %1362 = vmatprep.subr.mxu0 0.0
    %1363 = vmatpush1.msra.mxu0 0.0
    %1364 = vmatprep.subr.mxu0 0.0
    %1365 = vmatpush1.msra.mxu0 0.0
    %1366 = vmatprep.subr.mxu0 0.0
    %1367 = vmatpush1.msra.mxu0 0.0
    %1368 = vmatprep.subr.mxu0 0.0
    %1369 = vmatpush1.msra.mxu0 0.0
    %1370 = vmatprep.subr.mxu0 0.0
    %1371 = vmatpush1.msra.mxu0 0.0
    %1372 = vmatprep.subr.mxu0 0.0
    %1373 = vmatpush1.msra.mxu0 0.0
    %1374 = vmatprep.subr.mxu0 0.0
    %1375 = vmatpush1.msra.mxu0 0.0
    %1376 = vmatprep.subr.mxu0 0.0
    %1377 = vmatpush1.msra.mxu0 0.0
    %1378 = vmatprep.subr.mxu0 0.0
    %1379 = vmatpush1.msra.mxu0 0.0
    %1380 = vmatprep.subr.mxu0 0.0
    %1381 = vmatpush1.msra.mxu0 0.0
    %1382 = vmatprep.subr.mxu0 0.0
    %1383 = vmatpush1.msra.mxu0 0.0
    %1384 = vmatprep.subr.mxu0 0.0
    %1385 = vmatpush1.msra.mxu0 0.0
    %1386 = vmatprep.subr.mxu0 %v193
    %1387 = vmatpush1.msra.mxu0 %v192
    %1388 = vmatprep.subr.mxu0 %v161
    %1389 = vmatpush1.msra.mxu0 %v160
    %1390 = vmatprep.subr.mxu0 %v129
    %1391 = vmatpush1.msra.mxu0 %v128
    %1392 = vmatprep.subr.mxu0 %v97
    %1393 = vmatpush1.msra.mxu0 %v96
    %1394 = vmatprep.subr.mxu0 0.0
    %1395 = vmatpush2.msra.mxu0 0.0
    %1396 = vmatprep.subr.mxu0 0.0
    %1397 = vmatpush2.msra.mxu0 0.0
    %1398 = vmatprep.subr.mxu0 0.0
    %1399 = vmatpush2.msra.mxu0 0.0
    %1400 = vmatprep.subr.mxu0 0.0
    %1401 = vmatpush2.msra.mxu0 0.0
    %1402 = vmatprep.subr.mxu0 0.0
    %1403 = vmatpush2.msra.mxu0 0.0
    %1404 = vmatprep.subr.mxu0 0.0
    %1405 = vmatpush2.msra.mxu0 0.0
    %1406 = vmatprep.subr.mxu0 0.0
    %1407 = vmatpush2.msra.mxu0 0.0
    %1408 = vmatprep.subr.mxu0 0.0
    %1409 = vmatpush2.msra.mxu0 0.0
    %1410 = vmatprep.subr.mxu0 0.0
    %1411 = vmatpush2.msra.mxu0 0.0
    %1412 = vmatprep.subr.mxu0 0.0
    %1413 = vmatpush2.msra.mxu0 0.0
    %1414 = vmatprep.subr.mxu0 0.0
    %1415 = vmatpush2.msra.mxu0 0.0
    %1416 = vmatprep.subr.mxu0 0.0
    %1417 = vmatpush2.msra.mxu0 0.0
    %1418 = vmatprep.subr.mxu0 0.0
    %1419 = vmatpush2.msra.mxu0 0.0
    %1420 = vmatprep.subr.mxu0 0.0
    %1421 = vmatpush2.msra.mxu0 0.0
    %1422 = vmatprep.subr.mxu0 0.0
    %1423 = vmatpush2.msra.mxu0 0.0
    %1424 = vmatprep.subr.mxu0 0.0
    %1425 = vmatpush2.msra.mxu0 0.0
    %1426 = vmatprep.mubr.f32.mxu0 0.0
    %1427 = vmatmul.mubr.f32.gmra.mxu0 %v366
    %v1428 = vpop.f32.mrf.mxu0
    %v1429 = vadd.f32 %v319, %v1428
    %v1430 = vpop.f32.mrf.mxu0
    %v1431 = vadd.f32 %v323, %v1430
    %1432 = vdwg.mxu0
    %1433 = vmatprep.subr.mxu0 0.0
    %1434 = vmatpush1.msra.mxu0 0.0
    %1435 = vmatprep.subr.mxu0 0.0
    %1436 = vmatpush1.msra.mxu0 0.0
    %1437 = vmatprep.subr.mxu0 0.0
    %1438 = vmatpush1.msra.mxu0 0.0
    %1439 = vmatprep.subr.mxu0 0.0
    %1440 = vmatpush1.msra.mxu0 0.0
    %1441 = vmatprep.subr.mxu0 0.0
    %1442 = vmatpush1.msra.mxu0 0.0
    %1443 = vmatprep.subr.mxu0 0.0
    %1444 = vmatpush1.msra.mxu0 0.0
    %1445 = vmatprep.subr.mxu0 0.0
    %1446 = vmatpush1.msra.mxu0 0.0
    %1447 = vmatprep.subr.mxu0 0.0
    %1448 = vmatpush1.msra.mxu0 0.0
    %1449 = vmatprep.subr.mxu0 0.0
    %1450 = vmatpush1.msra.mxu0 0.0
    %1451 = vmatprep.subr.mxu0 0.0
    %1452 = vmatpush1.msra.mxu0 0.0
    %1453 = vmatprep.subr.mxu0 0.0
    %1454 = vmatpush1.msra.mxu0 0.0
    %1455 = vmatprep.subr.mxu0 0.0
    %1456 = vmatpush1.msra.mxu0 0.0
    %1457 = vmatprep.subr.mxu0 %v195
    %1458 = vmatpush1.msra.mxu0 %v194
    %1459 = vmatprep.subr.mxu0 %v163
    %1460 = vmatpush1.msra.mxu0 %v162
    %1461 = vmatprep.subr.mxu0 %v131
    %1462 = vmatpush1.msra.mxu0 %v130
    %1463 = vmatprep.subr.mxu0 %v99
    %1464 = vmatpush1.msra.mxu0 %v98
    %1465 = vmatprep.subr.mxu0 0.0
    %1466 = vmatpush2.msra.mxu0 0.0
    %1467 = vmatprep.subr.mxu0 0.0
    %1468 = vmatpush2.msra.mxu0 0.0
    %1469 = vmatprep.subr.mxu0 0.0
    %1470 = vmatpush2.msra.mxu0 0.0
    %1471 = vmatprep.subr.mxu0 0.0
    %1472 = vmatpush2.msra.mxu0 0.0
    %1473 = vmatprep.subr.mxu0 0.0
    %1474 = vmatpush2.msra.mxu0 0.0
    %1475 = vmatprep.subr.mxu0 0.0
    %1476 = vmatpush2.msra.mxu0 0.0
    %1477 = vmatprep.subr.mxu0 0.0
    %1478 = vmatpush2.msra.mxu0 0.0
    %1479 = vmatprep.subr.mxu0 0.0
    %1480 = vmatpush2.msra.mxu0 0.0
    %1481 = vmatprep.subr.mxu0 0.0
    %1482 = vmatpush2.msra.mxu0 0.0
    %1483 = vmatprep.subr.mxu0 0.0
    %1484 = vmatpush2.msra.mxu0 0.0
    %1485 = vmatprep.subr.mxu0 0.0
    %1486 = vmatpush2.msra.mxu0 0.0
    %1487 = vmatprep.subr.mxu0 0.0
    %1488 = vmatpush2.msra.mxu0 0.0
    %1489 = vmatprep.subr.mxu0 0.0
    %1490 = vmatpush2.msra.mxu0 0.0
    %1491 = vmatprep.subr.mxu0 0.0
    %1492 = vmatpush2.msra.mxu0 0.0
    %1493 = vmatprep.subr.mxu0 0.0
    %1494 = vmatpush2.msra.mxu0 0.0
    %1495 = vmatprep.subr.mxu0 0.0
    %1496 = vmatpush2.msra.mxu0 0.0
    %1497 = vmatprep.mubr.f32.mxu0 0.0
    %1498 = vmatmul.mubr.f32.gmra.mxu0 %v366
    %v1499 = vpop.f32.mrf.mxu0
    %v1500 = vadd.f32 %v327, %v1499
    %v1501 = vpop.f32.mrf.mxu0
    %v1502 = vadd.f32 %v331, %v1501
    %1503 = vdwg.mxu0
    %v1504 = vmax.f32 %v435, 0.0
    %v1505 = vmax.f32 %v437, 0.0
    %v1506 = vmax.f32 %v506, 0.0
    %v1507 = vmax.f32 %v508, 0.0
    %v1508 = vmax.f32 %v577, 0.0
    %v1509 = vmax.f32 %v579, 0.0
    %v1510 = vmax.f32 %v648, 0.0
    %v1511 = vmax.f32 %v650, 0.0
    %v1512 = vmax.f32 %v719, 0.0
    %v1513 = vmax.f32 %v721, 0.0
    %v1514 = vmax.f32 %v790, 0.0
    %v1515 = vmax.f32 %v792, 0.0
    %v1516 = vmax.f32 %v861, 0.0
    %v1517 = vmax.f32 %v863, 0.0
    %v1518 = vmax.f32 %v932, 0.0
    %v1519 = vmax.f32 %v934, 0.0
    %v1520 = vmax.f32 %v1003, 0.0
    %v1521 = vmax.f32 %v1005, 0.0
    %v1522 = vmax.f32 %v1074, 0.0
    %v1523 = vmax.f32 %v1076, 0.0
    %v1524 = vmax.f32 %v1145, 0.0
    %v1525 = vmax.f32 %v1147, 0.0
    %v1526 = vmax.f32 %v1216, 0.0
    %v1527 = vmax.f32 %v1218, 0.0
    %v1528 = vmax.f32 %v1287, 0.0
    %v1529 = vmax.f32 %v1289, 0.0
    %v1530 = vmax.f32 %v1358, 0.0
    %v1531 = vmax.f32 %v1360, 0.0
    %v1532 = vmax.f32 %v1429, 0.0
    %v1533 = vmax.f32 %v1431, 0.0
    %v1534 = vmax.f32 %v1500, 0.0
    %v1535 = vmax.f32 %v1502, 0.0
    %vm1536 = vcmask 523264
    %1537 = vst.msk [vmem:[#allocation2] sm:$0xff] %vm1536, 0.0
    %vm1538 = vcmask 519168
    %1539 = vst.msk [vmem:[#allocation2 + $0x8] sm:$0xf] %vm1538, 0.0
    %1540 = vst.msk [vmem:[#allocation2 + $0x10] sm:$0xff] %vm1536, 0.0
    %1541 = vst.msk [vmem:[#allocation2 + $0x18] sm:$0xf] %vm1538, 0.0
    %1542 = vst.msk [vmem:[#allocation2 + $0x20] sm:$0xff] %vm1536, 0.0
    %1543 = vst.msk [vmem:[#allocation2 + $0x28] sm:$0xf] %vm1538, 0.0
    %1544 = vst.msk [vmem:[#allocation2 + $0x30] sm:$0xff] %vm1536, 0.0
    %1545 = vst.msk [vmem:[#allocation2 + $0x38] sm:$0xf] %vm1538, 0.0
    %1546 = vst.msk [vmem:[#allocation2 + $0x40] sm:$0xff] %vm1536, 0.0
    %1547 = vst.msk [vmem:[#allocation2 + $0x48] sm:$0xf] %vm1538, 0.0
    %1548 = vst.msk [vmem:[#allocation2 + $0x50] sm:$0xff] %vm1536, 0.0
    %1549 = vst.msk [vmem:[#allocation2 + $0x58] sm:$0xf] %vm1538, 0.0
    %1550 = vst.msk [vmem:[#allocation2 + $0x60] sm:$0xff] %vm1536, 0.0
    %1551 = vst.msk [vmem:[#allocation2 + $0x68] sm:$0xf] %vm1538, 0.0
    %1552 = vst.msk [vmem:[#allocation2 + $0x70] sm:$0xff] %vm1536, 0.0
    %1553 = vst.msk [vmem:[#allocation2 + $0x78] sm:$0xf] %vm1538, 0.0
    %1554 = vst.msk [vmem:[#allocation2 + $0x80] sm:$0xff] %vm1536, 0.0
    %1555 = vst.msk [vmem:[#allocation2 + $0x88] sm:$0xf] %vm1538, 0.0
    %1556 = vst.msk [vmem:[#allocation2 + $0x90] sm:$0xff] %vm1536, 0.0
    %1557 = vst.msk [vmem:[#allocation2 + $0x98] sm:$0xf] %vm1538, 0.0
    %1558 = vst.msk [vmem:[#allocation2 + $0xa0] sm:$0xff] %vm1536, 0.0
    %1559 = vst.msk [vmem:[#allocation2 + $0xa8] sm:$0xf] %vm1538, 0.0
    %1560 = vst.msk [vmem:[#allocation2 + $0xb0] sm:$0xff] %vm1536, 0.0
    %1561 = vst.msk [vmem:[#allocation2 + $0xb8] sm:$0xf] %vm1538, 0.0
    %1562 = vst.msk [vmem:[#allocation2 + $0xc0] sm:$0xff] %vm1536, 0.0
    %1563 = vst.msk [vmem:[#allocation2 + $0xc8] sm:$0xf] %vm1538, 0.0
    %1564 = vst.msk [vmem:[#allocation2 + $0xd0] sm:$0xff] %vm1536, 0.0
    %1565 = vst.msk [vmem:[#allocation2 + $0xd8] sm:$0xf] %vm1538, 0.0
    %1566 = vst.msk [vmem:[#allocation2 + $0xe0] sm:$0xff] %vm1536, 0.0
    %1567 = vst.msk [vmem:[#allocation2 + $0xe8] sm:$0xf] %vm1538, 0.0
    %1568 = vst.msk [vmem:[#allocation2 + $0xf0] sm:$0xff] %vm1536, 0.0
    %1569 = vst.msk [vmem:[#allocation2 + $0xf8] sm:$0xf] %vm1538, 0.0
    %1570 = vst.msk [vmem:[#allocation2 + $0x100] sm:$0xff] %vm1536, 0.0
    %1571 = vst.msk [vmem:[#allocation2 + $0x108] sm:$0xf] %vm1538, 0.0
    %1572 = vst.msk [vmem:[#allocation2 + $0x110] sm:$0xff] %vm1536, 0.0
    %1573 = vst.msk [vmem:[#allocation2 + $0x118] sm:$0xf] %vm1538, 0.0
    %1574 = vst.msk [vmem:[#allocation2 + $0x120] sm:$0xff] %vm1536, 0.0
    %1575 = vst.msk [vmem:[#allocation2 + $0x128] sm:$0xf] %vm1538, 0.0
    %1576 = vst.msk [vmem:[#allocation2 + $0x130] sm:$0xff] %vm1536, 0.0
    %1577 = vst.msk [vmem:[#allocation2 + $0x138] sm:$0xf] %vm1538, 0.0
    %1578 = vst.msk [vmem:[#allocation2 + $0x140] sm:$0xff] %vm1536, 0.0
    %1579 = vst.msk [vmem:[#allocation2 + $0x148] sm:$0xf] %vm1538, 0.0
    %1580 = vst.msk [vmem:[#allocation2 + $0x150] sm:$0xff] %vm1536, 0.0
    %1581 = vst.msk [vmem:[#allocation2 + $0x158] sm:$0xf] %vm1538, 0.0
    %1582 = vst.msk [vmem:[#allocation2 + $0x160] sm:$0xff] %vm1536, 0.0
    %1583 = vst.msk [vmem:[#allocation2 + $0x168] sm:$0xf] %vm1538, 0.0
    %1584 = vst.msk [vmem:[#allocation2 + $0x170] sm:$0xff] %vm1536, 0.0
    %1585 = vst.msk [vmem:[#allocation2 + $0x178] sm:$0xf] %vm1538, 0.0
    %v1588 = vunpack.c.l.s4 1966171168
    %v1589 = vunpack.c.0.s8 %v1588
    %v1590 = vlaneseq
    %v1591 = vshrl.u32 %v1590, 7
    %v1592 = vsub.s32 %v1589, %v1591
    %v1593 = vrot.slane %v1504, %v1592
    %v1594 = vcombine.high %v1593, %v1593
    %v1596 = vunpack.c.l.s4 1966171168
    %v1597 = vunpack.c.0.s8 %v1596
    %v1598 = vlaneseq
    %v1599 = vshrl.u32 %v1598, 7
    %v1600 = vsub.s32 %v1597, %v1599
    %v1601 = vrot.slane %v1593, %v1600
    %v1603 = vunpack.c.l.s4 1966171168
    %v1604 = vunpack.c.0.s8 %v1603
    %v1605 = vlaneseq
    %v1606 = vshrl.u32 %v1605, 7
    %v1607 = vsub.s32 %v1604, %v1606
    %v1608 = vrot.slane %v1594, %v1607
    %s1611 = scalar_lea.vmem [#allocation2], 32
    %vm1612 = vcmask 516096
    %1613 = vst.msk [vmem:[%s1611 + $0x2] sm:$0x1] %vm1612, %v1601
    %1614 = vst.msk [vmem:[%s1611 + $0xc2] sm:$0x1] %vm1612, %v1608
    %v1615 = vlaneseq
    %v1616 = vshrl.u32 %v1615, 7
    %v1617 = vsub.s32 0, %v1616
    %v1618 = vrot.slane %v1601, %v1617
    %v1619 = vlaneseq
    %v1620 = vshrl.u32 %v1619, 7
    %v1621 = vsub.s32 0, %v1620
    %v1622 = vrot.slane %v1608, %v1621
    %1623 = vrot.lane.b32.xlu0 %v1618, 64
    %v1624 = vpop.permute.xlu0 %1623
    %1625 = vrot.lane.b32.xlu0 %v1622, 64
    %v1626 = vpop.permute.xlu0 %1625
    %1629 = vst.msk [vmem:[%s1611 + $0x3] sm:$0x1] %vm1612, %v1624
    %1630 = vst.msk [vmem:[%s1611 + $0xc3] sm:$0x1] %vm1612, %v1626
    %v1633 = vunpack.c.l.s4 1966171168
    %v1634 = vunpack.c.0.s8 %v1633
    %v1635 = vlaneseq
    %v1636 = vshrl.u32 %v1635, 7
    %v1637 = vsub.s32 %v1634, %v1636
    %v1638 = vrot.slane %v1505, %v1637
    %v1639 = vcombine.high %v1638, %v1638
    %v1641 = vunpack.c.l.s4 1966171168
    %v1642 = vunpack.c.0.s8 %v1641
    %v1643 = vlaneseq
    %v1644 = vshrl.u32 %v1643, 7
    %v1645 = vsub.s32 %v1642, %v1644
    %v1646 = vrot.slane %v1638, %v1645
    %v1648 = vunpack.c.l.s4 1966171168
    %v1649 = vunpack.c.0.s8 %v1648
    %v1650 = vlaneseq
    %v1651 = vshrl.u32 %v1650, 7
    %v1652 = vsub.s32 %v1649, %v1651
    %v1653 = vrot.slane %v1639, %v1652
    %1656 = vst.msk [vmem:[%s1611 + $0x4] sm:$0x1] %vm1612, %v1646
    %1657 = vst.msk [vmem:[%s1611 + $0xc4] sm:$0x1] %vm1612, %v1653
    %v1658 = vlaneseq
    %v1659 = vshrl.u32 %v1658, 7
    %v1660 = vsub.s32 0, %v1659
    %v1661 = vrot.slane %v1646, %v1660
    %v1662 = vlaneseq
    %v1663 = vshrl.u32 %v1662, 7
    %v1664 = vsub.s32 0, %v1663
    %v1665 = vrot.slane %v1653, %v1664
    %1666 = vrot.lane.b32.xlu0 %v1661, 64
    %v1667 = vpop.permute.xlu0 %1666
    %1668 = vrot.lane.b32.xlu0 %v1665, 64
    %v1669 = vpop.permute.xlu0 %1668
    %1672 = vst.msk [vmem:[%s1611 + $0x5] sm:$0x1] %vm1612, %v1667
    %1673 = vst.msk [vmem:[%s1611 + $0xc5] sm:$0x1] %vm1612, %v1669
    %v1676 = vunpack.c.l.s4 1966171168
    %v1677 = vunpack.c.0.s8 %v1676
    %v1678 = vlaneseq
    %v1679 = vshrl.u32 %v1678, 7
    %v1680 = vsub.s32 %v1677, %v1679
    %v1681 = vrot.slane %v1506, %v1680
    %v1682 = vcombine.high %v1681, %v1681
    %v1684 = vunpack.c.l.s4 1966171168
    %v1685 = vunpack.c.0.s8 %v1684
    %v1686 = vlaneseq
    %v1687 = vshrl.u32 %v1686, 7
    %v1688 = vsub.s32 %v1685, %v1687
    %v1689 = vrot.slane %v1681, %v1688
    %v1691 = vunpack.c.l.s4 1966171168
    %v1692 = vunpack.c.0.s8 %v1691
    %v1693 = vlaneseq
    %v1694 = vshrl.u32 %v1693, 7
    %v1695 = vsub.s32 %v1692, %v1694
    %v1696 = vrot.slane %v1682, %v1695
    %1699 = vst.msk [vmem:[%s1611 + $0x6] sm:$0x1] %vm1612, %v1689
    %1700 = vst.msk [vmem:[%s1611 + $0xc6] sm:$0x1] %vm1612, %v1696
    %v1701 = vlaneseq
    %v1702 = vshrl.u32 %v1701, 7
    %v1703 = vsub.s32 0, %v1702
    %v1704 = vrot.slane %v1689, %v1703
    %v1705 = vlaneseq
    %v1706 = vshrl.u32 %v1705, 7
    %v1707 = vsub.s32 0, %v1706
    %v1708 = vrot.slane %v1696, %v1707
    %1709 = vrot.lane.b32.xlu0 %v1704, 64
    %v1710 = vpop.permute.xlu0 %1709
    %1711 = vrot.lane.b32.xlu0 %v1708, 64
    %v1712 = vpop.permute.xlu0 %1711
    %1715 = vst.msk [vmem:[%s1611 + $0x7] sm:$0x1] %vm1612, %v1710
    %1716 = vst.msk [vmem:[%s1611 + $0xc7] sm:$0x1] %vm1612, %v1712
    %v1719 = vunpack.c.l.s4 1966171168
    %v1720 = vunpack.c.0.s8 %v1719
    %v1721 = vlaneseq
    %v1722 = vshrl.u32 %v1721, 7
    %v1723 = vsub.s32 %v1720, %v1722
    %v1724 = vrot.slane %v1507, %v1723
    %v1725 = vcombine.high %v1724, %v1724
    %v1727 = vunpack.c.l.s4 1966171168
    %v1728 = vunpack.c.0.s8 %v1727
    %v1729 = vlaneseq
    %v1730 = vshrl.u32 %v1729, 7
    %v1731 = vsub.s32 %v1728, %v1730
    %v1732 = vrot.slane %v1724, %v1731
    %v1734 = vunpack.c.l.s4 1966171168
    %v1735 = vunpack.c.0.s8 %v1734
    %v1736 = vlaneseq
    %v1737 = vshrl.u32 %v1736, 7
    %v1738 = vsub.s32 %v1735, %v1737
    %v1739 = vrot.slane %v1725, %v1738
    %1742 = vst.msk [vmem:[%s1611 + $0x8] sm:$0x1] %vm1612, %v1732
    %1743 = vst.msk [vmem:[%s1611 + $0xc8] sm:$0x1] %vm1612, %v1739
    %v1744 = vlaneseq
    %v1745 = vshrl.u32 %v1744, 7
    %v1746 = vsub.s32 0, %v1745
    %v1747 = vrot.slane %v1732, %v1746
    %v1748 = vlaneseq
    %v1749 = vshrl.u32 %v1748, 7
    %v1750 = vsub.s32 0, %v1749
    %v1751 = vrot.slane %v1739, %v1750
    %1752 = vrot.lane.b32.xlu0 %v1747, 64
    %v1753 = vpop.permute.xlu0 %1752
    %1754 = vrot.lane.b32.xlu0 %v1751, 64
    %v1755 = vpop.permute.xlu0 %1754
    %1758 = vst.msk [vmem:[%s1611 + $0x9] sm:$0x1] %vm1612, %v1753
    %1759 = vst.msk [vmem:[%s1611 + $0xc9] sm:$0x1] %vm1612, %v1755
    %v1762 = vunpack.c.l.s4 1966171168
    %v1763 = vunpack.c.0.s8 %v1762
    %v1764 = vlaneseq
    %v1765 = vshrl.u32 %v1764, 7
    %v1766 = vsub.s32 %v1763, %v1765
    %v1767 = vrot.slane %v1508, %v1766
    %v1768 = vcombine.high %v1767, %v1767
    %v1770 = vunpack.c.l.s4 1966171168
    %v1771 = vunpack.c.0.s8 %v1770
    %v1772 = vlaneseq
    %v1773 = vshrl.u32 %v1772, 7
    %v1774 = vsub.s32 %v1771, %v1773
    %v1775 = vrot.slane %v1767, %v1774
    %v1777 = vunpack.c.l.s4 1966171168
    %v1778 = vunpack.c.0.s8 %v1777
    %v1779 = vlaneseq
    %v1780 = vshrl.u32 %v1779, 7
    %v1781 = vsub.s32 %v1778, %v1780
    %v1782 = vrot.slane %v1768, %v1781
    %s1785 = scalar_lea.vmem [#allocation2], 48
    %1786 = vst.msk [vmem:[%s1785 + $0x2] sm:$0x1] %vm1612, %v1775
    %1787 = vst.msk [vmem:[%s1785 + $0xc2] sm:$0x1] %vm1612, %v1782
    %v1788 = vlaneseq
    %v1789 = vshrl.u32 %v1788, 7
    %v1790 = vsub.s32 0, %v1789
    %v1791 = vrot.slane %v1775, %v1790
    %v1792 = vlaneseq
    %v1793 = vshrl.u32 %v1792, 7
    %v1794 = vsub.s32 0, %v1793
    %v1795 = vrot.slane %v1782, %v1794
    %1796 = vrot.lane.b32.xlu0 %v1791, 64
    %v1797 = vpop.permute.xlu0 %1796
    %1798 = vrot.lane.b32.xlu0 %v1795, 64
    %v1799 = vpop.permute.xlu0 %1798
    %1802 = vst.msk [vmem:[%s1785 + $0x3] sm:$0x1] %vm1612, %v1797
    %1803 = vst.msk [vmem:[%s1785 + $0xc3] sm:$0x1] %vm1612, %v1799
    %v1806 = vunpack.c.l.s4 1966171168
    %v1807 = vunpack.c.0.s8 %v1806
    %v1808 = vlaneseq
    %v1809 = vshrl.u32 %v1808, 7
    %v1810 = vsub.s32 %v1807, %v1809
    %v1811 = vrot.slane %v1509, %v1810
    %v1812 = vcombine.high %v1811, %v1811
    %v1814 = vunpack.c.l.s4 1966171168
    %v1815 = vunpack.c.0.s8 %v1814
    %v1816 = vlaneseq
    %v1817 = vshrl.u32 %v1816, 7
    %v1818 = vsub.s32 %v1815, %v1817
    %v1819 = vrot.slane %v1811, %v1818
    %v1821 = vunpack.c.l.s4 1966171168
    %v1822 = vunpack.c.0.s8 %v1821
    %v1823 = vlaneseq
    %v1824 = vshrl.u32 %v1823, 7
    %v1825 = vsub.s32 %v1822, %v1824
    %v1826 = vrot.slane %v1812, %v1825
    %1829 = vst.msk [vmem:[%s1785 + $0x4] sm:$0x1] %vm1612, %v1819
    %1830 = vst.msk [vmem:[%s1785 + $0xc4] sm:$0x1] %vm1612, %v1826
    %v1831 = vlaneseq
    %v1832 = vshrl.u32 %v1831, 7
    %v1833 = vsub.s32 0, %v1832
    %v1834 = vrot.slane %v1819, %v1833
    %v1835 = vlaneseq
    %v1836 = vshrl.u32 %v1835, 7
    %v1837 = vsub.s32 0, %v1836
    %v1838 = vrot.slane %v1826, %v1837
    %1839 = vrot.lane.b32.xlu0 %v1834, 64
    %v1840 = vpop.permute.xlu0 %1839
    %1841 = vrot.lane.b32.xlu0 %v1838, 64
    %v1842 = vpop.permute.xlu0 %1841
    %1845 = vst.msk [vmem:[%s1785 + $0x5] sm:$0x1] %vm1612, %v1840
    %1846 = vst.msk [vmem:[%s1785 + $0xc5] sm:$0x1] %vm1612, %v1842
    %v1849 = vunpack.c.l.s4 1966171168
    %v1850 = vunpack.c.0.s8 %v1849
    %v1851 = vlaneseq
    %v1852 = vshrl.u32 %v1851, 7
    %v1853 = vsub.s32 %v1850, %v1852
    %v1854 = vrot.slane %v1510, %v1853
    %v1855 = vcombine.high %v1854, %v1854
    %v1857 = vunpack.c.l.s4 1966171168
    %v1858 = vunpack.c.0.s8 %v1857
    %v1859 = vlaneseq
    %v1860 = vshrl.u32 %v1859, 7
    %v1861 = vsub.s32 %v1858, %v1860
    %v1862 = vrot.slane %v1854, %v1861
    %v1864 = vunpack.c.l.s4 1966171168
    %v1865 = vunpack.c.0.s8 %v1864
    %v1866 = vlaneseq
    %v1867 = vshrl.u32 %v1866, 7
    %v1868 = vsub.s32 %v1865, %v1867
    %v1869 = vrot.slane %v1855, %v1868
    %1872 = vst.msk [vmem:[%s1785 + $0x6] sm:$0x1] %vm1612, %v1862
    %1873 = vst.msk [vmem:[%s1785 + $0xc6] sm:$0x1] %vm1612, %v1869
    %v1874 = vlaneseq
    %v1875 = vshrl.u32 %v1874, 7
    %v1876 = vsub.s32 0, %v1875
    %v1877 = vrot.slane %v1862, %v1876
    %v1878 = vlaneseq
    %v1879 = vshrl.u32 %v1878, 7
    %v1880 = vsub.s32 0, %v1879
    %v1881 = vrot.slane %v1869, %v1880
    %1882 = vrot.lane.b32.xlu0 %v1877, 64
    %v1883 = vpop.permute.xlu0 %1882
    %1884 = vrot.lane.b32.xlu0 %v1881, 64
    %v1885 = vpop.permute.xlu0 %1884
    %1888 = vst.msk [vmem:[%s1785 + $0x7] sm:$0x1] %vm1612, %v1883
    %1889 = vst.msk [vmem:[%s1785 + $0xc7] sm:$0x1] %vm1612, %v1885
    %v1892 = vunpack.c.l.s4 1966171168
    %v1893 = vunpack.c.0.s8 %v1892
    %v1894 = vlaneseq
    %v1895 = vshrl.u32 %v1894, 7
    %v1896 = vsub.s32 %v1893, %v1895
    %v1897 = vrot.slane %v1511, %v1896
    %v1898 = vcombine.high %v1897, %v1897
    %v1900 = vunpack.c.l.s4 1966171168
    %v1901 = vunpack.c.0.s8 %v1900
    %v1902 = vlaneseq
    %v1903 = vshrl.u32 %v1902, 7
    %v1904 = vsub.s32 %v1901, %v1903
    %v1905 = vrot.slane %v1897, %v1904
    %v1907 = vunpack.c.l.s4 1966171168
    %v1908 = vunpack.c.0.s8 %v1907
    %v1909 = vlaneseq
    %v1910 = vshrl.u32 %v1909, 7
    %v1911 = vsub.s32 %v1908, %v1910
    %v1912 = vrot.slane %v1898, %v1911
    %1915 = vst.msk [vmem:[%s1785 + $0x8] sm:$0x1] %vm1612, %v1905
    %1916 = vst.msk [vmem:[%s1785 + $0xc8] sm:$0x1] %vm1612, %v1912
    %v1917 = vlaneseq
    %v1918 = vshrl.u32 %v1917, 7
    %v1919 = vsub.s32 0, %v1918
    %v1920 = vrot.slane %v1905, %v1919
    %v1921 = vlaneseq
    %v1922 = vshrl.u32 %v1921, 7
    %v1923 = vsub.s32 0, %v1922
    %v1924 = vrot.slane %v1912, %v1923
    %1925 = vrot.lane.b32.xlu0 %v1920, 64
    %v1926 = vpop.permute.xlu0 %1925
    %1927 = vrot.lane.b32.xlu0 %v1924, 64
    %v1928 = vpop.permute.xlu0 %1927
    %1931 = vst.msk [vmem:[%s1785 + $0x9] sm:$0x1] %vm1612, %v1926
    %1932 = vst.msk [vmem:[%s1785 + $0xc9] sm:$0x1] %vm1612, %v1928
    %v1935 = vunpack.c.l.s4 1966171168
    %v1936 = vunpack.c.0.s8 %v1935
    %v1937 = vlaneseq
    %v1938 = vshrl.u32 %v1937, 7
    %v1939 = vsub.s32 %v1936, %v1938
    %v1940 = vrot.slane %v1512, %v1939
    %v1941 = vcombine.high %v1940, %v1940
    %v1943 = vunpack.c.l.s4 1966171168
    %v1944 = vunpack.c.0.s8 %v1943
    %v1945 = vlaneseq
    %v1946 = vshrl.u32 %v1945, 7
    %v1947 = vsub.s32 %v1944, %v1946
    %v1948 = vrot.slane %v1940, %v1947
    %v1950 = vunpack.c.l.s4 1966171168
    %v1951 = vunpack.c.0.s8 %v1950
    %v1952 = vlaneseq
    %v1953 = vshrl.u32 %v1952, 7
    %v1954 = vsub.s32 %v1951, %v1953
    %v1955 = vrot.slane %v1941, %v1954
    %s1958 = scalar_lea.vmem [#allocation2], 64
    %1959 = vst.msk [vmem:[%s1958 + $0x2] sm:$0x1] %vm1612, %v1948
    %1960 = vst.msk [vmem:[%s1958 + $0xc2] sm:$0x1] %vm1612, %v1955
    %v1961 = vlaneseq
    %v1962 = vshrl.u32 %v1961, 7
    %v1963 = vsub.s32 0, %v1962
    %v1964 = vrot.slane %v1948, %v1963
    %v1965 = vlaneseq
    %v1966 = vshrl.u32 %v1965, 7
    %v1967 = vsub.s32 0, %v1966
    %v1968 = vrot.slane %v1955, %v1967
    %1969 = vrot.lane.b32.xlu0 %v1964, 64
    %v1970 = vpop.permute.xlu0 %1969
    %1971 = vrot.lane.b32.xlu0 %v1968, 64
    %v1972 = vpop.permute.xlu0 %1971
    %1975 = vst.msk [vmem:[%s1958 + $0x3] sm:$0x1] %vm1612, %v1970
    %1976 = vst.msk [vmem:[%s1958 + $0xc3] sm:$0x1] %vm1612, %v1972
    %v1979 = vunpack.c.l.s4 1966171168
    %v1980 = vunpack.c.0.s8 %v1979
    %v1981 = vlaneseq
    %v1982 = vshrl.u32 %v1981, 7
    %v1983 = vsub.s32 %v1980, %v1982
    %v1984 = vrot.slane %v1513, %v1983
    %v1985 = vcombine.high %v1984, %v1984
    %v1987 = vunpack.c.l.s4 1966171168
    %v1988 = vunpack.c.0.s8 %v1987
    %v1989 = vlaneseq
    %v1990 = vshrl.u32 %v1989, 7
    %v1991 = vsub.s32 %v1988, %v1990
    %v1992 = vrot.slane %v1984, %v1991
    %v1994 = vunpack.c.l.s4 1966171168
    %v1995 = vunpack.c.0.s8 %v1994
    %v1996 = vlaneseq
    %v1997 = vshrl.u32 %v1996, 7
    %v1998 = vsub.s32 %v1995, %v1997
    %v1999 = vrot.slane %v1985, %v1998
    %2002 = vst.msk [vmem:[%s1958 + $0x4] sm:$0x1] %vm1612, %v1992
    %2003 = vst.msk [vmem:[%s1958 + $0xc4] sm:$0x1] %vm1612, %v1999
    %v2004 = vlaneseq
    %v2005 = vshrl.u32 %v2004, 7
    %v2006 = vsub.s32 0, %v2005
    %v2007 = vrot.slane %v1992, %v2006
    %v2008 = vlaneseq
    %v2009 = vshrl.u32 %v2008, 7
    %v2010 = vsub.s32 0, %v2009
    %v2011 = vrot.slane %v1999, %v2010
    %2012 = vrot.lane.b32.xlu0 %v2007, 64
    %v2013 = vpop.permute.xlu0 %2012
    %2014 = vrot.lane.b32.xlu0 %v2011, 64
    %v2015 = vpop.permute.xlu0 %2014
    %2018 = vst.msk [vmem:[%s1958 + $0x5] sm:$0x1] %vm1612, %v2013
    %2019 = vst.msk [vmem:[%s1958 + $0xc5] sm:$0x1] %vm1612, %v2015
    %v2022 = vunpack.c.l.s4 1966171168
    %v2023 = vunpack.c.0.s8 %v2022
    %v2024 = vlaneseq
    %v2025 = vshrl.u32 %v2024, 7
    %v2026 = vsub.s32 %v2023, %v2025
    %v2027 = vrot.slane %v1514, %v2026
    %v2028 = vcombine.high %v2027, %v2027
    %v2030 = vunpack.c.l.s4 1966171168
    %v2031 = vunpack.c.0.s8 %v2030
    %v2032 = vlaneseq
    %v2033 = vshrl.u32 %v2032, 7
    %v2034 = vsub.s32 %v2031, %v2033
    %v2035 = vrot.slane %v2027, %v2034
    %v2037 = vunpack.c.l.s4 1966171168
    %v2038 = vunpack.c.0.s8 %v2037
    %v2039 = vlaneseq
    %v2040 = vshrl.u32 %v2039, 7
    %v2041 = vsub.s32 %v2038, %v2040
    %v2042 = vrot.slane %v2028, %v2041
    %2045 = vst.msk [vmem:[%s1958 + $0x6] sm:$0x1] %vm1612, %v2035
    %2046 = vst.msk [vmem:[%s1958 + $0xc6] sm:$0x1] %vm1612, %v2042
    %v2047 = vlaneseq
    %v2048 = vshrl.u32 %v2047, 7
    %v2049 = vsub.s32 0, %v2048
    %v2050 = vrot.slane %v2035, %v2049
    %v2051 = vlaneseq
    %v2052 = vshrl.u32 %v2051, 7
    %v2053 = vsub.s32 0, %v2052
    %v2054 = vrot.slane %v2042, %v2053
    %2055 = vrot.lane.b32.xlu0 %v2050, 64
    %v2056 = vpop.permute.xlu0 %2055
    %2057 = vrot.lane.b32.xlu0 %v2054, 64
    %v2058 = vpop.permute.xlu0 %2057
    %2061 = vst.msk [vmem:[%s1958 + $0x7] sm:$0x1] %vm1612, %v2056
    %2062 = vst.msk [vmem:[%s1958 + $0xc7] sm:$0x1] %vm1612, %v2058
    %v2065 = vunpack.c.l.s4 1966171168
    %v2066 = vunpack.c.0.s8 %v2065
    %v2067 = vlaneseq
    %v2068 = vshrl.u32 %v2067, 7
    %v2069 = vsub.s32 %v2066, %v2068
    %v2070 = vrot.slane %v1515, %v2069
    %v2071 = vcombine.high %v2070, %v2070
    %v2073 = vunpack.c.l.s4 1966171168
    %v2074 = vunpack.c.0.s8 %v2073
    %v2075 = vlaneseq
    %v2076 = vshrl.u32 %v2075, 7
    %v2077 = vsub.s32 %v2074, %v2076
    %v2078 = vrot.slane %v2070, %v2077
    %v2080 = vunpack.c.l.s4 1966171168
    %v2081 = vunpack.c.0.s8 %v2080
    %v2082 = vlaneseq
    %v2083 = vshrl.u32 %v2082, 7
    %v2084 = vsub.s32 %v2081, %v2083
    %v2085 = vrot.slane %v2071, %v2084
    %2088 = vst.msk [vmem:[%s1958 + $0x8] sm:$0x1] %vm1612, %v2078
    %2089 = vst.msk [vmem:[%s1958 + $0xc8] sm:$0x1] %vm1612, %v2085
    %v2090 = vlaneseq
    %v2091 = vshrl.u32 %v2090, 7
    %v2092 = vsub.s32 0, %v2091
    %v2093 = vrot.slane %v2078, %v2092
    %v2094 = vlaneseq
    %v2095 = vshrl.u32 %v2094, 7
    %v2096 = vsub.s32 0, %v2095
    %v2097 = vrot.slane %v2085, %v2096
    %2098 = vrot.lane.b32.xlu0 %v2093, 64
    %v2099 = vpop.permute.xlu0 %2098
    %2100 = vrot.lane.b32.xlu0 %v2097, 64
    %v2101 = vpop.permute.xlu0 %2100
    %2104 = vst.msk [vmem:[%s1958 + $0x9] sm:$0x1] %vm1612, %v2099
    %2105 = vst.msk [vmem:[%s1958 + $0xc9] sm:$0x1] %vm1612, %v2101
    %v2108 = vunpack.c.l.s4 1966171168
    %v2109 = vunpack.c.0.s8 %v2108
    %v2110 = vlaneseq
    %v2111 = vshrl.u32 %v2110, 7
    %v2112 = vsub.s32 %v2109, %v2111
    %v2113 = vrot.slane %v1516, %v2112
    %v2114 = vcombine.high %v2113, %v2113
    %v2116 = vunpack.c.l.s4 1966171168
    %v2117 = vunpack.c.0.s8 %v2116
    %v2118 = vlaneseq
    %v2119 = vshrl.u32 %v2118, 7
    %v2120 = vsub.s32 %v2117, %v2119
    %v2121 = vrot.slane %v2113, %v2120
    %v2123 = vunpack.c.l.s4 1966171168
    %v2124 = vunpack.c.0.s8 %v2123
    %v2125 = vlaneseq
    %v2126 = vshrl.u32 %v2125, 7
    %v2127 = vsub.s32 %v2124, %v2126
    %v2128 = vrot.slane %v2114, %v2127
    %s2131 = scalar_lea.vmem [#allocation2], 80
    %2132 = vst.msk [vmem:[%s2131 + $0x2] sm:$0x1] %vm1612, %v2121
    %2133 = vst.msk [vmem:[%s2131 + $0xc2] sm:$0x1] %vm1612, %v2128
    %v2134 = vlaneseq
    %v2135 = vshrl.u32 %v2134, 7
    %v2136 = vsub.s32 0, %v2135
    %v2137 = vrot.slane %v2121, %v2136
    %v2138 = vlaneseq
    %v2139 = vshrl.u32 %v2138, 7
    %v2140 = vsub.s32 0, %v2139
    %v2141 = vrot.slane %v2128, %v2140
    %2142 = vrot.lane.b32.xlu0 %v2137, 64
    %v2143 = vpop.permute.xlu0 %2142
    %2144 = vrot.lane.b32.xlu0 %v2141, 64
    %v2145 = vpop.permute.xlu0 %2144
    %2148 = vst.msk [vmem:[%s2131 + $0x3] sm:$0x1] %vm1612, %v2143
    %2149 = vst.msk [vmem:[%s2131 + $0xc3] sm:$0x1] %vm1612, %v2145
    %v2152 = vunpack.c.l.s4 1966171168
    %v2153 = vunpack.c.0.s8 %v2152
    %v2154 = vlaneseq
    %v2155 = vshrl.u32 %v2154, 7
    %v2156 = vsub.s32 %v2153, %v2155
    %v2157 = vrot.slane %v1517, %v2156
    %v2158 = vcombine.high %v2157, %v2157
    %v2160 = vunpack.c.l.s4 1966171168
    %v2161 = vunpack.c.0.s8 %v2160
    %v2162 = vlaneseq
    %v2163 = vshrl.u32 %v2162, 7
    %v2164 = vsub.s32 %v2161, %v2163
    %v2165 = vrot.slane %v2157, %v2164
    %v2167 = vunpack.c.l.s4 1966171168
    %v2168 = vunpack.c.0.s8 %v2167
    %v2169 = vlaneseq
    %v2170 = vshrl.u32 %v2169, 7
    %v2171 = vsub.s32 %v2168, %v2170
    %v2172 = vrot.slane %v2158, %v2171
    %2175 = vst.msk [vmem:[%s2131 + $0x4] sm:$0x1] %vm1612, %v2165
    %2176 = vst.msk [vmem:[%s2131 + $0xc4] sm:$0x1] %vm1612, %v2172
    %v2177 = vlaneseq
    %v2178 = vshrl.u32 %v2177, 7
    %v2179 = vsub.s32 0, %v2178
    %v2180 = vrot.slane %v2165, %v2179
    %v2181 = vlaneseq
    %v2182 = vshrl.u32 %v2181, 7
    %v2183 = vsub.s32 0, %v2182
    %v2184 = vrot.slane %v2172, %v2183
    %2185 = vrot.lane.b32.xlu0 %v2180, 64
    %v2186 = vpop.permute.xlu0 %2185
    %2187 = vrot.lane.b32.xlu0 %v2184, 64
    %v2188 = vpop.permute.xlu0 %2187
    %2191 = vst.msk [vmem:[%s2131 + $0x5] sm:$0x1] %vm1612, %v2186
    %2192 = vst.msk [vmem:[%s2131 + $0xc5] sm:$0x1] %vm1612, %v2188
    %v2195 = vunpack.c.l.s4 1966171168
    %v2196 = vunpack.c.0.s8 %v2195
    %v2197 = vlaneseq
    %v2198 = vshrl.u32 %v2197, 7
    %v2199 = vsub.s32 %v2196, %v2198
    %v2200 = vrot.slane %v1518, %v2199
    %v2201 = vcombine.high %v2200, %v2200
    %v2203 = vunpack.c.l.s4 1966171168
    %v2204 = vunpack.c.0.s8 %v2203
    %v2205 = vlaneseq
    %v2206 = vshrl.u32 %v2205, 7
    %v2207 = vsub.s32 %v2204, %v2206
    %v2208 = vrot.slane %v2200, %v2207
    %v2210 = vunpack.c.l.s4 1966171168
    %v2211 = vunpack.c.0.s8 %v2210
    %v2212 = vlaneseq
    %v2213 = vshrl.u32 %v2212, 7
    %v2214 = vsub.s32 %v2211, %v2213
    %v2215 = vrot.slane %v2201, %v2214
    %2218 = vst.msk [vmem:[%s2131 + $0x6] sm:$0x1] %vm1612, %v2208
    %2219 = vst.msk [vmem:[%s2131 + $0xc6] sm:$0x1] %vm1612, %v2215
    %v2220 = vlaneseq
    %v2221 = vshrl.u32 %v2220, 7
    %v2222 = vsub.s32 0, %v2221
    %v2223 = vrot.slane %v2208, %v2222
    %v2224 = vlaneseq
    %v2225 = vshrl.u32 %v2224, 7
    %v2226 = vsub.s32 0, %v2225
    %v2227 = vrot.slane %v2215, %v2226
    %2228 = vrot.lane.b32.xlu0 %v2223, 64
    %v2229 = vpop.permute.xlu0 %2228
    %2230 = vrot.lane.b32.xlu0 %v2227, 64
    %v2231 = vpop.permute.xlu0 %2230
    %2234 = vst.msk [vmem:[%s2131 + $0x7] sm:$0x1] %vm1612, %v2229
    %2235 = vst.msk [vmem:[%s2131 + $0xc7] sm:$0x1] %vm1612, %v2231
    %v2238 = vunpack.c.l.s4 1966171168
    %v2239 = vunpack.c.0.s8 %v2238
    %v2240 = vlaneseq
    %v2241 = vshrl.u32 %v2240, 7
    %v2242 = vsub.s32 %v2239, %v2241
    %v2243 = vrot.slane %v1519, %v2242
    %v2244 = vcombine.high %v2243, %v2243
    %v2246 = vunpack.c.l.s4 1966171168
    %v2247 = vunpack.c.0.s8 %v2246
    %v2248 = vlaneseq
    %v2249 = vshrl.u32 %v2248, 7
    %v2250 = vsub.s32 %v2247, %v2249
    %v2251 = vrot.slane %v2243, %v2250
    %v2253 = vunpack.c.l.s4 1966171168
    %v2254 = vunpack.c.0.s8 %v2253
    %v2255 = vlaneseq
    %v2256 = vshrl.u32 %v2255, 7
    %v2257 = vsub.s32 %v2254, %v2256
    %v2258 = vrot.slane %v2244, %v2257
    %2261 = vst.msk [vmem:[%s2131 + $0x8] sm:$0x1] %vm1612, %v2251
    %2262 = vst.msk [vmem:[%s2131 + $0xc8] sm:$0x1] %vm1612, %v2258
    %v2263 = vlaneseq
    %v2264 = vshrl.u32 %v2263, 7
    %v2265 = vsub.s32 0, %v2264
    %v2266 = vrot.slane %v2251, %v2265
    %v2267 = vlaneseq
    %v2268 = vshrl.u32 %v2267, 7
    %v2269 = vsub.s32 0, %v2268
    %v2270 = vrot.slane %v2258, %v2269
    %2271 = vrot.lane.b32.xlu0 %v2266, 64
    %v2272 = vpop.permute.xlu0 %2271
    %2273 = vrot.lane.b32.xlu0 %v2270, 64
    %v2274 = vpop.permute.xlu0 %2273
    %2277 = vst.msk [vmem:[%s2131 + $0x9] sm:$0x1] %vm1612, %v2272
    %2278 = vst.msk [vmem:[%s2131 + $0xc9] sm:$0x1] %vm1612, %v2274
    %v2281 = vunpack.c.l.s4 1966171168
    %v2282 = vunpack.c.0.s8 %v2281
    %v2283 = vlaneseq
    %v2284 = vshrl.u32 %v2283, 7
    %v2285 = vsub.s32 %v2282, %v2284
    %v2286 = vrot.slane %v1520, %v2285
    %v2287 = vcombine.high %v2286, %v2286
    %v2289 = vunpack.c.l.s4 1966171168
    %v2290 = vunpack.c.0.s8 %v2289
    %v2291 = vlaneseq
    %v2292 = vshrl.u32 %v2291, 7
    %v2293 = vsub.s32 %v2290, %v2292
    %v2294 = vrot.slane %v2286, %v2293
    %v2296 = vunpack.c.l.s4 1966171168
    %v2297 = vunpack.c.0.s8 %v2296
    %v2298 = vlaneseq
    %v2299 = vshrl.u32 %v2298, 7
    %v2300 = vsub.s32 %v2297, %v2299
    %v2301 = vrot.slane %v2287, %v2300
    %s2304 = scalar_lea.vmem [#allocation2], 96
    %2305 = vst.msk [vmem:[%s2304 + $0x2] sm:$0x1] %vm1612, %v2294
    %2306 = vst.msk [vmem:[%s2304 + $0xc2] sm:$0x1] %vm1612, %v2301
    %v2307 = vlaneseq
    %v2308 = vshrl.u32 %v2307, 7
    %v2309 = vsub.s32 0, %v2308
    %v2310 = vrot.slane %v2294, %v2309
    %v2311 = vlaneseq
    %v2312 = vshrl.u32 %v2311, 7
    %v2313 = vsub.s32 0, %v2312
    %v2314 = vrot.slane %v2301, %v2313
    %2315 = vrot.lane.b32.xlu0 %v2310, 64
    %v2316 = vpop.permute.xlu0 %2315
    %2317 = vrot.lane.b32.xlu0 %v2314, 64
    %v2318 = vpop.permute.xlu0 %2317
    %2321 = vst.msk [vmem:[%s2304 + $0x3] sm:$0x1] %vm1612, %v2316
    %2322 = vst.msk [vmem:[%s2304 + $0xc3] sm:$0x1] %vm1612, %v2318
    %v2325 = vunpack.c.l.s4 1966171168
    %v2326 = vunpack.c.0.s8 %v2325
    %v2327 = vlaneseq
    %v2328 = vshrl.u32 %v2327, 7
    %v2329 = vsub.s32 %v2326, %v2328
    %v2330 = vrot.slane %v1521, %v2329
    %v2331 = vcombine.high %v2330, %v2330
    %v2333 = vunpack.c.l.s4 1966171168
    %v2334 = vunpack.c.0.s8 %v2333
    %v2335 = vlaneseq
    %v2336 = vshrl.u32 %v2335, 7
    %v2337 = vsub.s32 %v2334, %v2336
    %v2338 = vrot.slane %v2330, %v2337
    %v2340 = vunpack.c.l.s4 1966171168
    %v2341 = vunpack.c.0.s8 %v2340
    %v2342 = vlaneseq
    %v2343 = vshrl.u32 %v2342, 7
    %v2344 = vsub.s32 %v2341, %v2343
    %v2345 = vrot.slane %v2331, %v2344
    %2348 = vst.msk [vmem:[%s2304 + $0x4] sm:$0x1] %vm1612, %v2338
    %2349 = vst.msk [vmem:[%s2304 + $0xc4] sm:$0x1] %vm1612, %v2345
    %v2350 = vlaneseq
    %v2351 = vshrl.u32 %v2350, 7
    %v2352 = vsub.s32 0, %v2351
    %v2353 = vrot.slane %v2338, %v2352
    %v2354 = vlaneseq
    %v2355 = vshrl.u32 %v2354, 7
    %v2356 = vsub.s32 0, %v2355
    %v2357 = vrot.slane %v2345, %v2356
    %2358 = vrot.lane.b32.xlu0 %v2353, 64
    %v2359 = vpop.permute.xlu0 %2358
    %2360 = vrot.lane.b32.xlu0 %v2357, 64
    %v2361 = vpop.permute.xlu0 %2360
    %2364 = vst.msk [vmem:[%s2304 + $0x5] sm:$0x1] %vm1612, %v2359
    %2365 = vst.msk [vmem:[%s2304 + $0xc5] sm:$0x1] %vm1612, %v2361
    %v2368 = vunpack.c.l.s4 1966171168
    %v2369 = vunpack.c.0.s8 %v2368
    %v2370 = vlaneseq
    %v2371 = vshrl.u32 %v2370, 7
    %v2372 = vsub.s32 %v2369, %v2371
    %v2373 = vrot.slane %v1522, %v2372
    %v2374 = vcombine.high %v2373, %v2373
    %v2376 = vunpack.c.l.s4 1966171168
    %v2377 = vunpack.c.0.s8 %v2376
    %v2378 = vlaneseq
    %v2379 = vshrl.u32 %v2378, 7
    %v2380 = vsub.s32 %v2377, %v2379
    %v2381 = vrot.slane %v2373, %v2380
    %v2383 = vunpack.c.l.s4 1966171168
    %v2384 = vunpack.c.0.s8 %v2383
    %v2385 = vlaneseq
    %v2386 = vshrl.u32 %v2385, 7
    %v2387 = vsub.s32 %v2384, %v2386
    %v2388 = vrot.slane %v2374, %v2387
    %2391 = vst.msk [vmem:[%s2304 + $0x6] sm:$0x1] %vm1612, %v2381
    %2392 = vst.msk [vmem:[%s2304 + $0xc6] sm:$0x1] %vm1612, %v2388
    %v2393 = vlaneseq
    %v2394 = vshrl.u32 %v2393, 7
    %v2395 = vsub.s32 0, %v2394
    %v2396 = vrot.slane %v2381, %v2395
    %v2397 = vlaneseq
    %v2398 = vshrl.u32 %v2397, 7
    %v2399 = vsub.s32 0, %v2398
    %v2400 = vrot.slane %v2388, %v2399
    %2401 = vrot.lane.b32.xlu0 %v2396, 64
    %v2402 = vpop.permute.xlu0 %2401
    %2403 = vrot.lane.b32.xlu0 %v2400, 64
    %v2404 = vpop.permute.xlu0 %2403
    %2407 = vst.msk [vmem:[%s2304 + $0x7] sm:$0x1] %vm1612, %v2402
    %2408 = vst.msk [vmem:[%s2304 + $0xc7] sm:$0x1] %vm1612, %v2404
    %v2411 = vunpack.c.l.s4 1966171168
    %v2412 = vunpack.c.0.s8 %v2411
    %v2413 = vlaneseq
    %v2414 = vshrl.u32 %v2413, 7
    %v2415 = vsub.s32 %v2412, %v2414
    %v2416 = vrot.slane %v1523, %v2415
    %v2417 = vcombine.high %v2416, %v2416
    %v2419 = vunpack.c.l.s4 1966171168
    %v2420 = vunpack.c.0.s8 %v2419
    %v2421 = vlaneseq
    %v2422 = vshrl.u32 %v2421, 7
    %v2423 = vsub.s32 %v2420, %v2422
    %v2424 = vrot.slane %v2416, %v2423
    %v2426 = vunpack.c.l.s4 1966171168
    %v2427 = vunpack.c.0.s8 %v2426
    %v2428 = vlaneseq
    %v2429 = vshrl.u32 %v2428, 7
    %v2430 = vsub.s32 %v2427, %v2429
    %v2431 = vrot.slane %v2417, %v2430
    %2434 = vst.msk [vmem:[%s2304 + $0x8] sm:$0x1] %vm1612, %v2424
    %2435 = vst.msk [vmem:[%s2304 + $0xc8] sm:$0x1] %vm1612, %v2431
    %v2436 = vlaneseq
    %v2437 = vshrl.u32 %v2436, 7
    %v2438 = vsub.s32 0, %v2437
    %v2439 = vrot.slane %v2424, %v2438
    %v2440 = vlaneseq
    %v2441 = vshrl.u32 %v2440, 7
    %v2442 = vsub.s32 0, %v2441
    %v2443 = vrot.slane %v2431, %v2442
    %2444 = vrot.lane.b32.xlu0 %v2439, 64
    %v2445 = vpop.permute.xlu0 %2444
    %2446 = vrot.lane.b32.xlu0 %v2443, 64
    %v2447 = vpop.permute.xlu0 %2446
    %2450 = vst.msk [vmem:[%s2304 + $0x9] sm:$0x1] %vm1612, %v2445
    %2451 = vst.msk [vmem:[%s2304 + $0xc9] sm:$0x1] %vm1612, %v2447
    %v2454 = vunpack.c.l.s4 1966171168
    %v2455 = vunpack.c.0.s8 %v2454
    %v2456 = vlaneseq
    %v2457 = vshrl.u32 %v2456, 7
    %v2458 = vsub.s32 %v2455, %v2457
    %v2459 = vrot.slane %v1524, %v2458
    %v2460 = vcombine.high %v2459, %v2459
    %v2462 = vunpack.c.l.s4 1966171168
    %v2463 = vunpack.c.0.s8 %v2462
    %v2464 = vlaneseq
    %v2465 = vshrl.u32 %v2464, 7
    %v2466 = vsub.s32 %v2463, %v2465
    %v2467 = vrot.slane %v2459, %v2466
    %v2469 = vunpack.c.l.s4 1966171168
    %v2470 = vunpack.c.0.s8 %v2469
    %v2471 = vlaneseq
    %v2472 = vshrl.u32 %v2471, 7
    %v2473 = vsub.s32 %v2470, %v2472
    %v2474 = vrot.slane %v2460, %v2473
    %s2477 = scalar_lea.vmem [#allocation2], 112
    %2478 = vst.msk [vmem:[%s2477 + $0x2] sm:$0x1] %vm1612, %v2467
    %2479 = vst.msk [vmem:[%s2477 + $0xc2] sm:$0x1] %vm1612, %v2474
    %v2480 = vlaneseq
    %v2481 = vshrl.u32 %v2480, 7
    %v2482 = vsub.s32 0, %v2481
    %v2483 = vrot.slane %v2467, %v2482
    %v2484 = vlaneseq
    %v2485 = vshrl.u32 %v2484, 7
    %v2486 = vsub.s32 0, %v2485
    %v2487 = vrot.slane %v2474, %v2486
    %2488 = vrot.lane.b32.xlu0 %v2483, 64
    %v2489 = vpop.permute.xlu0 %2488
    %2490 = vrot.lane.b32.xlu0 %v2487, 64
    %v2491 = vpop.permute.xlu0 %2490
    %2494 = vst.msk [vmem:[%s2477 + $0x3] sm:$0x1] %vm1612, %v2489
    %2495 = vst.msk [vmem:[%s2477 + $0xc3] sm:$0x1] %vm1612, %v2491
    %v2498 = vunpack.c.l.s4 1966171168
    %v2499 = vunpack.c.0.s8 %v2498
    %v2500 = vlaneseq
    %v2501 = vshrl.u32 %v2500, 7
    %v2502 = vsub.s32 %v2499, %v2501
    %v2503 = vrot.slane %v1525, %v2502
    %v2504 = vcombine.high %v2503, %v2503
    %v2506 = vunpack.c.l.s4 1966171168
    %v2507 = vunpack.c.0.s8 %v2506
    %v2508 = vlaneseq
    %v2509 = vshrl.u32 %v2508, 7
    %v2510 = vsub.s32 %v2507, %v2509
    %v2511 = vrot.slane %v2503, %v2510
    %v2513 = vunpack.c.l.s4 1966171168
    %v2514 = vunpack.c.0.s8 %v2513
    %v2515 = vlaneseq
    %v2516 = vshrl.u32 %v2515, 7
    %v2517 = vsub.s32 %v2514, %v2516
    %v2518 = vrot.slane %v2504, %v2517
    %2521 = vst.msk [vmem:[%s2477 + $0x4] sm:$0x1] %vm1612, %v2511
    %2522 = vst.msk [vmem:[%s2477 + $0xc4] sm:$0x1] %vm1612, %v2518
    %v2523 = vlaneseq
    %v2524 = vshrl.u32 %v2523, 7
    %v2525 = vsub.s32 0, %v2524
    %v2526 = vrot.slane %v2511, %v2525
    %v2527 = vlaneseq
    %v2528 = vshrl.u32 %v2527, 7
    %v2529 = vsub.s32 0, %v2528
    %v2530 = vrot.slane %v2518, %v2529
    %2531 = vrot.lane.b32.xlu0 %v2526, 64
    %v2532 = vpop.permute.xlu0 %2531
    %2533 = vrot.lane.b32.xlu0 %v2530, 64
    %v2534 = vpop.permute.xlu0 %2533
    %2537 = vst.msk [vmem:[%s2477 + $0x5] sm:$0x1] %vm1612, %v2532
    %2538 = vst.msk [vmem:[%s2477 + $0xc5] sm:$0x1] %vm1612, %v2534
    %v2541 = vunpack.c.l.s4 1966171168
    %v2542 = vunpack.c.0.s8 %v2541
    %v2543 = vlaneseq
    %v2544 = vshrl.u32 %v2543, 7
    %v2545 = vsub.s32 %v2542, %v2544
    %v2546 = vrot.slane %v1526, %v2545
    %v2547 = vcombine.high %v2546, %v2546
    %v2549 = vunpack.c.l.s4 1966171168
    %v2550 = vunpack.c.0.s8 %v2549
    %v2551 = vlaneseq
    %v2552 = vshrl.u32 %v2551, 7
    %v2553 = vsub.s32 %v2550, %v2552
    %v2554 = vrot.slane %v2546, %v2553
    %v2556 = vunpack.c.l.s4 1966171168
    %v2557 = vunpack.c.0.s8 %v2556
    %v2558 = vlaneseq
    %v2559 = vshrl.u32 %v2558, 7
    %v2560 = vsub.s32 %v2557, %v2559
    %v2561 = vrot.slane %v2547, %v2560
    %2564 = vst.msk [vmem:[%s2477 + $0x6] sm:$0x1] %vm1612, %v2554
    %2565 = vst.msk [vmem:[%s2477 + $0xc6] sm:$0x1] %vm1612, %v2561
    %v2566 = vlaneseq
    %v2567 = vshrl.u32 %v2566, 7
    %v2568 = vsub.s32 0, %v2567
    %v2569 = vrot.slane %v2554, %v2568
    %v2570 = vlaneseq
    %v2571 = vshrl.u32 %v2570, 7
    %v2572 = vsub.s32 0, %v2571
    %v2573 = vrot.slane %v2561, %v2572
    %2574 = vrot.lane.b32.xlu0 %v2569, 64
    %v2575 = vpop.permute.xlu0 %2574
    %2576 = vrot.lane.b32.xlu0 %v2573, 64
    %v2577 = vpop.permute.xlu0 %2576
    %2580 = vst.msk [vmem:[%s2477 + $0x7] sm:$0x1] %vm1612, %v2575
    %2581 = vst.msk [vmem:[%s2477 + $0xc7] sm:$0x1] %vm1612, %v2577
    %v2584 = vunpack.c.l.s4 1966171168
    %v2585 = vunpack.c.0.s8 %v2584
    %v2586 = vlaneseq
    %v2587 = vshrl.u32 %v2586, 7
    %v2588 = vsub.s32 %v2585, %v2587
    %v2589 = vrot.slane %v1527, %v2588
    %v2590 = vcombine.high %v2589, %v2589
    %v2592 = vunpack.c.l.s4 1966171168
    %v2593 = vunpack.c.0.s8 %v2592
    %v2594 = vlaneseq
    %v2595 = vshrl.u32 %v2594, 7
    %v2596 = vsub.s32 %v2593, %v2595
    %v2597 = vrot.slane %v2589, %v2596
    %v2599 = vunpack.c.l.s4 1966171168
    %v2600 = vunpack.c.0.s8 %v2599
    %v2601 = vlaneseq
    %v2602 = vshrl.u32 %v2601, 7
    %v2603 = vsub.s32 %v2600, %v2602
    %v2604 = vrot.slane %v2590, %v2603
    %2607 = vst.msk [vmem:[%s2477 + $0x8] sm:$0x1] %vm1612, %v2597
    %2608 = vst.msk [vmem:[%s2477 + $0xc8] sm:$0x1] %vm1612, %v2604
    %v2609 = vlaneseq
    %v2610 = vshrl.u32 %v2609, 7
    %v2611 = vsub.s32 0, %v2610
    %v2612 = vrot.slane %v2597, %v2611
    %v2613 = vlaneseq
    %v2614 = vshrl.u32 %v2613, 7
    %v2615 = vsub.s32 0, %v2614
    %v2616 = vrot.slane %v2604, %v2615
    %2617 = vrot.lane.b32.xlu0 %v2612, 64
    %v2618 = vpop.permute.xlu0 %2617
    %2619 = vrot.lane.b32.xlu0 %v2616, 64
    %v2620 = vpop.permute.xlu0 %2619
    %2623 = vst.msk [vmem:[%s2477 + $0x9] sm:$0x1] %vm1612, %v2618
    %2624 = vst.msk [vmem:[%s2477 + $0xc9] sm:$0x1] %vm1612, %v2620
    %v2627 = vunpack.c.l.s4 1966171168
    %v2628 = vunpack.c.0.s8 %v2627
    %v2629 = vlaneseq
    %v2630 = vshrl.u32 %v2629, 7
    %v2631 = vsub.s32 %v2628, %v2630
    %v2632 = vrot.slane %v1528, %v2631
    %v2633 = vcombine.high %v2632, %v2632
    %v2635 = vunpack.c.l.s4 1966171168
    %v2636 = vunpack.c.0.s8 %v2635
    %v2637 = vlaneseq
    %v2638 = vshrl.u32 %v2637, 7
    %v2639 = vsub.s32 %v2636, %v2638
    %v2640 = vrot.slane %v2632, %v2639
    %v2642 = vunpack.c.l.s4 1966171168
    %v2643 = vunpack.c.0.s8 %v2642
    %v2644 = vlaneseq
    %v2645 = vshrl.u32 %v2644, 7
    %v2646 = vsub.s32 %v2643, %v2645
    %v2647 = vrot.slane %v2633, %v2646
    %s2650 = scalar_lea.vmem [#allocation2], 128
    %2651 = vst.msk [vmem:[%s2650 + $0x2] sm:$0x1] %vm1612, %v2640
    %2652 = vst.msk [vmem:[%s2650 + $0xc2] sm:$0x1] %vm1612, %v2647
    %v2653 = vlaneseq
    %v2654 = vshrl.u32 %v2653, 7
    %v2655 = vsub.s32 0, %v2654
    %v2656 = vrot.slane %v2640, %v2655
    %v2657 = vlaneseq
    %v2658 = vshrl.u32 %v2657, 7
    %v2659 = vsub.s32 0, %v2658
    %v2660 = vrot.slane %v2647, %v2659
    %2661 = vrot.lane.b32.xlu0 %v2656, 64
    %v2662 = vpop.permute.xlu0 %2661
    %2663 = vrot.lane.b32.xlu0 %v2660, 64
    %v2664 = vpop.permute.xlu0 %2663
    %2667 = vst.msk [vmem:[%s2650 + $0x3] sm:$0x1] %vm1612, %v2662
    %2668 = vst.msk [vmem:[%s2650 + $0xc3] sm:$0x1] %vm1612, %v2664
    %v2671 = vunpack.c.l.s4 1966171168
    %v2672 = vunpack.c.0.s8 %v2671
    %v2673 = vlaneseq
    %v2674 = vshrl.u32 %v2673, 7
    %v2675 = vsub.s32 %v2672, %v2674
    %v2676 = vrot.slane %v1529, %v2675
    %v2677 = vcombine.high %v2676, %v2676
    %v2679 = vunpack.c.l.s4 1966171168
    %v2680 = vunpack.c.0.s8 %v2679
    %v2681 = vlaneseq
    %v2682 = vshrl.u32 %v2681, 7
    %v2683 = vsub.s32 %v2680, %v2682
    %v2684 = vrot.slane %v2676, %v2683
    %v2686 = vunpack.c.l.s4 1966171168
    %v2687 = vunpack.c.0.s8 %v2686
    %v2688 = vlaneseq
    %v2689 = vshrl.u32 %v2688, 7
    %v2690 = vsub.s32 %v2687, %v2689
    %v2691 = vrot.slane %v2677, %v2690
    %2694 = vst.msk [vmem:[%s2650 + $0x4] sm:$0x1] %vm1612, %v2684
    %2695 = vst.msk [vmem:[%s2650 + $0xc4] sm:$0x1] %vm1612, %v2691
    %v2696 = vlaneseq
    %v2697 = vshrl.u32 %v2696, 7
    %v2698 = vsub.s32 0, %v2697
    %v2699 = vrot.slane %v2684, %v2698
    %v2700 = vlaneseq
    %v2701 = vshrl.u32 %v2700, 7
    %v2702 = vsub.s32 0, %v2701
    %v2703 = vrot.slane %v2691, %v2702
    %2704 = vrot.lane.b32.xlu0 %v2699, 64
    %v2705 = vpop.permute.xlu0 %2704
    %2706 = vrot.lane.b32.xlu0 %v2703, 64
    %v2707 = vpop.permute.xlu0 %2706
    %2710 = vst.msk [vmem:[%s2650 + $0x5] sm:$0x1] %vm1612, %v2705
    %2711 = vst.msk [vmem:[%s2650 + $0xc5] sm:$0x1] %vm1612, %v2707
    %v2714 = vunpack.c.l.s4 1966171168
    %v2715 = vunpack.c.0.s8 %v2714
    %v2716 = vlaneseq
    %v2717 = vshrl.u32 %v2716, 7
    %v2718 = vsub.s32 %v2715, %v2717
    %v2719 = vrot.slane %v1530, %v2718
    %v2720 = vcombine.high %v2719, %v2719
    %v2722 = vunpack.c.l.s4 1966171168
    %v2723 = vunpack.c.0.s8 %v2722
    %v2724 = vlaneseq
    %v2725 = vshrl.u32 %v2724, 7
    %v2726 = vsub.s32 %v2723, %v2725
    %v2727 = vrot.slane %v2719, %v2726
    %v2729 = vunpack.c.l.s4 1966171168
    %v2730 = vunpack.c.0.s8 %v2729
    %v2731 = vlaneseq
    %v2732 = vshrl.u32 %v2731, 7
    %v2733 = vsub.s32 %v2730, %v2732
    %v2734 = vrot.slane %v2720, %v2733
    %2737 = vst.msk [vmem:[%s2650 + $0x6] sm:$0x1] %vm1612, %v2727
    %2738 = vst.msk [vmem:[%s2650 + $0xc6] sm:$0x1] %vm1612, %v2734
    %v2739 = vlaneseq
    %v2740 = vshrl.u32 %v2739, 7
    %v2741 = vsub.s32 0, %v2740
    %v2742 = vrot.slane %v2727, %v2741
    %v2743 = vlaneseq
    %v2744 = vshrl.u32 %v2743, 7
    %v2745 = vsub.s32 0, %v2744
    %v2746 = vrot.slane %v2734, %v2745
    %2747 = vrot.lane.b32.xlu0 %v2742, 64
    %v2748 = vpop.permute.xlu0 %2747
    %2749 = vrot.lane.b32.xlu0 %v2746, 64
    %v2750 = vpop.permute.xlu0 %2749
    %2753 = vst.msk [vmem:[%s2650 + $0x7] sm:$0x1] %vm1612, %v2748
    %2754 = vst.msk [vmem:[%s2650 + $0xc7] sm:$0x1] %vm1612, %v2750
    %v2757 = vunpack.c.l.s4 1966171168
    %v2758 = vunpack.c.0.s8 %v2757
    %v2759 = vlaneseq
    %v2760 = vshrl.u32 %v2759, 7
    %v2761 = vsub.s32 %v2758, %v2760
    %v2762 = vrot.slane %v1531, %v2761
    %v2763 = vcombine.high %v2762, %v2762
    %v2765 = vunpack.c.l.s4 1966171168
    %v2766 = vunpack.c.0.s8 %v2765
    %v2767 = vlaneseq
    %v2768 = vshrl.u32 %v2767, 7
    %v2769 = vsub.s32 %v2766, %v2768
    %v2770 = vrot.slane %v2762, %v2769
    %v2772 = vunpack.c.l.s4 1966171168
    %v2773 = vunpack.c.0.s8 %v2772
    %v2774 = vlaneseq
    %v2775 = vshrl.u32 %v2774, 7
    %v2776 = vsub.s32 %v2773, %v2775
    %v2777 = vrot.slane %v2763, %v2776
    %2780 = vst.msk [vmem:[%s2650 + $0x8] sm:$0x1] %vm1612, %v2770
    %2781 = vst.msk [vmem:[%s2650 + $0xc8] sm:$0x1] %vm1612, %v2777
    %v2782 = vlaneseq
    %v2783 = vshrl.u32 %v2782, 7
    %v2784 = vsub.s32 0, %v2783
    %v2785 = vrot.slane %v2770, %v2784
    %v2786 = vlaneseq
    %v2787 = vshrl.u32 %v2786, 7
    %v2788 = vsub.s32 0, %v2787
    %v2789 = vrot.slane %v2777, %v2788
    %2790 = vrot.lane.b32.xlu0 %v2785, 64
    %v2791 = vpop.permute.xlu0 %2790
    %2792 = vrot.lane.b32.xlu0 %v2789, 64
    %v2793 = vpop.permute.xlu0 %2792
    %2796 = vst.msk [vmem:[%s2650 + $0x9] sm:$0x1] %vm1612, %v2791
    %2797 = vst.msk [vmem:[%s2650 + $0xc9] sm:$0x1] %vm1612, %v2793
    %v2800 = vunpack.c.l.s4 1966171168
    %v2801 = vunpack.c.0.s8 %v2800
    %v2802 = vlaneseq
    %v2803 = vshrl.u32 %v2802, 7
    %v2804 = vsub.s32 %v2801, %v2803
    %v2805 = vrot.slane %v1532, %v2804
    %v2806 = vcombine.high %v2805, %v2805
    %v2808 = vunpack.c.l.s4 1966171168
    %v2809 = vunpack.c.0.s8 %v2808
    %v2810 = vlaneseq
    %v2811 = vshrl.u32 %v2810, 7
    %v2812 = vsub.s32 %v2809, %v2811
    %v2813 = vrot.slane %v2805, %v2812
    %v2815 = vunpack.c.l.s4 1966171168
    %v2816 = vunpack.c.0.s8 %v2815
    %v2817 = vlaneseq
    %v2818 = vshrl.u32 %v2817, 7
    %v2819 = vsub.s32 %v2816, %v2818
    %v2820 = vrot.slane %v2806, %v2819
    %s2823 = scalar_lea.vmem [#allocation2], 144
    %2824 = vst.msk [vmem:[%s2823 + $0x2] sm:$0x1] %vm1612, %v2813
    %2825 = vst.msk [vmem:[%s2823 + $0xc2] sm:$0x1] %vm1612, %v2820
    %v2826 = vlaneseq
    %v2827 = vshrl.u32 %v2826, 7
    %v2828 = vsub.s32 0, %v2827
    %v2829 = vrot.slane %v2813, %v2828
    %v2830 = vlaneseq
    %v2831 = vshrl.u32 %v2830, 7
    %v2832 = vsub.s32 0, %v2831
    %v2833 = vrot.slane %v2820, %v2832
    %2834 = vrot.lane.b32.xlu0 %v2829, 64
    %v2835 = vpop.permute.xlu0 %2834
    %2836 = vrot.lane.b32.xlu0 %v2833, 64
    %v2837 = vpop.permute.xlu0 %2836
    %2840 = vst.msk [vmem:[%s2823 + $0x3] sm:$0x1] %vm1612, %v2835
    %2841 = vst.msk [vmem:[%s2823 + $0xc3] sm:$0x1] %vm1612, %v2837
    %v2844 = vunpack.c.l.s4 1966171168
    %v2845 = vunpack.c.0.s8 %v2844
    %v2846 = vlaneseq
    %v2847 = vshrl.u32 %v2846, 7
    %v2848 = vsub.s32 %v2845, %v2847
    %v2849 = vrot.slane %v1533, %v2848
    %v2850 = vcombine.high %v2849, %v2849
    %v2852 = vunpack.c.l.s4 1966171168
    %v2853 = vunpack.c.0.s8 %v2852
    %v2854 = vlaneseq
    %v2855 = vshrl.u32 %v2854, 7
    %v2856 = vsub.s32 %v2853, %v2855
    %v2857 = vrot.slane %v2849, %v2856
    %v2859 = vunpack.c.l.s4 1966171168
    %v2860 = vunpack.c.0.s8 %v2859
    %v2861 = vlaneseq
    %v2862 = vshrl.u32 %v2861, 7
    %v2863 = vsub.s32 %v2860, %v2862
    %v2864 = vrot.slane %v2850, %v2863
    %2867 = vst.msk [vmem:[%s2823 + $0x4] sm:$0x1] %vm1612, %v2857
    %2868 = vst.msk [vmem:[%s2823 + $0xc4] sm:$0x1] %vm1612, %v2864
    %v2869 = vlaneseq
    %v2870 = vshrl.u32 %v2869, 7
    %v2871 = vsub.s32 0, %v2870
    %v2872 = vrot.slane %v2857, %v2871
    %v2873 = vlaneseq
    %v2874 = vshrl.u32 %v2873, 7
    %v2875 = vsub.s32 0, %v2874
    %v2876 = vrot.slane %v2864, %v2875
    %2877 = vrot.lane.b32.xlu0 %v2872, 64
    %v2878 = vpop.permute.xlu0 %2877
    %2879 = vrot.lane.b32.xlu0 %v2876, 64
    %v2880 = vpop.permute.xlu0 %2879
    %2883 = vst.msk [vmem:[%s2823 + $0x5] sm:$0x1] %vm1612, %v2878
    %2884 = vst.msk [vmem:[%s2823 + $0xc5] sm:$0x1] %vm1612, %v2880
    %v2887 = vunpack.c.l.s4 1966171168
    %v2888 = vunpack.c.0.s8 %v2887
    %v2889 = vlaneseq
    %v2890 = vshrl.u32 %v2889, 7
    %v2891 = vsub.s32 %v2888, %v2890
    %v2892 = vrot.slane %v1534, %v2891
    %v2893 = vcombine.high %v2892, %v2892
    %v2895 = vunpack.c.l.s4 1966171168
    %v2896 = vunpack.c.0.s8 %v2895
    %v2897 = vlaneseq
    %v2898 = vshrl.u32 %v2897, 7
    %v2899 = vsub.s32 %v2896, %v2898
    %v2900 = vrot.slane %v2892, %v2899
    %v2902 = vunpack.c.l.s4 1966171168
    %v2903 = vunpack.c.0.s8 %v2902
    %v2904 = vlaneseq
    %v2905 = vshrl.u32 %v2904, 7
    %v2906 = vsub.s32 %v2903, %v2905
    %v2907 = vrot.slane %v2893, %v2906
    %2910 = vst.msk [vmem:[%s2823 + $0x6] sm:$0x1] %vm1612, %v2900
    %2911 = vst.msk [vmem:[%s2823 + $0xc6] sm:$0x1] %vm1612, %v2907
    %v2912 = vlaneseq
    %v2913 = vshrl.u32 %v2912, 7
    %v2914 = vsub.s32 0, %v2913
    %v2915 = vrot.slane %v2900, %v2914
    %v2916 = vlaneseq
    %v2917 = vshrl.u32 %v2916, 7
    %v2918 = vsub.s32 0, %v2917
    %v2919 = vrot.slane %v2907, %v2918
    %2920 = vrot.lane.b32.xlu0 %v2915, 64
    %v2921 = vpop.permute.xlu0 %2920
    %2922 = vrot.lane.b32.xlu0 %v2919, 64
    %v2923 = vpop.permute.xlu0 %2922
    %2926 = vst.msk [vmem:[%s2823 + $0x7] sm:$0x1] %vm1612, %v2921
    %2927 = vst.msk [vmem:[%s2823 + $0xc7] sm:$0x1] %vm1612, %v2923
    %v2930 = vunpack.c.l.s4 1966171168
    %v2931 = vunpack.c.0.s8 %v2930
    %v2932 = vlaneseq
    %v2933 = vshrl.u32 %v2932, 7
    %v2934 = vsub.s32 %v2931, %v2933
    %v2935 = vrot.slane %v1535, %v2934
    %v2936 = vcombine.high %v2935, %v2935
    %v2938 = vunpack.c.l.s4 1966171168
    %v2939 = vunpack.c.0.s8 %v2938
    %v2940 = vlaneseq
    %v2941 = vshrl.u32 %v2940, 7
    %v2942 = vsub.s32 %v2939, %v2941
    %v2943 = vrot.slane %v2935, %v2942
    %v2945 = vunpack.c.l.s4 1966171168
    %v2946 = vunpack.c.0.s8 %v2945
    %v2947 = vlaneseq
    %v2948 = vshrl.u32 %v2947, 7
    %v2949 = vsub.s32 %v2946, %v2948
    %v2950 = vrot.slane %v2936, %v2949
    %2953 = vst.msk [vmem:[%s2823 + $0x8] sm:$0x1] %vm1612, %v2943
    %2954 = vst.msk [vmem:[%s2823 + $0xc8] sm:$0x1] %vm1612, %v2950
    %v2955 = vlaneseq
    %v2956 = vshrl.u32 %v2955, 7
    %v2957 = vsub.s32 0, %v2956
    %v2958 = vrot.slane %v2943, %v2957
    %v2959 = vlaneseq
    %v2960 = vshrl.u32 %v2959, 7
    %v2961 = vsub.s32 0, %v2960
    %v2962 = vrot.slane %v2950, %v2961
    %2963 = vrot.lane.b32.xlu0 %v2958, 64
    %v2964 = vpop.permute.xlu0 %2963
    %2965 = vrot.lane.b32.xlu0 %v2962, 64
    %v2966 = vpop.permute.xlu0 %2965
    %2969 = vst.msk [vmem:[%s2823 + $0x9] sm:$0x1] %vm1612, %v2964
    %2970 = vst.msk [vmem:[%s2823 + $0xc9] sm:$0x1] %vm1612, %v2966
    %v2971 = vld [vmem:[#allocation2] sm:$0xff]
    %v2972 = vld [vmem:[#allocation2 + $0x8] sm:$0xf]
    %v2973 = vld [vmem:[#allocation2 + $0x10] sm:$0xff]
    %v2974 = vld [vmem:[#allocation2 + $0x18] sm:$0xf]
    %v2975 = vld [vmem:[#allocation2 + $0x20] sm:$0xff]
    %v2976 = vld [vmem:[#allocation2 + $0x28] sm:$0xf]
    %v2977 = vld [vmem:[#allocation2 + $0x30] sm:$0xff]
    %v2978 = vld [vmem:[#allocation2 + $0x38] sm:$0xf]
    %v2979 = vld [vmem:[#allocation2 + $0x40] sm:$0xff]
    %v2980 = vld [vmem:[#allocation2 + $0x48] sm:$0xf]
    %v2981 = vld [vmem:[#allocation2 + $0x50] sm:$0xff]
    %v2982 = vld [vmem:[#allocation2 + $0x58] sm:$0xf]
    %v2983 = vld [vmem:[#allocation2 + $0x60] sm:$0xff]
    %v2984 = vld [vmem:[#allocation2 + $0x68] sm:$0xf]
    %v2985 = vld [vmem:[#allocation2 + $0x70] sm:$0xff]
    %v2986 = vld [vmem:[#allocation2 + $0x78] sm:$0xf]
    %v2987 = vld [vmem:[#allocation2 + $0x80] sm:$0xff]
    %v2988 = vld [vmem:[#allocation2 + $0x88] sm:$0xf]
    %v2989 = vld [vmem:[#allocation2 + $0x90] sm:$0xff]
    %v2990 = vld [vmem:[#allocation2 + $0x98] sm:$0xf]
    %v2991 = vld [vmem:[#allocation2 + $0xa0] sm:$0xff]
    %v2992 = vld [vmem:[#allocation2 + $0xa8] sm:$0xf]
    %v2993 = vld [vmem:[#allocation2 + $0xb0] sm:$0xff]
    %v2994 = vld [vmem:[#allocation2 + $0xb8] sm:$0xf]
    %v2995 = vld [vmem:[#allocation2 + $0xc0] sm:$0xff]
    %v2996 = vld [vmem:[#allocation2 + $0xc8] sm:$0xf]
    %v2997 = vld [vmem:[#allocation2 + $0xd0] sm:$0xff]
    %v2998 = vld [vmem:[#allocation2 + $0xd8] sm:$0xf]
    %v2999 = vld [vmem:[#allocation2 + $0xe0] sm:$0xff]
    %v3000 = vld [vmem:[#allocation2 + $0xe8] sm:$0xf]
    %v3001 = vld [vmem:[#allocation2 + $0xf0] sm:$0xff]
    %v3002 = vld [vmem:[#allocation2 + $0xf8] sm:$0xf]
    %v3003 = vld [vmem:[#allocation2 + $0x100] sm:$0xff]
    %v3004 = vld [vmem:[#allocation2 + $0x108] sm:$0xf]
    %v3005 = vld [vmem:[#allocation2 + $0x110] sm:$0xff]
    %v3006 = vld [vmem:[#allocation2 + $0x118] sm:$0xf]
    %v3007 = vld [vmem:[#allocation2 + $0x120] sm:$0xff]
    %v3008 = vld [vmem:[#allocation2 + $0x128] sm:$0xf]
    %v3009 = vld [vmem:[#allocation2 + $0x130] sm:$0xff]
    %v3010 = vld [vmem:[#allocation2 + $0x138] sm:$0xf]
    %v3011 = vld [vmem:[#allocation2 + $0x140] sm:$0xff]
    %v3012 = vld [vmem:[#allocation2 + $0x148] sm:$0xf]
    %v3013 = vld [vmem:[#allocation2 + $0x150] sm:$0xff]
    %v3014 = vld [vmem:[#allocation2 + $0x158] sm:$0xf]
    %v3015 = vld [vmem:[#allocation2 + $0x160] sm:$0xff]
    %v3016 = vld [vmem:[#allocation2 + $0x168] sm:$0xf]
    %v3017 = vld [vmem:[#allocation2 + $0x170] sm:$0xff]
    %v3018 = vld [vmem:[#allocation2 + $0x178] sm:$0xf]
    %v3067 = vcombine.high %v2971, %v2971
    %v3068 = vcombine.high %v2973, %v2973
    %v3069 = vcombine.high %v2975, %v2975
    %v3070 = vcombine.high %v2977, %v2977
    %v3071 = vcombine.high %v2979, %v2979
    %v3072 = vcombine.high %v2981, %v2981
    %v3073 = vcombine.high %v2983, %v2983
    %v3074 = vcombine.high %v2985, %v2985
    %v3075 = vcombine.high %v2987, %v2987
    %v3076 = vcombine.high %v2989, %v2989
    %v3077 = vcombine.high %v2991, %v2991
    %v3078 = vcombine.high %v2993, %v2993
    %v3079 = vcombine.high %v2995, %v2995
    %v3080 = vcombine.high %v2997, %v2997
    %v3081 = vcombine.high %v2999, %v2999
    %v3082 = vcombine.high %v3001, %v3001
    %v3083 = vcombine.high %v3003, %v3003
    %v3084 = vcombine.high %v3005, %v3005
    %v3085 = vcombine.high %v3007, %v3007
    %v3086 = vcombine.high %v3009, %v3009
    %v3087 = vcombine.high %v3011, %v3011
    %v3088 = vcombine.high %v3013, %v3013
    %v3089 = vcombine.high %v3015, %v3015
    %v3090 = vcombine.high %v3017, %v3017
    %v3091 = vld [vmem:[#allocation9] sm:$0xff]
    %v3092 = vld [vmem:[#allocation9 + $0x8] sm:$0xff]
    %v3093 = vld [vmem:[#allocation9 + $0x10] sm:$0xff]
    %v3094 = vld [vmem:[#allocation9 + $0x18] sm:$0xff]
    %v3095 = vld [vmem:[#allocation9 + $0x20] sm:$0xff]
    %v3096 = vld [vmem:[#allocation9 + $0x28] sm:$0xff]
    %v3097 = vld [vmem:[#allocation9 + $0x30] sm:$0xff]
    %v3098 = vld [vmem:[#allocation9 + $0x38] sm:$0xff]
    %v3099 = vcombine.low %v2971, %v3067
    %v3100 = vcombine.low %v2972, %v2973
    %v3101 = vcombine.low %v3068, %v2974
    %v3102 = vcombine.low %v2975, %v3069
    %v3103 = vcombine.low %v2976, %v2977
    %v3104 = vcombine.low %v3070, %v2978
    %v3105 = vcombine.low %v2979, %v3071
    %v3106 = vcombine.low %v2980, %v2981
    %v3107 = vcombine.low %v3072, %v2982
    %v3108 = vcombine.low %v2983, %v3073
    %v3109 = vcombine.low %v2984, %v2985
    %v3110 = vcombine.low %v3074, %v2986
    %v3111 = vcombine.low %v2987, %v3075
    %v3112 = vcombine.low %v2988, %v2989
    %v3113 = vcombine.low %v3076, %v2990
    %v3114 = vcombine.low %v2991, %v3077
    %v3115 = vcombine.low %v2992, %v2993
    %v3116 = vcombine.low %v3078, %v2994
    %v3117 = vcombine.low %v2995, %v3079
    %v3118 = vcombine.low %v2996, %v2997
    %v3119 = vcombine.low %v3080, %v2998
    %v3120 = vcombine.low %v2999, %v3081
    %v3121 = vcombine.low %v3000, %v3001
    %v3122 = vcombine.low %v3082, %v3002
    %v3123 = vcombine.low %v3003, %v3083
    %v3124 = vcombine.low %v3004, %v3005
    %v3125 = vcombine.low %v3084, %v3006
    %v3126 = vcombine.low %v3007, %v3085
    %v3127 = vcombine.low %v3008, %v3009
    %v3128 = vcombine.low %v3086, %v3010
    %v3129 = vcombine.low %v3011, %v3087
    %v3130 = vcombine.low %v3012, %v3013
    %v3131 = vcombine.low %v3088, %v3014
    %v3132 = vcombine.low %v3015, %v3089
    %v3133 = vcombine.low %v3016, %v3017
    %v3134 = vcombine.low %v3090, %v3018
    %v3135 = vsel %vm1536, %v3099, 0
    %v3137 = vsel %vm1536, %v3100, 0
    %v3139 = vsel %vm1536, %v3101, 0
    %v3141 = vsel %vm1536, %v3102, 0
    %v3143 = vsel %vm1536, %v3103, 0
    %v3145 = vsel %vm1536, %v3104, 0
    %v3147 = vsel %vm1536, %v3105, 0
    %v3149 = vsel %vm1536, %v3106, 0
    %v3151 = vsel %vm1536, %v3107, 0
    %v3153 = vsel %vm1536, %v3108, 0
    %v3155 = vsel %vm1536, %v3109, 0
    %v3157 = vsel %vm1536, %v3110, 0
    %v3159 = vsel %vm1536, %v3111, 0
    %v3161 = vsel %vm1536, %v3112, 0
    %v3163 = vsel %vm1536, %v3113, 0
    %v3165 = vsel %vm1536, %v3114, 0
    %v3167 = vsel %vm1536, %v3115, 0
    %v3169 = vsel %vm1536, %v3116, 0
    %v3171 = vsel %vm1536, %v3117, 0
    %v3173 = vsel %vm1536, %v3118, 0
    %v3175 = vsel %vm1536, %v3119, 0
    %v3177 = vsel %vm1536, %v3120, 0
    %v3179 = vsel %vm1536, %v3121, 0
    %v3181 = vsel %vm1536, %v3122, 0
    %v3183 = vsel %vm1536, %v3123, 0
    %v3185 = vsel %vm1536, %v3124, 0
    %v3187 = vsel %vm1536, %v3125, 0
    %v3189 = vsel %vm1536, %v3126, 0
    %v3191 = vsel %vm1536, %v3127, 0
    %v3193 = vsel %vm1536, %v3128, 0
    %v3195 = vsel %vm1536, %v3129, 0
    %v3197 = vsel %vm1536, %v3130, 0
    %v3199 = vsel %vm1536, %v3131, 0
    %v3201 = vsel %vm1536, %v3132, 0
    %v3203 = vsel %vm1536, %v3133, 0
    %v3205 = vsel %vm1536, %v3134, 0
    %3207 = vmatprep.subr.mxu0 0.0
    %3208 = vmatpush1.msra.mxu0 0.0
    %3209 = vmatprep.subr.mxu0 0.0
    %3210 = vmatpush1.msra.mxu0 0.0
    %3211 = vmatprep.subr.mxu0 0.0
    %3212 = vmatpush1.msra.mxu0 0.0
    %3213 = vmatprep.subr.mxu0 0.0
    %3214 = vmatpush1.msra.mxu0 0.0
    %3215 = vmatprep.subr.mxu0 0.0
    %3216 = vmatpush1.msra.mxu0 0.0
    %3217 = vmatprep.subr.mxu0 0.0
    %3218 = vmatpush1.msra.mxu0 0.0
    %3219 = vmatprep.subr.mxu0 0.0
    %3220 = vmatpush1.msra.mxu0 0.0
    %3221 = vmatprep.subr.mxu0 0.0
    %3222 = vmatpush1.msra.mxu0 0.0
    %3223 = vmatprep.subr.mxu0 0.0
    %3224 = vmatpush1.msra.mxu0 %v3098
    %3225 = vmatprep.subr.mxu0 0.0
    %3226 = vmatpush1.msra.mxu0 %v3097
    %3227 = vmatprep.subr.mxu0 0.0
    %3228 = vmatpush1.msra.mxu0 %v3096
    %3229 = vmatprep.subr.mxu0 0.0
    %3230 = vmatpush1.msra.mxu0 %v3095
    %3231 = vmatprep.subr.mxu0 0.0
    %3232 = vmatpush1.msra.mxu0 %v3094
    %3233 = vmatprep.subr.mxu0 0.0
    %3234 = vmatpush1.msra.mxu0 %v3093
    %3235 = vmatprep.subr.mxu0 0.0
    %3236 = vmatpush1.msra.mxu0 %v3092
    %3237 = vmatprep.subr.mxu0 0.0
    %3238 = vmatpush1.msra.mxu0 %v3091
    %3239 = vmatprep.subr.mxu0 0.0
    %3240 = vmatpush2.msra.mxu0 0.0
    %3241 = vmatprep.subr.mxu0 0.0
    %3242 = vmatpush2.msra.mxu0 0.0
    %3243 = vmatprep.subr.mxu0 0.0
    %3244 = vmatpush2.msra.mxu0 0.0
    %3245 = vmatprep.subr.mxu0 0.0
    %3246 = vmatpush2.msra.mxu0 0.0
    %3247 = vmatprep.subr.mxu0 0.0
    %3248 = vmatpush2.msra.mxu0 0.0
    %3249 = vmatprep.subr.mxu0 0.0
    %3250 = vmatpush2.msra.mxu0 0.0
    %3251 = vmatprep.subr.mxu0 0.0
    %3252 = vmatpush2.msra.mxu0 0.0
    %3253 = vmatprep.subr.mxu0 0.0
    %3254 = vmatpush2.msra.mxu0 0.0
    %3255 = vmatprep.subr.mxu0 0.0
    %3256 = vmatpush2.msra.mxu0 0.0
    %3257 = vmatprep.subr.mxu0 0.0
    %3258 = vmatpush2.msra.mxu0 0.0
    %3259 = vmatprep.subr.mxu0 0.0
    %3260 = vmatpush2.msra.mxu0 0.0
    %3261 = vmatprep.subr.mxu0 0.0
    %3262 = vmatpush2.msra.mxu0 0.0
    %3263 = vmatprep.subr.mxu0 0.0
    %3264 = vmatpush2.msra.mxu0 0.0
    %3265 = vmatprep.subr.mxu0 0.0
    %3266 = vmatpush2.msra.mxu0 0.0
    %3267 = vmatprep.subr.mxu0 0.0
    %3268 = vmatpush2.msra.mxu0 0.0
    %3269 = vmatprep.subr.mxu0 0.0
    %3270 = vmatpush2.msra.mxu0 0.0
    %3271 = vmatprep.mubr.f32.mxu0 0.0
    %3272 = vmatmul.mubr.f32.gmra.mxu0 %v3135
    %v3273 = vpop.f32.mrf.mxu0
    %v3274 = vadd.f32 0.0, %v3273
    %v3275 = vpop.f32.mrf.mxu0
    %3276 = vmatprep.mubr.f32.mxu0 0.0
    %3277 = vmatmul.mubr.f32.gmra.mxu0 %v3137
    %v3278 = vpop.f32.mrf.mxu0
    %v3279 = vadd.f32 0.0, %v3278
    %v3280 = vpop.f32.mrf.mxu0
    %3281 = vmatprep.mubr.f32.mxu0 0.0
    %3282 = vmatmul.mubr.f32.gmra.mxu0 %v3139
    %v3283 = vpop.f32.mrf.mxu0
    %v3284 = vadd.f32 0.0, %v3283
    %v3285 = vpop.f32.mrf.mxu0
    %3286 = vmatprep.mubr.f32.mxu0 0.0
    %3287 = vmatmul.mubr.f32.gmra.mxu0 %v3141
    %v3288 = vpop.f32.mrf.mxu0
    %v3289 = vadd.f32 0.0, %v3288
    %v3290 = vpop.f32.mrf.mxu0
    %3291 = vmatprep.mubr.f32.mxu0 0.0
    %3292 = vmatmul.mubr.f32.gmra.mxu0 %v3143
    %v3293 = vpop.f32.mrf.mxu0
    %v3294 = vadd.f32 0.0, %v3293
    %v3295 = vpop.f32.mrf.mxu0
    %3296 = vmatprep.mubr.f32.mxu0 0.0
    %3297 = vmatmul.mubr.f32.gmra.mxu0 %v3145
    %v3298 = vpop.f32.mrf.mxu0
    %v3299 = vadd.f32 0.0, %v3298
    %v3300 = vpop.f32.mrf.mxu0
    %3301 = vmatprep.mubr.f32.mxu0 0.0
    %3302 = vmatmul.mubr.f32.gmra.mxu0 %v3147
    %v3303 = vpop.f32.mrf.mxu0
    %v3304 = vadd.f32 0.0, %v3303
    %v3305 = vpop.f32.mrf.mxu0
    %3306 = vmatprep.mubr.f32.mxu0 0.0
    %3307 = vmatmul.mubr.f32.gmra.mxu0 %v3149
    %v3308 = vpop.f32.mrf.mxu0
    %v3309 = vadd.f32 0.0, %v3308
    %v3310 = vpop.f32.mrf.mxu0
    %3311 = vmatprep.mubr.f32.mxu0 0.0
    %3312 = vmatmul.mubr.f32.gmra.mxu0 %v3151
    %v3313 = vpop.f32.mrf.mxu0
    %v3314 = vadd.f32 0.0, %v3313
    %v3315 = vpop.f32.mrf.mxu0
    %3316 = vmatprep.mubr.f32.mxu0 0.0
    %3317 = vmatmul.mubr.f32.gmra.mxu0 %v3153
    %v3318 = vpop.f32.mrf.mxu0
    %v3319 = vadd.f32 0.0, %v3318
    %v3320 = vpop.f32.mrf.mxu0
    %3321 = vmatprep.mubr.f32.mxu0 0.0
    %3322 = vmatmul.mubr.f32.gmra.mxu0 %v3155
    %v3323 = vpop.f32.mrf.mxu0
    %v3324 = vadd.f32 0.0, %v3323
    %v3325 = vpop.f32.mrf.mxu0
    %3326 = vmatprep.mubr.f32.mxu0 0.0
    %3327 = vmatmul.mubr.f32.gmra.mxu0 %v3157
    %v3328 = vpop.f32.mrf.mxu0
    %v3329 = vadd.f32 0.0, %v3328
    %v3330 = vpop.f32.mrf.mxu0
    %3331 = vmatprep.mubr.f32.mxu0 0.0
    %3332 = vmatmul.mubr.f32.gmra.mxu0 %v3159
    %v3333 = vpop.f32.mrf.mxu0
    %v3334 = vadd.f32 0.0, %v3333
    %v3335 = vpop.f32.mrf.mxu0
    %3336 = vmatprep.mubr.f32.mxu0 0.0
    %3337 = vmatmul.mubr.f32.gmra.mxu0 %v3161
    %v3338 = vpop.f32.mrf.mxu0
    %v3339 = vadd.f32 0.0, %v3338
    %v3340 = vpop.f32.mrf.mxu0
    %3341 = vmatprep.mubr.f32.mxu0 0.0
    %3342 = vmatmul.mubr.f32.gmra.mxu0 %v3163
    %v3343 = vpop.f32.mrf.mxu0
    %v3344 = vadd.f32 0.0, %v3343
    %v3345 = vpop.f32.mrf.mxu0
    %3346 = vmatprep.mubr.f32.mxu0 0.0
    %3347 = vmatmul.mubr.f32.gmra.mxu0 %v3165
    %v3348 = vpop.f32.mrf.mxu0
    %v3349 = vadd.f32 0.0, %v3348
    %v3350 = vpop.f32.mrf.mxu0
    %3351 = vmatprep.mubr.f32.mxu0 0.0
    %3352 = vmatmul.mubr.f32.gmra.mxu0 %v3167
    %v3353 = vpop.f32.mrf.mxu0
    %v3354 = vadd.f32 0.0, %v3353
    %v3355 = vpop.f32.mrf.mxu0
    %3356 = vmatprep.mubr.f32.mxu0 0.0
    %3357 = vmatmul.mubr.f32.gmra.mxu0 %v3169
    %v3358 = vpop.f32.mrf.mxu0
    %v3359 = vadd.f32 0.0, %v3358
    %v3360 = vpop.f32.mrf.mxu0
    %3361 = vmatprep.mubr.f32.mxu0 0.0
    %3362 = vmatmul.mubr.f32.gmra.mxu0 %v3171
    %v3363 = vpop.f32.mrf.mxu0
    %v3364 = vadd.f32 0.0, %v3363
    %v3365 = vpop.f32.mrf.mxu0
    %3366 = vmatprep.mubr.f32.mxu0 0.0
    %3367 = vmatmul.mubr.f32.gmra.mxu0 %v3173
    %v3368 = vpop.f32.mrf.mxu0
    %v3369 = vadd.f32 0.0, %v3368
    %v3370 = vpop.f32.mrf.mxu0
    %3371 = vmatprep.mubr.f32.mxu0 0.0
    %3372 = vmatmul.mubr.f32.gmra.mxu0 %v3175
    %v3373 = vpop.f32.mrf.mxu0
    %v3374 = vadd.f32 0.0, %v3373
    %v3375 = vpop.f32.mrf.mxu0
    %3376 = vmatprep.mubr.f32.mxu0 0.0
    %3377 = vmatmul.mubr.f32.gmra.mxu0 %v3177
    %v3378 = vpop.f32.mrf.mxu0
    %v3379 = vadd.f32 0.0, %v3378
    %v3380 = vpop.f32.mrf.mxu0
    %3381 = vmatprep.mubr.f32.mxu0 0.0
    %3382 = vmatmul.mubr.f32.gmra.mxu0 %v3179
    %v3383 = vpop.f32.mrf.mxu0
    %v3384 = vadd.f32 0.0, %v3383
    %v3385 = vpop.f32.mrf.mxu0
    %3386 = vmatprep.mubr.f32.mxu0 0.0
    %3387 = vmatmul.mubr.f32.gmra.mxu0 %v3181
    %v3388 = vpop.f32.mrf.mxu0
    %v3389 = vadd.f32 0.0, %v3388
    %v3390 = vpop.f32.mrf.mxu0
    %3391 = vmatprep.mubr.f32.mxu0 0.0
    %3392 = vmatmul.mubr.f32.gmra.mxu0 %v3183
    %v3393 = vpop.f32.mrf.mxu0
    %v3394 = vadd.f32 0.0, %v3393
    %v3395 = vpop.f32.mrf.mxu0
    %3396 = vmatprep.mubr.f32.mxu0 0.0
    %3397 = vmatmul.mubr.f32.gmra.mxu0 %v3185
    %v3398 = vpop.f32.mrf.mxu0
    %v3399 = vadd.f32 0.0, %v3398
    %v3400 = vpop.f32.mrf.mxu0
    %3401 = vmatprep.mubr.f32.mxu0 0.0
    %3402 = vmatmul.mubr.f32.gmra.mxu0 %v3187
    %v3403 = vpop.f32.mrf.mxu0
    %v3404 = vadd.f32 0.0, %v3403
    %v3405 = vpop.f32.mrf.mxu0
    %3406 = vmatprep.mubr.f32.mxu0 0.0
    %3407 = vmatmul.mubr.f32.gmra.mxu0 %v3189
    %v3408 = vpop.f32.mrf.mxu0
    %v3409 = vadd.f32 0.0, %v3408
    %v3410 = vpop.f32.mrf.mxu0
    %3411 = vmatprep.mubr.f32.mxu0 0.0
    %3412 = vmatmul.mubr.f32.gmra.mxu0 %v3191
    %v3413 = vpop.f32.mrf.mxu0
    %v3414 = vadd.f32 0.0, %v3413
    %v3415 = vpop.f32.mrf.mxu0
    %3416 = vmatprep.mubr.f32.mxu0 0.0
    %3417 = vmatmul.mubr.f32.gmra.mxu0 %v3193
    %v3418 = vpop.f32.mrf.mxu0
    %v3419 = vadd.f32 0.0, %v3418
    %v3420 = vpop.f32.mrf.mxu0
    %3421 = vmatprep.mubr.f32.mxu0 0.0
    %3422 = vmatmul.mubr.f32.gmra.mxu0 %v3195
    %v3423 = vpop.f32.mrf.mxu0
    %v3424 = vadd.f32 0.0, %v3423
    %v3425 = vpop.f32.mrf.mxu0
    %3426 = vmatprep.mubr.f32.mxu0 0.0
    %3427 = vmatmul.mubr.f32.gmra.mxu0 %v3197
    %v3428 = vpop.f32.mrf.mxu0
    %v3429 = vadd.f32 0.0, %v3428
    %v3430 = vpop.f32.mrf.mxu0
    %3431 = vmatprep.mubr.f32.mxu0 0.0
    %3432 = vmatmul.mubr.f32.gmra.mxu0 %v3199
    %v3433 = vpop.f32.mrf.mxu0
    %v3434 = vadd.f32 0.0, %v3433
    %v3435 = vpop.f32.mrf.mxu0
    %3436 = vmatprep.mubr.f32.mxu0 0.0
    %3437 = vmatmul.mubr.f32.gmra.mxu0 %v3201
    %v3438 = vpop.f32.mrf.mxu0
    %v3439 = vadd.f32 0.0, %v3438
    %v3440 = vpop.f32.mrf.mxu0
    %3441 = vmatprep.mubr.f32.mxu0 0.0
    %3442 = vmatmul.mubr.f32.gmra.mxu0 %v3203
    %v3443 = vpop.f32.mrf.mxu0
    %v3444 = vadd.f32 0.0, %v3443
    %v3445 = vpop.f32.mrf.mxu0
    %3446 = vmatprep.mubr.f32.mxu0 0.0
    %3447 = vmatmul.mubr.f32.gmra.mxu0 %v3205
    %v3448 = vpop.f32.mrf.mxu0
    %v3449 = vadd.f32 0.0, %v3448
    %v3450 = vpop.f32.mrf.mxu0
    %3451 = vdwg.mxu0
    %v3488 = vcombine.high %v3274, %v3274
    %v3489 = vcombine.high %v3279, %v3279
    %v3490 = vcombine.high %v3284, %v3284
    %v3491 = vcombine.high %v3289, %v3289
    %v3492 = vcombine.high %v3294, %v3294
    %v3493 = vcombine.high %v3299, %v3299
    %v3494 = vcombine.high %v3304, %v3304
    %v3495 = vcombine.high %v3309, %v3309
    %v3496 = vcombine.high %v3314, %v3314
    %v3497 = vcombine.high %v3319, %v3319
    %v3498 = vcombine.high %v3324, %v3324
    %v3499 = vcombine.high %v3329, %v3329
    %v3500 = vcombine.high %v3334, %v3334
    %v3501 = vcombine.high %v3339, %v3339
    %v3502 = vcombine.high %v3344, %v3344
    %v3503 = vcombine.high %v3349, %v3349
    %v3504 = vcombine.high %v3354, %v3354
    %v3505 = vcombine.high %v3359, %v3359
    %v3506 = vcombine.high %v3364, %v3364
    %v3507 = vcombine.high %v3369, %v3369
    %v3508 = vcombine.high %v3374, %v3374
    %v3509 = vcombine.high %v3379, %v3379
    %v3510 = vcombine.high %v3384, %v3384
    %v3511 = vcombine.high %v3389, %v3389
    %v3512 = vcombine.high %v3394, %v3394
    %v3513 = vcombine.high %v3399, %v3399
    %v3514 = vcombine.high %v3404, %v3404
    %v3515 = vcombine.high %v3409, %v3409
    %v3516 = vcombine.high %v3414, %v3414
    %v3517 = vcombine.high %v3419, %v3419
    %v3518 = vcombine.high %v3424, %v3424
    %v3519 = vcombine.high %v3429, %v3429
    %v3520 = vcombine.high %v3434, %v3434
    %v3521 = vcombine.high %v3439, %v3439
    %v3522 = vcombine.high %v3444, %v3444
    %v3523 = vcombine.high %v3449, %v3449
    %vm3554 = vcmask 1042432
    %vm3555 = vcmask 1046532
    %vm3556 = vmor %vm3554, %vm3555
    %v3557 = vrot.slane %v3274, 5
    %v3558 = vrot.slane %v3557, 4
    %v3559 = vrot.slane %v3488, 5
    %v3560 = vsel %vm3556, %v3558, %v3559
    %v3561 = vrot.slane %v3559, 4
    %v3562 = vrot.slane %v3279, 5
    %v3563 = vsel %vm3556, %v3561, %v3562
    %v3564 = vrot.slane %v3562, 4
    %v3565 = vrot.slane %v3489, 5
    %v3566 = vrot.slane %v3565, 4
    %v3567 = vrot.slane %v3284, 5
    %v3568 = vsel %vm3556, %v3566, %v3567
    %v3569 = vrot.slane %v3567, 4
    %v3570 = vrot.slane %v3490, 5
    %v3571 = vsel %vm3556, %v3569, %v3570
    %v3572 = vrot.slane %v3570, 4
    %v3573 = vrot.slane %v3289, 5
    %v3574 = vrot.slane %v3573, 4
    %v3575 = vrot.slane %v3491, 5
    %v3576 = vsel %vm3556, %v3574, %v3575
    %v3577 = vrot.slane %v3575, 4
    %v3578 = vrot.slane %v3294, 5
    %v3579 = vsel %vm3556, %v3577, %v3578
    %v3580 = vrot.slane %v3578, 4
    %v3581 = vrot.slane %v3492, 5
    %v3582 = vrot.slane %v3581, 4
    %v3583 = vrot.slane %v3299, 5
    %v3584 = vsel %vm3556, %v3582, %v3583
    %v3585 = vrot.slane %v3583, 4
    %v3586 = vrot.slane %v3493, 5
    %v3587 = vsel %vm3556, %v3585, %v3586
    %v3588 = vrot.slane %v3586, 4
    %v3589 = vrot.slane %v3304, 5
    %v3590 = vrot.slane %v3589, 4
    %v3591 = vrot.slane %v3494, 5
    %v3592 = vsel %vm3556, %v3590, %v3591
    %v3593 = vrot.slane %v3591, 4
    %v3594 = vrot.slane %v3309, 5
    %v3595 = vsel %vm3556, %v3593, %v3594
    %v3596 = vrot.slane %v3594, 4
    %v3597 = vrot.slane %v3495, 5
    %v3598 = vrot.slane %v3597, 4
    %v3599 = vrot.slane %v3314, 5
    %v3600 = vsel %vm3556, %v3598, %v3599
    %v3601 = vrot.slane %v3599, 4
    %v3602 = vrot.slane %v3496, 5
    %v3603 = vsel %vm3556, %v3601, %v3602
    %v3604 = vrot.slane %v3602, 4
    %v3605 = vrot.slane %v3319, 5
    %v3606 = vrot.slane %v3605, 4
    %v3607 = vrot.slane %v3497, 5
    %v3608 = vsel %vm3556, %v3606, %v3607
    %v3609 = vrot.slane %v3607, 4
    %v3610 = vrot.slane %v3324, 5
    %v3611 = vsel %vm3556, %v3609, %v3610
    %v3612 = vrot.slane %v3610, 4
    %v3613 = vrot.slane %v3498, 5
    %v3614 = vrot.slane %v3613, 4
    %v3615 = vrot.slane %v3329, 5
    %v3616 = vsel %vm3556, %v3614, %v3615
    %v3617 = vrot.slane %v3615, 4
    %v3618 = vrot.slane %v3499, 5
    %v3619 = vsel %vm3556, %v3617, %v3618
    %v3620 = vrot.slane %v3618, 4
    %v3621 = vrot.slane %v3334, 5
    %v3622 = vrot.slane %v3621, 4
    %v3623 = vrot.slane %v3500, 5
    %v3624 = vsel %vm3556, %v3622, %v3623
    %v3625 = vrot.slane %v3623, 4
    %v3626 = vrot.slane %v3339, 5
    %v3627 = vsel %vm3556, %v3625, %v3626
    %v3628 = vrot.slane %v3626, 4
    %v3629 = vrot.slane %v3501, 5
    %v3630 = vrot.slane %v3629, 4
    %v3631 = vrot.slane %v3344, 5
    %v3632 = vsel %vm3556, %v3630, %v3631
    %v3633 = vrot.slane %v3631, 4
    %v3634 = vrot.slane %v3502, 5
    %v3635 = vsel %vm3556, %v3633, %v3634
    %v3636 = vrot.slane %v3634, 4
    %v3637 = vrot.slane %v3364, 5
    %v3638 = vrot.slane %v3637, 4
    %v3639 = vrot.slane %v3506, 5
    %v3640 = vsel %vm3556, %v3638, %v3639
    %v3641 = vrot.slane %v3639, 4
    %v3642 = vrot.slane %v3369, 5
    %v3643 = vsel %vm3556, %v3641, %v3642
    %v3644 = vrot.slane %v3642, 4
    %v3645 = vrot.slane %v3507, 5
    %v3646 = vrot.slane %v3645, 4
    %v3647 = vrot.slane %v3374, 5
    %v3648 = vsel %vm3556, %v3646, %v3647
    %v3649 = vrot.slane %v3647, 4
    %v3650 = vrot.slane %v3508, 5
    %v3651 = vsel %vm3556, %v3649, %v3650
    %v3652 = vrot.slane %v3650, 4
    %v3653 = vrot.slane %v3379, 5
    %v3654 = vrot.slane %v3653, 4
    %v3655 = vrot.slane %v3509, 5
    %v3656 = vsel %vm3556, %v3654, %v3655
    %v3657 = vrot.slane %v3655, 4
    %v3658 = vrot.slane %v3384, 5
    %v3659 = vsel %vm3556, %v3657, %v3658
    %v3660 = vrot.slane %v3658, 4
    %v3661 = vrot.slane %v3510, 5
    %v3662 = vrot.slane %v3661, 4
    %v3663 = vrot.slane %v3389, 5
    %v3664 = vsel %vm3556, %v3662, %v3663
    %v3665 = vrot.slane %v3663, 4
    %v3666 = vrot.slane %v3511, 5
    %v3667 = vsel %vm3556, %v3665, %v3666
    %v3668 = vrot.slane %v3666, 4
    %v3669 = vrot.slane %v3394, 5
    %v3670 = vrot.slane %v3669, 4
    %v3671 = vrot.slane %v3512, 5
    %v3672 = vsel %vm3556, %v3670, %v3671
    %v3673 = vrot.slane %v3671, 4
    %v3674 = vrot.slane %v3399, 5
    %v3675 = vsel %vm3556, %v3673, %v3674
    %v3676 = vrot.slane %v3674, 4
    %v3677 = vrot.slane %v3513, 5
    %v3678 = vrot.slane %v3677, 4
    %v3679 = vrot.slane %v3404, 5
    %v3680 = vsel %vm3556, %v3678, %v3679
    %v3681 = vrot.slane %v3679, 4
    %v3682 = vrot.slane %v3514, 5
    %v3683 = vsel %vm3556, %v3681, %v3682
    %v3684 = vrot.slane %v3682, 4
    %v3685 = vrot.slane %v3409, 5
    %v3686 = vrot.slane %v3685, 4
    %v3687 = vrot.slane %v3515, 5
    %v3688 = vsel %vm3556, %v3686, %v3687
    %v3689 = vrot.slane %v3687, 4
    %v3690 = vrot.slane %v3414, 5
    %v3691 = vsel %vm3556, %v3689, %v3690
    %v3692 = vrot.slane %v3690, 4
    %v3693 = vrot.slane %v3516, 5
    %v3694 = vrot.slane %v3693, 4
    %v3695 = vrot.slane %v3419, 5
    %v3696 = vsel %vm3556, %v3694, %v3695
    %v3697 = vrot.slane %v3695, 4
    %v3698 = vrot.slane %v3517, 5
    %v3699 = vsel %vm3556, %v3697, %v3698
    %v3700 = vrot.slane %v3698, 4
    %v3701 = vrot.slane %v3424, 5
    %v3702 = vrot.slane %v3701, 4
    %v3703 = vrot.slane %v3518, 5
    %v3704 = vsel %vm3556, %v3702, %v3703
    %v3705 = vrot.slane %v3703, 4
    %v3706 = vrot.slane %v3429, 5
    %v3707 = vsel %vm3556, %v3705, %v3706
    %v3708 = vrot.slane %v3706, 4
    %v3709 = vrot.slane %v3519, 5
    %v3710 = vrot.slane %v3709, 4
    %v3711 = vrot.slane %v3434, 5
    %v3712 = vsel %vm3556, %v3710, %v3711
    %v3713 = vrot.slane %v3711, 4
    %v3714 = vrot.slane %v3520, 5
    %v3715 = vsel %vm3556, %v3713, %v3714
    %v3716 = vrot.slane %v3714, 4
    %3717 = vrot.lane.b32.xlu0 %v3560, 120
    %v3718 = vpop.permute.xlu0 %3717
    %3719 = vrot.lane.b32.xlu0 %v3563, 120
    %v3720 = vpop.permute.xlu0 %3719
    %3721 = vrot.lane.b32.xlu0 %v3564, 120
    %v3722 = vpop.permute.xlu0 %3721
    %3723 = vrot.lane.b32.xlu0 %v3568, 120
    %v3724 = vpop.permute.xlu0 %3723
    %3725 = vrot.lane.b32.xlu0 %v3571, 120
    %v3726 = vpop.permute.xlu0 %3725
    %3727 = vrot.lane.b32.xlu0 %v3572, 120
    %v3728 = vpop.permute.xlu0 %3727
    %3729 = vrot.lane.b32.xlu0 %v3576, 120
    %v3730 = vpop.permute.xlu0 %3729
    %3731 = vrot.lane.b32.xlu0 %v3579, 120
    %v3732 = vpop.permute.xlu0 %3731
    %3733 = vrot.lane.b32.xlu0 %v3580, 120
    %v3734 = vpop.permute.xlu0 %3733
    %3735 = vrot.lane.b32.xlu0 %v3584, 120
    %v3736 = vpop.permute.xlu0 %3735
    %3737 = vrot.lane.b32.xlu0 %v3587, 120
    %v3738 = vpop.permute.xlu0 %3737
    %3739 = vrot.lane.b32.xlu0 %v3588, 120
    %v3740 = vpop.permute.xlu0 %3739
    %3741 = vrot.lane.b32.xlu0 %v3592, 120
    %v3742 = vpop.permute.xlu0 %3741
    %3743 = vrot.lane.b32.xlu0 %v3595, 120
    %v3744 = vpop.permute.xlu0 %3743
    %3745 = vrot.lane.b32.xlu0 %v3596, 120
    %v3746 = vpop.permute.xlu0 %3745
    %3747 = vrot.lane.b32.xlu0 %v3600, 120
    %v3748 = vpop.permute.xlu0 %3747
    %3749 = vrot.lane.b32.xlu0 %v3603, 120
    %v3750 = vpop.permute.xlu0 %3749
    %3751 = vrot.lane.b32.xlu0 %v3604, 120
    %v3752 = vpop.permute.xlu0 %3751
    %3753 = vrot.lane.b32.xlu0 %v3608, 120
    %v3754 = vpop.permute.xlu0 %3753
    %3755 = vrot.lane.b32.xlu0 %v3611, 120
    %v3756 = vpop.permute.xlu0 %3755
    %3757 = vrot.lane.b32.xlu0 %v3612, 120
    %v3758 = vpop.permute.xlu0 %3757
    %3759 = vrot.lane.b32.xlu0 %v3616, 120
    %v3760 = vpop.permute.xlu0 %3759
    %3761 = vrot.lane.b32.xlu0 %v3619, 120
    %v3762 = vpop.permute.xlu0 %3761
    %3763 = vrot.lane.b32.xlu0 %v3620, 120
    %v3764 = vpop.permute.xlu0 %3763
    %3765 = vrot.lane.b32.xlu0 %v3624, 120
    %v3766 = vpop.permute.xlu0 %3765
    %3767 = vrot.lane.b32.xlu0 %v3627, 120
    %v3768 = vpop.permute.xlu0 %3767
    %3769 = vrot.lane.b32.xlu0 %v3628, 120
    %v3770 = vpop.permute.xlu0 %3769
    %3771 = vrot.lane.b32.xlu0 %v3632, 120
    %v3772 = vpop.permute.xlu0 %3771
    %3773 = vrot.lane.b32.xlu0 %v3635, 120
    %v3774 = vpop.permute.xlu0 %3773
    %3775 = vrot.lane.b32.xlu0 %v3636, 120
    %v3776 = vpop.permute.xlu0 %3775
    %3777 = vrot.lane.b32.xlu0 %v3640, 120
    %v3778 = vpop.permute.xlu0 %3777
    %3779 = vrot.lane.b32.xlu0 %v3643, 120
    %v3780 = vpop.permute.xlu0 %3779
    %3781 = vrot.lane.b32.xlu0 %v3644, 120
    %v3782 = vpop.permute.xlu0 %3781
    %3783 = vrot.lane.b32.xlu0 %v3648, 120
    %v3784 = vpop.permute.xlu0 %3783
    %3785 = vrot.lane.b32.xlu0 %v3651, 120
    %v3786 = vpop.permute.xlu0 %3785
    %3787 = vrot.lane.b32.xlu0 %v3652, 120
    %v3788 = vpop.permute.xlu0 %3787
    %3789 = vrot.lane.b32.xlu0 %v3656, 120
    %v3790 = vpop.permute.xlu0 %3789
    %3791 = vrot.lane.b32.xlu0 %v3659, 120
    %v3792 = vpop.permute.xlu0 %3791
    %3793 = vrot.lane.b32.xlu0 %v3660, 120
    %v3794 = vpop.permute.xlu0 %3793
    %3795 = vrot.lane.b32.xlu0 %v3664, 120
    %v3796 = vpop.permute.xlu0 %3795
    %3797 = vrot.lane.b32.xlu0 %v3667, 120
    %v3798 = vpop.permute.xlu0 %3797
    %3799 = vrot.lane.b32.xlu0 %v3668, 120
    %v3800 = vpop.permute.xlu0 %3799
    %3801 = vrot.lane.b32.xlu0 %v3672, 120
    %v3802 = vpop.permute.xlu0 %3801
    %3803 = vrot.lane.b32.xlu0 %v3675, 120
    %v3804 = vpop.permute.xlu0 %3803
    %3805 = vrot.lane.b32.xlu0 %v3676, 120
    %v3806 = vpop.permute.xlu0 %3805
    %3807 = vrot.lane.b32.xlu0 %v3680, 120
    %v3808 = vpop.permute.xlu0 %3807
    %3809 = vrot.lane.b32.xlu0 %v3683, 120
    %v3810 = vpop.permute.xlu0 %3809
    %3811 = vrot.lane.b32.xlu0 %v3684, 120
    %v3812 = vpop.permute.xlu0 %3811
    %3813 = vrot.lane.b32.xlu0 %v3688, 120
    %v3814 = vpop.permute.xlu0 %3813
    %3815 = vrot.lane.b32.xlu0 %v3691, 120
    %v3816 = vpop.permute.xlu0 %3815
    %3817 = vrot.lane.b32.xlu0 %v3692, 120
    %v3818 = vpop.permute.xlu0 %3817
    %3819 = vrot.lane.b32.xlu0 %v3696, 120
    %v3820 = vpop.permute.xlu0 %3819
    %3821 = vrot.lane.b32.xlu0 %v3699, 120
    %v3822 = vpop.permute.xlu0 %3821
    %3823 = vrot.lane.b32.xlu0 %v3700, 120
    %v3824 = vpop.permute.xlu0 %3823
    %3825 = vrot.lane.b32.xlu0 %v3704, 120
    %v3826 = vpop.permute.xlu0 %3825
    %3827 = vrot.lane.b32.xlu0 %v3707, 120
    %v3828 = vpop.permute.xlu0 %3827
    %3829 = vrot.lane.b32.xlu0 %v3708, 120
    %v3830 = vpop.permute.xlu0 %3829
    %3831 = vrot.lane.b32.xlu0 %v3712, 120
    %v3832 = vpop.permute.xlu0 %3831
    %3833 = vrot.lane.b32.xlu0 %v3715, 120
    %v3834 = vpop.permute.xlu0 %3833
    %3835 = vrot.lane.b32.xlu0 %v3716, 120
    %v3836 = vpop.permute.xlu0 %3835
    %v3897 = vadd.f32 %v3274, %v3718
    %v3898 = vadd.f32 %v3488, %v3720
    %v3899 = vadd.f32 %v3279, %v3722
    %v3900 = vadd.f32 %v3489, %v3724
    %v3901 = vadd.f32 %v3284, %v3726
    %v3902 = vadd.f32 %v3490, %v3728
    %v3903 = vadd.f32 %v3289, %v3730
    %v3904 = vadd.f32 %v3491, %v3732
    %v3905 = vadd.f32 %v3294, %v3734
    %v3906 = vadd.f32 %v3492, %v3736
    %v3907 = vadd.f32 %v3299, %v3738
    %v3908 = vadd.f32 %v3493, %v3740
    %v3909 = vadd.f32 %v3304, %v3742
    %v3910 = vadd.f32 %v3494, %v3744
    %v3911 = vadd.f32 %v3309, %v3746
    %v3912 = vadd.f32 %v3495, %v3748
    %v3913 = vadd.f32 %v3314, %v3750
    %v3914 = vadd.f32 %v3496, %v3752
    %v3915 = vadd.f32 %v3319, %v3754
    %v3916 = vadd.f32 %v3497, %v3756
    %v3917 = vadd.f32 %v3324, %v3758
    %v3918 = vadd.f32 %v3498, %v3760
    %v3919 = vadd.f32 %v3329, %v3762
    %v3920 = vadd.f32 %v3499, %v3764
    %v3921 = vadd.f32 %v3334, %v3766
    %v3922 = vadd.f32 %v3500, %v3768
    %v3923 = vadd.f32 %v3339, %v3770
    %v3924 = vadd.f32 %v3501, %v3772
    %v3925 = vadd.f32 %v3344, %v3774
    %v3926 = vadd.f32 %v3502, %v3776
    %v3927 = vadd.f32 %v3364, %v3778
    %v3928 = vadd.f32 %v3506, %v3780
    %v3929 = vadd.f32 %v3369, %v3782
    %v3930 = vadd.f32 %v3507, %v3784
    %v3931 = vadd.f32 %v3374, %v3786
    %v3932 = vadd.f32 %v3508, %v3788
    %v3933 = vadd.f32 %v3379, %v3790
    %v3934 = vadd.f32 %v3509, %v3792
    %v3935 = vadd.f32 %v3384, %v3794
    %v3936 = vadd.f32 %v3510, %v3796
    %v3937 = vadd.f32 %v3389, %v3798
    %v3938 = vadd.f32 %v3511, %v3800
    %v3939 = vadd.f32 %v3394, %v3802
    %v3940 = vadd.f32 %v3512, %v3804
    %v3941 = vadd.f32 %v3399, %v3806
    %v3942 = vadd.f32 %v3513, %v3808
    %v3943 = vadd.f32 %v3404, %v3810
    %v3944 = vadd.f32 %v3514, %v3812
    %v3945 = vadd.f32 %v3409, %v3814
    %v3946 = vadd.f32 %v3515, %v3816
    %v3947 = vadd.f32 %v3414, %v3818
    %v3948 = vadd.f32 %v3516, %v3820
    %v3949 = vadd.f32 %v3419, %v3822
    %v3950 = vadd.f32 %v3517, %v3824
    %v3951 = vadd.f32 %v3424, %v3826
    %v3952 = vadd.f32 %v3518, %v3828
    %v3953 = vadd.f32 %v3429, %v3830
    %v3954 = vadd.f32 %v3519, %v3832
    %v3955 = vadd.f32 %v3434, %v3834
    %v3956 = vadd.f32 %v3520, %v3836
    %vm3957 = vcmask 1041408
    %vm3958 = vcmask 1045508
    %vm3959 = vmor %vm3957, %vm3958
    %v3960 = vrot.slane %v3274, 6
    %v3961 = vrot.slane %v3960, 4
    %v3962 = vrot.slane %v3488, 6
    %v3963 = vsel %vm3959, %v3961, %v3962
    %v3964 = vrot.slane %v3962, 4
    %v3965 = vrot.slane %v3279, 6
    %v3966 = vsel %vm3959, %v3964, %v3965
    %v3967 = vrot.slane %v3965, 4
    %v3968 = vrot.slane %v3489, 6
    %v3969 = vrot.slane %v3968, 4
    %v3970 = vrot.slane %v3284, 6
    %v3971 = vsel %vm3959, %v3969, %v3970
    %v3972 = vrot.slane %v3970, 4
    %v3973 = vrot.slane %v3490, 6
    %v3974 = vsel %vm3959, %v3972, %v3973
    %v3975 = vrot.slane %v3973, 4
    %v3976 = vrot.slane %v3289, 6
    %v3977 = vrot.slane %v3976, 4
    %v3978 = vrot.slane %v3491, 6
    %v3979 = vsel %vm3959, %v3977, %v3978
    %v3980 = vrot.slane %v3978, 4
    %v3981 = vrot.slane %v3294, 6
    %v3982 = vsel %vm3959, %v3980, %v3981
    %v3983 = vrot.slane %v3981, 4
    %v3984 = vrot.slane %v3492, 6
    %v3985 = vrot.slane %v3984, 4
    %v3986 = vrot.slane %v3299, 6
    %v3987 = vsel %vm3959, %v3985, %v3986
    %v3988 = vrot.slane %v3986, 4
    %v3989 = vrot.slane %v3493, 6
    %v3990 = vsel %vm3959, %v3988, %v3989
    %v3991 = vrot.slane %v3989, 4
    %v3992 = vrot.slane %v3304, 6
    %v3993 = vrot.slane %v3992, 4
    %v3994 = vrot.slane %v3494, 6
    %v3995 = vsel %vm3959, %v3993, %v3994
    %v3996 = vrot.slane %v3994, 4
    %v3997 = vrot.slane %v3309, 6
    %v3998 = vsel %vm3959, %v3996, %v3997
    %v3999 = vrot.slane %v3997, 4
    %v4000 = vrot.slane %v3495, 6
    %v4001 = vrot.slane %v4000, 4
    %v4002 = vrot.slane %v3314, 6
    %v4003 = vsel %vm3959, %v4001, %v4002
    %v4004 = vrot.slane %v4002, 4
    %v4005 = vrot.slane %v3496, 6
    %v4006 = vsel %vm3959, %v4004, %v4005
    %v4007 = vrot.slane %v4005, 4
    %v4008 = vrot.slane %v3319, 6
    %v4009 = vrot.slane %v4008, 4
    %v4010 = vrot.slane %v3497, 6
    %v4011 = vsel %vm3959, %v4009, %v4010
    %v4012 = vrot.slane %v4010, 4
    %v4013 = vrot.slane %v3324, 6
    %v4014 = vsel %vm3959, %v4012, %v4013
    %v4015 = vrot.slane %v4013, 4
    %v4016 = vrot.slane %v3498, 6
    %v4017 = vrot.slane %v4016, 4
    %v4018 = vrot.slane %v3329, 6
    %v4019 = vsel %vm3959, %v4017, %v4018
    %v4020 = vrot.slane %v4018, 4
    %v4021 = vrot.slane %v3499, 6
    %v4022 = vsel %vm3959, %v4020, %v4021
    %v4023 = vrot.slane %v4021, 4
    %v4024 = vrot.slane %v3334, 6
    %v4025 = vrot.slane %v4024, 4
    %v4026 = vrot.slane %v3500, 6
    %v4027 = vsel %vm3959, %v4025, %v4026
    %v4028 = vrot.slane %v4026, 4
    %v4029 = vrot.slane %v3339, 6
    %v4030 = vsel %vm3959, %v4028, %v4029
    %v4031 = vrot.slane %v4029, 4
    %v4032 = vrot.slane %v3501, 6
    %v4033 = vrot.slane %v4032, 4
    %v4034 = vrot.slane %v3344, 6
    %v4035 = vsel %vm3959, %v4033, %v4034
    %v4036 = vrot.slane %v4034, 4
    %v4037 = vrot.slane %v3502, 6
    %v4038 = vsel %vm3959, %v4036, %v4037
    %v4039 = vrot.slane %v4037, 4
    %v4040 = vrot.slane %v3364, 6
    %v4041 = vrot.slane %v4040, 4
    %v4042 = vrot.slane %v3506, 6
    %v4043 = vsel %vm3959, %v4041, %v4042
    %v4044 = vrot.slane %v4042, 4
    %v4045 = vrot.slane %v3369, 6
    %v4046 = vsel %vm3959, %v4044, %v4045
    %v4047 = vrot.slane %v4045, 4
    %v4048 = vrot.slane %v3507, 6
    %v4049 = vrot.slane %v4048, 4
    %v4050 = vrot.slane %v3374, 6
    %v4051 = vsel %vm3959, %v4049, %v4050
    %v4052 = vrot.slane %v4050, 4
    %v4053 = vrot.slane %v3508, 6
    %v4054 = vsel %vm3959, %v4052, %v4053
    %v4055 = vrot.slane %v4053, 4
    %v4056 = vrot.slane %v3379, 6
    %v4057 = vrot.slane %v4056, 4
    %v4058 = vrot.slane %v3509, 6
    %v4059 = vsel %vm3959, %v4057, %v4058
    %v4060 = vrot.slane %v4058, 4
    %v4061 = vrot.slane %v3384, 6
    %v4062 = vsel %vm3959, %v4060, %v4061
    %v4063 = vrot.slane %v4061, 4
    %v4064 = vrot.slane %v3510, 6
    %v4065 = vrot.slane %v4064, 4
    %v4066 = vrot.slane %v3389, 6
    %v4067 = vsel %vm3959, %v4065, %v4066
    %v4068 = vrot.slane %v4066, 4
    %v4069 = vrot.slane %v3511, 6
    %v4070 = vsel %vm3959, %v4068, %v4069
    %v4071 = vrot.slane %v4069, 4
    %v4072 = vrot.slane %v3394, 6
    %v4073 = vrot.slane %v4072, 4
    %v4074 = vrot.slane %v3512, 6
    %v4075 = vsel %vm3959, %v4073, %v4074
    %v4076 = vrot.slane %v4074, 4
    %v4077 = vrot.slane %v3399, 6
    %v4078 = vsel %vm3959, %v4076, %v4077
    %v4079 = vrot.slane %v4077, 4
    %v4080 = vrot.slane %v3513, 6
    %v4081 = vrot.slane %v4080, 4
    %v4082 = vrot.slane %v3404, 6
    %v4083 = vsel %vm3959, %v4081, %v4082
    %v4084 = vrot.slane %v4082, 4
    %v4085 = vrot.slane %v3514, 6
    %v4086 = vsel %vm3959, %v4084, %v4085
    %v4087 = vrot.slane %v4085, 4
    %v4088 = vrot.slane %v3409, 6
    %v4089 = vrot.slane %v4088, 4
    %v4090 = vrot.slane %v3515, 6
    %v4091 = vsel %vm3959, %v4089, %v4090
    %v4092 = vrot.slane %v4090, 4
    %v4093 = vrot.slane %v3414, 6
    %v4094 = vsel %vm3959, %v4092, %v4093
    %v4095 = vrot.slane %v4093, 4
    %v4096 = vrot.slane %v3516, 6
    %v4097 = vrot.slane %v4096, 4
    %v4098 = vrot.slane %v3419, 6
    %v4099 = vsel %vm3959, %v4097, %v4098
    %v4100 = vrot.slane %v4098, 4
    %v4101 = vrot.slane %v3517, 6
    %v4102 = vsel %vm3959, %v4100, %v4101
    %v4103 = vrot.slane %v4101, 4
    %v4104 = vrot.slane %v3424, 6
    %v4105 = vrot.slane %v4104, 4
    %v4106 = vrot.slane %v3518, 6
    %v4107 = vsel %vm3959, %v4105, %v4106
    %v4108 = vrot.slane %v4106, 4
    %v4109 = vrot.slane %v3429, 6
    %v4110 = vsel %vm3959, %v4108, %v4109
    %v4111 = vrot.slane %v4109, 4
    %v4112 = vrot.slane %v3519, 6
    %v4113 = vrot.slane %v4112, 4
    %v4114 = vrot.slane %v3434, 6
    %v4115 = vsel %vm3959, %v4113, %v4114
    %v4116 = vrot.slane %v4114, 4
    %v4117 = vrot.slane %v3520, 6
    %v4118 = vsel %vm3959, %v4116, %v4117
    %v4119 = vrot.slane %v4117, 4
    %4120 = vrot.lane.b32.xlu0 %v3963, 112
    %v4121 = vpop.permute.xlu0 %4120
    %4122 = vrot.lane.b32.xlu0 %v3966, 112
    %v4123 = vpop.permute.xlu0 %4122
    %4124 = vrot.lane.b32.xlu0 %v3967, 112
    %v4125 = vpop.permute.xlu0 %4124
    %4126 = vrot.lane.b32.xlu0 %v3971, 112
    %v4127 = vpop.permute.xlu0 %4126
    %4128 = vrot.lane.b32.xlu0 %v3974, 112
    %v4129 = vpop.permute.xlu0 %4128
    %4130 = vrot.lane.b32.xlu0 %v3975, 112
    %v4131 = vpop.permute.xlu0 %4130
    %4132 = vrot.lane.b32.xlu0 %v3979, 112
    %v4133 = vpop.permute.xlu0 %4132
    %4134 = vrot.lane.b32.xlu0 %v3982, 112
    %v4135 = vpop.permute.xlu0 %4134
    %4136 = vrot.lane.b32.xlu0 %v3983, 112
    %v4137 = vpop.permute.xlu0 %4136
    %4138 = vrot.lane.b32.xlu0 %v3987, 112
    %v4139 = vpop.permute.xlu0 %4138
    %4140 = vrot.lane.b32.xlu0 %v3990, 112
    %v4141 = vpop.permute.xlu0 %4140
    %4142 = vrot.lane.b32.xlu0 %v3991, 112
    %v4143 = vpop.permute.xlu0 %4142
    %4144 = vrot.lane.b32.xlu0 %v3995, 112
    %v4145 = vpop.permute.xlu0 %4144
    %4146 = vrot.lane.b32.xlu0 %v3998, 112
    %v4147 = vpop.permute.xlu0 %4146
    %4148 = vrot.lane.b32.xlu0 %v3999, 112
    %v4149 = vpop.permute.xlu0 %4148
    %4150 = vrot.lane.b32.xlu0 %v4003, 112
    %v4151 = vpop.permute.xlu0 %4150
    %4152 = vrot.lane.b32.xlu0 %v4006, 112
    %v4153 = vpop.permute.xlu0 %4152
    %4154 = vrot.lane.b32.xlu0 %v4007, 112
    %v4155 = vpop.permute.xlu0 %4154
    %4156 = vrot.lane.b32.xlu0 %v4011, 112
    %v4157 = vpop.permute.xlu0 %4156
    %4158 = vrot.lane.b32.xlu0 %v4014, 112
    %v4159 = vpop.permute.xlu0 %4158
    %4160 = vrot.lane.b32.xlu0 %v4015, 112
    %v4161 = vpop.permute.xlu0 %4160
    %4162 = vrot.lane.b32.xlu0 %v4019, 112
    %v4163 = vpop.permute.xlu0 %4162
    %4164 = vrot.lane.b32.xlu0 %v4022, 112
    %v4165 = vpop.permute.xlu0 %4164
    %4166 = vrot.lane.b32.xlu0 %v4023, 112
    %v4167 = vpop.permute.xlu0 %4166
    %4168 = vrot.lane.b32.xlu0 %v4027, 112
    %v4169 = vpop.permute.xlu0 %4168
    %4170 = vrot.lane.b32.xlu0 %v4030, 112
    %v4171 = vpop.permute.xlu0 %4170
    %4172 = vrot.lane.b32.xlu0 %v4031, 112
    %v4173 = vpop.permute.xlu0 %4172
    %4174 = vrot.lane.b32.xlu0 %v4035, 112
    %v4175 = vpop.permute.xlu0 %4174
    %4176 = vrot.lane.b32.xlu0 %v4038, 112
    %v4177 = vpop.permute.xlu0 %4176
    %4178 = vrot.lane.b32.xlu0 %v4039, 112
    %v4179 = vpop.permute.xlu0 %4178
    %4180 = vrot.lane.b32.xlu0 %v4043, 112
    %v4181 = vpop.permute.xlu0 %4180
    %4182 = vrot.lane.b32.xlu0 %v4046, 112
    %v4183 = vpop.permute.xlu0 %4182
    %4184 = vrot.lane.b32.xlu0 %v4047, 112
    %v4185 = vpop.permute.xlu0 %4184
    %4186 = vrot.lane.b32.xlu0 %v4051, 112
    %v4187 = vpop.permute.xlu0 %4186
    %4188 = vrot.lane.b32.xlu0 %v4054, 112
    %v4189 = vpop.permute.xlu0 %4188
    %4190 = vrot.lane.b32.xlu0 %v4055, 112
    %v4191 = vpop.permute.xlu0 %4190
    %4192 = vrot.lane.b32.xlu0 %v4059, 112
    %v4193 = vpop.permute.xlu0 %4192
    %4194 = vrot.lane.b32.xlu0 %v4062, 112
    %v4195 = vpop.permute.xlu0 %4194
    %4196 = vrot.lane.b32.xlu0 %v4063, 112
    %v4197 = vpop.permute.xlu0 %4196
    %4198 = vrot.lane.b32.xlu0 %v4067, 112
    %v4199 = vpop.permute.xlu0 %4198
    %4200 = vrot.lane.b32.xlu0 %v4070, 112
    %v4201 = vpop.permute.xlu0 %4200
    %4202 = vrot.lane.b32.xlu0 %v4071, 112
    %v4203 = vpop.permute.xlu0 %4202
    %4204 = vrot.lane.b32.xlu0 %v4075, 112
    %v4205 = vpop.permute.xlu0 %4204
    %4206 = vrot.lane.b32.xlu0 %v4078, 112
    %v4207 = vpop.permute.xlu0 %4206
    %4208 = vrot.lane.b32.xlu0 %v4079, 112
    %v4209 = vpop.permute.xlu0 %4208
    %4210 = vrot.lane.b32.xlu0 %v4083, 112
    %v4211 = vpop.permute.xlu0 %4210
    %4212 = vrot.lane.b32.xlu0 %v4086, 112
    %v4213 = vpop.permute.xlu0 %4212
    %4214 = vrot.lane.b32.xlu0 %v4087, 112
    %v4215 = vpop.permute.xlu0 %4214
    %4216 = vrot.lane.b32.xlu0 %v4091, 112
    %v4217 = vpop.permute.xlu0 %4216
    %4218 = vrot.lane.b32.xlu0 %v4094, 112
    %v4219 = vpop.permute.xlu0 %4218
    %4220 = vrot.lane.b32.xlu0 %v4095, 112
    %v4221 = vpop.permute.xlu0 %4220
    %4222 = vrot.lane.b32.xlu0 %v4099, 112
    %v4223 = vpop.permute.xlu0 %4222
    %4224 = vrot.lane.b32.xlu0 %v4102, 112
    %v4225 = vpop.permute.xlu0 %4224
    %4226 = vrot.lane.b32.xlu0 %v4103, 112
    %v4227 = vpop.permute.xlu0 %4226
    %4228 = vrot.lane.b32.xlu0 %v4107, 112
    %v4229 = vpop.permute.xlu0 %4228
    %4230 = vrot.lane.b32.xlu0 %v4110, 112
    %v4231 = vpop.permute.xlu0 %4230
    %4232 = vrot.lane.b32.xlu0 %v4111, 112
    %v4233 = vpop.permute.xlu0 %4232
    %4234 = vrot.lane.b32.xlu0 %v4115, 112
    %v4235 = vpop.permute.xlu0 %4234
    %4236 = vrot.lane.b32.xlu0 %v4118, 112
    %v4237 = vpop.permute.xlu0 %4236
    %4238 = vrot.lane.b32.xlu0 %v4119, 112
    %v4239 = vpop.permute.xlu0 %4238
    %v4300 = vadd.f32 %v3897, %v4121
    %v4301 = vadd.f32 %v3898, %v4123
    %v4302 = vadd.f32 %v3899, %v4125
    %v4303 = vadd.f32 %v3900, %v4127
    %v4304 = vadd.f32 %v3901, %v4129
    %v4305 = vadd.f32 %v3902, %v4131
    %v4306 = vadd.f32 %v3903, %v4133
    %v4307 = vadd.f32 %v3904, %v4135
    %v4308 = vadd.f32 %v3905, %v4137
    %v4309 = vadd.f32 %v3906, %v4139
    %v4310 = vadd.f32 %v3907, %v4141
    %v4311 = vadd.f32 %v3908, %v4143
    %v4312 = vadd.f32 %v3909, %v4145
    %v4313 = vadd.f32 %v3910, %v4147
    %v4314 = vadd.f32 %v3911, %v4149
    %v4315 = vadd.f32 %v3912, %v4151
    %v4316 = vadd.f32 %v3913, %v4153
    %v4317 = vadd.f32 %v3914, %v4155
    %v4318 = vadd.f32 %v3915, %v4157
    %v4319 = vadd.f32 %v3916, %v4159
    %v4320 = vadd.f32 %v3917, %v4161
    %v4321 = vadd.f32 %v3918, %v4163
    %v4322 = vadd.f32 %v3919, %v4165
    %v4323 = vadd.f32 %v3920, %v4167
    %v4324 = vadd.f32 %v3921, %v4169
    %v4325 = vadd.f32 %v3922, %v4171
    %v4326 = vadd.f32 %v3923, %v4173
    %v4327 = vadd.f32 %v3924, %v4175
    %v4328 = vadd.f32 %v3925, %v4177
    %v4329 = vadd.f32 %v3926, %v4179
    %v4330 = vadd.f32 %v3927, %v4181
    %v4331 = vadd.f32 %v3928, %v4183
    %v4332 = vadd.f32 %v3929, %v4185
    %v4333 = vadd.f32 %v3930, %v4187
    %v4334 = vadd.f32 %v3931, %v4189
    %v4335 = vadd.f32 %v3932, %v4191
    %v4336 = vadd.f32 %v3933, %v4193
    %v4337 = vadd.f32 %v3934, %v4195
    %v4338 = vadd.f32 %v3935, %v4197
    %v4339 = vadd.f32 %v3936, %v4199
    %v4340 = vadd.f32 %v3937, %v4201
    %v4341 = vadd.f32 %v3938, %v4203
    %v4342 = vadd.f32 %v3939, %v4205
    %v4343 = vadd.f32 %v3940, %v4207
    %v4344 = vadd.f32 %v3941, %v4209
    %v4345 = vadd.f32 %v3942, %v4211
    %v4346 = vadd.f32 %v3943, %v4213
    %v4347 = vadd.f32 %v3944, %v4215
    %v4348 = vadd.f32 %v3945, %v4217
    %v4349 = vadd.f32 %v3946, %v4219
    %v4350 = vadd.f32 %v3947, %v4221
    %v4351 = vadd.f32 %v3948, %v4223
    %v4352 = vadd.f32 %v3949, %v4225
    %v4353 = vadd.f32 %v3950, %v4227
    %v4354 = vadd.f32 %v3951, %v4229
    %v4355 = vadd.f32 %v3952, %v4231
    %v4356 = vadd.f32 %v3953, %v4233
    %v4357 = vadd.f32 %v3954, %v4235
    %v4358 = vadd.f32 %v3955, %v4237
    %v4359 = vadd.f32 %v3956, %v4239
    %4360 = vrot.lane.b32.xlu0 %v3489, 104
    %v4361 = vpop.permute.xlu0 %4360
    %4362 = vrot.lane.b32.xlu0 %v3284, 104
    %v4363 = vpop.permute.xlu0 %4362
    %4364 = vrot.lane.b32.xlu0 %v3490, 104
    %v4365 = vpop.permute.xlu0 %4364
    %4366 = vrot.lane.b32.xlu0 %v3289, 104
    %v4367 = vpop.permute.xlu0 %4366
    %4368 = vrot.lane.b32.xlu0 %v3491, 104
    %v4369 = vpop.permute.xlu0 %4368
    %4370 = vrot.lane.b32.xlu0 %v3294, 104
    %v4371 = vpop.permute.xlu0 %4370
    %4372 = vrot.lane.b32.xlu0 %v3492, 104
    %v4373 = vpop.permute.xlu0 %4372
    %4374 = vrot.lane.b32.xlu0 %v3299, 104
    %v4375 = vpop.permute.xlu0 %4374
    %4376 = vrot.lane.b32.xlu0 %v3493, 104
    %v4377 = vpop.permute.xlu0 %4376
    %4378 = vrot.lane.b32.xlu0 %v3304, 104
    %v4379 = vpop.permute.xlu0 %4378
    %4380 = vrot.lane.b32.xlu0 %v3494, 104
    %v4381 = vpop.permute.xlu0 %4380
    %4382 = vrot.lane.b32.xlu0 %v3309, 104
    %v4383 = vpop.permute.xlu0 %4382
    %4384 = vrot.lane.b32.xlu0 %v3495, 104
    %v4385 = vpop.permute.xlu0 %4384
    %4386 = vrot.lane.b32.xlu0 %v3314, 104
    %v4387 = vpop.permute.xlu0 %4386
    %4388 = vrot.lane.b32.xlu0 %v3496, 104
    %v4389 = vpop.permute.xlu0 %4388
    %4390 = vrot.lane.b32.xlu0 %v3319, 104
    %v4391 = vpop.permute.xlu0 %4390
    %4392 = vrot.lane.b32.xlu0 %v3497, 104
    %v4393 = vpop.permute.xlu0 %4392
    %4394 = vrot.lane.b32.xlu0 %v3324, 104
    %v4395 = vpop.permute.xlu0 %4394
    %4396 = vrot.lane.b32.xlu0 %v3498, 104
    %v4397 = vpop.permute.xlu0 %4396
    %4398 = vrot.lane.b32.xlu0 %v3329, 104
    %v4399 = vpop.permute.xlu0 %4398
    %4400 = vrot.lane.b32.xlu0 %v3499, 104
    %v4401 = vpop.permute.xlu0 %4400
    %4402 = vrot.lane.b32.xlu0 %v3334, 104
    %v4403 = vpop.permute.xlu0 %4402
    %4404 = vrot.lane.b32.xlu0 %v3500, 104
    %v4405 = vpop.permute.xlu0 %4404
    %4406 = vrot.lane.b32.xlu0 %v3339, 104
    %v4407 = vpop.permute.xlu0 %4406
    %4408 = vrot.lane.b32.xlu0 %v3501, 104
    %v4409 = vpop.permute.xlu0 %4408
    %4410 = vrot.lane.b32.xlu0 %v3344, 104
    %v4411 = vpop.permute.xlu0 %4410
    %4412 = vrot.lane.b32.xlu0 %v3502, 104
    %v4413 = vpop.permute.xlu0 %4412
    %4414 = vrot.lane.b32.xlu0 %v3349, 104
    %v4415 = vpop.permute.xlu0 %4414
    %4416 = vrot.lane.b32.xlu0 %v3503, 104
    %v4417 = vpop.permute.xlu0 %4416
    %4418 = vrot.lane.b32.xlu0 %v3354, 104
    %v4419 = vpop.permute.xlu0 %4418
    %4420 = vrot.lane.b32.xlu0 %v3507, 104
    %v4421 = vpop.permute.xlu0 %4420
    %4422 = vrot.lane.b32.xlu0 %v3374, 104
    %v4423 = vpop.permute.xlu0 %4422
    %4424 = vrot.lane.b32.xlu0 %v3508, 104
    %v4425 = vpop.permute.xlu0 %4424
    %4426 = vrot.lane.b32.xlu0 %v3379, 104
    %v4427 = vpop.permute.xlu0 %4426
    %4428 = vrot.lane.b32.xlu0 %v3509, 104
    %v4429 = vpop.permute.xlu0 %4428
    %4430 = vrot.lane.b32.xlu0 %v3384, 104
    %v4431 = vpop.permute.xlu0 %4430
    %4432 = vrot.lane.b32.xlu0 %v3510, 104
    %v4433 = vpop.permute.xlu0 %4432
    %4434 = vrot.lane.b32.xlu0 %v3389, 104
    %v4435 = vpop.permute.xlu0 %4434
    %4436 = vrot.lane.b32.xlu0 %v3511, 104
    %v4437 = vpop.permute.xlu0 %4436
    %4438 = vrot.lane.b32.xlu0 %v3394, 104
    %v4439 = vpop.permute.xlu0 %4438
    %4440 = vrot.lane.b32.xlu0 %v3512, 104
    %v4441 = vpop.permute.xlu0 %4440
    %4442 = vrot.lane.b32.xlu0 %v3399, 104
    %v4443 = vpop.permute.xlu0 %4442
    %4444 = vrot.lane.b32.xlu0 %v3513, 104
    %v4445 = vpop.permute.xlu0 %4444
    %4446 = vrot.lane.b32.xlu0 %v3404, 104
    %v4447 = vpop.permute.xlu0 %4446
    %4448 = vrot.lane.b32.xlu0 %v3514, 104
    %v4449 = vpop.permute.xlu0 %4448
    %4450 = vrot.lane.b32.xlu0 %v3409, 104
    %v4451 = vpop.permute.xlu0 %4450
    %4452 = vrot.lane.b32.xlu0 %v3515, 104
    %v4453 = vpop.permute.xlu0 %4452
    %4454 = vrot.lane.b32.xlu0 %v3414, 104
    %v4455 = vpop.permute.xlu0 %4454
    %4456 = vrot.lane.b32.xlu0 %v3516, 104
    %v4457 = vpop.permute.xlu0 %4456
    %4458 = vrot.lane.b32.xlu0 %v3419, 104
    %v4459 = vpop.permute.xlu0 %4458
    %4460 = vrot.lane.b32.xlu0 %v3517, 104
    %v4461 = vpop.permute.xlu0 %4460
    %4462 = vrot.lane.b32.xlu0 %v3424, 104
    %v4463 = vpop.permute.xlu0 %4462
    %4464 = vrot.lane.b32.xlu0 %v3518, 104
    %v4465 = vpop.permute.xlu0 %4464
    %4466 = vrot.lane.b32.xlu0 %v3429, 104
    %v4467 = vpop.permute.xlu0 %4466
    %4468 = vrot.lane.b32.xlu0 %v3519, 104
    %v4469 = vpop.permute.xlu0 %4468
    %4470 = vrot.lane.b32.xlu0 %v3434, 104
    %v4471 = vpop.permute.xlu0 %4470
    %4472 = vrot.lane.b32.xlu0 %v3520, 104
    %v4473 = vpop.permute.xlu0 %4472
    %4474 = vrot.lane.b32.xlu0 %v3439, 104
    %v4475 = vpop.permute.xlu0 %4474
    %4476 = vrot.lane.b32.xlu0 %v3521, 104
    %v4477 = vpop.permute.xlu0 %4476
    %4478 = vrot.lane.b32.xlu0 %v3444, 104
    %v4479 = vpop.permute.xlu0 %4478
    %v4540 = vadd.f32 %v4300, %v4361
    %v4541 = vadd.f32 %v4301, %v4363
    %v4542 = vadd.f32 %v4302, %v4365
    %v4543 = vadd.f32 %v4303, %v4367
    %v4544 = vadd.f32 %v4304, %v4369
    %v4545 = vadd.f32 %v4305, %v4371
    %v4546 = vadd.f32 %v4306, %v4373
    %v4547 = vadd.f32 %v4307, %v4375
    %v4548 = vadd.f32 %v4308, %v4377
    %v4549 = vadd.f32 %v4309, %v4379
    %v4550 = vadd.f32 %v4310, %v4381
    %v4551 = vadd.f32 %v4311, %v4383
    %v4552 = vadd.f32 %v4312, %v4385
    %v4553 = vadd.f32 %v4313, %v4387
    %v4554 = vadd.f32 %v4314, %v4389
    %v4555 = vadd.f32 %v4315, %v4391
    %v4556 = vadd.f32 %v4316, %v4393
    %v4557 = vadd.f32 %v4317, %v4395
    %v4558 = vadd.f32 %v4318, %v4397
    %v4559 = vadd.f32 %v4319, %v4399
    %v4560 = vadd.f32 %v4320, %v4401
    %v4561 = vadd.f32 %v4321, %v4403
    %v4562 = vadd.f32 %v4322, %v4405
    %v4563 = vadd.f32 %v4323, %v4407
    %v4564 = vadd.f32 %v4324, %v4409
    %v4565 = vadd.f32 %v4325, %v4411
    %v4566 = vadd.f32 %v4326, %v4413
    %v4567 = vadd.f32 %v4327, %v4415
    %v4568 = vadd.f32 %v4328, %v4417
    %v4569 = vadd.f32 %v4329, %v4419
    %v4570 = vadd.f32 %v4330, %v4421
    %v4571 = vadd.f32 %v4331, %v4423
    %v4572 = vadd.f32 %v4332, %v4425
    %v4573 = vadd.f32 %v4333, %v4427
    %v4574 = vadd.f32 %v4334, %v4429
    %v4575 = vadd.f32 %v4335, %v4431
    %v4576 = vadd.f32 %v4336, %v4433
    %v4577 = vadd.f32 %v4337, %v4435
    %v4578 = vadd.f32 %v4338, %v4437
    %v4579 = vadd.f32 %v4339, %v4439
    %v4580 = vadd.f32 %v4340, %v4441
    %v4581 = vadd.f32 %v4341, %v4443
    %v4582 = vadd.f32 %v4342, %v4445
    %v4583 = vadd.f32 %v4343, %v4447
    %v4584 = vadd.f32 %v4344, %v4449
    %v4585 = vadd.f32 %v4345, %v4451
    %v4586 = vadd.f32 %v4346, %v4453
    %v4587 = vadd.f32 %v4347, %v4455
    %v4588 = vadd.f32 %v4348, %v4457
    %v4589 = vadd.f32 %v4349, %v4459
    %v4590 = vadd.f32 %v4350, %v4461
    %v4591 = vadd.f32 %v4351, %v4463
    %v4592 = vadd.f32 %v4352, %v4465
    %v4593 = vadd.f32 %v4353, %v4467
    %v4594 = vadd.f32 %v4354, %v4469
    %v4595 = vadd.f32 %v4355, %v4471
    %v4596 = vadd.f32 %v4356, %v4473
    %v4597 = vadd.f32 %v4357, %v4475
    %v4598 = vadd.f32 %v4358, %v4477
    %v4599 = vadd.f32 %v4359, %v4479
    %v4600 = vrot.slane %v3349, 5
    %v4601 = vrot.slane %v4600, 4
    %v4602 = vrot.slane %v3503, 5
    %v4603 = vsel %vm3556, %v4601, %v4602
    %v4604 = vrot.slane %v4602, 4
    %v4605 = vrot.slane %v3354, 5
    %v4606 = vsel %vm3556, %v4604, %v4605
    %v4607 = vrot.slane %v4605, 4
    %v4608 = vrot.slane %v3439, 5
    %v4609 = vrot.slane %v4608, 4
    %v4610 = vrot.slane %v3521, 5
    %v4611 = vsel %vm3556, %v4609, %v4610
    %v4612 = vrot.slane %v4610, 4
    %v4613 = vrot.slane %v3444, 5
    %v4614 = vsel %vm3556, %v4612, %v4613
    %v4615 = vrot.slane %v4613, 4
    %4616 = vrot.lane.b32.xlu0 %v3568, 96
    %v4617 = vpop.permute.xlu0 %4616
    %4618 = vrot.lane.b32.xlu0 %v3571, 96
    %v4619 = vpop.permute.xlu0 %4618
    %4620 = vrot.lane.b32.xlu0 %v3572, 96
    %v4621 = vpop.permute.xlu0 %4620
    %4622 = vrot.lane.b32.xlu0 %v3576, 96
    %v4623 = vpop.permute.xlu0 %4622
    %4624 = vrot.lane.b32.xlu0 %v3579, 96
    %v4625 = vpop.permute.xlu0 %4624
    %4626 = vrot.lane.b32.xlu0 %v3580, 96
    %v4627 = vpop.permute.xlu0 %4626
    %4628 = vrot.lane.b32.xlu0 %v3584, 96
    %v4629 = vpop.permute.xlu0 %4628
    %4630 = vrot.lane.b32.xlu0 %v3587, 96
    %v4631 = vpop.permute.xlu0 %4630
    %4632 = vrot.lane.b32.xlu0 %v3588, 96
    %v4633 = vpop.permute.xlu0 %4632
    %4634 = vrot.lane.b32.xlu0 %v3592, 96
    %v4635 = vpop.permute.xlu0 %4634
    %4636 = vrot.lane.b32.xlu0 %v3595, 96
    %v4637 = vpop.permute.xlu0 %4636
    %4638 = vrot.lane.b32.xlu0 %v3596, 96
    %v4639 = vpop.permute.xlu0 %4638
    %4640 = vrot.lane.b32.xlu0 %v3600, 96
    %v4641 = vpop.permute.xlu0 %4640
    %4642 = vrot.lane.b32.xlu0 %v3603, 96
    %v4643 = vpop.permute.xlu0 %4642
    %4644 = vrot.lane.b32.xlu0 %v3604, 96
    %v4645 = vpop.permute.xlu0 %4644
    %4646 = vrot.lane.b32.xlu0 %v3608, 96
    %v4647 = vpop.permute.xlu0 %4646
    %4648 = vrot.lane.b32.xlu0 %v3611, 96
    %v4649 = vpop.permute.xlu0 %4648
    %4650 = vrot.lane.b32.xlu0 %v3612, 96
    %v4651 = vpop.permute.xlu0 %4650
    %4652 = vrot.lane.b32.xlu0 %v3616, 96
    %v4653 = vpop.permute.xlu0 %4652
    %4654 = vrot.lane.b32.xlu0 %v3619, 96
    %v4655 = vpop.permute.xlu0 %4654
    %4656 = vrot.lane.b32.xlu0 %v3620, 96
    %v4657 = vpop.permute.xlu0 %4656
    %4658 = vrot.lane.b32.xlu0 %v3624, 96
    %v4659 = vpop.permute.xlu0 %4658
    %4660 = vrot.lane.b32.xlu0 %v3627, 96
    %v4661 = vpop.permute.xlu0 %4660
    %4662 = vrot.lane.b32.xlu0 %v3628, 96
    %v4663 = vpop.permute.xlu0 %4662
    %4664 = vrot.lane.b32.xlu0 %v3632, 96
    %v4665 = vpop.permute.xlu0 %4664
    %4666 = vrot.lane.b32.xlu0 %v3635, 96
    %v4667 = vpop.permute.xlu0 %4666
    %4668 = vrot.lane.b32.xlu0 %v3636, 96
    %v4669 = vpop.permute.xlu0 %4668
    %4670 = vrot.lane.b32.xlu0 %v4603, 96
    %v4671 = vpop.permute.xlu0 %4670
    %4672 = vrot.lane.b32.xlu0 %v4606, 96
    %v4673 = vpop.permute.xlu0 %4672
    %4674 = vrot.lane.b32.xlu0 %v4607, 96
    %v4675 = vpop.permute.xlu0 %4674
    %4676 = vrot.lane.b32.xlu0 %v3648, 96
    %v4677 = vpop.permute.xlu0 %4676
    %4678 = vrot.lane.b32.xlu0 %v3651, 96
    %v4679 = vpop.permute.xlu0 %4678
    %4680 = vrot.lane.b32.xlu0 %v3652, 96
    %v4681 = vpop.permute.xlu0 %4680
    %4682 = vrot.lane.b32.xlu0 %v3656, 96
    %v4683 = vpop.permute.xlu0 %4682
    %4684 = vrot.lane.b32.xlu0 %v3659, 96
    %v4685 = vpop.permute.xlu0 %4684
    %4686 = vrot.lane.b32.xlu0 %v3660, 96
    %v4687 = vpop.permute.xlu0 %4686
    %4688 = vrot.lane.b32.xlu0 %v3664, 96
    %v4689 = vpop.permute.xlu0 %4688
    %4690 = vrot.lane.b32.xlu0 %v3667, 96
    %v4691 = vpop.permute.xlu0 %4690
    %4692 = vrot.lane.b32.xlu0 %v3668, 96
    %v4693 = vpop.permute.xlu0 %4692
    %4694 = vrot.lane.b32.xlu0 %v3672, 96
    %v4695 = vpop.permute.xlu0 %4694
    %4696 = vrot.lane.b32.xlu0 %v3675, 96
    %v4697 = vpop.permute.xlu0 %4696
    %4698 = vrot.lane.b32.xlu0 %v3676, 96
    %v4699 = vpop.permute.xlu0 %4698
    %4700 = vrot.lane.b32.xlu0 %v3680, 96
    %v4701 = vpop.permute.xlu0 %4700
    %4702 = vrot.lane.b32.xlu0 %v3683, 96
    %v4703 = vpop.permute.xlu0 %4702
    %4704 = vrot.lane.b32.xlu0 %v3684, 96
    %v4705 = vpop.permute.xlu0 %4704
    %4706 = vrot.lane.b32.xlu0 %v3688, 96
    %v4707 = vpop.permute.xlu0 %4706
    %4708 = vrot.lane.b32.xlu0 %v3691, 96
    %v4709 = vpop.permute.xlu0 %4708
    %4710 = vrot.lane.b32.xlu0 %v3692, 96
    %v4711 = vpop.permute.xlu0 %4710
    %4712 = vrot.lane.b32.xlu0 %v3696, 96
    %v4713 = vpop.permute.xlu0 %4712
    %4714 = vrot.lane.b32.xlu0 %v3699, 96
    %v4715 = vpop.permute.xlu0 %4714
    %4716 = vrot.lane.b32.xlu0 %v3700, 96
    %v4717 = vpop.permute.xlu0 %4716
    %4718 = vrot.lane.b32.xlu0 %v3704, 96
    %v4719 = vpop.permute.xlu0 %4718
    %4720 = vrot.lane.b32.xlu0 %v3707, 96
    %v4721 = vpop.permute.xlu0 %4720
    %4722 = vrot.lane.b32.xlu0 %v3708, 96
    %v4723 = vpop.permute.xlu0 %4722
    %4724 = vrot.lane.b32.xlu0 %v3712, 96
    %v4725 = vpop.permute.xlu0 %4724
    %4726 = vrot.lane.b32.xlu0 %v3715, 96
    %v4727 = vpop.permute.xlu0 %4726
    %4728 = vrot.lane.b32.xlu0 %v3716, 96
    %v4729 = vpop.permute.xlu0 %4728
    %4730 = vrot.lane.b32.xlu0 %v4611, 96
    %v4731 = vpop.permute.xlu0 %4730
    %4732 = vrot.lane.b32.xlu0 %v4614, 96
    %v4733 = vpop.permute.xlu0 %4732
    %4734 = vrot.lane.b32.xlu0 %v4615, 96
    %v4735 = vpop.permute.xlu0 %4734
    %v4796 = vadd.f32 %v4540, %v4617
    %v4797 = vadd.f32 %v4541, %v4619
    %v4798 = vadd.f32 %v4542, %v4621
    %v4799 = vadd.f32 %v4543, %v4623
    %v4800 = vadd.f32 %v4544, %v4625
    %v4801 = vadd.f32 %v4545, %v4627
    %v4802 = vadd.f32 %v4546, %v4629
    %v4803 = vadd.f32 %v4547, %v4631
    %v4804 = vadd.f32 %v4548, %v4633
    %v4805 = vadd.f32 %v4549, %v4635
    %v4806 = vadd.f32 %v4550, %v4637
    %v4807 = vadd.f32 %v4551, %v4639
    %v4808 = vadd.f32 %v4552, %v4641
    %v4809 = vadd.f32 %v4553, %v4643
    %v4810 = vadd.f32 %v4554, %v4645
    %v4811 = vadd.f32 %v4555, %v4647
    %v4812 = vadd.f32 %v4556, %v4649
    %v4813 = vadd.f32 %v4557, %v4651
    %v4814 = vadd.f32 %v4558, %v4653
    %v4815 = vadd.f32 %v4559, %v4655
    %v4816 = vadd.f32 %v4560, %v4657
    %v4817 = vadd.f32 %v4561, %v4659
    %v4818 = vadd.f32 %v4562, %v4661
    %v4819 = vadd.f32 %v4563, %v4663
    %v4820 = vadd.f32 %v4564, %v4665
    %v4821 = vadd.f32 %v4565, %v4667
    %v4822 = vadd.f32 %v4566, %v4669
    %v4823 = vadd.f32 %v4567, %v4671
    %v4824 = vadd.f32 %v4568, %v4673
    %v4825 = vadd.f32 %v4569, %v4675
    %v4826 = vadd.f32 %v4570, %v4677
    %v4827 = vadd.f32 %v4571, %v4679
    %v4828 = vadd.f32 %v4572, %v4681
    %v4829 = vadd.f32 %v4573, %v4683
    %v4830 = vadd.f32 %v4574, %v4685
    %v4831 = vadd.f32 %v4575, %v4687
    %v4832 = vadd.f32 %v4576, %v4689
    %v4833 = vadd.f32 %v4577, %v4691
    %v4834 = vadd.f32 %v4578, %v4693
    %v4835 = vadd.f32 %v4579, %v4695
    %v4836 = vadd.f32 %v4580, %v4697
    %v4837 = vadd.f32 %v4581, %v4699
    %v4838 = vadd.f32 %v4582, %v4701
    %v4839 = vadd.f32 %v4583, %v4703
    %v4840 = vadd.f32 %v4584, %v4705
    %v4841 = vadd.f32 %v4585, %v4707
    %v4842 = vadd.f32 %v4586, %v4709
    %v4843 = vadd.f32 %v4587, %v4711
    %v4844 = vadd.f32 %v4588, %v4713
    %v4845 = vadd.f32 %v4589, %v4715
    %v4846 = vadd.f32 %v4590, %v4717
    %v4847 = vadd.f32 %v4591, %v4719
    %v4848 = vadd.f32 %v4592, %v4721
    %v4849 = vadd.f32 %v4593, %v4723
    %v4850 = vadd.f32 %v4594, %v4725
    %v4851 = vadd.f32 %v4595, %v4727
    %v4852 = vadd.f32 %v4596, %v4729
    %v4853 = vadd.f32 %v4597, %v4731
    %v4854 = vadd.f32 %v4598, %v4733
    %v4855 = vadd.f32 %v4599, %v4735
    %v4856 = vrot.slane %v3349, 6
    %v4857 = vrot.slane %v4856, 4
    %v4858 = vrot.slane %v3503, 6
    %v4859 = vsel %vm3959, %v4857, %v4858
    %v4860 = vrot.slane %v4858, 4
    %v4861 = vrot.slane %v3354, 6
    %v4862 = vsel %vm3959, %v4860, %v4861
    %v4863 = vrot.slane %v4861, 4
    %v4864 = vrot.slane %v3439, 6
    %v4865 = vrot.slane %v4864, 4
    %v4866 = vrot.slane %v3521, 6
    %v4867 = vsel %vm3959, %v4865, %v4866
    %v4868 = vrot.slane %v4866, 4
    %v4869 = vrot.slane %v3444, 6
    %v4870 = vsel %vm3959, %v4868, %v4869
    %v4871 = vrot.slane %v4869, 4
    %4872 = vrot.lane.b32.xlu0 %v3971, 88
    %v4873 = vpop.permute.xlu0 %4872
    %4874 = vrot.lane.b32.xlu0 %v3974, 88
    %v4875 = vpop.permute.xlu0 %4874
    %4876 = vrot.lane.b32.xlu0 %v3975, 88
    %v4877 = vpop.permute.xlu0 %4876
    %4878 = vrot.lane.b32.xlu0 %v3979, 88
    %v4879 = vpop.permute.xlu0 %4878
    %4880 = vrot.lane.b32.xlu0 %v3982, 88
    %v4881 = vpop.permute.xlu0 %4880
    %4882 = vrot.lane.b32.xlu0 %v3983, 88
    %v4883 = vpop.permute.xlu0 %4882
    %4884 = vrot.lane.b32.xlu0 %v3987, 88
    %v4885 = vpop.permute.xlu0 %4884
    %4886 = vrot.lane.b32.xlu0 %v3990, 88
    %v4887 = vpop.permute.xlu0 %4886
    %4888 = vrot.lane.b32.xlu0 %v3991, 88
    %v4889 = vpop.permute.xlu0 %4888
    %4890 = vrot.lane.b32.xlu0 %v3995, 88
    %v4891 = vpop.permute.xlu0 %4890
    %4892 = vrot.lane.b32.xlu0 %v3998, 88
    %v4893 = vpop.permute.xlu0 %4892
    %4894 = vrot.lane.b32.xlu0 %v3999, 88
    %v4895 = vpop.permute.xlu0 %4894
    %4896 = vrot.lane.b32.xlu0 %v4003, 88
    %v4897 = vpop.permute.xlu0 %4896
    %4898 = vrot.lane.b32.xlu0 %v4006, 88
    %v4899 = vpop.permute.xlu0 %4898
    %4900 = vrot.lane.b32.xlu0 %v4007, 88
    %v4901 = vpop.permute.xlu0 %4900
    %4902 = vrot.lane.b32.xlu0 %v4011, 88
    %v4903 = vpop.permute.xlu0 %4902
    %4904 = vrot.lane.b32.xlu0 %v4014, 88
    %v4905 = vpop.permute.xlu0 %4904
    %4906 = vrot.lane.b32.xlu0 %v4015, 88
    %v4907 = vpop.permute.xlu0 %4906
    %4908 = vrot.lane.b32.xlu0 %v4019, 88
    %v4909 = vpop.permute.xlu0 %4908
    %4910 = vrot.lane.b32.xlu0 %v4022, 88
    %v4911 = vpop.permute.xlu0 %4910
    %4912 = vrot.lane.b32.xlu0 %v4023, 88
    %v4913 = vpop.permute.xlu0 %4912
    %4914 = vrot.lane.b32.xlu0 %v4027, 88
    %v4915 = vpop.permute.xlu0 %4914
    %4916 = vrot.lane.b32.xlu0 %v4030, 88
    %v4917 = vpop.permute.xlu0 %4916
    %4918 = vrot.lane.b32.xlu0 %v4031, 88
    %v4919 = vpop.permute.xlu0 %4918
    %4920 = vrot.lane.b32.xlu0 %v4035, 88
    %v4921 = vpop.permute.xlu0 %4920
    %4922 = vrot.lane.b32.xlu0 %v4038, 88
    %v4923 = vpop.permute.xlu0 %4922
    %4924 = vrot.lane.b32.xlu0 %v4039, 88
    %v4925 = vpop.permute.xlu0 %4924
    %4926 = vrot.lane.b32.xlu0 %v4859, 88
    %v4927 = vpop.permute.xlu0 %4926
    %4928 = vrot.lane.b32.xlu0 %v4862, 88
    %v4929 = vpop.permute.xlu0 %4928
    %4930 = vrot.lane.b32.xlu0 %v4863, 88
    %v4931 = vpop.permute.xlu0 %4930
    %4932 = vrot.lane.b32.xlu0 %v4051, 88
    %v4933 = vpop.permute.xlu0 %4932
    %4934 = vrot.lane.b32.xlu0 %v4054, 88
    %v4935 = vpop.permute.xlu0 %4934
    %4936 = vrot.lane.b32.xlu0 %v4055, 88
    %v4937 = vpop.permute.xlu0 %4936
    %4938 = vrot.lane.b32.xlu0 %v4059, 88
    %v4939 = vpop.permute.xlu0 %4938
    %4940 = vrot.lane.b32.xlu0 %v4062, 88
    %v4941 = vpop.permute.xlu0 %4940
    %4942 = vrot.lane.b32.xlu0 %v4063, 88
    %v4943 = vpop.permute.xlu0 %4942
    %4944 = vrot.lane.b32.xlu0 %v4067, 88
    %v4945 = vpop.permute.xlu0 %4944
    %4946 = vrot.lane.b32.xlu0 %v4070, 88
    %v4947 = vpop.permute.xlu0 %4946
    %4948 = vrot.lane.b32.xlu0 %v4071, 88
    %v4949 = vpop.permute.xlu0 %4948
    %4950 = vrot.lane.b32.xlu0 %v4075, 88
    %v4951 = vpop.permute.xlu0 %4950
    %4952 = vrot.lane.b32.xlu0 %v4078, 88
    %v4953 = vpop.permute.xlu0 %4952
    %4954 = vrot.lane.b32.xlu0 %v4079, 88
    %v4955 = vpop.permute.xlu0 %4954
    %4956 = vrot.lane.b32.xlu0 %v4083, 88
    %v4957 = vpop.permute.xlu0 %4956
    %4958 = vrot.lane.b32.xlu0 %v4086, 88
    %v4959 = vpop.permute.xlu0 %4958
    %4960 = vrot.lane.b32.xlu0 %v4087, 88
    %v4961 = vpop.permute.xlu0 %4960
    %4962 = vrot.lane.b32.xlu0 %v4091, 88
    %v4963 = vpop.permute.xlu0 %4962
    %4964 = vrot.lane.b32.xlu0 %v4094, 88
    %v4965 = vpop.permute.xlu0 %4964
    %4966 = vrot.lane.b32.xlu0 %v4095, 88
    %v4967 = vpop.permute.xlu0 %4966
    %4968 = vrot.lane.b32.xlu0 %v4099, 88
    %v4969 = vpop.permute.xlu0 %4968
    %4970 = vrot.lane.b32.xlu0 %v4102, 88
    %v4971 = vpop.permute.xlu0 %4970
    %4972 = vrot.lane.b32.xlu0 %v4103, 88
    %v4973 = vpop.permute.xlu0 %4972
    %4974 = vrot.lane.b32.xlu0 %v4107, 88
    %v4975 = vpop.permute.xlu0 %4974
    %4976 = vrot.lane.b32.xlu0 %v4110, 88
    %v4977 = vpop.permute.xlu0 %4976
    %4978 = vrot.lane.b32.xlu0 %v4111, 88
    %v4979 = vpop.permute.xlu0 %4978
    %4980 = vrot.lane.b32.xlu0 %v4115, 88
    %v4981 = vpop.permute.xlu0 %4980
    %4982 = vrot.lane.b32.xlu0 %v4118, 88
    %v4983 = vpop.permute.xlu0 %4982
    %4984 = vrot.lane.b32.xlu0 %v4119, 88
    %v4985 = vpop.permute.xlu0 %4984
    %4986 = vrot.lane.b32.xlu0 %v4867, 88
    %v4987 = vpop.permute.xlu0 %4986
    %4988 = vrot.lane.b32.xlu0 %v4870, 88
    %v4989 = vpop.permute.xlu0 %4988
    %4990 = vrot.lane.b32.xlu0 %v4871, 88
    %v4991 = vpop.permute.xlu0 %4990
    %v5052 = vadd.f32 %v4796, %v4873
    %v5053 = vadd.f32 %v4797, %v4875
    %v5054 = vadd.f32 %v4798, %v4877
    %v5055 = vadd.f32 %v4799, %v4879
    %v5056 = vadd.f32 %v4800, %v4881
    %v5057 = vadd.f32 %v4801, %v4883
    %v5058 = vadd.f32 %v4802, %v4885
    %v5059 = vadd.f32 %v4803, %v4887
    %v5060 = vadd.f32 %v4804, %v4889
    %v5061 = vadd.f32 %v4805, %v4891
    %v5062 = vadd.f32 %v4806, %v4893
    %v5063 = vadd.f32 %v4807, %v4895
    %v5064 = vadd.f32 %v4808, %v4897
    %v5065 = vadd.f32 %v4809, %v4899
    %v5066 = vadd.f32 %v4810, %v4901
    %v5067 = vadd.f32 %v4811, %v4903
    %v5068 = vadd.f32 %v4812, %v4905
    %v5069 = vadd.f32 %v4813, %v4907
    %v5070 = vadd.f32 %v4814, %v4909
    %v5071 = vadd.f32 %v4815, %v4911
    %v5072 = vadd.f32 %v4816, %v4913
    %v5073 = vadd.f32 %v4817, %v4915
    %v5074 = vadd.f32 %v4818, %v4917
    %v5075 = vadd.f32 %v4819, %v4919
    %v5076 = vadd.f32 %v4820, %v4921
    %v5077 = vadd.f32 %v4821, %v4923
    %v5078 = vadd.f32 %v4822, %v4925
    %v5079 = vadd.f32 %v4823, %v4927
    %v5080 = vadd.f32 %v4824, %v4929
    %v5081 = vadd.f32 %v4825, %v4931
    %v5082 = vadd.f32 %v4826, %v4933
    %v5083 = vadd.f32 %v4827, %v4935
    %v5084 = vadd.f32 %v4828, %v4937
    %v5085 = vadd.f32 %v4829, %v4939
    %v5086 = vadd.f32 %v4830, %v4941
    %v5087 = vadd.f32 %v4831, %v4943
    %v5088 = vadd.f32 %v4832, %v4945
    %v5089 = vadd.f32 %v4833, %v4947
    %v5090 = vadd.f32 %v4834, %v4949
    %v5091 = vadd.f32 %v4835, %v4951
    %v5092 = vadd.f32 %v4836, %v4953
    %v5093 = vadd.f32 %v4837, %v4955
    %v5094 = vadd.f32 %v4838, %v4957
    %v5095 = vadd.f32 %v4839, %v4959
    %v5096 = vadd.f32 %v4840, %v4961
    %v5097 = vadd.f32 %v4841, %v4963
    %v5098 = vadd.f32 %v4842, %v4965
    %v5099 = vadd.f32 %v4843, %v4967
    %v5100 = vadd.f32 %v4844, %v4969
    %v5101 = vadd.f32 %v4845, %v4971
    %v5102 = vadd.f32 %v4846, %v4973
    %v5103 = vadd.f32 %v4847, %v4975
    %v5104 = vadd.f32 %v4848, %v4977
    %v5105 = vadd.f32 %v4849, %v4979
    %v5106 = vadd.f32 %v4850, %v4981
    %v5107 = vadd.f32 %v4851, %v4983
    %v5108 = vadd.f32 %v4852, %v4985
    %v5109 = vadd.f32 %v4853, %v4987
    %v5110 = vadd.f32 %v4854, %v4989
    %v5111 = vadd.f32 %v4855, %v4991
    %5112 = vrot.lane.b32.xlu0 %v3289, 80
    %v5113 = vpop.permute.xlu0 %5112
    %5114 = vrot.lane.b32.xlu0 %v3491, 80
    %v5115 = vpop.permute.xlu0 %5114
    %5116 = vrot.lane.b32.xlu0 %v3294, 80
    %v5117 = vpop.permute.xlu0 %5116
    %5118 = vrot.lane.b32.xlu0 %v3492, 80
    %v5119 = vpop.permute.xlu0 %5118
    %5120 = vrot.lane.b32.xlu0 %v3299, 80
    %v5121 = vpop.permute.xlu0 %5120
    %5122 = vrot.lane.b32.xlu0 %v3493, 80
    %v5123 = vpop.permute.xlu0 %5122
    %5124 = vrot.lane.b32.xlu0 %v3304, 80
    %v5125 = vpop.permute.xlu0 %5124
    %5126 = vrot.lane.b32.xlu0 %v3494, 80
    %v5127 = vpop.permute.xlu0 %5126
    %5128 = vrot.lane.b32.xlu0 %v3309, 80
    %v5129 = vpop.permute.xlu0 %5128
    %5130 = vrot.lane.b32.xlu0 %v3495, 80
    %v5131 = vpop.permute.xlu0 %5130
    %5132 = vrot.lane.b32.xlu0 %v3314, 80
    %v5133 = vpop.permute.xlu0 %5132
    %5134 = vrot.lane.b32.xlu0 %v3496, 80
    %v5135 = vpop.permute.xlu0 %5134
    %5136 = vrot.lane.b32.xlu0 %v3319, 80
    %v5137 = vpop.permute.xlu0 %5136
    %5138 = vrot.lane.b32.xlu0 %v3497, 80
    %v5139 = vpop.permute.xlu0 %5138
    %5140 = vrot.lane.b32.xlu0 %v3324, 80
    %v5141 = vpop.permute.xlu0 %5140
    %5142 = vrot.lane.b32.xlu0 %v3498, 80
    %v5143 = vpop.permute.xlu0 %5142
    %5144 = vrot.lane.b32.xlu0 %v3329, 80
    %v5145 = vpop.permute.xlu0 %5144
    %5146 = vrot.lane.b32.xlu0 %v3499, 80
    %v5147 = vpop.permute.xlu0 %5146
    %5148 = vrot.lane.b32.xlu0 %v3334, 80
    %v5149 = vpop.permute.xlu0 %5148
    %5150 = vrot.lane.b32.xlu0 %v3500, 80
    %v5151 = vpop.permute.xlu0 %5150
    %5152 = vrot.lane.b32.xlu0 %v3339, 80
    %v5153 = vpop.permute.xlu0 %5152
    %5154 = vrot.lane.b32.xlu0 %v3501, 80
    %v5155 = vpop.permute.xlu0 %5154
    %5156 = vrot.lane.b32.xlu0 %v3344, 80
    %v5157 = vpop.permute.xlu0 %5156
    %5158 = vrot.lane.b32.xlu0 %v3502, 80
    %v5159 = vpop.permute.xlu0 %5158
    %5160 = vrot.lane.b32.xlu0 %v3349, 80
    %v5161 = vpop.permute.xlu0 %5160
    %5162 = vrot.lane.b32.xlu0 %v3503, 80
    %v5163 = vpop.permute.xlu0 %5162
    %5164 = vrot.lane.b32.xlu0 %v3354, 80
    %v5165 = vpop.permute.xlu0 %5164
    %5166 = vrot.lane.b32.xlu0 %v3504, 80
    %v5167 = vpop.permute.xlu0 %5166
    %5168 = vrot.lane.b32.xlu0 %v3359, 80
    %v5169 = vpop.permute.xlu0 %5168
    %5170 = vrot.lane.b32.xlu0 %v3505, 80
    %v5171 = vpop.permute.xlu0 %5170
    %5172 = vrot.lane.b32.xlu0 %v3379, 80
    %v5173 = vpop.permute.xlu0 %5172
    %5174 = vrot.lane.b32.xlu0 %v3509, 80
    %v5175 = vpop.permute.xlu0 %5174
    %5176 = vrot.lane.b32.xlu0 %v3384, 80
    %v5177 = vpop.permute.xlu0 %5176
    %5178 = vrot.lane.b32.xlu0 %v3510, 80
    %v5179 = vpop.permute.xlu0 %5178
    %5180 = vrot.lane.b32.xlu0 %v3389, 80
    %v5181 = vpop.permute.xlu0 %5180
    %5182 = vrot.lane.b32.xlu0 %v3511, 80
    %v5183 = vpop.permute.xlu0 %5182
    %5184 = vrot.lane.b32.xlu0 %v3394, 80
    %v5185 = vpop.permute.xlu0 %5184
    %5186 = vrot.lane.b32.xlu0 %v3512, 80
    %v5187 = vpop.permute.xlu0 %5186
    %5188 = vrot.lane.b32.xlu0 %v3399, 80
    %v5189 = vpop.permute.xlu0 %5188
    %5190 = vrot.lane.b32.xlu0 %v3513, 80
    %v5191 = vpop.permute.xlu0 %5190
    %5192 = vrot.lane.b32.xlu0 %v3404, 80
    %v5193 = vpop.permute.xlu0 %5192
    %5194 = vrot.lane.b32.xlu0 %v3514, 80
    %v5195 = vpop.permute.xlu0 %5194
    %5196 = vrot.lane.b32.xlu0 %v3409, 80
    %v5197 = vpop.permute.xlu0 %5196
    %5198 = vrot.lane.b32.xlu0 %v3515, 80
    %v5199 = vpop.permute.xlu0 %5198
    %5200 = vrot.lane.b32.xlu0 %v3414, 80
    %v5201 = vpop.permute.xlu0 %5200
    %5202 = vrot.lane.b32.xlu0 %v3516, 80
    %v5203 = vpop.permute.xlu0 %5202
    %5204 = vrot.lane.b32.xlu0 %v3419, 80
    %v5205 = vpop.permute.xlu0 %5204
    %5206 = vrot.lane.b32.xlu0 %v3517, 80
    %v5207 = vpop.permute.xlu0 %5206
    %5208 = vrot.lane.b32.xlu0 %v3424, 80
    %v5209 = vpop.permute.xlu0 %5208
    %5210 = vrot.lane.b32.xlu0 %v3518, 80
    %v5211 = vpop.permute.xlu0 %5210
    %5212 = vrot.lane.b32.xlu0 %v3429, 80
    %v5213 = vpop.permute.xlu0 %5212
    %5214 = vrot.lane.b32.xlu0 %v3519, 80
    %v5215 = vpop.permute.xlu0 %5214
    %5216 = vrot.lane.b32.xlu0 %v3434, 80
    %v5217 = vpop.permute.xlu0 %5216
    %5218 = vrot.lane.b32.xlu0 %v3520, 80
    %v5219 = vpop.permute.xlu0 %5218
    %5220 = vrot.lane.b32.xlu0 %v3439, 80
    %v5221 = vpop.permute.xlu0 %5220
    %5222 = vrot.lane.b32.xlu0 %v3521, 80
    %v5223 = vpop.permute.xlu0 %5222
    %5224 = vrot.lane.b32.xlu0 %v3444, 80
    %v5225 = vpop.permute.xlu0 %5224
    %5226 = vrot.lane.b32.xlu0 %v3522, 80
    %v5227 = vpop.permute.xlu0 %5226
    %5228 = vrot.lane.b32.xlu0 %v3449, 80
    %v5229 = vpop.permute.xlu0 %5228
    %5230 = vrot.lane.b32.xlu0 %v3523, 80
    %v5231 = vpop.permute.xlu0 %5230
    %v5292 = vadd.f32 %v5052, %v5113
    %v5293 = vadd.f32 %v5053, %v5115
    %v5294 = vadd.f32 %v5054, %v5117
    %v5295 = vadd.f32 %v5055, %v5119
    %v5296 = vadd.f32 %v5056, %v5121
    %v5297 = vadd.f32 %v5057, %v5123
    %v5298 = vadd.f32 %v5058, %v5125
    %v5299 = vadd.f32 %v5059, %v5127
    %v5300 = vadd.f32 %v5060, %v5129
    %v5301 = vadd.f32 %v5061, %v5131
    %v5302 = vadd.f32 %v5062, %v5133
    %v5303 = vadd.f32 %v5063, %v5135
    %v5304 = vadd.f32 %v5064, %v5137
    %v5305 = vadd.f32 %v5065, %v5139
    %v5306 = vadd.f32 %v5066, %v5141
    %v5307 = vadd.f32 %v5067, %v5143
    %v5308 = vadd.f32 %v5068, %v5145
    %v5309 = vadd.f32 %v5069, %v5147
    %v5310 = vadd.f32 %v5070, %v5149
    %v5311 = vadd.f32 %v5071, %v5151
    %v5312 = vadd.f32 %v5072, %v5153
    %v5313 = vadd.f32 %v5073, %v5155
    %v5314 = vadd.f32 %v5074, %v5157
    %v5315 = vadd.f32 %v5075, %v5159
    %v5316 = vadd.f32 %v5076, %v5161
    %v5317 = vadd.f32 %v5077, %v5163
    %v5318 = vadd.f32 %v5078, %v5165
    %v5319 = vadd.f32 %v5079, %v5167
    %v5320 = vadd.f32 %v5080, %v5169
    %v5321 = vadd.f32 %v5081, %v5171
    %v5322 = vadd.f32 %v5082, %v5173
    %v5323 = vadd.f32 %v5083, %v5175
    %v5324 = vadd.f32 %v5084, %v5177
    %v5325 = vadd.f32 %v5085, %v5179
    %v5326 = vadd.f32 %v5086, %v5181
    %v5327 = vadd.f32 %v5087, %v5183
    %v5328 = vadd.f32 %v5088, %v5185
    %v5329 = vadd.f32 %v5089, %v5187
    %v5330 = vadd.f32 %v5090, %v5189
    %v5331 = vadd.f32 %v5091, %v5191
    %v5332 = vadd.f32 %v5092, %v5193
    %v5333 = vadd.f32 %v5093, %v5195
    %v5334 = vadd.f32 %v5094, %v5197
    %v5335 = vadd.f32 %v5095, %v5199
    %v5336 = vadd.f32 %v5096, %v5201
    %v5337 = vadd.f32 %v5097, %v5203
    %v5338 = vadd.f32 %v5098, %v5205
    %v5339 = vadd.f32 %v5099, %v5207
    %v5340 = vadd.f32 %v5100, %v5209
    %v5341 = vadd.f32 %v5101, %v5211
    %v5342 = vadd.f32 %v5102, %v5213
    %v5343 = vadd.f32 %v5103, %v5215
    %v5344 = vadd.f32 %v5104, %v5217
    %v5345 = vadd.f32 %v5105, %v5219
    %v5346 = vadd.f32 %v5106, %v5221
    %v5347 = vadd.f32 %v5107, %v5223
    %v5348 = vadd.f32 %v5108, %v5225
    %v5349 = vadd.f32 %v5109, %v5227
    %v5350 = vadd.f32 %v5110, %v5229
    %v5351 = vadd.f32 %v5111, %v5231
    %v5352 = vrot.slane %v3504, 5
    %v5353 = vrot.slane %v5352, 4
    %v5354 = vrot.slane %v3359, 5
    %v5355 = vsel %vm3556, %v5353, %v5354
    %v5356 = vrot.slane %v5354, 4
    %v5357 = vrot.slane %v3505, 5
    %v5358 = vsel %vm3556, %v5356, %v5357
    %v5359 = vrot.slane %v5357, 4
    %v5360 = vrot.slane %v3522, 5
    %v5361 = vrot.slane %v5360, 4
    %v5362 = vrot.slane %v3449, 5
    %v5363 = vsel %vm3556, %v5361, %v5362
    %v5364 = vrot.slane %v5362, 4
    %v5365 = vrot.slane %v3523, 5
    %v5366 = vsel %vm3556, %v5364, %v5365
    %v5367 = vrot.slane %v5365, 4
    %5368 = vrot.lane.b32.xlu0 %v3576, 72
    %v5369 = vpop.permute.xlu0 %5368
    %5370 = vrot.lane.b32.xlu0 %v3579, 72
    %v5371 = vpop.permute.xlu0 %5370
    %5372 = vrot.lane.b32.xlu0 %v3580, 72
    %v5373 = vpop.permute.xlu0 %5372
    %5374 = vrot.lane.b32.xlu0 %v3584, 72
    %v5375 = vpop.permute.xlu0 %5374
    %5376 = vrot.lane.b32.xlu0 %v3587, 72
    %v5377 = vpop.permute.xlu0 %5376
    %5378 = vrot.lane.b32.xlu0 %v3588, 72
    %v5379 = vpop.permute.xlu0 %5378
    %5380 = vrot.lane.b32.xlu0 %v3592, 72
    %v5381 = vpop.permute.xlu0 %5380
    %5382 = vrot.lane.b32.xlu0 %v3595, 72
    %v5383 = vpop.permute.xlu0 %5382
    %5384 = vrot.lane.b32.xlu0 %v3596, 72
    %v5385 = vpop.permute.xlu0 %5384
    %5386 = vrot.lane.b32.xlu0 %v3600, 72
    %v5387 = vpop.permute.xlu0 %5386
    %5388 = vrot.lane.b32.xlu0 %v3603, 72
    %v5389 = vpop.permute.xlu0 %5388
    %5390 = vrot.lane.b32.xlu0 %v3604, 72
    %v5391 = vpop.permute.xlu0 %5390
    %5392 = vrot.lane.b32.xlu0 %v3608, 72
    %v5393 = vpop.permute.xlu0 %5392
    %5394 = vrot.lane.b32.xlu0 %v3611, 72
    %v5395 = vpop.permute.xlu0 %5394
    %5396 = vrot.lane.b32.xlu0 %v3612, 72
    %v5397 = vpop.permute.xlu0 %5396
    %5398 = vrot.lane.b32.xlu0 %v3616, 72
    %v5399 = vpop.permute.xlu0 %5398
    %5400 = vrot.lane.b32.xlu0 %v3619, 72
    %v5401 = vpop.permute.xlu0 %5400
    %5402 = vrot.lane.b32.xlu0 %v3620, 72
    %v5403 = vpop.permute.xlu0 %5402
    %5404 = vrot.lane.b32.xlu0 %v3624, 72
    %v5405 = vpop.permute.xlu0 %5404
    %5406 = vrot.lane.b32.xlu0 %v3627, 72
    %v5407 = vpop.permute.xlu0 %5406
    %5408 = vrot.lane.b32.xlu0 %v3628, 72
    %v5409 = vpop.permute.xlu0 %5408
    %5410 = vrot.lane.b32.xlu0 %v3632, 72
    %v5411 = vpop.permute.xlu0 %5410
    %5412 = vrot.lane.b32.xlu0 %v3635, 72
    %v5413 = vpop.permute.xlu0 %5412
    %5414 = vrot.lane.b32.xlu0 %v3636, 72
    %v5415 = vpop.permute.xlu0 %5414
    %5416 = vrot.lane.b32.xlu0 %v4603, 72
    %v5417 = vpop.permute.xlu0 %5416
    %5418 = vrot.lane.b32.xlu0 %v4606, 72
    %v5419 = vpop.permute.xlu0 %5418
    %5420 = vrot.lane.b32.xlu0 %v4607, 72
    %v5421 = vpop.permute.xlu0 %5420
    %5422 = vrot.lane.b32.xlu0 %v5355, 72
    %v5423 = vpop.permute.xlu0 %5422
    %5424 = vrot.lane.b32.xlu0 %v5358, 72
    %v5425 = vpop.permute.xlu0 %5424
    %5426 = vrot.lane.b32.xlu0 %v5359, 72
    %v5427 = vpop.permute.xlu0 %5426
    %5428 = vrot.lane.b32.xlu0 %v3656, 72
    %v5429 = vpop.permute.xlu0 %5428
    %5430 = vrot.lane.b32.xlu0 %v3659, 72
    %v5431 = vpop.permute.xlu0 %5430
    %5432 = vrot.lane.b32.xlu0 %v3660, 72
    %v5433 = vpop.permute.xlu0 %5432
    %5434 = vrot.lane.b32.xlu0 %v3664, 72
    %v5435 = vpop.permute.xlu0 %5434
    %5436 = vrot.lane.b32.xlu0 %v3667, 72
    %v5437 = vpop.permute.xlu0 %5436
    %5438 = vrot.lane.b32.xlu0 %v3668, 72
    %v5439 = vpop.permute.xlu0 %5438
    %5440 = vrot.lane.b32.xlu0 %v3672, 72
    %v5441 = vpop.permute.xlu0 %5440
    %5442 = vrot.lane.b32.xlu0 %v3675, 72
    %v5443 = vpop.permute.xlu0 %5442
    %5444 = vrot.lane.b32.xlu0 %v3676, 72
    %v5445 = vpop.permute.xlu0 %5444
    %5446 = vrot.lane.b32.xlu0 %v3680, 72
    %v5447 = vpop.permute.xlu0 %5446
    %5448 = vrot.lane.b32.xlu0 %v3683, 72
    %v5449 = vpop.permute.xlu0 %5448
    %5450 = vrot.lane.b32.xlu0 %v3684, 72
    %v5451 = vpop.permute.xlu0 %5450
    %5452 = vrot.lane.b32.xlu0 %v3688, 72
    %v5453 = vpop.permute.xlu0 %5452
    %5454 = vrot.lane.b32.xlu0 %v3691, 72
    %v5455 = vpop.permute.xlu0 %5454
    %5456 = vrot.lane.b32.xlu0 %v3692, 72
    %v5457 = vpop.permute.xlu0 %5456
    %5458 = vrot.lane.b32.xlu0 %v3696, 72
    %v5459 = vpop.permute.xlu0 %5458
    %5460 = vrot.lane.b32.xlu0 %v3699, 72
    %v5461 = vpop.permute.xlu0 %5460
    %5462 = vrot.lane.b32.xlu0 %v3700, 72
    %v5463 = vpop.permute.xlu0 %5462
    %5464 = vrot.lane.b32.xlu0 %v3704, 72
    %v5465 = vpop.permute.xlu0 %5464
    %5466 = vrot.lane.b32.xlu0 %v3707, 72
    %v5467 = vpop.permute.xlu0 %5466
    %5468 = vrot.lane.b32.xlu0 %v3708, 72
    %v5469 = vpop.permute.xlu0 %5468
    %5470 = vrot.lane.b32.xlu0 %v3712, 72
    %v5471 = vpop.permute.xlu0 %5470
    %5472 = vrot.lane.b32.xlu0 %v3715, 72
    %v5473 = vpop.permute.xlu0 %5472
    %5474 = vrot.lane.b32.xlu0 %v3716, 72
    %v5475 = vpop.permute.xlu0 %5474
    %5476 = vrot.lane.b32.xlu0 %v4611, 72
    %v5477 = vpop.permute.xlu0 %5476
    %5478 = vrot.lane.b32.xlu0 %v4614, 72
    %v5479 = vpop.permute.xlu0 %5478
    %5480 = vrot.lane.b32.xlu0 %v4615, 72
    %v5481 = vpop.permute.xlu0 %5480
    %5482 = vrot.lane.b32.xlu0 %v5363, 72
    %v5483 = vpop.permute.xlu0 %5482
    %5484 = vrot.lane.b32.xlu0 %v5366, 72
    %v5485 = vpop.permute.xlu0 %5484
    %5486 = vrot.lane.b32.xlu0 %v5367, 72
    %v5487 = vpop.permute.xlu0 %5486
    %v5548 = vadd.f32 %v5292, %v5369
    %v5549 = vadd.f32 %v5293, %v5371
    %v5550 = vadd.f32 %v5294, %v5373
    %v5551 = vadd.f32 %v5295, %v5375
    %v5552 = vadd.f32 %v5296, %v5377
    %v5553 = vadd.f32 %v5297, %v5379
    %v5554 = vadd.f32 %v5298, %v5381
    %v5555 = vadd.f32 %v5299, %v5383
    %v5556 = vadd.f32 %v5300, %v5385
    %v5557 = vadd.f32 %v5301, %v5387
    %v5558 = vadd.f32 %v5302, %v5389
    %v5559 = vadd.f32 %v5303, %v5391
    %v5560 = vadd.f32 %v5304, %v5393
    %v5561 = vadd.f32 %v5305, %v5395
    %v5562 = vadd.f32 %v5306, %v5397
    %v5563 = vadd.f32 %v5307, %v5399
    %v5564 = vadd.f32 %v5308, %v5401
    %v5565 = vadd.f32 %v5309, %v5403
    %v5566 = vadd.f32 %v5310, %v5405
    %v5567 = vadd.f32 %v5311, %v5407
    %v5568 = vadd.f32 %v5312, %v5409
    %v5569 = vadd.f32 %v5313, %v5411
    %v5570 = vadd.f32 %v5314, %v5413
    %v5571 = vadd.f32 %v5315, %v5415
    %v5572 = vadd.f32 %v5316, %v5417
    %v5573 = vadd.f32 %v5317, %v5419
    %v5574 = vadd.f32 %v5318, %v5421
    %v5575 = vadd.f32 %v5319, %v5423
    %v5576 = vadd.f32 %v5320, %v5425
    %v5577 = vadd.f32 %v5321, %v5427
    %v5578 = vadd.f32 %v5322, %v5429
    %v5579 = vadd.f32 %v5323, %v5431
    %v5580 = vadd.f32 %v5324, %v5433
    %v5581 = vadd.f32 %v5325, %v5435
    %v5582 = vadd.f32 %v5326, %v5437
    %v5583 = vadd.f32 %v5327, %v5439
    %v5584 = vadd.f32 %v5328, %v5441
    %v5585 = vadd.f32 %v5329, %v5443
    %v5586 = vadd.f32 %v5330, %v5445
    %v5587 = vadd.f32 %v5331, %v5447
    %v5588 = vadd.f32 %v5332, %v5449
    %v5589 = vadd.f32 %v5333, %v5451
    %v5590 = vadd.f32 %v5334, %v5453
    %v5591 = vadd.f32 %v5335, %v5455
    %v5592 = vadd.f32 %v5336, %v5457
    %v5593 = vadd.f32 %v5337, %v5459
    %v5594 = vadd.f32 %v5338, %v5461
    %v5595 = vadd.f32 %v5339, %v5463
    %v5596 = vadd.f32 %v5340, %v5465
    %v5597 = vadd.f32 %v5341, %v5467
    %v5598 = vadd.f32 %v5342, %v5469
    %v5599 = vadd.f32 %v5343, %v5471
    %v5600 = vadd.f32 %v5344, %v5473
    %v5601 = vadd.f32 %v5345, %v5475
    %v5602 = vadd.f32 %v5346, %v5477
    %v5603 = vadd.f32 %v5347, %v5479
    %v5604 = vadd.f32 %v5348, %v5481
    %v5605 = vadd.f32 %v5349, %v5483
    %v5606 = vadd.f32 %v5350, %v5485
    %v5607 = vadd.f32 %v5351, %v5487
    %v5608 = vrot.slane %v3504, 6
    %v5609 = vrot.slane %v5608, 4
    %v5610 = vrot.slane %v3359, 6
    %v5611 = vsel %vm3959, %v5609, %v5610
    %v5612 = vrot.slane %v5610, 4
    %v5613 = vrot.slane %v3505, 6
    %v5614 = vsel %vm3959, %v5612, %v5613
    %v5615 = vrot.slane %v5613, 4
    %v5616 = vrot.slane %v3522, 6
    %v5617 = vrot.slane %v5616, 4
    %v5618 = vrot.slane %v3449, 6
    %v5619 = vsel %vm3959, %v5617, %v5618
    %v5620 = vrot.slane %v5618, 4
    %v5621 = vrot.slane %v3523, 6
    %v5622 = vsel %vm3959, %v5620, %v5621
    %v5623 = vrot.slane %v5621, 4
    %5624 = vrot.lane.b32.xlu0 %v3979, 64
    %v5625 = vpop.permute.xlu0 %5624
    %5626 = vrot.lane.b32.xlu0 %v3982, 64
    %v5627 = vpop.permute.xlu0 %5626
    %5628 = vrot.lane.b32.xlu0 %v3983, 64
    %v5629 = vpop.permute.xlu0 %5628
    %5630 = vrot.lane.b32.xlu0 %v3987, 64
    %v5631 = vpop.permute.xlu0 %5630
    %5632 = vrot.lane.b32.xlu0 %v3990, 64
    %v5633 = vpop.permute.xlu0 %5632
    %5634 = vrot.lane.b32.xlu0 %v3991, 64
    %v5635 = vpop.permute.xlu0 %5634
    %5636 = vrot.lane.b32.xlu0 %v3995, 64
    %v5637 = vpop.permute.xlu0 %5636
    %5638 = vrot.lane.b32.xlu0 %v3998, 64
    %v5639 = vpop.permute.xlu0 %5638
    %5640 = vrot.lane.b32.xlu0 %v3999, 64
    %v5641 = vpop.permute.xlu0 %5640
    %5642 = vrot.lane.b32.xlu0 %v4003, 64
    %v5643 = vpop.permute.xlu0 %5642
    %5644 = vrot.lane.b32.xlu0 %v4006, 64
    %v5645 = vpop.permute.xlu0 %5644
    %5646 = vrot.lane.b32.xlu0 %v4007, 64
    %v5647 = vpop.permute.xlu0 %5646
    %5648 = vrot.lane.b32.xlu0 %v4011, 64
    %v5649 = vpop.permute.xlu0 %5648
    %5650 = vrot.lane.b32.xlu0 %v4014, 64
    %v5651 = vpop.permute.xlu0 %5650
    %5652 = vrot.lane.b32.xlu0 %v4015, 64
    %v5653 = vpop.permute.xlu0 %5652
    %5654 = vrot.lane.b32.xlu0 %v4019, 64
    %v5655 = vpop.permute.xlu0 %5654
    %5656 = vrot.lane.b32.xlu0 %v4022, 64
    %v5657 = vpop.permute.xlu0 %5656
    %5658 = vrot.lane.b32.xlu0 %v4023, 64
    %v5659 = vpop.permute.xlu0 %5658
    %5660 = vrot.lane.b32.xlu0 %v4027, 64
    %v5661 = vpop.permute.xlu0 %5660
    %5662 = vrot.lane.b32.xlu0 %v4030, 64
    %v5663 = vpop.permute.xlu0 %5662
    %5664 = vrot.lane.b32.xlu0 %v4031, 64
    %v5665 = vpop.permute.xlu0 %5664
    %5666 = vrot.lane.b32.xlu0 %v4035, 64
    %v5667 = vpop.permute.xlu0 %5666
    %5668 = vrot.lane.b32.xlu0 %v4038, 64
    %v5669 = vpop.permute.xlu0 %5668
    %5670 = vrot.lane.b32.xlu0 %v4039, 64
    %v5671 = vpop.permute.xlu0 %5670
    %5672 = vrot.lane.b32.xlu0 %v4859, 64
    %v5673 = vpop.permute.xlu0 %5672
    %5674 = vrot.lane.b32.xlu0 %v4862, 64
    %v5675 = vpop.permute.xlu0 %5674
    %5676 = vrot.lane.b32.xlu0 %v4863, 64
    %v5677 = vpop.permute.xlu0 %5676
    %5678 = vrot.lane.b32.xlu0 %v5611, 64
    %v5679 = vpop.permute.xlu0 %5678
    %5680 = vrot.lane.b32.xlu0 %v5614, 64
    %v5681 = vpop.permute.xlu0 %5680
    %5682 = vrot.lane.b32.xlu0 %v5615, 64
    %v5683 = vpop.permute.xlu0 %5682
    %5684 = vrot.lane.b32.xlu0 %v4059, 64
    %v5685 = vpop.permute.xlu0 %5684
    %5686 = vrot.lane.b32.xlu0 %v4062, 64
    %v5687 = vpop.permute.xlu0 %5686
    %5688 = vrot.lane.b32.xlu0 %v4063, 64
    %v5689 = vpop.permute.xlu0 %5688
    %5690 = vrot.lane.b32.xlu0 %v4067, 64
    %v5691 = vpop.permute.xlu0 %5690
    %5692 = vrot.lane.b32.xlu0 %v4070, 64
    %v5693 = vpop.permute.xlu0 %5692
    %5694 = vrot.lane.b32.xlu0 %v4071, 64
    %v5695 = vpop.permute.xlu0 %5694
    %5696 = vrot.lane.b32.xlu0 %v4075, 64
    %v5697 = vpop.permute.xlu0 %5696
    %5698 = vrot.lane.b32.xlu0 %v4078, 64
    %v5699 = vpop.permute.xlu0 %5698
    %5700 = vrot.lane.b32.xlu0 %v4079, 64
    %v5701 = vpop.permute.xlu0 %5700
    %5702 = vrot.lane.b32.xlu0 %v4083, 64
    %v5703 = vpop.permute.xlu0 %5702
    %5704 = vrot.lane.b32.xlu0 %v4086, 64
    %v5705 = vpop.permute.xlu0 %5704
    %5706 = vrot.lane.b32.xlu0 %v4087, 64
    %v5707 = vpop.permute.xlu0 %5706
    %5708 = vrot.lane.b32.xlu0 %v4091, 64
    %v5709 = vpop.permute.xlu0 %5708
    %5710 = vrot.lane.b32.xlu0 %v4094, 64
    %v5711 = vpop.permute.xlu0 %5710
    %5712 = vrot.lane.b32.xlu0 %v4095, 64
    %v5713 = vpop.permute.xlu0 %5712
    %5714 = vrot.lane.b32.xlu0 %v4099, 64
    %v5715 = vpop.permute.xlu0 %5714
    %5716 = vrot.lane.b32.xlu0 %v4102, 64
    %v5717 = vpop.permute.xlu0 %5716
    %5718 = vrot.lane.b32.xlu0 %v4103, 64
    %v5719 = vpop.permute.xlu0 %5718
    %5720 = vrot.lane.b32.xlu0 %v4107, 64
    %v5721 = vpop.permute.xlu0 %5720
    %5722 = vrot.lane.b32.xlu0 %v4110, 64
    %v5723 = vpop.permute.xlu0 %5722
    %5724 = vrot.lane.b32.xlu0 %v4111, 64
    %v5725 = vpop.permute.xlu0 %5724
    %5726 = vrot.lane.b32.xlu0 %v4115, 64
    %v5727 = vpop.permute.xlu0 %5726
    %5728 = vrot.lane.b32.xlu0 %v4118, 64
    %v5729 = vpop.permute.xlu0 %5728
    %5730 = vrot.lane.b32.xlu0 %v4119, 64
    %v5731 = vpop.permute.xlu0 %5730
    %5732 = vrot.lane.b32.xlu0 %v4867, 64
    %v5733 = vpop.permute.xlu0 %5732
    %5734 = vrot.lane.b32.xlu0 %v4870, 64
    %v5735 = vpop.permute.xlu0 %5734
    %5736 = vrot.lane.b32.xlu0 %v4871, 64
    %v5737 = vpop.permute.xlu0 %5736
    %5738 = vrot.lane.b32.xlu0 %v5619, 64
    %v5739 = vpop.permute.xlu0 %5738
    %5740 = vrot.lane.b32.xlu0 %v5622, 64
    %v5741 = vpop.permute.xlu0 %5740
    %5742 = vrot.lane.b32.xlu0 %v5623, 64
    %v5743 = vpop.permute.xlu0 %5742
    %v5804 = vadd.f32 %v5548, %v5625
    %v5805 = vadd.f32 %v5549, %v5627
    %v5806 = vadd.f32 %v5550, %v5629
    %v5807 = vadd.f32 %v5551, %v5631
    %v5808 = vadd.f32 %v5552, %v5633
    %v5809 = vadd.f32 %v5553, %v5635
    %v5810 = vadd.f32 %v5554, %v5637
    %v5811 = vadd.f32 %v5555, %v5639
    %v5812 = vadd.f32 %v5556, %v5641
    %v5813 = vadd.f32 %v5557, %v5643
    %v5814 = vadd.f32 %v5558, %v5645
    %v5815 = vadd.f32 %v5559, %v5647
    %v5816 = vadd.f32 %v5560, %v5649
    %v5817 = vadd.f32 %v5561, %v5651
    %v5818 = vadd.f32 %v5562, %v5653
    %v5819 = vadd.f32 %v5563, %v5655
    %v5820 = vadd.f32 %v5564, %v5657
    %v5821 = vadd.f32 %v5565, %v5659
    %v5822 = vadd.f32 %v5566, %v5661
    %v5823 = vadd.f32 %v5567, %v5663
    %v5824 = vadd.f32 %v5568, %v5665
    %v5825 = vadd.f32 %v5569, %v5667
    %v5826 = vadd.f32 %v5570, %v5669
    %v5827 = vadd.f32 %v5571, %v5671
    %v5828 = vadd.f32 %v5572, %v5673
    %v5829 = vadd.f32 %v5573, %v5675
    %v5830 = vadd.f32 %v5574, %v5677
    %v5831 = vadd.f32 %v5575, %v5679
    %v5832 = vadd.f32 %v5576, %v5681
    %v5833 = vadd.f32 %v5577, %v5683
    %v5834 = vadd.f32 %v5578, %v5685
    %v5835 = vadd.f32 %v5579, %v5687
    %v5836 = vadd.f32 %v5580, %v5689
    %v5837 = vadd.f32 %v5581, %v5691
    %v5838 = vadd.f32 %v5582, %v5693
    %v5839 = vadd.f32 %v5583, %v5695
    %v5840 = vadd.f32 %v5584, %v5697
    %v5841 = vadd.f32 %v5585, %v5699
    %v5842 = vadd.f32 %v5586, %v5701
    %v5843 = vadd.f32 %v5587, %v5703
    %v5844 = vadd.f32 %v5588, %v5705
    %v5845 = vadd.f32 %v5589, %v5707
    %v5846 = vadd.f32 %v5590, %v5709
    %v5847 = vadd.f32 %v5591, %v5711
    %v5848 = vadd.f32 %v5592, %v5713
    %v5849 = vadd.f32 %v5593, %v5715
    %v5850 = vadd.f32 %v5594, %v5717
    %v5851 = vadd.f32 %v5595, %v5719
    %v5852 = vadd.f32 %v5596, %v5721
    %v5853 = vadd.f32 %v5597, %v5723
    %v5854 = vadd.f32 %v5598, %v5725
    %v5855 = vadd.f32 %v5599, %v5727
    %v5856 = vadd.f32 %v5600, %v5729
    %v5857 = vadd.f32 %v5601, %v5731
    %v5858 = vadd.f32 %v5602, %v5733
    %v5859 = vadd.f32 %v5603, %v5735
    %v5860 = vadd.f32 %v5604, %v5737
    %v5861 = vadd.f32 %v5605, %v5739
    %v5862 = vadd.f32 %v5606, %v5741
    %v5863 = vadd.f32 %v5607, %v5743
    %v5864 = vld [vmem:[%s4] sm:$0x1]
    %v5866 = vlaneseq
    %v5867 = vshrl.u32 %v5866, 7
    %v5868 = vsub.s32 0, %v5867
    %v5869 = vrot.slane %v5864, %v5868
    %v5871 = vcombine.high %v5869, %v5869
    %v5873 = vadd.f32 %v5804, %v5869
    %v5874 = vadd.f32 %v5805, %v5871
    %v5875 = vadd.f32 %v5806, %v5869
    %v5876 = vadd.f32 %v5807, %v5869
    %v5877 = vadd.f32 %v5808, %v5871
    %v5878 = vadd.f32 %v5809, %v5869
    %v5879 = vadd.f32 %v5810, %v5869
    %v5880 = vadd.f32 %v5811, %v5871
    %v5881 = vadd.f32 %v5812, %v5869
    %v5882 = vadd.f32 %v5813, %v5869
    %v5883 = vadd.f32 %v5814, %v5871
    %v5884 = vadd.f32 %v5815, %v5869
    %v5885 = vadd.f32 %v5816, %v5869
    %v5886 = vadd.f32 %v5817, %v5871
    %v5887 = vadd.f32 %v5818, %v5869
    %v5888 = vadd.f32 %v5819, %v5869
    %v5889 = vadd.f32 %v5820, %v5871
    %v5890 = vadd.f32 %v5821, %v5869
    %v5891 = vadd.f32 %v5822, %v5869
    %v5892 = vadd.f32 %v5823, %v5871
    %v5893 = vadd.f32 %v5824, %v5869
    %v5894 = vadd.f32 %v5825, %v5869
    %v5895 = vadd.f32 %v5826, %v5871
    %v5896 = vadd.f32 %v5827, %v5869
    %v5897 = vadd.f32 %v5828, %v5869
    %v5898 = vadd.f32 %v5829, %v5871
    %v5899 = vadd.f32 %v5830, %v5869
    %v5900 = vadd.f32 %v5831, %v5869
    %v5901 = vadd.f32 %v5832, %v5871
    %v5902 = vadd.f32 %v5833, %v5869
    %v5903 = vadd.f32 %v5834, %v5869
    %v5904 = vadd.f32 %v5835, %v5871
    %v5905 = vadd.f32 %v5836, %v5869
    %v5906 = vadd.f32 %v5837, %v5869
    %v5907 = vadd.f32 %v5838, %v5871
    %v5908 = vadd.f32 %v5839, %v5869
    %v5909 = vadd.f32 %v5840, %v5869
    %v5910 = vadd.f32 %v5841, %v5871
    %v5911 = vadd.f32 %v5842, %v5869
    %v5912 = vadd.f32 %v5843, %v5869
    %v5913 = vadd.f32 %v5844, %v5871
    %v5914 = vadd.f32 %v5845, %v5869
    %v5915 = vadd.f32 %v5846, %v5869
    %v5916 = vadd.f32 %v5847, %v5871
    %v5917 = vadd.f32 %v5848, %v5869
    %v5918 = vadd.f32 %v5849, %v5869
    %v5919 = vadd.f32 %v5850, %v5871
    %v5920 = vadd.f32 %v5851, %v5869
    %v5921 = vadd.f32 %v5852, %v5869
    %v5922 = vadd.f32 %v5853, %v5871
    %v5923 = vadd.f32 %v5854, %v5869
    %v5924 = vadd.f32 %v5855, %v5869
    %v5925 = vadd.f32 %v5856, %v5871
    %v5926 = vadd.f32 %v5857, %v5869
    %v5927 = vadd.f32 %v5858, %v5869
    %v5928 = vadd.f32 %v5859, %v5871
    %v5929 = vadd.f32 %v5860, %v5869
    %v5930 = vadd.f32 %v5861, %v5869
    %v5931 = vadd.f32 %v5862, %v5871
    %v5932 = vadd.f32 %v5863, %v5869
    %v5933 = vmax.f32 %v5873, 0.0
    %v5934 = vmax.f32 %v5874, 0.0
    %v5935 = vmax.f32 %v5875, 0.0
    %v5936 = vmax.f32 %v5876, 0.0
    %v5937 = vmax.f32 %v5877, 0.0
    %v5938 = vmax.f32 %v5878, 0.0
    %v5939 = vmax.f32 %v5879, 0.0
    %v5940 = vmax.f32 %v5880, 0.0
    %v5941 = vmax.f32 %v5881, 0.0
    %v5942 = vmax.f32 %v5882, 0.0
    %v5943 = vmax.f32 %v5883, 0.0
    %v5944 = vmax.f32 %v5884, 0.0
    %v5945 = vmax.f32 %v5885, 0.0
    %v5946 = vmax.f32 %v5886, 0.0
    %v5947 = vmax.f32 %v5887, 0.0
    %v5948 = vmax.f32 %v5888, 0.0
    %v5949 = vmax.f32 %v5889, 0.0
    %v5950 = vmax.f32 %v5890, 0.0
    %v5951 = vmax.f32 %v5891, 0.0
    %v5952 = vmax.f32 %v5892, 0.0
    %v5953 = vmax.f32 %v5893, 0.0
    %v5954 = vmax.f32 %v5894, 0.0
    %v5955 = vmax.f32 %v5895, 0.0
    %v5956 = vmax.f32 %v5896, 0.0
    %v5957 = vmax.f32 %v5897, 0.0
    %v5958 = vmax.f32 %v5898, 0.0
    %v5959 = vmax.f32 %v5899, 0.0
    %v5960 = vmax.f32 %v5900, 0.0
    %v5961 = vmax.f32 %v5901, 0.0
    %v5962 = vmax.f32 %v5902, 0.0
    %v5963 = vmax.f32 %v5903, 0.0
    %v5964 = vmax.f32 %v5904, 0.0
    %v5965 = vmax.f32 %v5905, 0.0
    %v5966 = vmax.f32 %v5906, 0.0
    %v5967 = vmax.f32 %v5907, 0.0
    %v5968 = vmax.f32 %v5908, 0.0
    %v5969 = vmax.f32 %v5909, 0.0
    %v5970 = vmax.f32 %v5910, 0.0
    %v5971 = vmax.f32 %v5911, 0.0
    %v5972 = vmax.f32 %v5912, 0.0
    %v5973 = vmax.f32 %v5913, 0.0
    %v5974 = vmax.f32 %v5914, 0.0
    %v5975 = vmax.f32 %v5915, 0.0
    %v5976 = vmax.f32 %v5916, 0.0
    %v5977 = vmax.f32 %v5917, 0.0
    %v5978 = vmax.f32 %v5918, 0.0
    %v5979 = vmax.f32 %v5919, 0.0
    %v5980 = vmax.f32 %v5920, 0.0
    %v5981 = vmax.f32 %v5921, 0.0
    %v5982 = vmax.f32 %v5922, 0.0
    %v5983 = vmax.f32 %v5923, 0.0
    %v5984 = vmax.f32 %v5924, 0.0
    %v5985 = vmax.f32 %v5925, 0.0
    %v5986 = vmax.f32 %v5926, 0.0
    %v5987 = vmax.f32 %v5927, 0.0
    %v5988 = vmax.f32 %v5928, 0.0
    %v5989 = vmax.f32 %v5929, 0.0
    %v5990 = vmax.f32 %v5930, 0.0
    %v5991 = vmax.f32 %v5931, 0.0
    %v5992 = vmax.f32 %v5932, 0.0
    %vm5993 = vcmask 64512
    %5994 = vst.msk [vmem:[#allocation3] sm:$0xff] %vm5993, 0.0
    %vm5995 = vcmask 62464
    %5996 = vst.msk [vmem:[#allocation3 + $0x8] sm:$0x3f] %vm5995, 0.0
    %5997 = vst.msk [vmem:[#allocation3 + $0x10] sm:$0xff] %vm5993, 0.0
    %5998 = vst.msk [vmem:[#allocation3 + $0x18] sm:$0x3f] %vm5995, 0.0
    %5999 = vst.msk [vmem:[#allocation3 + $0x20] sm:$0xff] %vm5993, 0.0
    %6000 = vst.msk [vmem:[#allocation3 + $0x28] sm:$0x3f] %vm5995, 0.0
    %6001 = vst.msk [vmem:[#allocation3 + $0x30] sm:$0xff] %vm5993, 0.0
    %6002 = vst.msk [vmem:[#allocation3 + $0x38] sm:$0x3f] %vm5995, 0.0
    %6003 = vst.msk [vmem:[#allocation3 + $0x40] sm:$0xff] %vm5993, 0.0
    %6004 = vst.msk [vmem:[#allocation3 + $0x48] sm:$0x3f] %vm5995, 0.0
    %6005 = vst.msk [vmem:[#allocation3 + $0x50] sm:$0xff] %vm5993, 0.0
    %6006 = vst.msk [vmem:[#allocation3 + $0x58] sm:$0x3f] %vm5995, 0.0
    %6007 = vst.msk [vmem:[#allocation3 + $0x60] sm:$0xff] %vm5993, 0.0
    %6008 = vst.msk [vmem:[#allocation3 + $0x68] sm:$0x3f] %vm5995, 0.0
    %6009 = vst.msk [vmem:[#allocation3 + $0x70] sm:$0xff] %vm5993, 0.0
    %6010 = vst.msk [vmem:[#allocation3 + $0x78] sm:$0x3f] %vm5995, 0.0
    %6011 = vst.msk [vmem:[#allocation3 + $0x80] sm:$0xff] %vm5993, 0.0
    %6012 = vst.msk [vmem:[#allocation3 + $0x88] sm:$0x3f] %vm5995, 0.0
    %6013 = vst.msk [vmem:[#allocation3 + $0x90] sm:$0xff] %vm5993, 0.0
    %6014 = vst.msk [vmem:[#allocation3 + $0x98] sm:$0x3f] %vm5995, 0.0
    %6015 = vst.msk [vmem:[#allocation3 + $0xa0] sm:$0xff] %vm5993, 0.0
    %6016 = vst.msk [vmem:[#allocation3 + $0xa8] sm:$0x3f] %vm5995, 0.0
    %6017 = vst.msk [vmem:[#allocation3 + $0xb0] sm:$0xff] %vm5993, 0.0
    %6018 = vst.msk [vmem:[#allocation3 + $0xb8] sm:$0x3f] %vm5995, 0.0
    %6019 = vst.msk [vmem:[#allocation3 + $0xc0] sm:$0xff] %vm5993, 0.0
    %6020 = vst.msk [vmem:[#allocation3 + $0xc8] sm:$0x3f] %vm5995, 0.0
    %6021 = vst.msk [vmem:[#allocation3 + $0xd0] sm:$0xff] %vm5993, 0.0
    %6022 = vst.msk [vmem:[#allocation3 + $0xd8] sm:$0x3f] %vm5995, 0.0
    %6023 = vst.msk [vmem:[#allocation3 + $0xe0] sm:$0xff] %vm5993, 0.0
    %6024 = vst.msk [vmem:[#allocation3 + $0xe8] sm:$0x3f] %vm5995, 0.0
    %6025 = vst.msk [vmem:[#allocation3 + $0xf0] sm:$0xff] %vm5993, 0.0
    %6026 = vst.msk [vmem:[#allocation3 + $0xf8] sm:$0x3f] %vm5995, 0.0
    %6027 = vst.msk [vmem:[#allocation3 + $0x100] sm:$0xff] %vm5993, 0.0
    %6028 = vst.msk [vmem:[#allocation3 + $0x108] sm:$0x3f] %vm5995, 0.0
    %6029 = vst.msk [vmem:[#allocation3 + $0x110] sm:$0xff] %vm5993, 0.0
    %6030 = vst.msk [vmem:[#allocation3 + $0x118] sm:$0x3f] %vm5995, 0.0
    %6031 = vst.msk [vmem:[#allocation3 + $0x120] sm:$0xff] %vm5993, 0.0
    %6032 = vst.msk [vmem:[#allocation3 + $0x128] sm:$0x3f] %vm5995, 0.0
    %6033 = vst.msk [vmem:[#allocation3 + $0x130] sm:$0xff] %vm5993, 0.0
    %6034 = vst.msk [vmem:[#allocation3 + $0x138] sm:$0x3f] %vm5995, 0.0
    %6035 = vst.msk [vmem:[#allocation3 + $0x140] sm:$0xff] %vm5993, 0.0
    %6036 = vst.msk [vmem:[#allocation3 + $0x148] sm:$0x3f] %vm5995, 0.0
    %6037 = vst.msk [vmem:[#allocation3 + $0x150] sm:$0xff] %vm5993, 0.0
    %6038 = vst.msk [vmem:[#allocation3 + $0x158] sm:$0x3f] %vm5995, 0.0
    %6039 = vst.msk [vmem:[#allocation3 + $0x160] sm:$0xff] %vm5993, 0.0
    %6040 = vst.msk [vmem:[#allocation3 + $0x168] sm:$0x3f] %vm5995, 0.0
    %6041 = vst.msk [vmem:[#allocation3 + $0x170] sm:$0xff] %vm5993, 0.0
    %6042 = vst.msk [vmem:[#allocation3 + $0x178] sm:$0x3f] %vm5995, 0.0
    %6043 = vst.msk [vmem:[#allocation3 + $0x180] sm:$0xff] %vm5993, 0.0
    %6044 = vst.msk [vmem:[#allocation3 + $0x188] sm:$0x3f] %vm5995, 0.0
    %6045 = vst.msk [vmem:[#allocation3 + $0x190] sm:$0xff] %vm5993, 0.0
    %6046 = vst.msk [vmem:[#allocation3 + $0x198] sm:$0x3f] %vm5995, 0.0
    %6047 = vst.msk [vmem:[#allocation3 + $0x1a0] sm:$0xff] %vm5993, 0.0
    %6048 = vst.msk [vmem:[#allocation3 + $0x1a8] sm:$0x3f] %vm5995, 0.0
    %6049 = vst.msk [vmem:[#allocation3 + $0x1b0] sm:$0xff] %vm5993, 0.0
    %6050 = vst.msk [vmem:[#allocation3 + $0x1b8] sm:$0x3f] %vm5995, 0.0
    %v6091 = vcombine.low %v5933, %v5934
    %v6092 = vcombine.low %v5936, %v5937
    %v6093 = vcombine.low %v5939, %v5940
    %v6094 = vcombine.low %v5942, %v5943
    %v6095 = vcombine.low %v5945, %v5946
    %v6096 = vcombine.low %v5948, %v5949
    %v6097 = vcombine.low %v5951, %v5952
    %v6098 = vcombine.low %v5954, %v5955
    %v6099 = vcombine.low %v5957, %v5958
    %v6100 = vcombine.low %v5960, %v5961
    %v6101 = vcombine.low %v5963, %v5964
    %v6102 = vcombine.low %v5966, %v5967
    %v6103 = vcombine.low %v5969, %v5970
    %v6104 = vcombine.low %v5972, %v5973
    %v6105 = vcombine.low %v5975, %v5976
    %v6106 = vcombine.low %v5978, %v5979
    %v6107 = vcombine.low %v5981, %v5982
    %v6108 = vcombine.low %v5984, %v5985
    %v6109 = vcombine.low %v5987, %v5988
    %v6110 = vcombine.low %v5990, %v5991
    %s6131 = scalar_lea.vmem [#allocation3], 32
    %6132 = vst.msk [vmem:[%s6131 + $0x2] sm:$0xff] %vm5993, %v6091
    %vm6133 = vcmask 58368
    %6134 = vst.msk [vmem:[%s6131 + $0xa] sm:$0x3] %vm6133, %v5935
    %6135 = vst.msk [vmem:[%s6131 + $0x12] sm:$0xff] %vm5993, %v6092
    %6136 = vst.msk [vmem:[%s6131 + $0x1a] sm:$0x3] %vm6133, %v5938
    %6137 = vst.msk [vmem:[%s6131 + $0x22] sm:$0xff] %vm5993, %v6093
    %6138 = vst.msk [vmem:[%s6131 + $0x2a] sm:$0x3] %vm6133, %v5941
    %6139 = vst.msk [vmem:[%s6131 + $0x32] sm:$0xff] %vm5993, %v6094
    %6140 = vst.msk [vmem:[%s6131 + $0x3a] sm:$0x3] %vm6133, %v5944
    %6141 = vst.msk [vmem:[%s6131 + $0x42] sm:$0xff] %vm5993, %v6095
    %6142 = vst.msk [vmem:[%s6131 + $0x4a] sm:$0x3] %vm6133, %v5947
    %6143 = vst.msk [vmem:[%s6131 + $0x52] sm:$0xff] %vm5993, %v6096
    %6144 = vst.msk [vmem:[%s6131 + $0x5a] sm:$0x3] %vm6133, %v5950
    %6145 = vst.msk [vmem:[%s6131 + $0x62] sm:$0xff] %vm5993, %v6097
    %6146 = vst.msk [vmem:[%s6131 + $0x6a] sm:$0x3] %vm6133, %v5953
    %6147 = vst.msk [vmem:[%s6131 + $0x72] sm:$0xff] %vm5993, %v6098
    %6148 = vst.msk [vmem:[%s6131 + $0x7a] sm:$0x3] %vm6133, %v5956
    %6149 = vst.msk [vmem:[%s6131 + $0x82] sm:$0xff] %vm5993, %v6099
    %6150 = vst.msk [vmem:[%s6131 + $0x8a] sm:$0x3] %vm6133, %v5959
    %6151 = vst.msk [vmem:[%s6131 + $0x92] sm:$0xff] %vm5993, %v6100
    %6152 = vst.msk [vmem:[%s6131 + $0x9a] sm:$0x3] %vm6133, %v5962
    %6153 = vst.msk [vmem:[%s6131 + $0xe2] sm:$0xff] %vm5993, %v6101
    %6154 = vst.msk [vmem:[%s6131 + $0xea] sm:$0x3] %vm6133, %v5965
    %6155 = vst.msk [vmem:[%s6131 + $0xf2] sm:$0xff] %vm5993, %v6102
    %6156 = vst.msk [vmem:[%s6131 + $0xfa] sm:$0x3] %vm6133, %v5968
    %6157 = vst.msk [vmem:[%s6131 + $0x102] sm:$0xff] %vm5993, %v6103
    %6158 = vst.msk [vmem:[%s6131 + $0x10a] sm:$0x3] %vm6133, %v5971
    %6159 = vst.msk [vmem:[%s6131 + $0x112] sm:$0xff] %vm5993, %v6104
    %6160 = vst.msk [vmem:[%s6131 + $0x11a] sm:$0x3] %vm6133, %v5974
    %6161 = vst.msk [vmem:[%s6131 + $0x122] sm:$0xff] %vm5993, %v6105
    %6162 = vst.msk [vmem:[%s6131 + $0x12a] sm:$0x3] %vm6133, %v5977
    %6163 = vst.msk [vmem:[%s6131 + $0x132] sm:$0xff] %vm5993, %v6106
    %6164 = vst.msk [vmem:[%s6131 + $0x13a] sm:$0x3] %vm6133, %v5980
    %6165 = vst.msk [vmem:[%s6131 + $0x142] sm:$0xff] %vm5993, %v6107
    %6166 = vst.msk [vmem:[%s6131 + $0x14a] sm:$0x3] %vm6133, %v5983
    %6167 = vst.msk [vmem:[%s6131 + $0x152] sm:$0xff] %vm5993, %v6108
    %6168 = vst.msk [vmem:[%s6131 + $0x15a] sm:$0x3] %vm6133, %v5986
    %6169 = vst.msk [vmem:[%s6131 + $0x162] sm:$0xff] %vm5993, %v6109
    %6170 = vst.msk [vmem:[%s6131 + $0x16a] sm:$0x3] %vm6133, %v5989
    %6171 = vst.msk [vmem:[%s6131 + $0x172] sm:$0xff] %vm5993, %v6110
    %6172 = vst.msk [vmem:[%s6131 + $0x17a] sm:$0x3] %vm6133, %v5992
    %v6173 = vld [vmem:[#allocation3] sm:$0xff]
    %v6174 = vld [vmem:[#allocation3 + $0x8] sm:$0x3f]
    %v6175 = vld [vmem:[#allocation3 + $0x10] sm:$0xff]
    %v6176 = vld [vmem:[#allocation3 + $0x18] sm:$0x3f]
    %v6177 = vld [vmem:[#allocation3 + $0x20] sm:$0xff]
    %v6178 = vld [vmem:[#allocation3 + $0x28] sm:$0x3f]
    %v6179 = vld [vmem:[#allocation3 + $0x30] sm:$0xff]
    %v6180 = vld [vmem:[#allocation3 + $0x38] sm:$0x3f]
    %v6181 = vld [vmem:[#allocation3 + $0x40] sm:$0xff]
    %v6182 = vld [vmem:[#allocation3 + $0x48] sm:$0x3f]
    %v6183 = vld [vmem:[#allocation3 + $0x50] sm:$0xff]
    %v6184 = vld [vmem:[#allocation3 + $0x58] sm:$0x3f]
    %v6185 = vld [vmem:[#allocation3 + $0x60] sm:$0xff]
    %v6186 = vld [vmem:[#allocation3 + $0x68] sm:$0x3f]
    %v6187 = vld [vmem:[#allocation3 + $0x70] sm:$0xff]
    %v6188 = vld [vmem:[#allocation3 + $0x78] sm:$0x3f]
    %v6189 = vld [vmem:[#allocation3 + $0x80] sm:$0xff]
    %v6190 = vld [vmem:[#allocation3 + $0x88] sm:$0x3f]
    %v6191 = vld [vmem:[#allocation3 + $0x90] sm:$0xff]
    %v6192 = vld [vmem:[#allocation3 + $0x98] sm:$0x3f]
    %v6193 = vld [vmem:[#allocation3 + $0xa0] sm:$0xff]
    %v6194 = vld [vmem:[#allocation3 + $0xa8] sm:$0x3f]
    %v6195 = vld [vmem:[#allocation3 + $0xb0] sm:$0xff]
    %v6196 = vld [vmem:[#allocation3 + $0xb8] sm:$0x3f]
    %v6197 = vld [vmem:[#allocation3 + $0xc0] sm:$0xff]
    %v6198 = vld [vmem:[#allocation3 + $0xc8] sm:$0x3f]
    %v6199 = vld [vmem:[#allocation3 + $0xd0] sm:$0xff]
    %v6200 = vld [vmem:[#allocation3 + $0xd8] sm:$0x3f]
    %v6201 = vld [vmem:[#allocation3 + $0xe0] sm:$0xff]
    %v6202 = vld [vmem:[#allocation3 + $0xe8] sm:$0x3f]
    %v6203 = vld [vmem:[#allocation3 + $0xf0] sm:$0xff]
    %v6204 = vld [vmem:[#allocation3 + $0xf8] sm:$0x3f]
    %v6205 = vld [vmem:[#allocation3 + $0x100] sm:$0xff]
    %v6206 = vld [vmem:[#allocation3 + $0x108] sm:$0x3f]
    %v6207 = vld [vmem:[#allocation3 + $0x110] sm:$0xff]
    %v6208 = vld [vmem:[#allocation3 + $0x118] sm:$0x3f]
    %v6209 = vld [vmem:[#allocation3 + $0x120] sm:$0xff]
    %v6210 = vld [vmem:[#allocation3 + $0x128] sm:$0x3f]
    %v6211 = vld [vmem:[#allocation3 + $0x130] sm:$0xff]
    %v6212 = vld [vmem:[#allocation3 + $0x138] sm:$0x3f]
    %v6213 = vld [vmem:[#allocation3 + $0x140] sm:$0xff]
    %v6214 = vld [vmem:[#allocation3 + $0x148] sm:$0x3f]
    %v6215 = vld [vmem:[#allocation3 + $0x150] sm:$0xff]
    %v6216 = vld [vmem:[#allocation3 + $0x158] sm:$0x3f]
    %v6217 = vld [vmem:[#allocation3 + $0x160] sm:$0xff]
    %v6218 = vld [vmem:[#allocation3 + $0x168] sm:$0x3f]
    %v6219 = vld [vmem:[#allocation3 + $0x170] sm:$0xff]
    %v6220 = vld [vmem:[#allocation3 + $0x178] sm:$0x3f]
    %v6221 = vld [vmem:[#allocation3 + $0x180] sm:$0xff]
    %v6222 = vld [vmem:[#allocation3 + $0x188] sm:$0x3f]
    %v6223 = vld [vmem:[#allocation3 + $0x190] sm:$0xff]
    %v6224 = vld [vmem:[#allocation3 + $0x198] sm:$0x3f]
    %v6225 = vld [vmem:[#allocation3 + $0x1a0] sm:$0xff]
    %v6226 = vld [vmem:[#allocation3 + $0x1a8] sm:$0x3f]
    %v6227 = vld [vmem:[#allocation3 + $0x1b0] sm:$0xff]
    %v6228 = vld [vmem:[#allocation3 + $0x1b8] sm:$0x3f]
    %v6229 = vld [vmem:[%s5] sm:$0x1]
    %v6231 = vlaneseq
    %v6232 = vshrl.u32 %v6231, 7
    %v6233 = vsub.s32 0, %v6232
    %v6234 = vrot.slane %v6229, %v6233
    %v6236 = vmul.f32 %v6173, %v6234
    %v6237 = vmul.f32 %v6174, %v6234
    %v6238 = vmul.f32 %v6175, %v6234
    %v6239 = vmul.f32 %v6176, %v6234
    %v6240 = vmul.f32 %v6177, %v6234
    %v6241 = vmul.f32 %v6178, %v6234
    %v6242 = vmul.f32 %v6179, %v6234
    %v6243 = vmul.f32 %v6180, %v6234
    %v6244 = vmul.f32 %v6181, %v6234
    %v6245 = vmul.f32 %v6182, %v6234
    %v6246 = vmul.f32 %v6183, %v6234
    %v6247 = vmul.f32 %v6184, %v6234
    %v6248 = vmul.f32 %v6185, %v6234
    %v6249 = vmul.f32 %v6186, %v6234
    %v6250 = vmul.f32 %v6187, %v6234
    %v6251 = vmul.f32 %v6188, %v6234
    %v6252 = vmul.f32 %v6189, %v6234
    %v6253 = vmul.f32 %v6190, %v6234
    %v6254 = vmul.f32 %v6191, %v6234
    %v6255 = vmul.f32 %v6192, %v6234
    %v6256 = vmul.f32 %v6193, %v6234
    %v6257 = vmul.f32 %v6194, %v6234
    %v6258 = vmul.f32 %v6195, %v6234
    %v6259 = vmul.f32 %v6196, %v6234
    %v6260 = vmul.f32 %v6201, %v6234
    %v6261 = vmul.f32 %v6202, %v6234
    %v6262 = vmul.f32 %v6203, %v6234
    %v6263 = vmul.f32 %v6204, %v6234
    %v6264 = vmul.f32 %v6205, %v6234
    %v6265 = vmul.f32 %v6206, %v6234
    %v6266 = vmul.f32 %v6207, %v6234
    %v6267 = vmul.f32 %v6208, %v6234
    %v6268 = vmul.f32 %v6209, %v6234
    %v6269 = vmul.f32 %v6210, %v6234
    %v6270 = vmul.f32 %v6211, %v6234
    %v6271 = vmul.f32 %v6212, %v6234
    %v6272 = vmul.f32 %v6213, %v6234
    %v6273 = vmul.f32 %v6214, %v6234
    %v6274 = vmul.f32 %v6215, %v6234
    %v6275 = vmul.f32 %v6216, %v6234
    %v6276 = vmul.f32 %v6217, %v6234
    %v6277 = vmul.f32 %v6218, %v6234
    %v6278 = vmul.f32 %v6219, %v6234
    %v6279 = vmul.f32 %v6220, %v6234
    %v6280 = vmul.f32 %v6221, %v6234
    %v6281 = vmul.f32 %v6222, %v6234
    %v6282 = vmul.f32 %v6223, %v6234
    %v6283 = vmul.f32 %v6224, %v6234
    %s6284 = scalar_lea.vmem %s5, 1
    %v6285 = vld [vmem:[%s6284] sm:$0x1]
    %v6287 = vlaneseq
    %v6288 = vshrl.u32 %v6287, 7
    %v6289 = vsub.s32 0, %v6288
    %v6290 = vrot.slane %v6285, %v6289
    %v6292 = vmul.f32 %v6173, %v6290
    %v6293 = vmul.f32 %v6174, %v6290
    %v6294 = vmul.f32 %v6175, %v6290
    %v6295 = vmul.f32 %v6176, %v6290
    %v6296 = vmul.f32 %v6177, %v6290
    %v6297 = vmul.f32 %v6178, %v6290
    %v6298 = vmul.f32 %v6179, %v6290
    %v6299 = vmul.f32 %v6180, %v6290
    %v6300 = vmul.f32 %v6181, %v6290
    %v6301 = vmul.f32 %v6182, %v6290
    %v6302 = vmul.f32 %v6183, %v6290
    %v6303 = vmul.f32 %v6184, %v6290
    %v6304 = vmul.f32 %v6185, %v6290
    %v6305 = vmul.f32 %v6186, %v6290
    %v6306 = vmul.f32 %v6187, %v6290
    %v6307 = vmul.f32 %v6188, %v6290
    %v6308 = vmul.f32 %v6189, %v6290
    %v6309 = vmul.f32 %v6190, %v6290
    %v6310 = vmul.f32 %v6191, %v6290
    %v6311 = vmul.f32 %v6192, %v6290
    %v6312 = vmul.f32 %v6193, %v6290
    %v6313 = vmul.f32 %v6194, %v6290
    %v6314 = vmul.f32 %v6195, %v6290
    %v6315 = vmul.f32 %v6196, %v6290
    %v6316 = vmul.f32 %v6201, %v6290
    %v6317 = vmul.f32 %v6202, %v6290
    %v6318 = vmul.f32 %v6203, %v6290
    %v6319 = vmul.f32 %v6204, %v6290
    %v6320 = vmul.f32 %v6205, %v6290
    %v6321 = vmul.f32 %v6206, %v6290
    %v6322 = vmul.f32 %v6207, %v6290
    %v6323 = vmul.f32 %v6208, %v6290
    %v6324 = vmul.f32 %v6209, %v6290
    %v6325 = vmul.f32 %v6210, %v6290
    %v6326 = vmul.f32 %v6211, %v6290
    %v6327 = vmul.f32 %v6212, %v6290
    %v6328 = vmul.f32 %v6213, %v6290
    %v6329 = vmul.f32 %v6214, %v6290
    %v6330 = vmul.f32 %v6215, %v6290
    %v6331 = vmul.f32 %v6216, %v6290
    %v6332 = vmul.f32 %v6217, %v6290
    %v6333 = vmul.f32 %v6218, %v6290
    %v6334 = vmul.f32 %v6219, %v6290
    %v6335 = vmul.f32 %v6220, %v6290
    %v6336 = vmul.f32 %v6221, %v6290
    %v6337 = vmul.f32 %v6222, %v6290
    %v6338 = vmul.f32 %v6223, %v6290
    %v6339 = vmul.f32 %v6224, %v6290
    %vm6388 = vcmask 1046528
    %v6389 = vrot.slane %v6292, 1
    %v6390 = vrot.slane %v6293, 1
    %v6391 = vsel %vm6388, %v6389, %v6390
    %v6392 = vrot.slane %v6294, 1
    %v6393 = vrot.slane %v6295, 1
    %v6394 = vsel %vm6388, %v6392, %v6393
    %v6395 = vrot.slane %v6296, 1
    %v6396 = vrot.slane %v6297, 1
    %v6397 = vsel %vm6388, %v6395, %v6396
    %v6398 = vrot.slane %v6298, 1
    %v6399 = vrot.slane %v6299, 1
    %v6400 = vsel %vm6388, %v6398, %v6399
    %v6401 = vrot.slane %v6300, 1
    %v6402 = vrot.slane %v6301, 1
    %v6403 = vsel %vm6388, %v6401, %v6402
    %v6404 = vrot.slane %v6302, 1
    %v6405 = vrot.slane %v6303, 1
    %v6406 = vsel %vm6388, %v6404, %v6405
    %v6407 = vrot.slane %v6304, 1
    %v6408 = vrot.slane %v6305, 1
    %v6409 = vsel %vm6388, %v6407, %v6408
    %v6410 = vrot.slane %v6306, 1
    %v6411 = vrot.slane %v6307, 1
    %v6412 = vsel %vm6388, %v6410, %v6411
    %v6413 = vrot.slane %v6308, 1
    %v6414 = vrot.slane %v6309, 1
    %v6415 = vsel %vm6388, %v6413, %v6414
    %v6416 = vrot.slane %v6310, 1
    %v6417 = vrot.slane %v6311, 1
    %v6418 = vsel %vm6388, %v6416, %v6417
    %v6419 = vrot.slane %v6312, 1
    %v6420 = vrot.slane %v6313, 1
    %v6421 = vsel %vm6388, %v6419, %v6420
    %v6422 = vrot.slane %v6314, 1
    %v6423 = vrot.slane %v6315, 1
    %v6424 = vsel %vm6388, %v6422, %v6423
    %v6425 = vrot.slane %v6316, 1
    %v6426 = vrot.slane %v6317, 1
    %v6427 = vsel %vm6388, %v6425, %v6426
    %v6428 = vrot.slane %v6318, 1
    %v6429 = vrot.slane %v6319, 1
    %v6430 = vsel %vm6388, %v6428, %v6429
    %v6431 = vrot.slane %v6320, 1
    %v6432 = vrot.slane %v6321, 1
    %v6433 = vsel %vm6388, %v6431, %v6432
    %v6434 = vrot.slane %v6322, 1
    %v6435 = vrot.slane %v6323, 1
    %v6436 = vsel %vm6388, %v6434, %v6435
    %v6437 = vrot.slane %v6324, 1
    %v6438 = vrot.slane %v6325, 1
    %v6439 = vsel %vm6388, %v6437, %v6438
    %v6440 = vrot.slane %v6326, 1
    %v6441 = vrot.slane %v6327, 1
    %v6442 = vsel %vm6388, %v6440, %v6441
    %v6443 = vrot.slane %v6328, 1
    %v6444 = vrot.slane %v6329, 1
    %v6445 = vsel %vm6388, %v6443, %v6444
    %v6446 = vrot.slane %v6330, 1
    %v6447 = vrot.slane %v6331, 1
    %v6448 = vsel %vm6388, %v6446, %v6447
    %v6449 = vrot.slane %v6332, 1
    %v6450 = vrot.slane %v6333, 1
    %v6451 = vsel %vm6388, %v6449, %v6450
    %v6452 = vrot.slane %v6334, 1
    %v6453 = vrot.slane %v6335, 1
    %v6454 = vsel %vm6388, %v6452, %v6453
    %v6455 = vrot.slane %v6336, 1
    %v6456 = vrot.slane %v6337, 1
    %v6457 = vsel %vm6388, %v6455, %v6456
    %v6458 = vrot.slane %v6338, 1
    %v6459 = vrot.slane %v6339, 1
    %v6460 = vsel %vm6388, %v6458, %v6459
    %v6509 = vadd.f32 %v6236, %v6391
    %v6510 = vadd.f32 %v6237, %v6390
    %v6511 = vadd.f32 %v6238, %v6394
    %v6512 = vadd.f32 %v6239, %v6393
    %v6513 = vadd.f32 %v6240, %v6397
    %v6514 = vadd.f32 %v6241, %v6396
    %v6515 = vadd.f32 %v6242, %v6400
    %v6516 = vadd.f32 %v6243, %v6399
    %v6517 = vadd.f32 %v6244, %v6403
    %v6518 = vadd.f32 %v6245, %v6402
    %v6519 = vadd.f32 %v6246, %v6406
    %v6520 = vadd.f32 %v6247, %v6405
    %v6521 = vadd.f32 %v6248, %v6409
    %v6522 = vadd.f32 %v6249, %v6408
    %v6523 = vadd.f32 %v6250, %v6412
    %v6524 = vadd.f32 %v6251, %v6411
    %v6525 = vadd.f32 %v6252, %v6415
    %v6526 = vadd.f32 %v6253, %v6414
    %v6527 = vadd.f32 %v6254, %v6418
    %v6528 = vadd.f32 %v6255, %v6417
    %v6529 = vadd.f32 %v6256, %v6421
    %v6530 = vadd.f32 %v6257, %v6420
    %v6531 = vadd.f32 %v6258, %v6424
    %v6532 = vadd.f32 %v6259, %v6423
    %v6533 = vadd.f32 %v6260, %v6427
    %v6534 = vadd.f32 %v6261, %v6426
    %v6535 = vadd.f32 %v6262, %v6430
    %v6536 = vadd.f32 %v6263, %v6429
    %v6537 = vadd.f32 %v6264, %v6433
    %v6538 = vadd.f32 %v6265, %v6432
    %v6539 = vadd.f32 %v6266, %v6436
    %v6540 = vadd.f32 %v6267, %v6435
    %v6541 = vadd.f32 %v6268, %v6439
    %v6542 = vadd.f32 %v6269, %v6438
    %v6543 = vadd.f32 %v6270, %v6442
    %v6544 = vadd.f32 %v6271, %v6441
    %v6545 = vadd.f32 %v6272, %v6445
    %v6546 = vadd.f32 %v6273, %v6444
    %v6547 = vadd.f32 %v6274, %v6448
    %v6548 = vadd.f32 %v6275, %v6447
    %v6549 = vadd.f32 %v6276, %v6451
    %v6550 = vadd.f32 %v6277, %v6450
    %v6551 = vadd.f32 %v6278, %v6454
    %v6552 = vadd.f32 %v6279, %v6453
    %v6553 = vadd.f32 %v6280, %v6457
    %v6554 = vadd.f32 %v6281, %v6456
    %v6555 = vadd.f32 %v6282, %v6460
    %v6556 = vadd.f32 %v6283, %v6459
    %s6557 = scalar_lea.vmem %s5, 2
    %v6558 = vld [vmem:[%s6557] sm:$0x1]
    %v6560 = vlaneseq
    %v6561 = vshrl.u32 %v6560, 7
    %v6562 = vsub.s32 0, %v6561
    %v6563 = vrot.slane %v6558, %v6562
    %v6565 = vmul.f32 %v6173, %v6563
    %v6566 = vmul.f32 %v6174, %v6563
    %v6567 = vmul.f32 %v6175, %v6563
    %v6568 = vmul.f32 %v6176, %v6563
    %v6569 = vmul.f32 %v6177, %v6563
    %v6570 = vmul.f32 %v6178, %v6563
    %v6571 = vmul.f32 %v6179, %v6563
    %v6572 = vmul.f32 %v6180, %v6563
    %v6573 = vmul.f32 %v6181, %v6563
    %v6574 = vmul.f32 %v6182, %v6563
    %v6575 = vmul.f32 %v6183, %v6563
    %v6576 = vmul.f32 %v6184, %v6563
    %v6577 = vmul.f32 %v6185, %v6563
    %v6578 = vmul.f32 %v6186, %v6563
    %v6579 = vmul.f32 %v6187, %v6563
    %v6580 = vmul.f32 %v6188, %v6563
    %v6581 = vmul.f32 %v6189, %v6563
    %v6582 = vmul.f32 %v6190, %v6563
    %v6583 = vmul.f32 %v6191, %v6563
    %v6584 = vmul.f32 %v6192, %v6563
    %v6585 = vmul.f32 %v6193, %v6563
    %v6586 = vmul.f32 %v6194, %v6563
    %v6587 = vmul.f32 %v6195, %v6563
    %v6588 = vmul.f32 %v6196, %v6563
    %v6589 = vmul.f32 %v6201, %v6563
    %v6590 = vmul.f32 %v6202, %v6563
    %v6591 = vmul.f32 %v6203, %v6563
    %v6592 = vmul.f32 %v6204, %v6563
    %v6593 = vmul.f32 %v6205, %v6563
    %v6594 = vmul.f32 %v6206, %v6563
    %v6595 = vmul.f32 %v6207, %v6563
    %v6596 = vmul.f32 %v6208, %v6563
    %v6597 = vmul.f32 %v6209, %v6563
    %v6598 = vmul.f32 %v6210, %v6563
    %v6599 = vmul.f32 %v6211, %v6563
    %v6600 = vmul.f32 %v6212, %v6563
    %v6601 = vmul.f32 %v6213, %v6563
    %v6602 = vmul.f32 %v6214, %v6563
    %v6603 = vmul.f32 %v6215, %v6563
    %v6604 = vmul.f32 %v6216, %v6563
    %v6605 = vmul.f32 %v6217, %v6563
    %v6606 = vmul.f32 %v6218, %v6563
    %v6607 = vmul.f32 %v6219, %v6563
    %v6608 = vmul.f32 %v6220, %v6563
    %v6609 = vmul.f32 %v6221, %v6563
    %v6610 = vmul.f32 %v6222, %v6563
    %v6611 = vmul.f32 %v6223, %v6563
    %v6612 = vmul.f32 %v6224, %v6563
    %vm6661 = vcmask 1045504
    %v6662 = vrot.slane %v6565, 2
    %v6663 = vrot.slane %v6566, 2
    %v6664 = vsel %vm6661, %v6662, %v6663
    %v6665 = vrot.slane %v6567, 2
    %v6666 = vrot.slane %v6568, 2
    %v6667 = vsel %vm6661, %v6665, %v6666
    %v6668 = vrot.slane %v6569, 2
    %v6669 = vrot.slane %v6570, 2
    %v6670 = vsel %vm6661, %v6668, %v6669
    %v6671 = vrot.slane %v6571, 2
    %v6672 = vrot.slane %v6572, 2
    %v6673 = vsel %vm6661, %v6671, %v6672
    %v6674 = vrot.slane %v6573, 2
    %v6675 = vrot.slane %v6574, 2
    %v6676 = vsel %vm6661, %v6674, %v6675
    %v6677 = vrot.slane %v6575, 2
    %v6678 = vrot.slane %v6576, 2
    %v6679 = vsel %vm6661, %v6677, %v6678
    %v6680 = vrot.slane %v6577, 2
    %v6681 = vrot.slane %v6578, 2
    %v6682 = vsel %vm6661, %v6680, %v6681
    %v6683 = vrot.slane %v6579, 2
    %v6684 = vrot.slane %v6580, 2
    %v6685 = vsel %vm6661, %v6683, %v6684
    %v6686 = vrot.slane %v6581, 2
    %v6687 = vrot.slane %v6582, 2
    %v6688 = vsel %vm6661, %v6686, %v6687
    %v6689 = vrot.slane %v6583, 2
    %v6690 = vrot.slane %v6584, 2
    %v6691 = vsel %vm6661, %v6689, %v6690
    %v6692 = vrot.slane %v6585, 2
    %v6693 = vrot.slane %v6586, 2
    %v6694 = vsel %vm6661, %v6692, %v6693
    %v6695 = vrot.slane %v6587, 2
    %v6696 = vrot.slane %v6588, 2
    %v6697 = vsel %vm6661, %v6695, %v6696
    %v6698 = vrot.slane %v6589, 2
    %v6699 = vrot.slane %v6590, 2
    %v6700 = vsel %vm6661, %v6698, %v6699
    %v6701 = vrot.slane %v6591, 2
    %v6702 = vrot.slane %v6592, 2
    %v6703 = vsel %vm6661, %v6701, %v6702
    %v6704 = vrot.slane %v6593, 2
    %v6705 = vrot.slane %v6594, 2
    %v6706 = vsel %vm6661, %v6704, %v6705
    %v6707 = vrot.slane %v6595, 2
    %v6708 = vrot.slane %v6596, 2
    %v6709 = vsel %vm6661, %v6707, %v6708
    %v6710 = vrot.slane %v6597, 2
    %v6711 = vrot.slane %v6598, 2
    %v6712 = vsel %vm6661, %v6710, %v6711
    %v6713 = vrot.slane %v6599, 2
    %v6714 = vrot.slane %v6600, 2
    %v6715 = vsel %vm6661, %v6713, %v6714
    %v6716 = vrot.slane %v6601, 2
    %v6717 = vrot.slane %v6602, 2
    %v6718 = vsel %vm6661, %v6716, %v6717
    %v6719 = vrot.slane %v6603, 2
    %v6720 = vrot.slane %v6604, 2
    %v6721 = vsel %vm6661, %v6719, %v6720
    %v6722 = vrot.slane %v6605, 2
    %v6723 = vrot.slane %v6606, 2
    %v6724 = vsel %vm6661, %v6722, %v6723
    %v6725 = vrot.slane %v6607, 2
    %v6726 = vrot.slane %v6608, 2
    %v6727 = vsel %vm6661, %v6725, %v6726
    %v6728 = vrot.slane %v6609, 2
    %v6729 = vrot.slane %v6610, 2
    %v6730 = vsel %vm6661, %v6728, %v6729
    %v6731 = vrot.slane %v6611, 2
    %v6732 = vrot.slane %v6612, 2
    %v6733 = vsel %vm6661, %v6731, %v6732
    %v6782 = vadd.f32 %v6509, %v6664
    %v6783 = vadd.f32 %v6510, %v6663
    %v6784 = vadd.f32 %v6511, %v6667
    %v6785 = vadd.f32 %v6512, %v6666
    %v6786 = vadd.f32 %v6513, %v6670
    %v6787 = vadd.f32 %v6514, %v6669
    %v6788 = vadd.f32 %v6515, %v6673
    %v6789 = vadd.f32 %v6516, %v6672
    %v6790 = vadd.f32 %v6517, %v6676
    %v6791 = vadd.f32 %v6518, %v6675
    %v6792 = vadd.f32 %v6519, %v6679
    %v6793 = vadd.f32 %v6520, %v6678
    %v6794 = vadd.f32 %v6521, %v6682
    %v6795 = vadd.f32 %v6522, %v6681
    %v6796 = vadd.f32 %v6523, %v6685
    %v6797 = vadd.f32 %v6524, %v6684
    %v6798 = vadd.f32 %v6525, %v6688
    %v6799 = vadd.f32 %v6526, %v6687
    %v6800 = vadd.f32 %v6527, %v6691
    %v6801 = vadd.f32 %v6528, %v6690
    %v6802 = vadd.f32 %v6529, %v6694
    %v6803 = vadd.f32 %v6530, %v6693
    %v6804 = vadd.f32 %v6531, %v6697
    %v6805 = vadd.f32 %v6532, %v6696
    %v6806 = vadd.f32 %v6533, %v6700
    %v6807 = vadd.f32 %v6534, %v6699
    %v6808 = vadd.f32 %v6535, %v6703
    %v6809 = vadd.f32 %v6536, %v6702
    %v6810 = vadd.f32 %v6537, %v6706
    %v6811 = vadd.f32 %v6538, %v6705
    %v6812 = vadd.f32 %v6539, %v6709
    %v6813 = vadd.f32 %v6540, %v6708
    %v6814 = vadd.f32 %v6541, %v6712
    %v6815 = vadd.f32 %v6542, %v6711
    %v6816 = vadd.f32 %v6543, %v6715
    %v6817 = vadd.f32 %v6544, %v6714
    %v6818 = vadd.f32 %v6545, %v6718
    %v6819 = vadd.f32 %v6546, %v6717
    %v6820 = vadd.f32 %v6547, %v6721
    %v6821 = vadd.f32 %v6548, %v6720
    %v6822 = vadd.f32 %v6549, %v6724
    %v6823 = vadd.f32 %v6550, %v6723
    %v6824 = vadd.f32 %v6551, %v6727
    %v6825 = vadd.f32 %v6552, %v6726
    %v6826 = vadd.f32 %v6553, %v6730
    %v6827 = vadd.f32 %v6554, %v6729
    %v6828 = vadd.f32 %v6555, %v6733
    %v6829 = vadd.f32 %v6556, %v6732
    %s6830 = scalar_lea.vmem %s5, 3
    %v6831 = vld [vmem:[%s6830] sm:$0x1]
    %v6833 = vlaneseq
    %v6834 = vshrl.u32 %v6833, 7
    %v6835 = vsub.s32 0, %v6834
    %v6836 = vrot.slane %v6831, %v6835
    %v6838 = vmul.f32 %v6175, %v6836
    %v6839 = vmul.f32 %v6176, %v6836
    %v6840 = vmul.f32 %v6177, %v6836
    %v6841 = vmul.f32 %v6178, %v6836
    %v6842 = vmul.f32 %v6179, %v6836
    %v6843 = vmul.f32 %v6180, %v6836
    %v6844 = vmul.f32 %v6181, %v6836
    %v6845 = vmul.f32 %v6182, %v6836
    %v6846 = vmul.f32 %v6183, %v6836
    %v6847 = vmul.f32 %v6184, %v6836
    %v6848 = vmul.f32 %v6185, %v6836
    %v6849 = vmul.f32 %v6186, %v6836
    %v6850 = vmul.f32 %v6187, %v6836
    %v6851 = vmul.f32 %v6188, %v6836
    %v6852 = vmul.f32 %v6189, %v6836
    %v6853 = vmul.f32 %v6190, %v6836
    %v6854 = vmul.f32 %v6191, %v6836
    %v6855 = vmul.f32 %v6192, %v6836
    %v6856 = vmul.f32 %v6193, %v6836
    %v6857 = vmul.f32 %v6194, %v6836
    %v6858 = vmul.f32 %v6195, %v6836
    %v6859 = vmul.f32 %v6196, %v6836
    %v6860 = vmul.f32 %v6197, %v6836
    %v6861 = vmul.f32 %v6198, %v6836
    %v6862 = vmul.f32 %v6203, %v6836
    %v6863 = vmul.f32 %v6204, %v6836
    %v6864 = vmul.f32 %v6205, %v6836
    %v6865 = vmul.f32 %v6206, %v6836
    %v6866 = vmul.f32 %v6207, %v6836
    %v6867 = vmul.f32 %v6208, %v6836
    %v6868 = vmul.f32 %v6209, %v6836
    %v6869 = vmul.f32 %v6210, %v6836
    %v6870 = vmul.f32 %v6211, %v6836
    %v6871 = vmul.f32 %v6212, %v6836
    %v6872 = vmul.f32 %v6213, %v6836
    %v6873 = vmul.f32 %v6214, %v6836
    %v6874 = vmul.f32 %v6215, %v6836
    %v6875 = vmul.f32 %v6216, %v6836
    %v6876 = vmul.f32 %v6217, %v6836
    %v6877 = vmul.f32 %v6218, %v6836
    %v6878 = vmul.f32 %v6219, %v6836
    %v6879 = vmul.f32 %v6220, %v6836
    %v6880 = vmul.f32 %v6221, %v6836
    %v6881 = vmul.f32 %v6222, %v6836
    %v6882 = vmul.f32 %v6223, %v6836
    %v6883 = vmul.f32 %v6224, %v6836
    %v6884 = vmul.f32 %v6225, %v6836
    %v6885 = vmul.f32 %v6226, %v6836
    %v6886 = vadd.f32 %v6782, %v6838
    %v6887 = vadd.f32 %v6783, %v6839
    %v6888 = vadd.f32 %v6784, %v6840
    %v6889 = vadd.f32 %v6785, %v6841
    %v6890 = vadd.f32 %v6786, %v6842
    %v6891 = vadd.f32 %v6787, %v6843
    %v6892 = vadd.f32 %v6788, %v6844
    %v6893 = vadd.f32 %v6789, %v6845
    %v6894 = vadd.f32 %v6790, %v6846
    %v6895 = vadd.f32 %v6791, %v6847
    %v6896 = vadd.f32 %v6792, %v6848
    %v6897 = vadd.f32 %v6793, %v6849
    %v6898 = vadd.f32 %v6794, %v6850
    %v6899 = vadd.f32 %v6795, %v6851
    %v6900 = vadd.f32 %v6796, %v6852
    %v6901 = vadd.f32 %v6797, %v6853
    %v6902 = vadd.f32 %v6798, %v6854
    %v6903 = vadd.f32 %v6799, %v6855
    %v6904 = vadd.f32 %v6800, %v6856
    %v6905 = vadd.f32 %v6801, %v6857
    %v6906 = vadd.f32 %v6802, %v6858
    %v6907 = vadd.f32 %v6803, %v6859
    %v6908 = vadd.f32 %v6804, %v6860
    %v6909 = vadd.f32 %v6805, %v6861
    %v6910 = vadd.f32 %v6806, %v6862
    %v6911 = vadd.f32 %v6807, %v6863
    %v6912 = vadd.f32 %v6808, %v6864
    %v6913 = vadd.f32 %v6809, %v6865
    %v6914 = vadd.f32 %v6810, %v6866
    %v6915 = vadd.f32 %v6811, %v6867
    %v6916 = vadd.f32 %v6812, %v6868
    %v6917 = vadd.f32 %v6813, %v6869
    %v6918 = vadd.f32 %v6814, %v6870
    %v6919 = vadd.f32 %v6815, %v6871
    %v6920 = vadd.f32 %v6816, %v6872
    %v6921 = vadd.f32 %v6817, %v6873
    %v6922 = vadd.f32 %v6818, %v6874
    %v6923 = vadd.f32 %v6819, %v6875
    %v6924 = vadd.f32 %v6820, %v6876
    %v6925 = vadd.f32 %v6821, %v6877
    %v6926 = vadd.f32 %v6822, %v6878
    %v6927 = vadd.f32 %v6823, %v6879
    %v6928 = vadd.f32 %v6824, %v6880
    %v6929 = vadd.f32 %v6825, %v6881
    %v6930 = vadd.f32 %v6826, %v6882
    %v6931 = vadd.f32 %v6827, %v6883
    %v6932 = vadd.f32 %v6828, %v6884
    %v6933 = vadd.f32 %v6829, %v6885
    %s6934 = scalar_lea.vmem %s5, 4
    %v6935 = vld [vmem:[%s6934] sm:$0x1]
    %v6937 = vlaneseq
    %v6938 = vshrl.u32 %v6937, 7
    %v6939 = vsub.s32 0, %v6938
    %v6940 = vrot.slane %v6935, %v6939
    %v6942 = vmul.f32 %v6175, %v6940
    %v6943 = vmul.f32 %v6176, %v6940
    %v6944 = vmul.f32 %v6177, %v6940
    %v6945 = vmul.f32 %v6178, %v6940
    %v6946 = vmul.f32 %v6179, %v6940
    %v6947 = vmul.f32 %v6180, %v6940
    %v6948 = vmul.f32 %v6181, %v6940
    %v6949 = vmul.f32 %v6182, %v6940
    %v6950 = vmul.f32 %v6183, %v6940
    %v6951 = vmul.f32 %v6184, %v6940
    %v6952 = vmul.f32 %v6185, %v6940
    %v6953 = vmul.f32 %v6186, %v6940
    %v6954 = vmul.f32 %v6187, %v6940
    %v6955 = vmul.f32 %v6188, %v6940
    %v6956 = vmul.f32 %v6189, %v6940
    %v6957 = vmul.f32 %v6190, %v6940
    %v6958 = vmul.f32 %v6191, %v6940
    %v6959 = vmul.f32 %v6192, %v6940
    %v6960 = vmul.f32 %v6193, %v6940
    %v6961 = vmul.f32 %v6194, %v6940
    %v6962 = vmul.f32 %v6195, %v6940
    %v6963 = vmul.f32 %v6196, %v6940
    %v6964 = vmul.f32 %v6197, %v6940
    %v6965 = vmul.f32 %v6198, %v6940
    %v6966 = vmul.f32 %v6203, %v6940
    %v6967 = vmul.f32 %v6204, %v6940
    %v6968 = vmul.f32 %v6205, %v6940
    %v6969 = vmul.f32 %v6206, %v6940
    %v6970 = vmul.f32 %v6207, %v6940
    %v6971 = vmul.f32 %v6208, %v6940
    %v6972 = vmul.f32 %v6209, %v6940
    %v6973 = vmul.f32 %v6210, %v6940
    %v6974 = vmul.f32 %v6211, %v6940
    %v6975 = vmul.f32 %v6212, %v6940
    %v6976 = vmul.f32 %v6213, %v6940
    %v6977 = vmul.f32 %v6214, %v6940
    %v6978 = vmul.f32 %v6215, %v6940
    %v6979 = vmul.f32 %v6216, %v6940
    %v6980 = vmul.f32 %v6217, %v6940
    %v6981 = vmul.f32 %v6218, %v6940
    %v6982 = vmul.f32 %v6219, %v6940
    %v6983 = vmul.f32 %v6220, %v6940
    %v6984 = vmul.f32 %v6221, %v6940
    %v6985 = vmul.f32 %v6222, %v6940
    %v6986 = vmul.f32 %v6223, %v6940
    %v6987 = vmul.f32 %v6224, %v6940
    %v6988 = vmul.f32 %v6225, %v6940
    %v6989 = vmul.f32 %v6226, %v6940
    %v7038 = vrot.slane %v6942, 1
    %v7039 = vrot.slane %v6943, 1
    %v7040 = vsel %vm6388, %v7038, %v7039
    %v7041 = vrot.slane %v6944, 1
    %v7042 = vrot.slane %v6945, 1
    %v7043 = vsel %vm6388, %v7041, %v7042
    %v7044 = vrot.slane %v6946, 1
    %v7045 = vrot.slane %v6947, 1
    %v7046 = vsel %vm6388, %v7044, %v7045
    %v7047 = vrot.slane %v6948, 1
    %v7048 = vrot.slane %v6949, 1
    %v7049 = vsel %vm6388, %v7047, %v7048
    %v7050 = vrot.slane %v6950, 1
    %v7051 = vrot.slane %v6951, 1
    %v7052 = vsel %vm6388, %v7050, %v7051
    %v7053 = vrot.slane %v6952, 1
    %v7054 = vrot.slane %v6953, 1
    %v7055 = vsel %vm6388, %v7053, %v7054
    %v7056 = vrot.slane %v6954, 1
    %v7057 = vrot.slane %v6955, 1
    %v7058 = vsel %vm6388, %v7056, %v7057
    %v7059 = vrot.slane %v6956, 1
    %v7060 = vrot.slane %v6957, 1
    %v7061 = vsel %vm6388, %v7059, %v7060
    %v7062 = vrot.slane %v6958, 1
    %v7063 = vrot.slane %v6959, 1
    %v7064 = vsel %vm6388, %v7062, %v7063
    %v7065 = vrot.slane %v6960, 1
    %v7066 = vrot.slane %v6961, 1
    %v7067 = vsel %vm6388, %v7065, %v7066
    %v7068 = vrot.slane %v6962, 1
    %v7069 = vrot.slane %v6963, 1
    %v7070 = vsel %vm6388, %v7068, %v7069
    %v7071 = vrot.slane %v6964, 1
    %v7072 = vrot.slane %v6965, 1
    %v7073 = vsel %vm6388, %v7071, %v7072
    %v7074 = vrot.slane %v6966, 1
    %v7075 = vrot.slane %v6967, 1
    %v7076 = vsel %vm6388, %v7074, %v7075
    %v7077 = vrot.slane %v6968, 1
    %v7078 = vrot.slane %v6969, 1
    %v7079 = vsel %vm6388, %v7077, %v7078
    %v7080 = vrot.slane %v6970, 1
    %v7081 = vrot.slane %v6971, 1
    %v7082 = vsel %vm6388, %v7080, %v7081
    %v7083 = vrot.slane %v6972, 1
    %v7084 = vrot.slane %v6973, 1
    %v7085 = vsel %vm6388, %v7083, %v7084
    %v7086 = vrot.slane %v6974, 1
    %v7087 = vrot.slane %v6975, 1
    %v7088 = vsel %vm6388, %v7086, %v7087
    %v7089 = vrot.slane %v6976, 1
    %v7090 = vrot.slane %v6977, 1
    %v7091 = vsel %vm6388, %v7089, %v7090
    %v7092 = vrot.slane %v6978, 1
    %v7093 = vrot.slane %v6979, 1
    %v7094 = vsel %vm6388, %v7092, %v7093
    %v7095 = vrot.slane %v6980, 1
    %v7096 = vrot.slane %v6981, 1
    %v7097 = vsel %vm6388, %v7095, %v7096
    %v7098 = vrot.slane %v6982, 1
    %v7099 = vrot.slane %v6983, 1
    %v7100 = vsel %vm6388, %v7098, %v7099
    %v7101 = vrot.slane %v6984, 1
    %v7102 = vrot.slane %v6985, 1
    %v7103 = vsel %vm6388, %v7101, %v7102
    %v7104 = vrot.slane %v6986, 1
    %v7105 = vrot.slane %v6987, 1
    %v7106 = vsel %vm6388, %v7104, %v7105
    %v7107 = vrot.slane %v6988, 1
    %v7108 = vrot.slane %v6989, 1
    %v7109 = vsel %vm6388, %v7107, %v7108
    %v7158 = vadd.f32 %v6886, %v7040
    %v7159 = vadd.f32 %v6887, %v7039
    %v7160 = vadd.f32 %v6888, %v7043
    %v7161 = vadd.f32 %v6889, %v7042
    %v7162 = vadd.f32 %v6890, %v7046
    %v7163 = vadd.f32 %v6891, %v7045
    %v7164 = vadd.f32 %v6892, %v7049
    %v7165 = vadd.f32 %v6893, %v7048
    %v7166 = vadd.f32 %v6894, %v7052
    %v7167 = vadd.f32 %v6895, %v7051
    %v7168 = vadd.f32 %v6896, %v7055
    %v7169 = vadd.f32 %v6897, %v7054
    %v7170 = vadd.f32 %v6898, %v7058
    %v7171 = vadd.f32 %v6899, %v7057
    %v7172 = vadd.f32 %v6900, %v7061
    %v7173 = vadd.f32 %v6901, %v7060
    %v7174 = vadd.f32 %v6902, %v7064
    %v7175 = vadd.f32 %v6903, %v7063
    %v7176 = vadd.f32 %v6904, %v7067
    %v7177 = vadd.f32 %v6905, %v7066
    %v7178 = vadd.f32 %v6906, %v7070
    %v7179 = vadd.f32 %v6907, %v7069
    %v7180 = vadd.f32 %v6908, %v7073
    %v7181 = vadd.f32 %v6909, %v7072
    %v7182 = vadd.f32 %v6910, %v7076
    %v7183 = vadd.f32 %v6911, %v7075
    %v7184 = vadd.f32 %v6912, %v7079
    %v7185 = vadd.f32 %v6913, %v7078
    %v7186 = vadd.f32 %v6914, %v7082
    %v7187 = vadd.f32 %v6915, %v7081
    %v7188 = vadd.f32 %v6916, %v7085
    %v7189 = vadd.f32 %v6917, %v7084
    %v7190 = vadd.f32 %v6918, %v7088
    %v7191 = vadd.f32 %v6919, %v7087
    %v7192 = vadd.f32 %v6920, %v7091
    %v7193 = vadd.f32 %v6921, %v7090
    %v7194 = vadd.f32 %v6922, %v7094
    %v7195 = vadd.f32 %v6923, %v7093
    %v7196 = vadd.f32 %v6924, %v7097
    %v7197 = vadd.f32 %v6925, %v7096
    %v7198 = vadd.f32 %v6926, %v7100
    %v7199 = vadd.f32 %v6927, %v7099
    %v7200 = vadd.f32 %v6928, %v7103
    %v7201 = vadd.f32 %v6929, %v7102
    %v7202 = vadd.f32 %v6930, %v7106
    %v7203 = vadd.f32 %v6931, %v7105
    %v7204 = vadd.f32 %v6932, %v7109
    %v7205 = vadd.f32 %v6933, %v7108
    %s7206 = scalar_lea.vmem %s5, 5
    %v7207 = vld [vmem:[%s7206] sm:$0x1]
    %v7209 = vlaneseq
    %v7210 = vshrl.u32 %v7209, 7
    %v7211 = vsub.s32 0, %v7210
    %v7212 = vrot.slane %v7207, %v7211
    %v7214 = vmul.f32 %v6175, %v7212
    %v7215 = vmul.f32 %v6176, %v7212
    %v7216 = vmul.f32 %v6177, %v7212
    %v7217 = vmul.f32 %v6178, %v7212
    %v7218 = vmul.f32 %v6179, %v7212
    %v7219 = vmul.f32 %v6180, %v7212
    %v7220 = vmul.f32 %v6181, %v7212
    %v7221 = vmul.f32 %v6182, %v7212
    %v7222 = vmul.f32 %v6183, %v7212
    %v7223 = vmul.f32 %v6184, %v7212
    %v7224 = vmul.f32 %v6185, %v7212
    %v7225 = vmul.f32 %v6186, %v7212
    %v7226 = vmul.f32 %v6187, %v7212
    %v7227 = vmul.f32 %v6188, %v7212
    %v7228 = vmul.f32 %v6189, %v7212
    %v7229 = vmul.f32 %v6190, %v7212
    %v7230 = vmul.f32 %v6191, %v7212
    %v7231 = vmul.f32 %v6192, %v7212
    %v7232 = vmul.f32 %v6193, %v7212
    %v7233 = vmul.f32 %v6194, %v7212
    %v7234 = vmul.f32 %v6195, %v7212
    %v7235 = vmul.f32 %v6196, %v7212
    %v7236 = vmul.f32 %v6197, %v7212
    %v7237 = vmul.f32 %v6198, %v7212
    %v7238 = vmul.f32 %v6203, %v7212
    %v7239 = vmul.f32 %v6204, %v7212
    %v7240 = vmul.f32 %v6205, %v7212
    %v7241 = vmul.f32 %v6206, %v7212
    %v7242 = vmul.f32 %v6207, %v7212
    %v7243 = vmul.f32 %v6208, %v7212
    %v7244 = vmul.f32 %v6209, %v7212
    %v7245 = vmul.f32 %v6210, %v7212
    %v7246 = vmul.f32 %v6211, %v7212
    %v7247 = vmul.f32 %v6212, %v7212
    %v7248 = vmul.f32 %v6213, %v7212
    %v7249 = vmul.f32 %v6214, %v7212
    %v7250 = vmul.f32 %v6215, %v7212
    %v7251 = vmul.f32 %v6216, %v7212
    %v7252 = vmul.f32 %v6217, %v7212
    %v7253 = vmul.f32 %v6218, %v7212
    %v7254 = vmul.f32 %v6219, %v7212
    %v7255 = vmul.f32 %v6220, %v7212
    %v7256 = vmul.f32 %v6221, %v7212
    %v7257 = vmul.f32 %v6222, %v7212
    %v7258 = vmul.f32 %v6223, %v7212
    %v7259 = vmul.f32 %v6224, %v7212
    %v7260 = vmul.f32 %v6225, %v7212
    %v7261 = vmul.f32 %v6226, %v7212
    %v7310 = vrot.slane %v7214, 2
    %v7311 = vrot.slane %v7215, 2
    %v7312 = vsel %vm6661, %v7310, %v7311
    %v7313 = vrot.slane %v7216, 2
    %v7314 = vrot.slane %v7217, 2
    %v7315 = vsel %vm6661, %v7313, %v7314
    %v7316 = vrot.slane %v7218, 2
    %v7317 = vrot.slane %v7219, 2
    %v7318 = vsel %vm6661, %v7316, %v7317
    %v7319 = vrot.slane %v7220, 2
    %v7320 = vrot.slane %v7221, 2
    %v7321 = vsel %vm6661, %v7319, %v7320
    %v7322 = vrot.slane %v7222, 2
    %v7323 = vrot.slane %v7223, 2
    %v7324 = vsel %vm6661, %v7322, %v7323
    %v7325 = vrot.slane %v7224, 2
    %v7326 = vrot.slane %v7225, 2
    %v7327 = vsel %vm6661, %v7325, %v7326
    %v7328 = vrot.slane %v7226, 2
    %v7329 = vrot.slane %v7227, 2
    %v7330 = vsel %vm6661, %v7328, %v7329
    %v7331 = vrot.slane %v7228, 2
    %v7332 = vrot.slane %v7229, 2
    %v7333 = vsel %vm6661, %v7331, %v7332
    %v7334 = vrot.slane %v7230, 2
    %v7335 = vrot.slane %v7231, 2
    %v7336 = vsel %vm6661, %v7334, %v7335
    %v7337 = vrot.slane %v7232, 2
    %v7338 = vrot.slane %v7233, 2
    %v7339 = vsel %vm6661, %v7337, %v7338
    %v7340 = vrot.slane %v7234, 2
    %v7341 = vrot.slane %v7235, 2
    %v7342 = vsel %vm6661, %v7340, %v7341
    %v7343 = vrot.slane %v7236, 2
    %v7344 = vrot.slane %v7237, 2
    %v7345 = vsel %vm6661, %v7343, %v7344
    %v7346 = vrot.slane %v7238, 2
    %v7347 = vrot.slane %v7239, 2
    %v7348 = vsel %vm6661, %v7346, %v7347
    %v7349 = vrot.slane %v7240, 2
    %v7350 = vrot.slane %v7241, 2
    %v7351 = vsel %vm6661, %v7349, %v7350
    %v7352 = vrot.slane %v7242, 2
    %v7353 = vrot.slane %v7243, 2
    %v7354 = vsel %vm6661, %v7352, %v7353
    %v7355 = vrot.slane %v7244, 2
    %v7356 = vrot.slane %v7245, 2
    %v7357 = vsel %vm6661, %v7355, %v7356
    %v7358 = vrot.slane %v7246, 2
    %v7359 = vrot.slane %v7247, 2
    %v7360 = vsel %vm6661, %v7358, %v7359
    %v7361 = vrot.slane %v7248, 2
    %v7362 = vrot.slane %v7249, 2
    %v7363 = vsel %vm6661, %v7361, %v7362
    %v7364 = vrot.slane %v7250, 2
    %v7365 = vrot.slane %v7251, 2
    %v7366 = vsel %vm6661, %v7364, %v7365
    %v7367 = vrot.slane %v7252, 2
    %v7368 = vrot.slane %v7253, 2
    %v7369 = vsel %vm6661, %v7367, %v7368
    %v7370 = vrot.slane %v7254, 2
    %v7371 = vrot.slane %v7255, 2
    %v7372 = vsel %vm6661, %v7370, %v7371
    %v7373 = vrot.slane %v7256, 2
    %v7374 = vrot.slane %v7257, 2
    %v7375 = vsel %vm6661, %v7373, %v7374
    %v7376 = vrot.slane %v7258, 2
    %v7377 = vrot.slane %v7259, 2
    %v7378 = vsel %vm6661, %v7376, %v7377
    %v7379 = vrot.slane %v7260, 2
    %v7380 = vrot.slane %v7261, 2
    %v7381 = vsel %vm6661, %v7379, %v7380
    %v7430 = vadd.f32 %v7158, %v7312
    %v7431 = vadd.f32 %v7159, %v7311
    %v7432 = vadd.f32 %v7160, %v7315
    %v7433 = vadd.f32 %v7161, %v7314
    %v7434 = vadd.f32 %v7162, %v7318
    %v7435 = vadd.f32 %v7163, %v7317
    %v7436 = vadd.f32 %v7164, %v7321
    %v7437 = vadd.f32 %v7165, %v7320
    %v7438 = vadd.f32 %v7166, %v7324
    %v7439 = vadd.f32 %v7167, %v7323
    %v7440 = vadd.f32 %v7168, %v7327
    %v7441 = vadd.f32 %v7169, %v7326
    %v7442 = vadd.f32 %v7170, %v7330
    %v7443 = vadd.f32 %v7171, %v7329
    %v7444 = vadd.f32 %v7172, %v7333
    %v7445 = vadd.f32 %v7173, %v7332
    %v7446 = vadd.f32 %v7174, %v7336
    %v7447 = vadd.f32 %v7175, %v7335
    %v7448 = vadd.f32 %v7176, %v7339
    %v7449 = vadd.f32 %v7177, %v7338
    %v7450 = vadd.f32 %v7178, %v7342
    %v7451 = vadd.f32 %v7179, %v7341
    %v7452 = vadd.f32 %v7180, %v7345
    %v7453 = vadd.f32 %v7181, %v7344
    %v7454 = vadd.f32 %v7182, %v7348
    %v7455 = vadd.f32 %v7183, %v7347
    %v7456 = vadd.f32 %v7184, %v7351
    %v7457 = vadd.f32 %v7185, %v7350
    %v7458 = vadd.f32 %v7186, %v7354
    %v7459 = vadd.f32 %v7187, %v7353
    %v7460 = vadd.f32 %v7188, %v7357
    %v7461 = vadd.f32 %v7189, %v7356
    %v7462 = vadd.f32 %v7190, %v7360
    %v7463 = vadd.f32 %v7191, %v7359
    %v7464 = vadd.f32 %v7192, %v7363
    %v7465 = vadd.f32 %v7193, %v7362
    %v7466 = vadd.f32 %v7194, %v7366
    %v7467 = vadd.f32 %v7195, %v7365
    %v7468 = vadd.f32 %v7196, %v7369
    %v7469 = vadd.f32 %v7197, %v7368
    %v7470 = vadd.f32 %v7198, %v7372
    %v7471 = vadd.f32 %v7199, %v7371
    %v7472 = vadd.f32 %v7200, %v7375
    %v7473 = vadd.f32 %v7201, %v7374
    %v7474 = vadd.f32 %v7202, %v7378
    %v7475 = vadd.f32 %v7203, %v7377
    %v7476 = vadd.f32 %v7204, %v7381
    %v7477 = vadd.f32 %v7205, %v7380
    %s7478 = scalar_lea.vmem %s5, 6
    %v7479 = vld [vmem:[%s7478] sm:$0x1]
    %v7481 = vlaneseq
    %v7482 = vshrl.u32 %v7481, 7
    %v7483 = vsub.s32 0, %v7482
    %v7484 = vrot.slane %v7479, %v7483
    %v7486 = vmul.f32 %v6177, %v7484
    %v7487 = vmul.f32 %v6178, %v7484
    %v7488 = vmul.f32 %v6179, %v7484
    %v7489 = vmul.f32 %v6180, %v7484
    %v7490 = vmul.f32 %v6181, %v7484
    %v7491 = vmul.f32 %v6182, %v7484
    %v7492 = vmul.f32 %v6183, %v7484
    %v7493 = vmul.f32 %v6184, %v7484
    %v7494 = vmul.f32 %v6185, %v7484
    %v7495 = vmul.f32 %v6186, %v7484
    %v7496 = vmul.f32 %v6187, %v7484
    %v7497 = vmul.f32 %v6188, %v7484
    %v7498 = vmul.f32 %v6189, %v7484
    %v7499 = vmul.f32 %v6190, %v7484
    %v7500 = vmul.f32 %v6191, %v7484
    %v7501 = vmul.f32 %v6192, %v7484
    %v7502 = vmul.f32 %v6193, %v7484
    %v7503 = vmul.f32 %v6194, %v7484
    %v7504 = vmul.f32 %v6195, %v7484
    %v7505 = vmul.f32 %v6196, %v7484
    %v7506 = vmul.f32 %v6197, %v7484
    %v7507 = vmul.f32 %v6198, %v7484
    %v7508 = vmul.f32 %v6199, %v7484
    %v7509 = vmul.f32 %v6200, %v7484
    %v7510 = vmul.f32 %v6205, %v7484
    %v7511 = vmul.f32 %v6206, %v7484
    %v7512 = vmul.f32 %v6207, %v7484
    %v7513 = vmul.f32 %v6208, %v7484
    %v7514 = vmul.f32 %v6209, %v7484
    %v7515 = vmul.f32 %v6210, %v7484
    %v7516 = vmul.f32 %v6211, %v7484
    %v7517 = vmul.f32 %v6212, %v7484
    %v7518 = vmul.f32 %v6213, %v7484
    %v7519 = vmul.f32 %v6214, %v7484
    %v7520 = vmul.f32 %v6215, %v7484
    %v7521 = vmul.f32 %v6216, %v7484
    %v7522 = vmul.f32 %v6217, %v7484
    %v7523 = vmul.f32 %v6218, %v7484
    %v7524 = vmul.f32 %v6219, %v7484
    %v7525 = vmul.f32 %v6220, %v7484
    %v7526 = vmul.f32 %v6221, %v7484
    %v7527 = vmul.f32 %v6222, %v7484
    %v7528 = vmul.f32 %v6223, %v7484
    %v7529 = vmul.f32 %v6224, %v7484
    %v7530 = vmul.f32 %v6225, %v7484
    %v7531 = vmul.f32 %v6226, %v7484
    %v7532 = vmul.f32 %v6227, %v7484
    %v7533 = vmul.f32 %v6228, %v7484
    %v7534 = vadd.f32 %v7430, %v7486
    %v7535 = vadd.f32 %v7431, %v7487
    %v7536 = vadd.f32 %v7432, %v7488
    %v7537 = vadd.f32 %v7433, %v7489
    %v7538 = vadd.f32 %v7434, %v7490
    %v7539 = vadd.f32 %v7435, %v7491
    %v7540 = vadd.f32 %v7436, %v7492
    %v7541 = vadd.f32 %v7437, %v7493
    %v7542 = vadd.f32 %v7438, %v7494
    %v7543 = vadd.f32 %v7439, %v7495
    %v7544 = vadd.f32 %v7440, %v7496
    %v7545 = vadd.f32 %v7441, %v7497
    %v7546 = vadd.f32 %v7442, %v7498
    %v7547 = vadd.f32 %v7443, %v7499
    %v7548 = vadd.f32 %v7444, %v7500
    %v7549 = vadd.f32 %v7445, %v7501
    %v7550 = vadd.f32 %v7446, %v7502
    %v7551 = vadd.f32 %v7447, %v7503
    %v7552 = vadd.f32 %v7448, %v7504
    %v7553 = vadd.f32 %v7449, %v7505
    %v7554 = vadd.f32 %v7450, %v7506
    %v7555 = vadd.f32 %v7451, %v7507
    %v7556 = vadd.f32 %v7452, %v7508
    %v7557 = vadd.f32 %v7453, %v7509
    %v7558 = vadd.f32 %v7454, %v7510
    %v7559 = vadd.f32 %v7455, %v7511
    %v7560 = vadd.f32 %v7456, %v7512
    %v7561 = vadd.f32 %v7457, %v7513
    %v7562 = vadd.f32 %v7458, %v7514
    %v7563 = vadd.f32 %v7459, %v7515
    %v7564 = vadd.f32 %v7460, %v7516
    %v7565 = vadd.f32 %v7461, %v7517
    %v7566 = vadd.f32 %v7462, %v7518
    %v7567 = vadd.f32 %v7463, %v7519
    %v7568 = vadd.f32 %v7464, %v7520
    %v7569 = vadd.f32 %v7465, %v7521
    %v7570 = vadd.f32 %v7466, %v7522
    %v7571 = vadd.f32 %v7467, %v7523
    %v7572 = vadd.f32 %v7468, %v7524
    %v7573 = vadd.f32 %v7469, %v7525
    %v7574 = vadd.f32 %v7470, %v7526
    %v7575 = vadd.f32 %v7471, %v7527
    %v7576 = vadd.f32 %v7472, %v7528
    %v7577 = vadd.f32 %v7473, %v7529
    %v7578 = vadd.f32 %v7474, %v7530
    %v7579 = vadd.f32 %v7475, %v7531
    %v7580 = vadd.f32 %v7476, %v7532
    %v7581 = vadd.f32 %v7477, %v7533
    %s7582 = scalar_lea.vmem %s5, 7
    %v7583 = vld [vmem:[%s7582] sm:$0x1]
    %v7585 = vlaneseq
    %v7586 = vshrl.u32 %v7585, 7
    %v7587 = vsub.s32 0, %v7586
    %v7588 = vrot.slane %v7583, %v7587
    %v7590 = vmul.f32 %v6177, %v7588
    %v7591 = vmul.f32 %v6178, %v7588
    %v7592 = vmul.f32 %v6179, %v7588
    %v7593 = vmul.f32 %v6180, %v7588
    %v7594 = vmul.f32 %v6181, %v7588
    %v7595 = vmul.f32 %v6182, %v7588
    %v7596 = vmul.f32 %v6183, %v7588
    %v7597 = vmul.f32 %v6184, %v7588
    %v7598 = vmul.f32 %v6185, %v7588
    %v7599 = vmul.f32 %v6186, %v7588
    %v7600 = vmul.f32 %v6187, %v7588
    %v7601 = vmul.f32 %v6188, %v7588
    %v7602 = vmul.f32 %v6189, %v7588
    %v7603 = vmul.f32 %v6190, %v7588
    %v7604 = vmul.f32 %v6191, %v7588
    %v7605 = vmul.f32 %v6192, %v7588
    %v7606 = vmul.f32 %v6193, %v7588
    %v7607 = vmul.f32 %v6194, %v7588
    %v7608 = vmul.f32 %v6195, %v7588
    %v7609 = vmul.f32 %v6196, %v7588
    %v7610 = vmul.f32 %v6197, %v7588
    %v7611 = vmul.f32 %v6198, %v7588
    %v7612 = vmul.f32 %v6199, %v7588
    %v7613 = vmul.f32 %v6200, %v7588
    %v7614 = vmul.f32 %v6205, %v7588
    %v7615 = vmul.f32 %v6206, %v7588
    %v7616 = vmul.f32 %v6207, %v7588
    %v7617 = vmul.f32 %v6208, %v7588
    %v7618 = vmul.f32 %v6209, %v7588
    %v7619 = vmul.f32 %v6210, %v7588
    %v7620 = vmul.f32 %v6211, %v7588
    %v7621 = vmul.f32 %v6212, %v7588
    %v7622 = vmul.f32 %v6213, %v7588
    %v7623 = vmul.f32 %v6214, %v7588
    %v7624 = vmul.f32 %v6215, %v7588
    %v7625 = vmul.f32 %v6216, %v7588
    %v7626 = vmul.f32 %v6217, %v7588
    %v7627 = vmul.f32 %v6218, %v7588
    %v7628 = vmul.f32 %v6219, %v7588
    %v7629 = vmul.f32 %v6220, %v7588
    %v7630 = vmul.f32 %v6221, %v7588
    %v7631 = vmul.f32 %v6222, %v7588
    %v7632 = vmul.f32 %v6223, %v7588
    %v7633 = vmul.f32 %v6224, %v7588
    %v7634 = vmul.f32 %v6225, %v7588
    %v7635 = vmul.f32 %v6226, %v7588
    %v7636 = vmul.f32 %v6227, %v7588
    %v7637 = vmul.f32 %v6228, %v7588
    %v7686 = vrot.slane %v7590, 1
    %v7687 = vrot.slane %v7591, 1
    %v7688 = vsel %vm6388, %v7686, %v7687
    %v7689 = vrot.slane %v7592, 1
    %v7690 = vrot.slane %v7593, 1
    %v7691 = vsel %vm6388, %v7689, %v7690
    %v7692 = vrot.slane %v7594, 1
    %v7693 = vrot.slane %v7595, 1
    %v7694 = vsel %vm6388, %v7692, %v7693
    %v7695 = vrot.slane %v7596, 1
    %v7696 = vrot.slane %v7597, 1
    %v7697 = vsel %vm6388, %v7695, %v7696
    %v7698 = vrot.slane %v7598, 1
    %v7699 = vrot.slane %v7599, 1
    %v7700 = vsel %vm6388, %v7698, %v7699
    %v7701 = vrot.slane %v7600, 1
    %v7702 = vrot.slane %v7601, 1
    %v7703 = vsel %vm6388, %v7701, %v7702
    %v7704 = vrot.slane %v7602, 1
    %v7705 = vrot.slane %v7603, 1
    %v7706 = vsel %vm6388, %v7704, %v7705
    %v7707 = vrot.slane %v7604, 1
    %v7708 = vrot.slane %v7605, 1
    %v7709 = vsel %vm6388, %v7707, %v7708
    %v7710 = vrot.slane %v7606, 1
    %v7711 = vrot.slane %v7607, 1
    %v7712 = vsel %vm6388, %v7710, %v7711
    %v7713 = vrot.slane %v7608, 1
    %v7714 = vrot.slane %v7609, 1
    %v7715 = vsel %vm6388, %v7713, %v7714
    %v7716 = vrot.slane %v7610, 1
    %v7717 = vrot.slane %v7611, 1
    %v7718 = vsel %vm6388, %v7716, %v7717
    %v7719 = vrot.slane %v7612, 1
    %v7720 = vrot.slane %v7613, 1
    %v7721 = vsel %vm6388, %v7719, %v7720
    %v7722 = vrot.slane %v7614, 1
    %v7723 = vrot.slane %v7615, 1
    %v7724 = vsel %vm6388, %v7722, %v7723
    %v7725 = vrot.slane %v7616, 1
    %v7726 = vrot.slane %v7617, 1
    %v7727 = vsel %vm6388, %v7725, %v7726
    %v7728 = vrot.slane %v7618, 1
    %v7729 = vrot.slane %v7619, 1
    %v7730 = vsel %vm6388, %v7728, %v7729
    %v7731 = vrot.slane %v7620, 1
    %v7732 = vrot.slane %v7621, 1
    %v7733 = vsel %vm6388, %v7731, %v7732
    %v7734 = vrot.slane %v7622, 1
    %v7735 = vrot.slane %v7623, 1
    %v7736 = vsel %vm6388, %v7734, %v7735
    %v7737 = vrot.slane %v7624, 1
    %v7738 = vrot.slane %v7625, 1
    %v7739 = vsel %vm6388, %v7737, %v7738
    %v7740 = vrot.slane %v7626, 1
    %v7741 = vrot.slane %v7627, 1
    %v7742 = vsel %vm6388, %v7740, %v7741
    %v7743 = vrot.slane %v7628, 1
    %v7744 = vrot.slane %v7629, 1
    %v7745 = vsel %vm6388, %v7743, %v7744
    %v7746 = vrot.slane %v7630, 1
    %v7747 = vrot.slane %v7631, 1
    %v7748 = vsel %vm6388, %v7746, %v7747
    %v7749 = vrot.slane %v7632, 1
    %v7750 = vrot.slane %v7633, 1
    %v7751 = vsel %vm6388, %v7749, %v7750
    %v7752 = vrot.slane %v7634, 1
    %v7753 = vrot.slane %v7635, 1
    %v7754 = vsel %vm6388, %v7752, %v7753
    %v7755 = vrot.slane %v7636, 1
    %v7756 = vrot.slane %v7637, 1
    %v7757 = vsel %vm6388, %v7755, %v7756
    %v7806 = vadd.f32 %v7534, %v7688
    %v7807 = vadd.f32 %v7535, %v7687
    %v7808 = vadd.f32 %v7536, %v7691
    %v7809 = vadd.f32 %v7537, %v7690
    %v7810 = vadd.f32 %v7538, %v7694
    %v7811 = vadd.f32 %v7539, %v7693
    %v7812 = vadd.f32 %v7540, %v7697
    %v7813 = vadd.f32 %v7541, %v7696
    %v7814 = vadd.f32 %v7542, %v7700
    %v7815 = vadd.f32 %v7543, %v7699
    %v7816 = vadd.f32 %v7544, %v7703
    %v7817 = vadd.f32 %v7545, %v7702
    %v7818 = vadd.f32 %v7546, %v7706
    %v7819 = vadd.f32 %v7547, %v7705
    %v7820 = vadd.f32 %v7548, %v7709
    %v7821 = vadd.f32 %v7549, %v7708
    %v7822 = vadd.f32 %v7550, %v7712
    %v7823 = vadd.f32 %v7551, %v7711
    %v7824 = vadd.f32 %v7552, %v7715
    %v7825 = vadd.f32 %v7553, %v7714
    %v7826 = vadd.f32 %v7554, %v7718
    %v7827 = vadd.f32 %v7555, %v7717
    %v7828 = vadd.f32 %v7556, %v7721
    %v7829 = vadd.f32 %v7557, %v7720
    %v7830 = vadd.f32 %v7558, %v7724
    %v7831 = vadd.f32 %v7559, %v7723
    %v7832 = vadd.f32 %v7560, %v7727
    %v7833 = vadd.f32 %v7561, %v7726
    %v7834 = vadd.f32 %v7562, %v7730
    %v7835 = vadd.f32 %v7563, %v7729
    %v7836 = vadd.f32 %v7564, %v7733
    %v7837 = vadd.f32 %v7565, %v7732
    %v7838 = vadd.f32 %v7566, %v7736
    %v7839 = vadd.f32 %v7567, %v7735
    %v7840 = vadd.f32 %v7568, %v7739
    %v7841 = vadd.f32 %v7569, %v7738
    %v7842 = vadd.f32 %v7570, %v7742
    %v7843 = vadd.f32 %v7571, %v7741
    %v7844 = vadd.f32 %v7572, %v7745
    %v7845 = vadd.f32 %v7573, %v7744
    %v7846 = vadd.f32 %v7574, %v7748
    %v7847 = vadd.f32 %v7575, %v7747
    %v7848 = vadd.f32 %v7576, %v7751
    %v7849 = vadd.f32 %v7577, %v7750
    %v7850 = vadd.f32 %v7578, %v7754
    %v7851 = vadd.f32 %v7579, %v7753
    %v7852 = vadd.f32 %v7580, %v7757
    %v7853 = vadd.f32 %v7581, %v7756
    %s7854 = scalar_lea.vmem %s5, 8
    %v7855 = vld [vmem:[%s7854] sm:$0x1]
    %v7857 = vlaneseq
    %v7858 = vshrl.u32 %v7857, 7
    %v7859 = vsub.s32 0, %v7858
    %v7860 = vrot.slane %v7855, %v7859
    %v7862 = vmul.f32 %v6177, %v7860
    %v7863 = vmul.f32 %v6178, %v7860
    %v7864 = vmul.f32 %v6179, %v7860
    %v7865 = vmul.f32 %v6180, %v7860
    %v7866 = vmul.f32 %v6181, %v7860
    %v7867 = vmul.f32 %v6182, %v7860
    %v7868 = vmul.f32 %v6183, %v7860
    %v7869 = vmul.f32 %v6184, %v7860
    %v7870 = vmul.f32 %v6185, %v7860
    %v7871 = vmul.f32 %v6186, %v7860
    %v7872 = vmul.f32 %v6187, %v7860
    %v7873 = vmul.f32 %v6188, %v7860
    %v7874 = vmul.f32 %v6189, %v7860
    %v7875 = vmul.f32 %v6190, %v7860
    %v7876 = vmul.f32 %v6191, %v7860
    %v7877 = vmul.f32 %v6192, %v7860
    %v7878 = vmul.f32 %v6193, %v7860
    %v7879 = vmul.f32 %v6194, %v7860
    %v7880 = vmul.f32 %v6195, %v7860
    %v7881 = vmul.f32 %v6196, %v7860
    %v7882 = vmul.f32 %v6197, %v7860
    %v7883 = vmul.f32 %v6198, %v7860
    %v7884 = vmul.f32 %v6199, %v7860
    %v7885 = vmul.f32 %v6200, %v7860
    %v7886 = vmul.f32 %v6205, %v7860
    %v7887 = vmul.f32 %v6206, %v7860
    %v7888 = vmul.f32 %v6207, %v7860
    %v7889 = vmul.f32 %v6208, %v7860
    %v7890 = vmul.f32 %v6209, %v7860
    %v7891 = vmul.f32 %v6210, %v7860
    %v7892 = vmul.f32 %v6211, %v7860
    %v7893 = vmul.f32 %v6212, %v7860
    %v7894 = vmul.f32 %v6213, %v7860
    %v7895 = vmul.f32 %v6214, %v7860
    %v7896 = vmul.f32 %v6215, %v7860
    %v7897 = vmul.f32 %v6216, %v7860
    %v7898 = vmul.f32 %v6217, %v7860
    %v7899 = vmul.f32 %v6218, %v7860
    %v7900 = vmul.f32 %v6219, %v7860
    %v7901 = vmul.f32 %v6220, %v7860
    %v7902 = vmul.f32 %v6221, %v7860
    %v7903 = vmul.f32 %v6222, %v7860
    %v7904 = vmul.f32 %v6223, %v7860
    %v7905 = vmul.f32 %v6224, %v7860
    %v7906 = vmul.f32 %v6225, %v7860
    %v7907 = vmul.f32 %v6226, %v7860
    %v7908 = vmul.f32 %v6227, %v7860
    %v7909 = vmul.f32 %v6228, %v7860
    %v7958 = vrot.slane %v7862, 2
    %v7959 = vrot.slane %v7863, 2
    %v7960 = vsel %vm6661, %v7958, %v7959
    %v7961 = vrot.slane %v7864, 2
    %v7962 = vrot.slane %v7865, 2
    %v7963 = vsel %vm6661, %v7961, %v7962
    %v7964 = vrot.slane %v7866, 2
    %v7965 = vrot.slane %v7867, 2
    %v7966 = vsel %vm6661, %v7964, %v7965
    %v7967 = vrot.slane %v7868, 2
    %v7968 = vrot.slane %v7869, 2
    %v7969 = vsel %vm6661, %v7967, %v7968
    %v7970 = vrot.slane %v7870, 2
    %v7971 = vrot.slane %v7871, 2
    %v7972 = vsel %vm6661, %v7970, %v7971
    %v7973 = vrot.slane %v7872, 2
    %v7974 = vrot.slane %v7873, 2
    %v7975 = vsel %vm6661, %v7973, %v7974
    %v7976 = vrot.slane %v7874, 2
    %v7977 = vrot.slane %v7875, 2
    %v7978 = vsel %vm6661, %v7976, %v7977
    %v7979 = vrot.slane %v7876, 2
    %v7980 = vrot.slane %v7877, 2
    %v7981 = vsel %vm6661, %v7979, %v7980
    %v7982 = vrot.slane %v7878, 2
    %v7983 = vrot.slane %v7879, 2
    %v7984 = vsel %vm6661, %v7982, %v7983
    %v7985 = vrot.slane %v7880, 2
    %v7986 = vrot.slane %v7881, 2
    %v7987 = vsel %vm6661, %v7985, %v7986
    %v7988 = vrot.slane %v7882, 2
    %v7989 = vrot.slane %v7883, 2
    %v7990 = vsel %vm6661, %v7988, %v7989
    %v7991 = vrot.slane %v7884, 2
    %v7992 = vrot.slane %v7885, 2
    %v7993 = vsel %vm6661, %v7991, %v7992
    %v7994 = vrot.slane %v7886, 2
    %v7995 = vrot.slane %v7887, 2
    %v7996 = vsel %vm6661, %v7994, %v7995
    %v7997 = vrot.slane %v7888, 2
    %v7998 = vrot.slane %v7889, 2
    %v7999 = vsel %vm6661, %v7997, %v7998
    %v8000 = vrot.slane %v7890, 2
    %v8001 = vrot.slane %v7891, 2
    %v8002 = vsel %vm6661, %v8000, %v8001
    %v8003 = vrot.slane %v7892, 2
    %v8004 = vrot.slane %v7893, 2
    %v8005 = vsel %vm6661, %v8003, %v8004
    %v8006 = vrot.slane %v7894, 2
    %v8007 = vrot.slane %v7895, 2
    %v8008 = vsel %vm6661, %v8006, %v8007
    %v8009 = vrot.slane %v7896, 2
    %v8010 = vrot.slane %v7897, 2
    %v8011 = vsel %vm6661, %v8009, %v8010
    %v8012 = vrot.slane %v7898, 2
    %v8013 = vrot.slane %v7899, 2
    %v8014 = vsel %vm6661, %v8012, %v8013
    %v8015 = vrot.slane %v7900, 2
    %v8016 = vrot.slane %v7901, 2
    %v8017 = vsel %vm6661, %v8015, %v8016
    %v8018 = vrot.slane %v7902, 2
    %v8019 = vrot.slane %v7903, 2
    %v8020 = vsel %vm6661, %v8018, %v8019
    %v8021 = vrot.slane %v7904, 2
    %v8022 = vrot.slane %v7905, 2
    %v8023 = vsel %vm6661, %v8021, %v8022
    %v8024 = vrot.slane %v7906, 2
    %v8025 = vrot.slane %v7907, 2
    %v8026 = vsel %vm6661, %v8024, %v8025
    %v8027 = vrot.slane %v7908, 2
    %v8028 = vrot.slane %v7909, 2
    %v8029 = vsel %vm6661, %v8027, %v8028
    %v8078 = vadd.f32 %v7806, %v7960
    %v8079 = vadd.f32 %v7807, %v7959
    %v8080 = vadd.f32 %v7808, %v7963
    %v8081 = vadd.f32 %v7809, %v7962
    %v8082 = vadd.f32 %v7810, %v7966
    %v8083 = vadd.f32 %v7811, %v7965
    %v8084 = vadd.f32 %v7812, %v7969
    %v8085 = vadd.f32 %v7813, %v7968
    %v8086 = vadd.f32 %v7814, %v7972
    %v8087 = vadd.f32 %v7815, %v7971
    %v8088 = vadd.f32 %v7816, %v7975
    %v8089 = vadd.f32 %v7817, %v7974
    %v8090 = vadd.f32 %v7818, %v7978
    %v8091 = vadd.f32 %v7819, %v7977
    %v8092 = vadd.f32 %v7820, %v7981
    %v8093 = vadd.f32 %v7821, %v7980
    %v8094 = vadd.f32 %v7822, %v7984
    %v8095 = vadd.f32 %v7823, %v7983
    %v8096 = vadd.f32 %v7824, %v7987
    %v8097 = vadd.f32 %v7825, %v7986
    %v8098 = vadd.f32 %v7826, %v7990
    %v8099 = vadd.f32 %v7827, %v7989
    %v8100 = vadd.f32 %v7828, %v7993
    %v8101 = vadd.f32 %v7829, %v7992
    %v8102 = vadd.f32 %v7830, %v7996
    %v8103 = vadd.f32 %v7831, %v7995
    %v8104 = vadd.f32 %v7832, %v7999
    %v8105 = vadd.f32 %v7833, %v7998
    %v8106 = vadd.f32 %v7834, %v8002
    %v8107 = vadd.f32 %v7835, %v8001
    %v8108 = vadd.f32 %v7836, %v8005
    %v8109 = vadd.f32 %v7837, %v8004
    %v8110 = vadd.f32 %v7838, %v8008
    %v8111 = vadd.f32 %v7839, %v8007
    %v8112 = vadd.f32 %v7840, %v8011
    %v8113 = vadd.f32 %v7841, %v8010
    %v8114 = vadd.f32 %v7842, %v8014
    %v8115 = vadd.f32 %v7843, %v8013
    %v8116 = vadd.f32 %v7844, %v8017
    %v8117 = vadd.f32 %v7845, %v8016
    %v8118 = vadd.f32 %v7846, %v8020
    %v8119 = vadd.f32 %v7847, %v8019
    %v8120 = vadd.f32 %v7848, %v8023
    %v8121 = vadd.f32 %v7849, %v8022
    %v8122 = vadd.f32 %v7850, %v8026
    %v8123 = vadd.f32 %v7851, %v8025
    %v8124 = vadd.f32 %v7852, %v8029
    %v8125 = vadd.f32 %v7853, %v8028
    %v8126 = vsel %vm5993, %v8078, 0.0
    %8127 = vadd.xlane.f32.xlu0 %v8126
    %v8128 = vpop.xlane.xlu0 %8127
    %vm8129 = vcmask 60416
    %v8130 = vsel %vm8129, %v8079, 0.0
    %8131 = vadd.xlane.f32.xlu0 %v8130
    %v8132 = vpop.xlane.xlu0 %8131
    %v8133 = vsel %vm5993, %v8080, 0.0
    %8134 = vadd.xlane.f32.xlu0 %v8133
    %v8135 = vpop.xlane.xlu0 %8134
    %v8136 = vsel %vm8129, %v8081, 0.0
    %8137 = vadd.xlane.f32.xlu0 %v8136
    %v8138 = vpop.xlane.xlu0 %8137
    %v8139 = vsel %vm5993, %v8082, 0.0
    %8140 = vadd.xlane.f32.xlu0 %v8139
    %v8141 = vpop.xlane.xlu0 %8140
    %v8142 = vsel %vm8129, %v8083, 0.0
    %8143 = vadd.xlane.f32.xlu0 %v8142
    %v8144 = vpop.xlane.xlu0 %8143
    %v8145 = vsel %vm5993, %v8084, 0.0
    %8146 = vadd.xlane.f32.xlu0 %v8145
    %v8147 = vpop.xlane.xlu0 %8146
    %v8148 = vsel %vm8129, %v8085, 0.0
    %8149 = vadd.xlane.f32.xlu0 %v8148
    %v8150 = vpop.xlane.xlu0 %8149
    %v8151 = vsel %vm5993, %v8086, 0.0
    %8152 = vadd.xlane.f32.xlu0 %v8151
    %v8153 = vpop.xlane.xlu0 %8152
    %v8154 = vsel %vm8129, %v8087, 0.0
    %8155 = vadd.xlane.f32.xlu0 %v8154
    %v8156 = vpop.xlane.xlu0 %8155
    %v8157 = vsel %vm5993, %v8088, 0.0
    %8158 = vadd.xlane.f32.xlu0 %v8157
    %v8159 = vpop.xlane.xlu0 %8158
    %v8160 = vsel %vm8129, %v8089, 0.0
    %8161 = vadd.xlane.f32.xlu0 %v8160
    %v8162 = vpop.xlane.xlu0 %8161
    %v8163 = vsel %vm5993, %v8090, 0.0
    %8164 = vadd.xlane.f32.xlu0 %v8163
    %v8165 = vpop.xlane.xlu0 %8164
    %v8166 = vsel %vm8129, %v8091, 0.0
    %8167 = vadd.xlane.f32.xlu0 %v8166
    %v8168 = vpop.xlane.xlu0 %8167
    %v8169 = vsel %vm5993, %v8092, 0.0
    %8170 = vadd.xlane.f32.xlu0 %v8169
    %v8171 = vpop.xlane.xlu0 %8170
    %v8172 = vsel %vm8129, %v8093, 0.0
    %8173 = vadd.xlane.f32.xlu0 %v8172
    %v8174 = vpop.xlane.xlu0 %8173
    %v8175 = vsel %vm5993, %v8094, 0.0
    %8176 = vadd.xlane.f32.xlu0 %v8175
    %v8177 = vpop.xlane.xlu0 %8176
    %v8178 = vsel %vm8129, %v8095, 0.0
    %8179 = vadd.xlane.f32.xlu0 %v8178
    %v8180 = vpop.xlane.xlu0 %8179
    %v8181 = vsel %vm5993, %v8096, 0.0
    %8182 = vadd.xlane.f32.xlu0 %v8181
    %v8183 = vpop.xlane.xlu0 %8182
    %v8184 = vsel %vm8129, %v8097, 0.0
    %8185 = vadd.xlane.f32.xlu0 %v8184
    %v8186 = vpop.xlane.xlu0 %8185
    %v8187 = vsel %vm5993, %v8098, 0.0
    %8188 = vadd.xlane.f32.xlu0 %v8187
    %v8189 = vpop.xlane.xlu0 %8188
    %v8190 = vsel %vm8129, %v8099, 0.0
    %8191 = vadd.xlane.f32.xlu0 %v8190
    %v8192 = vpop.xlane.xlu0 %8191
    %v8193 = vsel %vm5993, %v8100, 0.0
    %8194 = vadd.xlane.f32.xlu0 %v8193
    %v8195 = vpop.xlane.xlu0 %8194
    %v8196 = vsel %vm8129, %v8101, 0.0
    %8197 = vadd.xlane.f32.xlu0 %v8196
    %v8198 = vpop.xlane.xlu0 %8197
    %v8199 = vsel %vm5993, %v8102, 0.0
    %8200 = vadd.xlane.f32.xlu0 %v8199
    %v8201 = vpop.xlane.xlu0 %8200
    %v8202 = vsel %vm8129, %v8103, 0.0
    %8203 = vadd.xlane.f32.xlu0 %v8202
    %v8204 = vpop.xlane.xlu0 %8203
    %v8205 = vsel %vm5993, %v8104, 0.0
    %8206 = vadd.xlane.f32.xlu0 %v8205
    %v8207 = vpop.xlane.xlu0 %8206
    %v8208 = vsel %vm8129, %v8105, 0.0
    %8209 = vadd.xlane.f32.xlu0 %v8208
    %v8210 = vpop.xlane.xlu0 %8209
    %v8211 = vsel %vm5993, %v8106, 0.0
    %8212 = vadd.xlane.f32.xlu0 %v8211
    %v8213 = vpop.xlane.xlu0 %8212
    %v8214 = vsel %vm8129, %v8107, 0.0
    %8215 = vadd.xlane.f32.xlu0 %v8214
    %v8216 = vpop.xlane.xlu0 %8215
    %v8217 = vsel %vm5993, %v8108, 0.0
    %8218 = vadd.xlane.f32.xlu0 %v8217
    %v8219 = vpop.xlane.xlu0 %8218
    %v8220 = vsel %vm8129, %v8109, 0.0
    %8221 = vadd.xlane.f32.xlu0 %v8220
    %v8222 = vpop.xlane.xlu0 %8221
    %v8223 = vsel %vm5993, %v8110, 0.0
    %8224 = vadd.xlane.f32.xlu0 %v8223
    %v8225 = vpop.xlane.xlu0 %8224
    %v8226 = vsel %vm8129, %v8111, 0.0
    %8227 = vadd.xlane.f32.xlu0 %v8226
    %v8228 = vpop.xlane.xlu0 %8227
    %v8229 = vsel %vm5993, %v8112, 0.0
    %8230 = vadd.xlane.f32.xlu0 %v8229
    %v8231 = vpop.xlane.xlu0 %8230
    %v8232 = vsel %vm8129, %v8113, 0.0
    %8233 = vadd.xlane.f32.xlu0 %v8232
    %v8234 = vpop.xlane.xlu0 %8233
    %v8235 = vsel %vm5993, %v8114, 0.0
    %8236 = vadd.xlane.f32.xlu0 %v8235
    %v8237 = vpop.xlane.xlu0 %8236
    %v8238 = vsel %vm8129, %v8115, 0.0
    %8239 = vadd.xlane.f32.xlu0 %v8238
    %v8240 = vpop.xlane.xlu0 %8239
    %v8241 = vsel %vm5993, %v8116, 0.0
    %8242 = vadd.xlane.f32.xlu0 %v8241
    %v8243 = vpop.xlane.xlu0 %8242
    %v8244 = vsel %vm8129, %v8117, 0.0
    %8245 = vadd.xlane.f32.xlu0 %v8244
    %v8246 = vpop.xlane.xlu0 %8245
    %v8247 = vsel %vm5993, %v8118, 0.0
    %8248 = vadd.xlane.f32.xlu0 %v8247
    %v8249 = vpop.xlane.xlu0 %8248
    %v8250 = vsel %vm8129, %v8119, 0.0
    %8251 = vadd.xlane.f32.xlu0 %v8250
    %v8252 = vpop.xlane.xlu0 %8251
    %v8253 = vsel %vm5993, %v8120, 0.0
    %8254 = vadd.xlane.f32.xlu0 %v8253
    %v8255 = vpop.xlane.xlu0 %8254
    %v8256 = vsel %vm8129, %v8121, 0.0
    %8257 = vadd.xlane.f32.xlu0 %v8256
    %v8258 = vpop.xlane.xlu0 %8257
    %v8259 = vsel %vm5993, %v8122, 0.0
    %8260 = vadd.xlane.f32.xlu0 %v8259
    %v8261 = vpop.xlane.xlu0 %8260
    %v8262 = vsel %vm8129, %v8123, 0.0
    %8263 = vadd.xlane.f32.xlu0 %v8262
    %v8264 = vpop.xlane.xlu0 %8263
    %v8265 = vsel %vm5993, %v8124, 0.0
    %8266 = vadd.xlane.f32.xlu0 %v8265
    %v8267 = vpop.xlane.xlu0 %8266
    %v8268 = vsel %vm8129, %v8125, 0.0
    %8269 = vadd.xlane.f32.xlu0 %v8268
    %v8270 = vpop.xlane.xlu0 %8269
    %v8271 = vld [vmem:[#allocation4] sm:$0x1]
    %v8273 = vlaneseq
    %v8274 = vshrl.u32 %v8273, 7
    %v8275 = vsub.s32 0, %v8274
    %v8276 = vrot.slane %v8271, %v8275
    %8277 = vset.pattern.permute.xlu0 0
    %8278 = vperm.xlu0 %8277, %v8276
    %v8279 = vpop.permute.xlu0 %8278
    %v8281 = vadd.f32 %v8128, %v8279
    %v8282 = vadd.f32 %v8132, %v8279
    %v8283 = vadd.f32 %v8135, %v8279
    %v8284 = vadd.f32 %v8138, %v8279
    %v8285 = vadd.f32 %v8141, %v8279
    %v8286 = vadd.f32 %v8144, %v8279
    %v8287 = vadd.f32 %v8147, %v8279
    %v8288 = vadd.f32 %v8150, %v8279
    %v8289 = vadd.f32 %v8153, %v8279
    %v8290 = vadd.f32 %v8156, %v8279
    %v8291 = vadd.f32 %v8159, %v8279
    %v8292 = vadd.f32 %v8162, %v8279
    %v8293 = vadd.f32 %v8165, %v8279
    %v8294 = vadd.f32 %v8168, %v8279
    %v8295 = vadd.f32 %v8171, %v8279
    %v8296 = vadd.f32 %v8174, %v8279
    %v8297 = vadd.f32 %v8177, %v8279
    %v8298 = vadd.f32 %v8180, %v8279
    %v8299 = vadd.f32 %v8183, %v8279
    %v8300 = vadd.f32 %v8186, %v8279
    %v8301 = vadd.f32 %v8189, %v8279
    %v8302 = vadd.f32 %v8192, %v8279
    %v8303 = vadd.f32 %v8195, %v8279
    %v8304 = vadd.f32 %v8198, %v8279
    %v8305 = vadd.f32 %v8201, %v8279
    %v8306 = vadd.f32 %v8204, %v8279
    %v8307 = vadd.f32 %v8207, %v8279
    %v8308 = vadd.f32 %v8210, %v8279
    %v8309 = vadd.f32 %v8213, %v8279
    %v8310 = vadd.f32 %v8216, %v8279
    %v8311 = vadd.f32 %v8219, %v8279
    %v8312 = vadd.f32 %v8222, %v8279
    %v8313 = vadd.f32 %v8225, %v8279
    %v8314 = vadd.f32 %v8228, %v8279
    %v8315 = vadd.f32 %v8231, %v8279
    %v8316 = vadd.f32 %v8234, %v8279
    %v8317 = vadd.f32 %v8237, %v8279
    %v8318 = vadd.f32 %v8240, %v8279
    %v8319 = vadd.f32 %v8243, %v8279
    %v8320 = vadd.f32 %v8246, %v8279
    %v8321 = vadd.f32 %v8249, %v8279
    %v8322 = vadd.f32 %v8252, %v8279
    %v8323 = vadd.f32 %v8255, %v8279
    %v8324 = vadd.f32 %v8258, %v8279
    %v8325 = vadd.f32 %v8261, %v8279
    %v8326 = vadd.f32 %v8264, %v8279
    %v8327 = vadd.f32 %v8267, %v8279
    %v8328 = vadd.f32 %v8270, %v8279
    %v8329 = vsub.f32 0.0, %v8281
    %v8330 = vsub.f32 0.0, %v8282
    %v8331 = vsub.f32 0.0, %v8283
    %v8332 = vsub.f32 0.0, %v8284
    %v8333 = vsub.f32 0.0, %v8285
    %v8334 = vsub.f32 0.0, %v8286
    %v8335 = vsub.f32 0.0, %v8287
    %v8336 = vsub.f32 0.0, %v8288
    %v8337 = vsub.f32 0.0, %v8289
    %v8338 = vsub.f32 0.0, %v8290
    %v8339 = vsub.f32 0.0, %v8291
    %v8340 = vsub.f32 0.0, %v8292
    %v8341 = vsub.f32 0.0, %v8293
    %v8342 = vsub.f32 0.0, %v8294
    %v8343 = vsub.f32 0.0, %v8295
    %v8344 = vsub.f32 0.0, %v8296
    %v8345 = vsub.f32 0.0, %v8297
    %v8346 = vsub.f32 0.0, %v8298
    %v8347 = vsub.f32 0.0, %v8299
    %v8348 = vsub.f32 0.0, %v8300
    %v8349 = vsub.f32 0.0, %v8301
    %v8350 = vsub.f32 0.0, %v8302
    %v8351 = vsub.f32 0.0, %v8303
    %v8352 = vsub.f32 0.0, %v8304
    %v8353 = vsub.f32 0.0, %v8305
    %v8354 = vsub.f32 0.0, %v8306
    %v8355 = vsub.f32 0.0, %v8307
    %v8356 = vsub.f32 0.0, %v8308
    %v8357 = vsub.f32 0.0, %v8309
    %v8358 = vsub.f32 0.0, %v8310
    %v8359 = vsub.f32 0.0, %v8311
    %v8360 = vsub.f32 0.0, %v8312
    %v8361 = vsub.f32 0.0, %v8313
    %v8362 = vsub.f32 0.0, %v8314
    %v8363 = vsub.f32 0.0, %v8315
    %v8364 = vsub.f32 0.0, %v8316
    %v8365 = vsub.f32 0.0, %v8317
    %v8366 = vsub.f32 0.0, %v8318
    %v8367 = vsub.f32 0.0, %v8319
    %v8368 = vsub.f32 0.0, %v8320
    %v8369 = vsub.f32 0.0, %v8321
    %v8370 = vsub.f32 0.0, %v8322
    %v8371 = vsub.f32 0.0, %v8323
    %v8372 = vsub.f32 0.0, %v8324
    %v8373 = vsub.f32 0.0, %v8325
    %v8374 = vsub.f32 0.0, %v8326
    %v8375 = vsub.f32 0.0, %v8327
    %v8376 = vsub.f32 0.0, %v8328
    %v8377 = vmul.f32 %v8329, 1.442695
    %v8378 = vpow.pop %v8377
    %v8379 = vmul.f32 %v8330, 1.442695
    %v8380 = vpow.pop %v8379
    %v8381 = vmul.f32 %v8331, 1.442695
    %v8382 = vpow.pop %v8381
    %v8383 = vmul.f32 %v8332, 1.442695
    %v8384 = vpow.pop %v8383
    %v8385 = vmul.f32 %v8333, 1.442695
    %v8386 = vpow.pop %v8385
    %v8387 = vmul.f32 %v8334, 1.442695
    %v8388 = vpow.pop %v8387
    %v8389 = vmul.f32 %v8335, 1.442695
    %v8390 = vpow.pop %v8389
    %v8391 = vmul.f32 %v8336, 1.442695
    %v8392 = vpow.pop %v8391
    %v8393 = vmul.f32 %v8337, 1.442695
    %v8394 = vpow.pop %v8393
    %v8395 = vmul.f32 %v8338, 1.442695
    %v8396 = vpow.pop %v8395
    %v8397 = vmul.f32 %v8339, 1.442695
    %v8398 = vpow.pop %v8397
    %v8399 = vmul.f32 %v8340, 1.442695
    %v8400 = vpow.pop %v8399
    %v8401 = vmul.f32 %v8341, 1.442695
    %v8402 = vpow.pop %v8401
    %v8403 = vmul.f32 %v8342, 1.442695
    %v8404 = vpow.pop %v8403
    %v8405 = vmul.f32 %v8343, 1.442695
    %v8406 = vpow.pop %v8405
    %v8407 = vmul.f32 %v8344, 1.442695
    %v8408 = vpow.pop %v8407
    %v8409 = vmul.f32 %v8345, 1.442695
    %v8410 = vpow.pop %v8409
    %v8411 = vmul.f32 %v8346, 1.442695
    %v8412 = vpow.pop %v8411
    %v8413 = vmul.f32 %v8347, 1.442695
    %v8414 = vpow.pop %v8413
    %v8415 = vmul.f32 %v8348, 1.442695
    %v8416 = vpow.pop %v8415
    %v8417 = vmul.f32 %v8349, 1.442695
    %v8418 = vpow.pop %v8417
    %v8419 = vmul.f32 %v8350, 1.442695
    %v8420 = vpow.pop %v8419
    %v8421 = vmul.f32 %v8351, 1.442695
    %v8422 = vpow.pop %v8421
    %v8423 = vmul.f32 %v8352, 1.442695
    %v8424 = vpow.pop %v8423
    %v8425 = vmul.f32 %v8353, 1.442695
    %v8426 = vpow.pop %v8425
    %v8427 = vmul.f32 %v8354, 1.442695
    %v8428 = vpow.pop %v8427
    %v8429 = vmul.f32 %v8355, 1.442695
    %v8430 = vpow.pop %v8429
    %v8431 = vmul.f32 %v8356, 1.442695
    %v8432 = vpow.pop %v8431
    %v8433 = vmul.f32 %v8357, 1.442695
    %v8434 = vpow.pop %v8433
    %v8435 = vmul.f32 %v8358, 1.442695
    %v8436 = vpow.pop %v8435
    %v8437 = vmul.f32 %v8359, 1.442695
    %v8438 = vpow.pop %v8437
    %v8439 = vmul.f32 %v8360, 1.442695
    %v8440 = vpow.pop %v8439
    %v8441 = vmul.f32 %v8361, 1.442695
    %v8442 = vpow.pop %v8441
    %v8443 = vmul.f32 %v8362, 1.442695
    %v8444 = vpow.pop %v8443
    %v8445 = vmul.f32 %v8363, 1.442695
    %v8446 = vpow.pop %v8445
    %v8447 = vmul.f32 %v8364, 1.442695
    %v8448 = vpow.pop %v8447
    %v8449 = vmul.f32 %v8365, 1.442695
    %v8450 = vpow.pop %v8449
    %v8451 = vmul.f32 %v8366, 1.442695
    %v8452 = vpow.pop %v8451
    %v8453 = vmul.f32 %v8367, 1.442695
    %v8454 = vpow.pop %v8453
    %v8455 = vmul.f32 %v8368, 1.442695
    %v8456 = vpow.pop %v8455
    %v8457 = vmul.f32 %v8369, 1.442695
    %v8458 = vpow.pop %v8457
    %v8459 = vmul.f32 %v8370, 1.442695
    %v8460 = vpow.pop %v8459
    %v8461 = vmul.f32 %v8371, 1.442695
    %v8462 = vpow.pop %v8461
    %v8463 = vmul.f32 %v8372, 1.442695
    %v8464 = vpow.pop %v8463
    %v8465 = vmul.f32 %v8373, 1.442695
    %v8466 = vpow.pop %v8465
    %v8467 = vmul.f32 %v8374, 1.442695
    %v8468 = vpow.pop %v8467
    %v8469 = vmul.f32 %v8375, 1.442695
    %v8470 = vpow.pop %v8469
    %v8471 = vmul.f32 %v8376, 1.442695
    %v8472 = vpow.pop %v8471
    %v8473 = vadd.f32 %v8378, 1.0
    %v8474 = vadd.f32 %v8380, 1.0
    %v8475 = vadd.f32 %v8382, 1.0
    %v8476 = vadd.f32 %v8384, 1.0
    %v8477 = vadd.f32 %v8386, 1.0
    %v8478 = vadd.f32 %v8388, 1.0
    %v8479 = vadd.f32 %v8390, 1.0
    %v8480 = vadd.f32 %v8392, 1.0
    %v8481 = vadd.f32 %v8394, 1.0
    %v8482 = vadd.f32 %v8396, 1.0
    %v8483 = vadd.f32 %v8398, 1.0
    %v8484 = vadd.f32 %v8400, 1.0
    %v8485 = vadd.f32 %v8402, 1.0
    %v8486 = vadd.f32 %v8404, 1.0
    %v8487 = vadd.f32 %v8406, 1.0
    %v8488 = vadd.f32 %v8408, 1.0
    %v8489 = vadd.f32 %v8410, 1.0
    %v8490 = vadd.f32 %v8412, 1.0
    %v8491 = vadd.f32 %v8414, 1.0
    %v8492 = vadd.f32 %v8416, 1.0
    %v8493 = vadd.f32 %v8418, 1.0
    %v8494 = vadd.f32 %v8420, 1.0
    %v8495 = vadd.f32 %v8422, 1.0
    %v8496 = vadd.f32 %v8424, 1.0
    %v8497 = vadd.f32 %v8426, 1.0
    %v8498 = vadd.f32 %v8428, 1.0
    %v8499 = vadd.f32 %v8430, 1.0
    %v8500 = vadd.f32 %v8432, 1.0
    %v8501 = vadd.f32 %v8434, 1.0
    %v8502 = vadd.f32 %v8436, 1.0
    %v8503 = vadd.f32 %v8438, 1.0
    %v8504 = vadd.f32 %v8440, 1.0
    %v8505 = vadd.f32 %v8442, 1.0
    %v8506 = vadd.f32 %v8444, 1.0
    %v8507 = vadd.f32 %v8446, 1.0
    %v8508 = vadd.f32 %v8448, 1.0
    %v8509 = vadd.f32 %v8450, 1.0
    %v8510 = vadd.f32 %v8452, 1.0
    %v8511 = vadd.f32 %v8454, 1.0
    %v8512 = vadd.f32 %v8456, 1.0
    %v8513 = vadd.f32 %v8458, 1.0
    %v8514 = vadd.f32 %v8460, 1.0
    %v8515 = vadd.f32 %v8462, 1.0
    %v8516 = vadd.f32 %v8464, 1.0
    %v8517 = vadd.f32 %v8466, 1.0
    %v8518 = vadd.f32 %v8468, 1.0
    %v8519 = vadd.f32 %v8470, 1.0
    %v8520 = vadd.f32 %v8472, 1.0
    %v8521 = vrcp.pop %v8473
    %v8522 = vrcp.pop %v8474
    %v8523 = vrcp.pop %v8475
    %v8524 = vrcp.pop %v8476
    %v8525 = vrcp.pop %v8477
    %v8526 = vrcp.pop %v8478
    %v8527 = vrcp.pop %v8479
    %v8528 = vrcp.pop %v8480
    %v8529 = vrcp.pop %v8481
    %v8530 = vrcp.pop %v8482
    %v8531 = vrcp.pop %v8483
    %v8532 = vrcp.pop %v8484
    %v8533 = vrcp.pop %v8485
    %v8534 = vrcp.pop %v8486
    %v8535 = vrcp.pop %v8487
    %v8536 = vrcp.pop %v8488
    %v8537 = vrcp.pop %v8489
    %v8538 = vrcp.pop %v8490
    %v8539 = vrcp.pop %v8491
    %v8540 = vrcp.pop %v8492
    %v8541 = vrcp.pop %v8493
    %v8542 = vrcp.pop %v8494
    %v8543 = vrcp.pop %v8495
    %v8544 = vrcp.pop %v8496
    %v8545 = vrcp.pop %v8497
    %v8546 = vrcp.pop %v8498
    %v8547 = vrcp.pop %v8499
    %v8548 = vrcp.pop %v8500
    %v8549 = vrcp.pop %v8501
    %v8550 = vrcp.pop %v8502
    %v8551 = vrcp.pop %v8503
    %v8552 = vrcp.pop %v8504
    %v8553 = vrcp.pop %v8505
    %v8554 = vrcp.pop %v8506
    %v8555 = vrcp.pop %v8507
    %v8556 = vrcp.pop %v8508
    %v8557 = vrcp.pop %v8509
    %v8558 = vrcp.pop %v8510
    %v8559 = vrcp.pop %v8511
    %v8560 = vrcp.pop %v8512
    %v8561 = vrcp.pop %v8513
    %v8562 = vrcp.pop %v8514
    %v8563 = vrcp.pop %v8515
    %v8564 = vrcp.pop %v8516
    %v8565 = vrcp.pop %v8517
    %v8566 = vrcp.pop %v8518
    %v8567 = vrcp.pop %v8519
    %v8568 = vrcp.pop %v8520
    %v8617 = vlaneseq
    %v8618 = vand.u32 %v8617, 127
    %v8619 = vlaneseq
    %v8620 = vshrl.u32 %v8619, 7
    %v8621 = vsub.s32 %v8618, %v8620
    %v8622 = vrot.slane %v8521, %v8621
    %v8623 = vadd.s32 %v8618, 4294967288
    %v8624 = vlaneseq
    %v8625 = vshrl.u32 %v8624, 7
    %v8626 = vsub.s32 %v8623, %v8625
    %v8627 = vrot.slane %v8522, %v8626
    %vm8628 = vcmask 130112
    %v8629 = vsel %vm8628, %v8627, %v8622
    %v8630 = vlaneseq
    %v8631 = vshrl.u32 %v8630, 7
    %v8632 = vsub.s32 %v8618, %v8631
    %v8633 = vrot.slane %v8523, %v8632
    %v8634 = vlaneseq
    %v8635 = vshrl.u32 %v8634, 7
    %v8636 = vsub.s32 %v8623, %v8635
    %v8637 = vrot.slane %v8524, %v8636
    %v8638 = vsel %vm8628, %v8637, %v8633
    %v8639 = vlaneseq
    %v8640 = vshrl.u32 %v8639, 7
    %v8641 = vsub.s32 %v8618, %v8640
    %v8642 = vrot.slane %v8525, %v8641
    %v8643 = vlaneseq
    %v8644 = vshrl.u32 %v8643, 7
    %v8645 = vsub.s32 %v8623, %v8644
    %v8646 = vrot.slane %v8526, %v8645
    %v8647 = vsel %vm8628, %v8646, %v8642
    %v8648 = vlaneseq
    %v8649 = vshrl.u32 %v8648, 7
    %v8650 = vsub.s32 %v8618, %v8649
    %v8651 = vrot.slane %v8527, %v8650
    %v8652 = vlaneseq
    %v8653 = vshrl.u32 %v8652, 7
    %v8654 = vsub.s32 %v8623, %v8653
    %v8655 = vrot.slane %v8528, %v8654
    %v8656 = vsel %vm8628, %v8655, %v8651
    %v8657 = vlaneseq
    %v8658 = vshrl.u32 %v8657, 7
    %v8659 = vsub.s32 %v8618, %v8658
    %v8660 = vrot.slane %v8529, %v8659
    %v8661 = vlaneseq
    %v8662 = vshrl.u32 %v8661, 7
    %v8663 = vsub.s32 %v8623, %v8662
    %v8664 = vrot.slane %v8530, %v8663
    %v8665 = vsel %vm8628, %v8664, %v8660
    %v8666 = vlaneseq
    %v8667 = vshrl.u32 %v8666, 7
    %v8668 = vsub.s32 %v8618, %v8667
    %v8669 = vrot.slane %v8531, %v8668
    %v8670 = vlaneseq
    %v8671 = vshrl.u32 %v8670, 7
    %v8672 = vsub.s32 %v8623, %v8671
    %v8673 = vrot.slane %v8532, %v8672
    %v8674 = vsel %vm8628, %v8673, %v8669
    %v8675 = vlaneseq
    %v8676 = vshrl.u32 %v8675, 7
    %v8677 = vsub.s32 %v8618, %v8676
    %v8678 = vrot.slane %v8533, %v8677
    %v8679 = vlaneseq
    %v8680 = vshrl.u32 %v8679, 7
    %v8681 = vsub.s32 %v8623, %v8680
    %v8682 = vrot.slane %v8534, %v8681
    %v8683 = vsel %vm8628, %v8682, %v8678
    %v8684 = vlaneseq
    %v8685 = vshrl.u32 %v8684, 7
    %v8686 = vsub.s32 %v8618, %v8685
    %v8687 = vrot.slane %v8535, %v8686
    %v8688 = vlaneseq
    %v8689 = vshrl.u32 %v8688, 7
    %v8690 = vsub.s32 %v8623, %v8689
    %v8691 = vrot.slane %v8536, %v8690
    %v8692 = vsel %vm8628, %v8691, %v8687
    %v8693 = vlaneseq
    %v8694 = vshrl.u32 %v8693, 7
    %v8695 = vsub.s32 %v8618, %v8694
    %v8696 = vrot.slane %v8537, %v8695
    %v8697 = vlaneseq
    %v8698 = vshrl.u32 %v8697, 7
    %v8699 = vsub.s32 %v8623, %v8698
    %v8700 = vrot.slane %v8538, %v8699
    %v8701 = vsel %vm8628, %v8700, %v8696
    %v8702 = vlaneseq
    %v8703 = vshrl.u32 %v8702, 7
    %v8704 = vsub.s32 %v8618, %v8703
    %v8705 = vrot.slane %v8539, %v8704
    %v8706 = vlaneseq
    %v8707 = vshrl.u32 %v8706, 7
    %v8708 = vsub.s32 %v8623, %v8707
    %v8709 = vrot.slane %v8540, %v8708
    %v8710 = vsel %vm8628, %v8709, %v8705
    %v8711 = vlaneseq
    %v8712 = vshrl.u32 %v8711, 7
    %v8713 = vsub.s32 %v8618, %v8712
    %v8714 = vrot.slane %v8541, %v8713
    %v8715 = vlaneseq
    %v8716 = vshrl.u32 %v8715, 7
    %v8717 = vsub.s32 %v8623, %v8716
    %v8718 = vrot.slane %v8542, %v8717
    %v8719 = vsel %vm8628, %v8718, %v8714
    %v8720 = vlaneseq
    %v8721 = vshrl.u32 %v8720, 7
    %v8722 = vsub.s32 %v8618, %v8721
    %v8723 = vrot.slane %v8543, %v8722
    %v8724 = vlaneseq
    %v8725 = vshrl.u32 %v8724, 7
    %v8726 = vsub.s32 %v8623, %v8725
    %v8727 = vrot.slane %v8544, %v8726
    %v8728 = vsel %vm8628, %v8727, %v8723
    %v8729 = vlaneseq
    %v8730 = vshrl.u32 %v8729, 7
    %v8731 = vsub.s32 %v8618, %v8730
    %v8732 = vrot.slane %v8545, %v8731
    %v8733 = vlaneseq
    %v8734 = vshrl.u32 %v8733, 7
    %v8735 = vsub.s32 %v8623, %v8734
    %v8736 = vrot.slane %v8546, %v8735
    %v8737 = vsel %vm8628, %v8736, %v8732
    %v8738 = vlaneseq
    %v8739 = vshrl.u32 %v8738, 7
    %v8740 = vsub.s32 %v8618, %v8739
    %v8741 = vrot.slane %v8547, %v8740
    %v8742 = vlaneseq
    %v8743 = vshrl.u32 %v8742, 7
    %v8744 = vsub.s32 %v8623, %v8743
    %v8745 = vrot.slane %v8548, %v8744
    %v8746 = vsel %vm8628, %v8745, %v8741
    %v8747 = vlaneseq
    %v8748 = vshrl.u32 %v8747, 7
    %v8749 = vsub.s32 %v8618, %v8748
    %v8750 = vrot.slane %v8549, %v8749
    %v8751 = vlaneseq
    %v8752 = vshrl.u32 %v8751, 7
    %v8753 = vsub.s32 %v8623, %v8752
    %v8754 = vrot.slane %v8550, %v8753
    %v8755 = vsel %vm8628, %v8754, %v8750
    %v8756 = vlaneseq
    %v8757 = vshrl.u32 %v8756, 7
    %v8758 = vsub.s32 %v8618, %v8757
    %v8759 = vrot.slane %v8551, %v8758
    %v8760 = vlaneseq
    %v8761 = vshrl.u32 %v8760, 7
    %v8762 = vsub.s32 %v8623, %v8761
    %v8763 = vrot.slane %v8552, %v8762
    %v8764 = vsel %vm8628, %v8763, %v8759
    %v8765 = vlaneseq
    %v8766 = vshrl.u32 %v8765, 7
    %v8767 = vsub.s32 %v8618, %v8766
    %v8768 = vrot.slane %v8553, %v8767
    %v8769 = vlaneseq
    %v8770 = vshrl.u32 %v8769, 7
    %v8771 = vsub.s32 %v8623, %v8770
    %v8772 = vrot.slane %v8554, %v8771
    %v8773 = vsel %vm8628, %v8772, %v8768
    %v8774 = vlaneseq
    %v8775 = vshrl.u32 %v8774, 7
    %v8776 = vsub.s32 %v8618, %v8775
    %v8777 = vrot.slane %v8555, %v8776
    %v8778 = vlaneseq
    %v8779 = vshrl.u32 %v8778, 7
    %v8780 = vsub.s32 %v8623, %v8779
    %v8781 = vrot.slane %v8556, %v8780
    %v8782 = vsel %vm8628, %v8781, %v8777
    %v8783 = vlaneseq
    %v8784 = vshrl.u32 %v8783, 7
    %v8785 = vsub.s32 %v8618, %v8784
    %v8786 = vrot.slane %v8557, %v8785
    %v8787 = vlaneseq
    %v8788 = vshrl.u32 %v8787, 7
    %v8789 = vsub.s32 %v8623, %v8788
    %v8790 = vrot.slane %v8558, %v8789
    %v8791 = vsel %vm8628, %v8790, %v8786
    %v8792 = vlaneseq
    %v8793 = vshrl.u32 %v8792, 7
    %v8794 = vsub.s32 %v8618, %v8793
    %v8795 = vrot.slane %v8559, %v8794
    %v8796 = vlaneseq
    %v8797 = vshrl.u32 %v8796, 7
    %v8798 = vsub.s32 %v8623, %v8797
    %v8799 = vrot.slane %v8560, %v8798
    %v8800 = vsel %vm8628, %v8799, %v8795
    %v8801 = vlaneseq
    %v8802 = vshrl.u32 %v8801, 7
    %v8803 = vsub.s32 %v8618, %v8802
    %v8804 = vrot.slane %v8561, %v8803
    %v8805 = vlaneseq
    %v8806 = vshrl.u32 %v8805, 7
    %v8807 = vsub.s32 %v8623, %v8806
    %v8808 = vrot.slane %v8562, %v8807
    %v8809 = vsel %vm8628, %v8808, %v8804
    %v8810 = vlaneseq
    %v8811 = vshrl.u32 %v8810, 7
    %v8812 = vsub.s32 %v8618, %v8811
    %v8813 = vrot.slane %v8563, %v8812
    %v8814 = vlaneseq
    %v8815 = vshrl.u32 %v8814, 7
    %v8816 = vsub.s32 %v8623, %v8815
    %v8817 = vrot.slane %v8564, %v8816
    %v8818 = vsel %vm8628, %v8817, %v8813
    %v8819 = vlaneseq
    %v8820 = vshrl.u32 %v8819, 7
    %v8821 = vsub.s32 %v8618, %v8820
    %v8822 = vrot.slane %v8565, %v8821
    %v8823 = vlaneseq
    %v8824 = vshrl.u32 %v8823, 7
    %v8825 = vsub.s32 %v8623, %v8824
    %v8826 = vrot.slane %v8566, %v8825
    %v8827 = vsel %vm8628, %v8826, %v8822
    %v8828 = vlaneseq
    %v8829 = vshrl.u32 %v8828, 7
    %v8830 = vsub.s32 %v8618, %v8829
    %v8831 = vrot.slane %v8567, %v8830
    %v8832 = vlaneseq
    %v8833 = vshrl.u32 %v8832, 7
    %v8834 = vsub.s32 %v8623, %v8833
    %v8835 = vrot.slane %v8568, %v8834
    %v8836 = vsel %vm8628, %v8835, %v8831
    %vm8837 = vcmask 1041409
    %v8838 = vsel %vm8837, %v8638, %v8629
    %vm8839 = vcmask 1042434
    %v8840 = vsel %vm8839, %v8647, %v8838
    %vm8841 = vcmask 1043459
    %v8842 = vsel %vm8841, %v8656, %v8840
    %vm8843 = vcmask 1044484
    %v8844 = vsel %vm8843, %v8665, %v8842
    %vm8845 = vcmask 1045509
    %v8846 = vsel %vm8845, %v8674, %v8844
    %vm8847 = vcmask 1046534
    %v8848 = vsel %vm8847, %v8683, %v8846
    %vm8849 = vcmask 1047559
    %v8850 = vsel %vm8849, %v8692, %v8848
    %v8851 = vsel %vm8837, %v8710, %v8701
    %v8852 = vsel %vm8839, %v8719, %v8851
    %v8853 = vsel %vm8841, %v8728, %v8852
    %v8854 = vsel %vm8837, %v8746, %v8737
    %v8855 = vsel %vm8839, %v8755, %v8854
    %v8856 = vsel %vm8841, %v8764, %v8855
    %v8857 = vsel %vm8843, %v8773, %v8856
    %v8858 = vsel %vm8845, %v8782, %v8857
    %v8859 = vsel %vm8847, %v8791, %v8858
    %v8860 = vsel %vm8849, %v8800, %v8859
    %v8861 = vsel %vm8837, %v8818, %v8809
    %v8862 = vsel %vm8839, %v8827, %v8861
    %v8863 = vsel %vm8841, %v8836, %v8862
    %vm8868 = vcmask 97280
    %8869 = vst.msk [vmem:[%s7] sm:$0xff] %vm8868, %v8850
    %vm8870 = vcmask 93184
    %8871 = vst.msk [vmem:[%s7 + $0x8] sm:$0xf] %vm8870, %v8853
    %8872 = vst.msk [vmem:[%s7 + $0x10] sm:$0xff] %vm8868, %v8860
    %8873 = vst.msk [vmem:[%s7 + $0x18] sm:$0xf] %vm8870, %v8863
    // Predicated region
    $region42: #{decoder_forward.1} parent=1 // pred_check
      _
    $region43: #{decoder_forward.1} parent=1 // pred_check_branch
      %8875 = sbr.rel (0) target = $region45
    $region44: #{decoder_forward.1} parent=1 // pred_region
      _
    $region45: #{decoder_forward.1} parent=1 // pred_fallthru
      _
    // Predicated region
    $region46: #{decoder_forward.1} parent=1 // pred_check
      _
    $region47: #{decoder_forward.1} parent=1 // pred_check_branch
      %8877 = sbr.rel (0) target = $region49
    $region48: #{decoder_forward.1} parent=1 // pred_region
      _
    $region49: #{decoder_forward.1} parent=1 // pred_fallthru
      _
    %8878 = vsyncpa [#allocation6], 1
    %8879 = vsyncpa [#allocation8], 1

</llo_original>
